<compile_context>
chip_gen: v7x
topology: tpu7x:2x2x1
jax: 0.10.0
libtpu: 0.0.40
codegen_flags: <defaults>
</compile_context>

<pallas_src>
import functools

import jax
import jax.numpy as jnp
from jax import lax
from jax.experimental import pallas as pl
from jax.experimental.pallas import tpu as pltpu


# ----------------------------------------------------------------------------
# Kernel 1: per-head linear projection + attention logits (one layer)
#   x_ref     : (h_in,  blk, c_in)   bf16   (row-tiled)
#   w_ref     : (h_in, h_out, c_in, c_out) bf16  (resident)
#   att_ref   : (h_out, c_out, 2)    bf16   (resident; [...,0]=att_dst, [...,1]=att_src)
#   h_ref     : (h_out, blk, c_out)  bf16   (row-tiled output)
#   logit_ref : (h_out, blk, 2)      f32    (row-tiled output)
# ----------------------------------------------------------------------------
def _proj_kernel(x_ref, w_ref, att_ref, h_ref, logit_ref, *, n_heads_in, n_heads_out):
    blk = x_ref.shape[1]
    c_out = w_ref.shape[3]
    # Static loops only drive small O(N*D^2) matmuls (no N^2 temporaries), so
    # leaving them unrolled is fine for live ranges.
    for ho in range(n_heads_out):
        acc = jnp.zeros((blk, c_out), jnp.float32)
        for hi in range(n_heads_in):
            acc = acc + jnp.dot(x_ref[hi], w_ref[hi, ho],
                                preferred_element_type=jnp.float32)
        h_bf = acc.astype(jnp.bfloat16)
        h_ref[ho] = h_bf
        logit_ref[ho] = jnp.dot(h_bf, att_ref[ho],
                                preferred_element_type=jnp.float32)


# ----------------------------------------------------------------------------
# Kernel 2: masked attention softmax + aggregation + bias + ELU (one layer)
#   ad_ref  : (H, blk, 1)  f32   destination logits (row-tiled)
#   adj_ref : (blk, N)     int8  adjacency rows (row-tiled)
#   ast_ref : (H, 1, N)    f32   source logits (resident)
#   h_ref   : (H, N, C)    bf16  projected node features (resident)
#   b_ref   : (H, 1, C)    f32   GATConv bias (resident)
#   act_ref : (H, blk, C)  bf16  layer output (row-tiled)
# ----------------------------------------------------------------------------
def _attn_kernel(ad_ref, adj_ref, ast_ref, h_ref, b_ref, act_ref, *, heads,
                 negative_slope=0.2):
    # Additive mask built in-kernel from int8 adjacency, hoisted out of the
    # per-head loop (cheap VPU work hidden under exp).
    mask_add = jnp.where(adj_ref[...].astype(jnp.float32) > 0.0,
                         jnp.float32(0.0), jnp.float32(-1e30))      # (blk, N)

    def head_body(hd, carry):
        # e[i, j] = LeakyReLU(alpha_dst[i] + alpha_src[j]) + mask
        e = ad_ref[hd] + ast_ref[hd]                                 # (blk, N)
        e = jnp.maximum(e, negative_slope * e)                       # LeakyReLU(0.2)
        e = e + mask_add
        m = jnp.max(e, axis=-1, keepdims=True)                       # finite: self-loops
        # TODO(synk): compute exp in bf16 on v6e/v7x and add a scalar-prefetched
        # occupancy table + pl.when to skip fully-masked column blocks.
        p = jnp.exp(e - m)                                           # unnormalized
        s = jnp.sum(p, axis=-1, keepdims=True)
        # Deferred softmax normalization: aggregate first (MXU, bf16 in / f32 acc),
        # then scale the small (blk, C) result once.
        out = jnp.dot(p.astype(jnp.bfloat16), h_ref[hd],
                      preferred_element_type=jnp.float32)            # (blk, C)
        out = out * pl.reciprocal(s, approx=True)
        out = out + b_ref[hd]
        out = jnp.where(out > 0, out, jnp.exp(out) - 1.0)            # fused F.elu
        # F.dropout is identity in eval mode.
        act_ref[hd] = out.astype(act_ref.dtype)
        return carry

    # fori_loop bounds the live ranges of the per-head (blk, N) temporaries.
    lax.fori_loop(0, heads, head_body, 0)


# ----------------------------------------------------------------------------
# Kernel 3: final Linear head, output padded to 128 lanes (lane-dense store)
#   act_ref : (H, blk, C)        bf16 (row-tiled)
#   w_ref   : (H, C, ncls_pad)   bf16 (resident)
#   b_ref   : (1, ncls_pad)      f32  (resident)
#   o_ref   : (blk, ncls_pad)    f32  (row-tiled)
# ----------------------------------------------------------------------------
def _fc_kernel(act_ref, w_ref, b_ref, o_ref, *, heads):
    acc = jnp.zeros(o_ref.shape, jnp.float32)
    for hd in range(heads):
        acc = acc + jnp.dot(act_ref[hd], w_ref[hd],
                            preferred_element_type=jnp.float32)
    o_ref[...] = acc + b_ref[...]


# ----------------------------------------------------------------------------
# VMEM budgeting helpers (analytic block working set + headroom, capped below
# the smallest physical VMEM -> safe on v7x / v6e / v5e).
# ----------------------------------------------------------------------------
def _vmem_limit(working_set_bytes):
    return int(min(2 * working_set_bytes + (8 << 20), 64 << 20))


def _proj_vmem(rb, h_in, c_in, h_out, c_out):
    tiled = h_in * rb * c_in * 2 + h_out * rb * c_out * 2 + h_out * rb * 2 * 4
    resident = h_in * h_out * c_in * c_out * 2 + h_out * c_out * 2 * 2
    return 2 * tiled + resident + 2 * rb * c_out * 4


def _attn_vmem(rb, n_pad, heads, c):
    tiled = heads * rb * 4 + rb * n_pad + heads * rb * c * 2
    resident = heads * n_pad * 4 + heads * n_pad * c * 2 + heads * c * 4
    temps = 4 * rb * n_pad * 4   # mask_add + e + p + slack (f32)
    return 2 * tiled + resident + temps


def _fc_vmem(rb, heads, c, ncls):
    tiled = heads * rb * c * 2 + rb * ncls * 4
    resident = heads * c * ncls * 2 + ncls * 4
    return 2 * tiled + resident + rb * ncls * 4


# ----------------------------------------------------------------------------
# JAX glue
# ----------------------------------------------------------------------------
@functools.partial(jax.jit, static_argnames=("heads", "c1", "c2", "row_block"))
def gat_model_forward(params, x, adj, *, heads=4, c1=128, c2=64, row_block=128):
    n, f_in = x.shape
    num_classes = params["wfc"].shape[1]

    n_pad = row_block * pl.cdiv(n, row_block)
    f_pad = 128 * pl.cdiv(f_in, 128)
    ncls_pad = 128 * pl.cdiv(num_classes, 128)
    grid = (n_pad // row_block,)

    # --- pad & cast inputs ---------------------------------------------------
    x_p = jnp.zeros((1, n_pad, f_pad), jnp.bfloat16)
    x_p = x_p.at[0, :n, :f_in].set(x.astype(jnp.bfloat16))
    adj_p = jnp.zeros((n_pad, n_pad), jnp.int8)
    adj_p = adj_p.at[:n, :n].set((adj != 0).astype(jnp.int8))

    # --- weights in per-head block layout (tiny reshapes, done once) ----------
    w1_pad = jnp.zeros((f_pad, heads * c1), params["w1"].dtype).at[:f_in].set(params["w1"])
    w1_k = w1_pad.reshape(f_pad, heads, c1).transpose(1, 0, 2)[None].astype(jnp.bfloat16)   # (1,H,Fp,c1)
    att1 = jnp.stack([params["ad1"], params["as1"]], axis=-1).astype(jnp.bfloat16)           # (H,c1,2)
    b1_k = params["b1"].reshape(heads, 1, c1).astype(jnp.float32)

    w2_k = params["w2"].reshape(heads, c1, heads, c2).transpose(0, 2, 1, 3).astype(jnp.bfloat16)  # (H,H,c1,c2)
    att2 = jnp.stack([params["ad2"], params["as2"]], axis=-1).astype(jnp.bfloat16)                # (H,c2,2)
    b2_k = params["b2"].reshape(heads, 1, c2).astype(jnp.float32)

    wfc_k = jnp.pad(params["wfc"], ((0, 0), (0, ncls_pad - num_classes)))
    wfc_k = wfc_k.reshape(heads, c2, ncls_pad).astype(jnp.bfloat16)                               # (H,c2,ncp)
    bfc_k = jnp.pad(params["bfc"], ((0, 0), (0, ncls_pad - num_classes))).astype(jnp.float32)     # (1,ncp)

    def proj(x_in, w_k, att_k, h_in, c_in, c_out):
        kern = functools.partial(_proj_kernel, n_heads_in=h_in, n_heads_out=heads)
        return pl.pallas_call(
            kern,
            grid=grid,
            in_specs=[
                pl.BlockSpec((h_in, row_block, c_in), lambda i: (0, i, 0)),
                pl.BlockSpec((h_in, heads, c_in, c_out), lambda i: (0, 0, 0, 0)),
                pl.BlockSpec((heads, c_out, 2), lambda i: (0, 0, 0)),
            ],
            out_specs=(
                pl.BlockSpec((heads, row_block, c_out), lambda i: (0, i, 0)),
                pl.BlockSpec((heads, row_block, 2), lambda i: (0, i, 0)),
            ),
            out_shape=(
                jax.ShapeDtypeStruct((heads, n_pad, c_out), jnp.bfloat16),
                jax.ShapeDtypeStruct((heads, n_pad, 2), jnp.float32),
            ),
            compiler_params=pltpu.CompilerParams(
                dimension_semantics=("parallel",),
                vmem_limit_bytes=_vmem_limit(_proj_vmem(row_block, h_in, c_in, heads, c_out)),
            ),
        )(x_in, w_k, att_k)

    def attn(ad, ast, h_full, b_k, c_out):
        kern = functools.partial(_attn_kernel, heads=heads)
        return pl.pallas_call(
            kern,
            grid=grid,
            in_specs=[
                pl.BlockSpec((heads, row_block, 1), lambda i: (0, i, 0)),
                pl.BlockSpec((row_block, n_pad), lambda i: (i, 0)),
                pl.BlockSpec((heads, 1, n_pad), lambda i: (0, 0, 0)),
                pl.BlockSpec((heads, n_pad, c_out), lambda i: (0, 0, 0)),
                pl.BlockSpec((heads, 1, c_out), lambda i: (0, 0, 0)),
            ],
            out_specs=pl.BlockSpec((heads, row_block, c_out), lambda i: (0, i, 0)),
            out_shape=jax.ShapeDtypeStruct((heads, n_pad, c_out), jnp.bfloat16),
            compiler_params=pltpu.CompilerParams(
                dimension_semantics=("parallel",),
                vmem_limit_bytes=_vmem_limit(_attn_vmem(row_block, n_pad, heads, c_out)),
            ),
            # TODO(synk): for very large N, add a second "arbitrary" src-col
            # grid axis with online softmax instead of keeping the full
            # (H, N, C) h slab resident.
        )(ad, adj_p, ast, h_full, b_k)

    def fc(act):
        kern = functools.partial(_fc_kernel, heads=heads)
        return pl.pallas_call(
            kern,
            grid=grid,
            in_specs=[
                pl.BlockSpec((heads, row_block, c2), lambda i: (0, i, 0)),
                pl.BlockSpec((heads, c2, ncls_pad), lambda i: (0, 0, 0)),
                pl.BlockSpec((1, ncls_pad), lambda i: (0, 0)),
            ],
            out_specs=pl.BlockSpec((row_block, ncls_pad), lambda i: (i, 0)),
            out_shape=jax.ShapeDtypeStruct((n_pad, ncls_pad), jnp.float32),
            compiler_params=pltpu.CompilerParams(
                dimension_semantics=("parallel",),
                vmem_limit_bytes=_vmem_limit(_fc_vmem(row_block, heads, c2, ncls_pad)),
            ),
        )(act, wfc_k, bfc_k)

    # ---- layer 1: conv1 + ELU -------------------------------------------------
    h1, lg1 = proj(x_p, w1_k, att1, 1, f_pad, c1)
    ad1 = lg1[..., 0:1]                                   # (H, N_pad, 1)
    ast1 = jnp.transpose(lg1[..., 1:2], (0, 2, 1))        # (H, 1, N_pad)  tiny glue op
    act1 = attn(ad1, ast1, h1, b1_k, c1)                  # (H, N_pad, c1) bf16

    # ---- layer 2: conv2 + ELU ---------------------------------------------------
    h2, lg2 = proj(act1, w2_k, att2, heads, c1, c2)
    ad2 = lg2[..., 0:1]
    ast2 = jnp.transpose(lg2[..., 1:2], (0, 2, 1))
    act2 = attn(ad2, ast2, h2, b2_k, c2)                  # (H, N_pad, c2) bf16

    # ---- classifier head --------------------------------------------------------
    out_pad = fc(act2)                                    # (N_pad, ncls_pad)
    return out_pad[:n, :num_classes]


def init_params(key, num_node_features, num_classes, heads):
    ks = jax.random.split(key, 10)
    scale = 0.1
    c1, c2 = 128, 64
    return {
        "w1": scale * jax.random.normal(ks[0], (num_node_features, heads * c1), jnp.float32),
        "as1": scale * jax.random.normal(ks[1], (heads, c1), jnp.float32),
        "ad1": scale * jax.random.normal(ks[2], (heads, c1), jnp.float32),
        "b1": scale * jax.random.normal(ks[3], (1, heads * c1), jnp.float32),
        "w2": scale * jax.random.normal(ks[4], (heads * c1, heads * c2), jnp.float32),
        "as2": scale * jax.random.normal(ks[5], (heads, c2), jnp.float32),
        "ad2": scale * jax.random.normal(ks[6], (heads, c2), jnp.float32),
        "b2": scale * jax.random.normal(ks[7], (1, heads * c2), jnp.float32),
        "wfc": scale * jax.random.normal(ks[8], (heads * c2, num_classes), jnp.float32),
        "bfc": scale * jax.random.normal(ks[9], (1, num_classes), jnp.float32),
    }


if __name__ == "__main__":
    key = jax.random.PRNGKey(0)
    k_x, k_src, k_dst, k_params = jax.random.split(key, 4)

    N, F_IN, NUM_CLASSES, HEADS, E = 32, 16, 8, 4, 96

    # node features
    x = jax.random.normal(k_x, (N, F_IN), jnp.float32)

    # synthetic edge_index [2, E]  (row 0 = source, row 1 = target)
    src = jax.random.randint(k_src, (E,), 0, N)
    dst = jax.random.randint(k_dst, (E,), 0, N)

    # dense adjacency: adj[i, j] = 1 iff edge j -> i, plus self loops (PyG default)
    adj = jnp.zeros((N, N), jnp.float32).at[dst, src].set(1.0)
    adj = jnp.maximum(adj, jnp.eye(N, dtype=jnp.float32))

    params = init_params(k_params, F_IN, NUM_CLASSES, HEADS)

    out = gat_model_forward(params, x, adj, heads=HEADS)
    out = jax.block_until_ready(out)

    assert out.shape == (N, NUM_CLASSES), out.shape
    assert bool(jnp.all(jnp.isfinite(out)))
    print("KERNEL_OK")
</pallas_src>

<mosaic_0001>
module attributes {stable_mosaic.version = 11 : i64} {
  func.func @_proj_kernel(%arg0: i32, %arg1: memref<1x128x128xbf16, #tpu.memory_space<vmem>>, %arg2: memref<1x4x128x128xbf16, #tpu.memory_space<vmem>>, %arg3: memref<4x128x2xbf16, #tpu.memory_space<vmem>>, %arg4: memref<4x128x128xbf16, #tpu.memory_space<vmem>>, %arg5: memref<4x128x2xf32, #tpu.memory_space<vmem>>) attributes {dimension_semantics = [#tpu.dimension_semantics<parallel>], iteration_bounds = array<i64: 1>, scalar_prefetch = 0 : i64, scratch_operands = 0 : i64, tpu.core_type = #tpu.core_type<tc>, window_params = [{transform_indices = @transform_0, window_bounds = array<i64: 1, 128, 128>}, {pipeline_mode = #tpu.pipeline_mode<synchronous>, transform_indices = @transform_1, window_bounds = array<i64: 1, 4, 128, 128>}, {pipeline_mode = #tpu.pipeline_mode<synchronous>, transform_indices = @transform_2, window_bounds = array<i64: 4, 128, 2>}, {transform_indices = @transform_3, window_bounds = array<i64: 4, 128, 128>}, {transform_indices = @transform_4, window_bounds = array<i64: 4, 128, 2>}]} {
    %cst = arith.constant 0.000000e+00 : f32
    %0 = vector.broadcast %cst : f32 to vector<128x128xf32>
    %c0 = arith.constant 0 : index
    %c0_0 = arith.constant 0 : index
    %c0_1 = arith.constant 0 : index
    %1 = vector.load %arg1[%c0, %c0_0, %c0_1] : memref<1x128x128xbf16, #tpu.memory_space<vmem>>, vector<1x128x128xbf16>
    %2 = vector.shape_cast %1 : vector<1x128x128xbf16> to vector<128x128xbf16>
    %c0_2 = arith.constant 0 : index
    %c0_3 = arith.constant 0 : index
    %c0_4 = arith.constant 0 : index
    %c0_5 = arith.constant 0 : index
    %3 = vector.load %arg2[%c0_2, %c0_3, %c0_4, %c0_5] : memref<1x4x128x128xbf16, #tpu.memory_space<vmem>>, vector<1x1x128x128xbf16>
    %4 = vector.shape_cast %3 : vector<1x1x128x128xbf16> to vector<128x128xbf16>
    %cst_6 = arith.constant dense<0.000000e+00> : vector<128x128xf32>
    %5 = tpu.matmul %2, %4, %cst_6 {dimension_numbers = #tpu.dot_dimension_numbers<[1], [0], [0], [1], [0, 0, 1, 1], [], []>} : vector<128x128xbf16>, vector<128x128xbf16>, vector<128x128xf32> -> vector<128x128xf32>
    %6 = arith.addf %0, %5 : vector<128x128xf32>
    %7 = arith.truncf %6 : vector<128x128xf32> to vector<128x128xbf16>
    %c0_7 = arith.constant 0 : index
    %c0_8 = arith.constant 0 : index
    %c0_9 = arith.constant 0 : index
    %8 = vector.load %arg4[%c0_7, %c0_8, %c0_9] : memref<4x128x128xbf16, #tpu.memory_space<vmem>>, vector<1x128x128xbf16>
    %9 = vector.shape_cast %8 : vector<1x128x128xbf16> to vector<128x128xbf16>
    %10 = vector.shape_cast %7 : vector<128x128xbf16> to vector<1x128x128xbf16>
    tpu.vector_store %arg4[%c0_7, %c0_8, %c0_9], %10 {strides = array<i32>} : memref<4x128x128xbf16, #tpu.memory_space<vmem>>, vector<1x128x128xbf16>,
    %c0_10 = arith.constant 0 : index
    %c0_11 = arith.constant 0 : index
    %c0_12 = arith.constant 0 : index
    %11 = vector.load %arg3[%c0_10, %c0_11, %c0_12] : memref<4x128x2xbf16, #tpu.memory_space<vmem>>, vector<1x128x2xbf16>
    %12 = vector.shape_cast %11 : vector<1x128x2xbf16> to vector<128x2xbf16>
    %cst_13 = arith.constant dense<0.000000e+00> : vector<128x2xf32>
    %13 = tpu.matmul %7, %12, %cst_13 {dimension_numbers = #tpu.dot_dimension_numbers<[1], [0], [0], [1], [0, 0, 1, 1], [], []>} : vector<128x128xbf16>, vector<128x2xbf16>, vector<128x2xf32> -> vector<128x2xf32>
    %c0_14 = arith.constant 0 : index
    %c0_15 = arith.constant 0 : index
    %c0_16 = arith.constant 0 : index
    %14 = vector.load %arg5[%c0_14, %c0_15, %c0_16] : memref<4x128x2xf32, #tpu.memory_space<vmem>>, vector<1x128x2xf32>
    %15 = vector.shape_cast %14 : vector<1x128x2xf32> to vector<128x2xf32>
    %16 = vector.shape_cast %13 : vector<128x2xf32> to vector<1x128x2xf32>
    tpu.vector_store %arg5[%c0_14, %c0_15, %c0_16], %16 {strides = array<i32>} : memref<4x128x2xf32, #tpu.memory_space<vmem>>, vector<1x128x2xf32>,
    %cst_17 = arith.constant 0.000000e+00 : f32
    %17 = vector.broadcast %cst_17 : f32 to vector<128x128xf32>
    %c0_18 = arith.constant 0 : index
    %c0_19 = arith.constant 0 : index
    %c0_20 = arith.constant 0 : index
    %18 = vector.load %arg1[%c0_18, %c0_19, %c0_20] : memref<1x128x128xbf16, #tpu.memory_space<vmem>>, vector<1x128x128xbf16>
    %19 = vector.shape_cast %18 : vector<1x128x128xbf16> to vector<128x128xbf16>
    %c0_21 = arith.constant 0 : index
    %c1 = arith.constant 1 : index
    %c0_22 = arith.constant 0 : index
    %c0_23 = arith.constant 0 : index
    %20 = vector.load %arg2[%c0_21, %c1, %c0_22, %c0_23] : memref<1x4x128x128xbf16, #tpu.memory_space<vmem>>, vector<1x1x128x128xbf16>
    %21 = vector.shape_cast %20 : vector<1x1x128x128xbf16> to vector<128x128xbf16>
    %cst_24 = arith.constant dense<0.000000e+00> : vector<128x128xf32>
    %22 = tpu.matmul %19, %21, %cst_24 {dimension_numbers = #tpu.dot_dimension_numbers<[1], [0], [0], [1], [0, 0, 1, 1], [], []>} : vector<128x128xbf16>, vector<128x128xbf16>, vector<128x128xf32> -> vector<128x128xf32>
    %23 = arith.addf %17, %22 : vector<128x128xf32>
    %24 = arith.truncf %23 : vector<128x128xf32> to vector<128x128xbf16>
    %c1_25 = arith.constant 1 : index
    %c0_26 = arith.constant 0 : index
    %c0_27 = arith.constant 0 : index
    %25 = vector.load %arg4[%c1_25, %c0_26, %c0_27] : memref<4x128x128xbf16, #tpu.memory_space<vmem>>, vector<1x128x128xbf16>
    %26 = vector.shape_cast %25 : vector<1x128x128xbf16> to vector<128x128xbf16>
    %27 = vector.shape_cast %24 : vector<128x128xbf16> to vector<1x128x128xbf16>
    tpu.vector_store %arg4[%c1_25, %c0_26, %c0_27], %27 {strides = array<i32>} : memref<4x128x128xbf16, #tpu.memory_space<vmem>>, vector<1x128x128xbf16>,
    %c1_28 = arith.constant 1 : index
    %c0_29 = arith.constant 0 : index
    %c0_30 = arith.constant 0 : index
    %28 = vector.load %arg3[%c1_28, %c0_29, %c0_30] : memref<4x128x2xbf16, #tpu.memory_space<vmem>>, vector<1x128x2xbf16>
    %29 = vector.shape_cast %28 : vector<1x128x2xbf16> to vector<128x2xbf16>
    %cst_31 = arith.constant dense<0.000000e+00> : vector<128x2xf32>
    %30 = tpu.matmul %24, %29, %cst_31 {dimension_numbers = #tpu.dot_dimension_numbers<[1], [0], [0], [1], [0, 0, 1, 1], [], []>} : vector<128x128xbf16>, vector<128x2xbf16>, vector<128x2xf32> -> vector<128x2xf32>
    %c1_32 = arith.constant 1 : index
    %c0_33 = arith.constant 0 : index
    %c0_34 = arith.constant 0 : index
    %31 = vector.load %arg5[%c1_32, %c0_33, %c0_34] : memref<4x128x2xf32, #tpu.memory_space<vmem>>, vector<1x128x2xf32>
    %32 = vector.shape_cast %31 : vector<1x128x2xf32> to vector<128x2xf32>
    %33 = vector.shape_cast %30 : vector<128x2xf32> to vector<1x128x2xf32>
    tpu.vector_store %arg5[%c1_32, %c0_33, %c0_34], %33 {strides = array<i32>} : memref<4x128x2xf32, #tpu.memory_space<vmem>>, vector<1x128x2xf32>,
    %cst_35 = arith.constant 0.000000e+00 : f32
    %34 = vector.broadcast %cst_35 : f32 to vector<128x128xf32>
    %c0_36 = arith.constant 0 : index
    %c0_37 = arith.constant 0 : index
    %c0_38 = arith.constant 0 : index
    %35 = vector.load %arg1[%c0_36, %c0_37, %c0_38] : memref<1x128x128xbf16, #tpu.memory_space<vmem>>, vector<1x128x128xbf16>
    %36 = vector.shape_cast %35 : vector<1x128x128xbf16> to vector<128x128xbf16>
    %c0_39 = arith.constant 0 : index
    %c2 = arith.constant 2 : index
    %c0_40 = arith.constant 0 : index
    %c0_41 = arith.constant 0 : index
    %37 = vector.load %arg2[%c0_39, %c2, %c0_40, %c0_41] : memref<1x4x128x128xbf16, #tpu.memory_space<vmem>>, vector<1x1x128x128xbf16>
    %38 = vector.shape_cast %37 : vector<1x1x128x128xbf16> to vector<128x128xbf16>
    %cst_42 = arith.constant dense<0.000000e+00> : vector<128x128xf32>
    %39 = tpu.matmul %36, %38, %cst_42 {dimension_numbers = #tpu.dot_dimension_numbers<[1], [0], [0], [1], [0, 0, 1, 1], [], []>} : vector<128x128xbf16>, vector<128x128xbf16>, vector<128x128xf32> -> vector<128x128xf32>
    %40 = arith.addf %34, %39 : vector<128x128xf32>
    %41 = arith.truncf %40 : vector<128x128xf32> to vector<128x128xbf16>
    %c2_43 = arith.constant 2 : index
    %c0_44 = arith.constant 0 : index
    %c0_45 = arith.constant 0 : index
    %42 = vector.load %arg4[%c2_43, %c0_44, %c0_45] : memref<4x128x128xbf16, #tpu.memory_space<vmem>>, vector<1x128x128xbf16>
    %43 = vector.shape_cast %42 : vector<1x128x128xbf16> to vector<128x128xbf16>
    %44 = vector.shape_cast %41 : vector<128x128xbf16> to vector<1x128x128xbf16>
    tpu.vector_store %arg4[%c2_43, %c0_44, %c0_45], %44 {strides = array<i32>} : memref<4x128x128xbf16, #tpu.memory_space<vmem>>, vector<1x128x128xbf16>,
    %c2_46 = arith.constant 2 : index
    %c0_47 = arith.constant 0 : index
    %c0_48 = arith.constant 0 : index
    %45 = vector.load %arg3[%c2_46, %c0_47, %c0_48] : memref<4x128x2xbf16, #tpu.memory_space<vmem>>, vector<1x128x2xbf16>
    %46 = vector.shape_cast %45 : vector<1x128x2xbf16> to vector<128x2xbf16>
    %cst_49 = arith.constant dense<0.000000e+00> : vector<128x2xf32>
    %47 = tpu.matmul %41, %46, %cst_49 {dimension_numbers = #tpu.dot_dimension_numbers<[1], [0], [0], [1], [0, 0, 1, 1], [], []>} : vector<128x128xbf16>, vector<128x2xbf16>, vector<128x2xf32> -> vector<128x2xf32>
    %c2_50 = arith.constant 2 : index
    %c0_51 = arith.constant 0 : index
    %c0_52 = arith.constant 0 : index
    %48 = vector.load %arg5[%c2_50, %c0_51, %c0_52] : memref<4x128x2xf32, #tpu.memory_space<vmem>>, vector<1x128x2xf32>
    %49 = vector.shape_cast %48 : vector<1x128x2xf32> to vector<128x2xf32>
    %50 = vector.shape_cast %47 : vector<128x2xf32> to vector<1x128x2xf32>
    tpu.vector_store %arg5[%c2_50, %c0_51, %c0_52], %50 {strides = array<i32>} : memref<4x128x2xf32, #tpu.memory_space<vmem>>, vector<1x128x2xf32>,
    %cst_53 = arith.constant 0.000000e+00 : f32
    %51 = vector.broadcast %cst_53 : f32 to vector<128x128xf32>
    %c0_54 = arith.constant 0 : index
    %c0_55 = arith.constant 0 : index
    %c0_56 = arith.constant 0 : index
    %52 = vector.load %arg1[%c0_54, %c0_55, %c0_56] : memref<1x128x128xbf16, #tpu.memory_space<vmem>>, vector<1x128x128xbf16>
    %53 = vector.shape_cast %52 : vector<1x128x128xbf16> to vector<128x128xbf16>
    %c0_57 = arith.constant 0 : index
    %c3 = arith.constant 3 : index
    %c0_58 = arith.constant 0 : index
    %c0_59 = arith.constant 0 : index
    %54 = vector.load %arg2[%c0_57, %c3, %c0_58, %c0_59] : memref<1x4x128x128xbf16, #tpu.memory_space<vmem>>, vector<1x1x128x128xbf16>
    %55 = vector.shape_cast %54 : vector<1x1x128x128xbf16> to vector<128x128xbf16>
    %cst_60 = arith.constant dense<0.000000e+00> : vector<128x128xf32>
    %56 = tpu.matmul %53, %55, %cst_60 {dimension_numbers = #tpu.dot_dimension_numbers<[1], [0], [0], [1], [0, 0, 1, 1], [], []>} : vector<128x128xbf16>, vector<128x128xbf16>, vector<128x128xf32> -> vector<128x128xf32>
    %57 = arith.addf %51, %56 : vector<128x128xf32>
    %58 = arith.truncf %57 : vector<128x128xf32> to vector<128x128xbf16>
    %c3_61 = arith.constant 3 : index
    %c0_62 = arith.constant 0 : index
    %c0_63 = arith.constant 0 : index
    %59 = vector.load %arg4[%c3_61, %c0_62, %c0_63] : memref<4x128x128xbf16, #tpu.memory_space<vmem>>, vector<1x128x128xbf16>
    %60 = vector.shape_cast %59 : vector<1x128x128xbf16> to vector<128x128xbf16>
    %61 = vector.shape_cast %58 : vector<128x128xbf16> to vector<1x128x128xbf16>
    tpu.vector_store %arg4[%c3_61, %c0_62, %c0_63], %61 {strides = array<i32>} : memref<4x128x128xbf16, #tpu.memory_space<vmem>>, vector<1x128x128xbf16>,
    %c3_64 = arith.constant 3 : index
    %c0_65 = arith.constant 0 : index
    %c0_66 = arith.constant 0 : index
    %62 = vector.load %arg3[%c3_64, %c0_65, %c0_66] : memref<4x128x2xbf16, #tpu.memory_space<vmem>>, vector<1x128x2xbf16>
    %63 = vector.shape_cast %62 : vector<1x128x2xbf16> to vector<128x2xbf16>
    %cst_67 = arith.constant dense<0.000000e+00> : vector<128x2xf32>
    %64 = tpu.matmul %58, %63, %cst_67 {dimension_numbers = #tpu.dot_dimension_numbers<[1], [0], [0], [1], [0, 0, 1, 1], [], []>} : vector<128x128xbf16>, vector<128x2xbf16>, vector<128x2xf32> -> vector<128x2xf32>
    %c3_68 = arith.constant 3 : index
    %c0_69 = arith.constant 0 : index
    %c0_70 = arith.constant 0 : index
    %65 = vector.load %arg5[%c3_68, %c0_69, %c0_70] : memref<4x128x2xf32, #tpu.memory_space<vmem>>, vector<1x128x2xf32>
    %66 = vector.shape_cast %65 : vector<1x128x2xf32> to vector<128x2xf32>
    %67 = vector.shape_cast %64 : vector<128x2xf32> to vector<1x128x2xf32>
    tpu.vector_store %arg5[%c3_68, %c0_69, %c0_70], %67 {strides = array<i32>} : memref<4x128x2xf32, #tpu.memory_space<vmem>>, vector<1x128x2xf32>,
    return
  }
  func.func @transform_0(%arg0: i32) -> (i32, i32, i32) {
    %c0_i32 = arith.constant 0 : i32
    %c0_i32_0 = arith.constant 0 : i32
    %c0_i32_1 = arith.constant 0 : i32
    return %c0_i32, %arg0, %c0_i32_0 : i32, i32, i32
  }
  func.func @transform_1(%arg0: i32) -> (i32, i32, i32, i32) {
    %c0_i32 = arith.constant 0 : i32
    %c0_i32_0 = arith.constant 0 : i32
    %c0_i32_1 = arith.constant 0 : i32
    %c0_i32_2 = arith.constant 0 : i32
    %c0_i32_3 = arith.constant 0 : i32
    return %c0_i32, %c0_i32_0, %c0_i32_1, %c0_i32_2 : i32, i32, i32, i32
  }
  func.func @transform_2(%arg0: i32) -> (i32, i32, i32) {
    %c0_i32 = arith.constant 0 : i32
    %c0_i32_0 = arith.constant 0 : i32
    %c0_i32_1 = arith.constant 0 : i32
    %c0_i32_2 = arith.constant 0 : i32
    return %c0_i32, %c0_i32_0, %c0_i32_1 : i32, i32, i32
  }
  func.func @transform_3(%arg0: i32) -> (i32, i32, i32) {
    %c0_i32 = arith.constant 0 : i32
    %c0_i32_0 = arith.constant 0 : i32
    %c0_i32_1 = arith.constant 0 : i32
    return %c0_i32, %arg0, %c0_i32_0 : i32, i32, i32
  }
  func.func @transform_4(%arg0: i32) -> (i32, i32, i32) {
    %c0_i32 = arith.constant 0 : i32
    %c0_i32_0 = arith.constant 0 : i32
    %c0_i32_1 = arith.constant 0 : i32
    return %c0_i32, %arg0, %c0_i32_0 : i32, i32, i32
  }
}

module attributes {stable_mosaic.version = 11 : i64} {
  func.func @_attn_kernel(%arg0: i32, %arg1: memref<4x128x1xf32, #tpu.memory_space<vmem>>, %arg2: memref<128x128xi8, #tpu.memory_space<vmem>>, %arg3: memref<4x1x128xf32, #tpu.memory_space<vmem>>, %arg4: memref<4x128x128xbf16, #tpu.memory_space<vmem>>, %arg5: memref<4x1x128xf32, #tpu.memory_space<vmem>>, %arg6: memref<4x128x128xbf16, #tpu.memory_space<vmem>>) attributes {dimension_semantics = [#tpu.dimension_semantics<parallel>], iteration_bounds = array<i64: 1>, scalar_prefetch = 0 : i64, scratch_operands = 0 : i64, tpu.core_type = #tpu.core_type<tc>, window_params = [{transform_indices = @transform_0, window_bounds = array<i64: 4, 128, 1>}, {transform_indices = @transform_1, window_bounds = array<i64: 128, 128>}, {pipeline_mode = #tpu.pipeline_mode<synchronous>, transform_indices = @transform_2, window_bounds = array<i64: 4, 1, 128>}, {pipeline_mode = #tpu.pipeline_mode<synchronous>, transform_indices = @transform_3, window_bounds = array<i64: 4, 128, 128>}, {pipeline_mode = #tpu.pipeline_mode<synchronous>, transform_indices = @transform_4, window_bounds = array<i64: 4, 1, 128>}, {transform_indices = @transform_5, window_bounds = array<i64: 4, 128, 128>}]} {
    %c0 = arith.constant 0 : index
    %c0_0 = arith.constant 0 : index
    %0 = vector.load %arg2[%c0, %c0_0] : memref<128x128xi8, #tpu.memory_space<vmem>>, vector<128x128xi8>
    %1 = arith.sitofp %0 : vector<128x128xi8> to vector<128x128xf32>
    %cst = arith.constant 0.000000e+00 : f32
    %2 = vector.broadcast %cst : f32 to vector<128x128xf32>
    %3 = arith.cmpf ogt, %1, %2 : vector<128x128xf32>
    %cst_1 = arith.constant 0.000000e+00 : f32
    %cst_2 = arith.constant -1.000000e+30 : f32
    %4 = vector.broadcast %cst_1 : f32 to vector<128x128xf32>
    %5 = vector.broadcast %cst_2 : f32 to vector<128x128xf32>
    %6 = arith.select %3, %4, %5 : vector<128x128xi1>, vector<128x128xf32>
    %c0_i32 = arith.constant 0 : i32
    %c4_i32 = arith.constant 4 : i32
    %7 = arith.addi %c0_i32, %c4_i32 : i32
    %c1_i32 = arith.constant 1 : i32
    scf.for %arg7 = %c0_i32 to %7 step %c1_i32  : i32 {
      %8 = arith.index_cast %arg7 : i32 to index
      %c0_4 = arith.constant 0 : index
      %c0_5 = arith.constant 0 : index
      %9 = vector.load %arg1[%8, %c0_4, %c0_5] : memref<4x128x1xf32, #tpu.memory_space<vmem>>, vector<1x128x1xf32>
      %10 = vector.shape_cast %9 : vector<1x128x1xf32> to vector<128x1xf32>
      %11 = arith.index_cast %arg7 : i32 to index
      %c0_6 = arith.constant 0 : index
      %c0_7 = arith.constant 0 : index
      %12 = vector.load %arg3[%11, %c0_6, %c0_7] : memref<4x1x128xf32, #tpu.memory_space<vmem>>, vector<1x1x128xf32>
      %13 = vector.shape_cast %12 : vector<1x1x128xf32> to vector<1x128xf32>
      %14 = vector.broadcast %10 : vector<128x1xf32> to vector<128x128xf32>
      %15 = vector.broadcast %13 : vector<1x128xf32> to vector<128x128xf32>
      %16 = arith.addf %14, %15 : vector<128x128xf32>
      %cst_8 = arith.constant 2.000000e-01 : f32
      %17 = vector.broadcast %cst_8 : f32 to vector<128x128xf32>
      %18 = arith.mulf %17, %16 : vector<128x128xf32>
      %19 = arith.maximumf %16, %18 : vector<128x128xf32>
      %20 = arith.addf %19, %6 : vector<128x128xf32>
      %cst_9 = arith.constant dense<0xFF800000> : vector<128xf32>
      %21 = vector.multi_reduction <maximumf>, %20, %cst_9 [1] : vector<128x128xf32> to vector<128xf32>
      %22 = vector.shape_cast %21 : vector<128xf32> to vector<128x1xf32>
      %23 = vector.broadcast %22 : vector<128x1xf32> to vector<128x128xf32>
      %24 = arith.subf %20, %23 : vector<128x128xf32>
      %25 = math.exp %24 : vector<128x128xf32>
      %cst_10 = arith.constant dense<0.000000e+00> : vector<128xf32>
      %26 = vector.multi_reduction <add>, %25, %cst_10 [1] : vector<128x128xf32> to vector<128xf32>
      %27 = vector.shape_cast %26 : vector<128xf32> to vector<128x1xf32>
      %28 = arith.truncf %25 : vector<128x128xf32> to vector<128x128xbf16>
      %29 = arith.index_cast %arg7 : i32 to index
      %c0_11 = arith.constant 0 : index
      %c0_12 = arith.constant 0 : index
      %30 = vector.load %arg4[%29, %c0_11, %c0_12] : memref<4x128x128xbf16, #tpu.memory_space<vmem>>, vector<1x128x128xbf16>
      %31 = vector.shape_cast %30 : vector<1x128x128xbf16> to vector<128x128xbf16>
      %cst_13 = arith.constant dense<0.000000e+00> : vector<128x128xf32>
      %32 = tpu.matmul %28, %31, %cst_13 {dimension_numbers = #tpu.dot_dimension_numbers<[1], [0], [0], [1], [0, 0, 1, 1], [], []>} : vector<128x128xbf16>, vector<128x128xbf16>, vector<128x128xf32> -> vector<128x128xf32>
      %33 = tpu.reciprocal %27 {approx = true} : vector<128x1xf32> -> vector<128x1xf32>
      %34 = vector.broadcast %33 : vector<128x1xf32> to vector<128x128xf32>
      %35 = arith.mulf %32, %34 : vector<128x128xf32>
      %36 = arith.index_cast %arg7 : i32 to index
      %c0_14 = arith.constant 0 : index
      %c0_15 = arith.constant 0 : index
      %37 = vector.load %arg5[%36, %c0_14, %c0_15] : memref<4x1x128xf32, #tpu.memory_space<vmem>>, vector<1x1x128xf32>
      %38 = vector.shape_cast %37 : vector<1x1x128xf32> to vector<1x128xf32>
      %39 = vector.broadcast %38 : vector<1x128xf32> to vector<128x128xf32>
      %40 = arith.addf %35, %39 : vector<128x128xf32>
      %cst_16 = arith.constant 0.000000e+00 : f32
      %41 = vector.broadcast %cst_16 : f32 to vector<128x128xf32>
      %42 = arith.cmpf ogt, %40, %41 : vector<128x128xf32>
      %43 = math.exp %40 : vector<128x128xf32>
      %cst_17 = arith.constant 1.000000e+00 : f32
      %44 = vector.broadcast %cst_17 : f32 to vector<128x128xf32>
      %45 = arith.subf %43, %44 : vector<128x128xf32>
      %46 = arith.select %42, %40, %45 : vector<128x128xi1>, vector<128x128xf32>
      %47 = arith.truncf %46 : vector<128x128xf32> to vector<128x128xbf16>
      %48 = arith.index_cast %arg7 : i32 to index
      %c0_18 = arith.constant 0 : index
      %c0_19 = arith.constant 0 : index
      %49 = vector.load %arg6[%48, %c0_18, %c0_19] : memref<4x128x128xbf16, #tpu.memory_space<vmem>>, vector<1x128x128xbf16>
      %50 = vector.shape_cast %49 : vector<1x128x128xbf16> to vector<128x128xbf16>
      %51 = vector.shape_cast %47 : vector<128x128xbf16> to vector<1x128x128xbf16>
      tpu.vector_store %arg6[%48, %c0_18, %c0_19], %51 {strides = array<i32>} : memref<4x128x128xbf16, #tpu.memory_space<vmem>>, vector<1x128x128xbf16>,
    }
    %c4_i32_3 = arith.constant 4 : i32
    return
  }
  func.func @transform_0(%arg0: i32) -> (i32, i32, i32) {
    %c0_i32 = arith.constant 0 : i32
    %c0_i32_0 = arith.constant 0 : i32
    %c0_i32_1 = arith.constant 0 : i32
    return %c0_i32, %arg0, %c0_i32_0 : i32, i32, i32
  }
  func.func @transform_1(%arg0: i32) -> (i32, i32) {
    %c0_i32 = arith.constant 0 : i32
    %c0_i32_0 = arith.constant 0 : i32
    return %arg0, %c0_i32 : i32, i32
  }
  func.func @transform_2(%arg0: i32) -> (i32, i32, i32) {
    %c0_i32 = arith.constant 0 : i32
    %c0_i32_0 = arith.constant 0 : i32
    %c0_i32_1 = arith.constant 0 : i32
    %c0_i32_2 = arith.constant 0 : i32
    return %c0_i32, %c0_i32_0, %c0_i32_1 : i32, i32, i32
  }
  func.func @transform_3(%arg0: i32) -> (i32, i32, i32) {
    %c0_i32 = arith.constant 0 : i32
    %c0_i32_0 = arith.constant 0 : i32
    %c0_i32_1 = arith.constant 0 : i32
    %c0_i32_2 = arith.constant 0 : i32
    return %c0_i32, %c0_i32_0, %c0_i32_1 : i32, i32, i32
  }
  func.func @transform_4(%arg0: i32) -> (i32, i32, i32) {
    %c0_i32 = arith.constant 0 : i32
    %c0_i32_0 = arith.constant 0 : i32
    %c0_i32_1 = arith.constant 0 : i32
    %c0_i32_2 = arith.constant 0 : i32
    return %c0_i32, %c0_i32_0, %c0_i32_1 : i32, i32, i32
  }
  func.func @transform_5(%arg0: i32) -> (i32, i32, i32) {
    %c0_i32 = arith.constant 0 : i32
    %c0_i32_0 = arith.constant 0 : i32
    %c0_i32_1 = arith.constant 0 : i32
    return %c0_i32, %arg0, %c0_i32_0 : i32, i32, i32
  }
}

module attributes {stable_mosaic.version = 11 : i64} {
  func.func @_proj_kernel(%arg0: i32, %arg1: memref<4x128x128xbf16, #tpu.memory_space<vmem>>, %arg2: memref<4x4x128x64xbf16, #tpu.memory_space<vmem>>, %arg3: memref<4x64x2xbf16, #tpu.memory_space<vmem>>, %arg4: memref<4x128x64xbf16, #tpu.memory_space<vmem>>, %arg5: memref<4x128x2xf32, #tpu.memory_space<vmem>>) attributes {dimension_semantics = [#tpu.dimension_semantics<parallel>], iteration_bounds = array<i64: 1>, scalar_prefetch = 0 : i64, scratch_operands = 0 : i64, tpu.core_type = #tpu.core_type<tc>, window_params = [{transform_indices = @transform_0, window_bounds = array<i64: 4, 128, 128>}, {pipeline_mode = #tpu.pipeline_mode<synchronous>, transform_indices = @transform_1, window_bounds = array<i64: 4, 4, 128, 64>}, {pipeline_mode = #tpu.pipeline_mode<synchronous>, transform_indices = @transform_2, window_bounds = array<i64: 4, 64, 2>}, {transform_indices = @transform_3, window_bounds = array<i64: 4, 128, 64>}, {transform_indices = @transform_4, window_bounds = array<i64: 4, 128, 2>}]} {
    %cst = arith.constant 0.000000e+00 : f32
    %0 = vector.broadcast %cst : f32 to vector<128x64xf32>
    %c0 = arith.constant 0 : index
    %c0_0 = arith.constant 0 : index
    %c0_1 = arith.constant 0 : index
    %1 = vector.load %arg1[%c0, %c0_0, %c0_1] : memref<4x128x128xbf16, #tpu.memory_space<vmem>>, vector<1x128x128xbf16>
    %2 = vector.shape_cast %1 : vector<1x128x128xbf16> to vector<128x128xbf16>
    %c0_2 = arith.constant 0 : index
    %c0_3 = arith.constant 0 : index
    %c0_4 = arith.constant 0 : index
    %c0_5 = arith.constant 0 : index
    %3 = vector.load %arg2[%c0_2, %c0_3, %c0_4, %c0_5] : memref<4x4x128x64xbf16, #tpu.memory_space<vmem>>, vector<1x1x128x64xbf16>
    %4 = vector.shape_cast %3 : vector<1x1x128x64xbf16> to vector<128x64xbf16>
    %cst_6 = arith.constant dense<0.000000e+00> : vector<128x64xf32>
    %5 = tpu.matmul %2, %4, %cst_6 {dimension_numbers = #tpu.dot_dimension_numbers<[1], [0], [0], [1], [0, 0, 1, 1], [], []>} : vector<128x128xbf16>, vector<128x64xbf16>, vector<128x64xf32> -> vector<128x64xf32>
    %6 = arith.addf %0, %5 : vector<128x64xf32>
    %c1 = arith.constant 1 : index
    %c0_7 = arith.constant 0 : index
    %c0_8 = arith.constant 0 : index
    %7 = vector.load %arg1[%c1, %c0_7, %c0_8] : memref<4x128x128xbf16, #tpu.memory_space<vmem>>, vector<1x128x128xbf16>
    %8 = vector.shape_cast %7 : vector<1x128x128xbf16> to vector<128x128xbf16>
    %c1_9 = arith.constant 1 : index
    %c0_10 = arith.constant 0 : index
    %c0_11 = arith.constant 0 : index
    %c0_12 = arith.constant 0 : index
    %9 = vector.load %arg2[%c1_9, %c0_10, %c0_11, %c0_12] : memref<4x4x128x64xbf16, #tpu.memory_space<vmem>>, vector<1x1x128x64xbf16>
    %10 = vector.shape_cast %9 : vector<1x1x128x64xbf16> to vector<128x64xbf16>
    %cst_13 = arith.constant dense<0.000000e+00> : vector<128x64xf32>
    %11 = tpu.matmul %8, %10, %cst_13 {dimension_numbers = #tpu.dot_dimension_numbers<[1], [0], [0], [1], [0, 0, 1, 1], [], []>} : vector<128x128xbf16>, vector<128x64xbf16>, vector<128x64xf32> -> vector<128x64xf32>
    %12 = arith.addf %6, %11 : vector<128x64xf32>
    %c2 = arith.constant 2 : index
    %c0_14 = arith.constant 0 : index
    %c0_15 = arith.constant 0 : index
    %13 = vector.load %arg1[%c2, %c0_14, %c0_15] : memref<4x128x128xbf16, #tpu.memory_space<vmem>>, vector<1x128x128xbf16>
    %14 = vector.shape_cast %13 : vector<1x128x128xbf16> to vector<128x128xbf16>
    %c2_16 = arith.constant 2 : index
    %c0_17 = arith.constant 0 : index
    %c0_18 = arith.constant 0 : index
    %c0_19 = arith.constant 0 : index
    %15 = vector.load %arg2[%c2_16, %c0_17, %c0_18, %c0_19] : memref<4x4x128x64xbf16, #tpu.memory_space<vmem>>, vector<1x1x128x64xbf16>
    %16 = vector.shape_cast %15 : vector<1x1x128x64xbf16> to vector<128x64xbf16>
    %cst_20 = arith.constant dense<0.000000e+00> : vector<128x64xf32>
    %17 = tpu.matmul %14, %16, %cst_20 {dimension_numbers = #tpu.dot_dimension_numbers<[1], [0], [0], [1], [0, 0, 1, 1], [], []>} : vector<128x128xbf16>, vector<128x64xbf16>, vector<128x64xf32> -> vector<128x64xf32>
    %18 = arith.addf %12, %17 : vector<128x64xf32>
    %c3 = arith.constant 3 : index
    %c0_21 = arith.constant 0 : index
    %c0_22 = arith.constant 0 : index
    %19 = vector.load %arg1[%c3, %c0_21, %c0_22] : memref<4x128x128xbf16, #tpu.memory_space<vmem>>, vector<1x128x128xbf16>
    %20 = vector.shape_cast %19 : vector<1x128x128xbf16> to vector<128x128xbf16>
    %c3_23 = arith.constant 3 : index
    %c0_24 = arith.constant 0 : index
    %c0_25 = arith.constant 0 : index
    %c0_26 = arith.constant 0 : index
    %21 = vector.load %arg2[%c3_23, %c0_24, %c0_25, %c0_26] : memref<4x4x128x64xbf16, #tpu.memory_space<vmem>>, vector<1x1x128x64xbf16>
    %22 = vector.shape_cast %21 : vector<1x1x128x64xbf16> to vector<128x64xbf16>
    %cst_27 = arith.constant dense<0.000000e+00> : vector<128x64xf32>
    %23 = tpu.matmul %20, %22, %cst_27 {dimension_numbers = #tpu.dot_dimension_numbers<[1], [0], [0], [1], [0, 0, 1, 1], [], []>} : vector<128x128xbf16>, vector<128x64xbf16>, vector<128x64xf32> -> vector<128x64xf32>
    %24 = arith.addf %18, %23 : vector<128x64xf32>
    %25 = arith.truncf %24 : vector<128x64xf32> to vector<128x64xbf16>
    %c0_28 = arith.constant 0 : index
    %c0_29 = arith.constant 0 : index
    %c0_30 = arith.constant 0 : index
    %26 = vector.load %arg4[%c0_28, %c0_29, %c0_30] : memref<4x128x64xbf16, #tpu.memory_space<vmem>>, vector<1x128x64xbf16>
    %27 = vector.shape_cast %26 : vector<1x128x64xbf16> to vector<128x64xbf16>
    %28 = vector.shape_cast %25 : vector<128x64xbf16> to vector<1x128x64xbf16>
    tpu.vector_store %arg4[%c0_28, %c0_29, %c0_30], %28 {strides = array<i32>} : memref<4x128x64xbf16, #tpu.memory_space<vmem>>, vector<1x128x64xbf16>,
    %c0_31 = arith.constant 0 : index
    %c0_32 = arith.constant 0 : index
    %c0_33 = arith.constant 0 : index
    %29 = vector.load %arg3[%c0_31, %c0_32, %c0_33] : memref<4x64x2xbf16, #tpu.memory_space<vmem>>, vector<1x64x2xbf16>
    %30 = vector.shape_cast %29 : vector<1x64x2xbf16> to vector<64x2xbf16>
    %cst_34 = arith.constant dense<0.000000e+00> : vector<128x2xf32>
    %31 = tpu.matmul %25, %30, %cst_34 {dimension_numbers = #tpu.dot_dimension_numbers<[1], [0], [0], [1], [0, 0, 1, 1], [], []>} : vector<128x64xbf16>, vector<64x2xbf16>, vector<128x2xf32> -> vector<128x2xf32>
    %c0_35 = arith.constant 0 : index
    %c0_36 = arith.constant 0 : index
    %c0_37 = arith.constant 0 : index
    %32 = vector.load %arg5[%c0_35, %c0_36, %c0_37] : memref<4x128x2xf32, #tpu.memory_space<vmem>>, vector<1x128x2xf32>
    %33 = vector.shape_cast %32 : vector<1x128x2xf32> to vector<128x2xf32>
    %34 = vector.shape_cast %31 : vector<128x2xf32> to vector<1x128x2xf32>
    tpu.vector_store %arg5[%c0_35, %c0_36, %c0_37], %34 {strides = array<i32>} : memref<4x128x2xf32, #tpu.memory_space<vmem>>, vector<1x128x2xf32>,
    %cst_38 = arith.constant 0.000000e+00 : f32
    %35 = vector.broadcast %cst_38 : f32 to vector<128x64xf32>
    %c0_39 = arith.constant 0 : index
    %c0_40 = arith.constant 0 : index
    %c0_41 = arith.constant 0 : index
    %36 = vector.load %arg1[%c0_39, %c0_40, %c0_41] : memref<4x128x128xbf16, #tpu.memory_space<vmem>>, vector<1x128x128xbf16>
    %37 = vector.shape_cast %36 : vector<1x128x128xbf16> to vector<128x128xbf16>
    %c0_42 = arith.constant 0 : index
    %c1_43 = arith.constant 1 : index
    %c0_44 = arith.constant 0 : index
    %c0_45 = arith.constant 0 : index
    %38 = vector.load %arg2[%c0_42, %c1_43, %c0_44, %c0_45] : memref<4x4x128x64xbf16, #tpu.memory_space<vmem>>, vector<1x1x128x64xbf16>
    %39 = vector.shape_cast %38 : vector<1x1x128x64xbf16> to vector<128x64xbf16>
    %cst_46 = arith.constant dense<0.000000e+00> : vector<128x64xf32>
    %40 = tpu.matmul %37, %39, %cst_46 {dimension_numbers = #tpu.dot_dimension_numbers<[1], [0], [0], [1], [0, 0, 1, 1], [], []>} : vector<128x128xbf16>, vector<128x64xbf16>, vector<128x64xf32> -> vector<128x64xf32>
    %41 = arith.addf %35, %40 : vector<128x64xf32>
    %c1_47 = arith.constant 1 : index
    %c0_48 = arith.constant 0 : index
    %c0_49 = arith.constant 0 : index
    %42 = vector.load %arg1[%c1_47, %c0_48, %c0_49] : memref<4x128x128xbf16, #tpu.memory_space<vmem>>, vector<1x128x128xbf16>
    %43 = vector.shape_cast %42 : vector<1x128x128xbf16> to vector<128x128xbf16>
    %c1_50 = arith.constant 1 : index
    %c1_51 = arith.constant 1 : index
    %c0_52 = arith.constant 0 : index
    %c0_53 = arith.constant 0 : index
    %44 = vector.load %arg2[%c1_50, %c1_51, %c0_52, %c0_53] : memref<4x4x128x64xbf16, #tpu.memory_space<vmem>>, vector<1x1x128x64xbf16>
    %45 = vector.shape_cast %44 : vector<1x1x128x64xbf16> to vector<128x64xbf16>
    %cst_54 = arith.constant dense<0.000000e+00> : vector<128x64xf32>
    %46 = tpu.matmul %43, %45, %cst_54 {dimension_numbers = #tpu.dot_dimension_numbers<[1], [0], [0], [1], [0, 0, 1, 1], [], []>} : vector<128x128xbf16>, vector<128x64xbf16>, vector<128x64xf32> -> vector<128x64xf32>
    %47 = arith.addf %41, %46 : vector<128x64xf32>
    %c2_55 = arith.constant 2 : index
    %c0_56 = arith.constant 0 : index
    %c0_57 = arith.constant 0 : index
    %48 = vector.load %arg1[%c2_55, %c0_56, %c0_57] : memref<4x128x128xbf16, #tpu.memory_space<vmem>>, vector<1x128x128xbf16>
    %49 = vector.shape_cast %48 : vector<1x128x128xbf16> to vector<128x128xbf16>
    %c2_58 = arith.constant 2 : index
    %c1_59 = arith.constant 1 : index
    %c0_60 = arith.constant 0 : index
    %c0_61 = arith.constant 0 : index
    %50 = vector.load %arg2[%c2_58, %c1_59, %c0_60, %c0_61] : memref<4x4x128x64xbf16, #tpu.memory_space<vmem>>, vector<1x1x128x64xbf16>
    %51 = vector.shape_cast %50 : vector<1x1x128x64xbf16> to vector<128x64xbf16>
    %cst_62 = arith.constant dense<0.000000e+00> : vector<128x64xf32>
    %52 = tpu.matmul %49, %51, %cst_62 {dimension_numbers = #tpu.dot_dimension_numbers<[1], [0], [0], [1], [0, 0, 1, 1], [], []>} : vector<128x128xbf16>, vector<128x64xbf16>, vector<128x64xf32> -> vector<128x64xf32>
    %53 = arith.addf %47, %52 : vector<128x64xf32>
    %c3_63 = arith.constant 3 : index
    %c0_64 = arith.constant 0 : index
    %c0_65 = arith.constant 0 : index
    %54 = vector.load %arg1[%c3_63, %c0_64, %c0_65] : memref<4x128x128xbf16, #tpu.memory_space<vmem>>, vector<1x128x128xbf16>
    %55 = vector.shape_cast %54 : vector<1x128x128xbf16> to vector<128x128xbf16>
    %c3_66 = arith.constant 3 : index
    %c1_67 = arith.constant 1 : index
    %c0_68 = arith.constant 0 : index
    %c0_69 = arith.constant 0 : index
    %56 = vector.load %arg2[%c3_66, %c1_67, %c0_68, %c0_69] : memref<4x4x128x64xbf16, #tpu.memory_space<vmem>>, vector<1x1x128x64xbf16>
    %57 = vector.shape_cast %56 : vector<1x1x128x64xbf16> to vector<128x64xbf16>
    %cst_70 = arith.constant dense<0.000000e+00> : vector<128x64xf32>
    %58 = tpu.matmul %55, %57, %cst_70 {dimension_numbers = #tpu.dot_dimension_numbers<[1], [0], [0], [1], [0, 0, 1, 1], [], []>} : vector<128x128xbf16>, vector<128x64xbf16>, vector<128x64xf32> -> vector<128x64xf32>
    %59 = arith.addf %53, %58 : vector<128x64xf32>
    %60 = arith.truncf %59 : vector<128x64xf32> to vector<128x64xbf16>
    %c1_71 = arith.constant 1 : index
    %c0_72 = arith.constant 0 : index
    %c0_73 = arith.constant 0 : index
    %61 = vector.load %arg4[%c1_71, %c0_72, %c0_73] : memref<4x128x64xbf16, #tpu.memory_space<vmem>>, vector<1x128x64xbf16>
    %62 = vector.shape_cast %61 : vector<1x128x64xbf16> to vector<128x64xbf16>
    %63 = vector.shape_cast %60 : vector<128x64xbf16> to vector<1x128x64xbf16>
    tpu.vector_store %arg4[%c1_71, %c0_72, %c0_73], %63 {strides = array<i32>} : memref<4x128x64xbf16, #tpu.memory_space<vmem>>, vector<1x128x64xbf16>,
    %c1_74 = arith.constant 1 : index
    %c0_75 = arith.constant 0 : index
    %c0_76 = arith.constant 0 : index
    %64 = vector.load %arg3[%c1_74, %c0_75, %c0_76] : memref<4x64x2xbf16, #tpu.memory_space<vmem>>, vector<1x64x2xbf16>
    %65 = vector.shape_cast %64 : vector<1x64x2xbf16> to vector<64x2xbf16>
    %cst_77 = arith.constant dense<0.000000e+00> : vector<128x2xf32>
    %66 = tpu.matmul %60, %65, %cst_77 {dimension_numbers = #tpu.dot_dimension_numbers<[1], [0], [0], [1], [0, 0, 1, 1], [], []>} : vector<128x64xbf16>, vector<64x2xbf16>, vector<128x2xf32> -> vector<128x2xf32>
    %c1_78 = arith.constant 1 : index
    %c0_79 = arith.constant 0 : index
    %c0_80 = arith.constant 0 : index
    %67 = vector.load %arg5[%c1_78, %c0_79, %c0_80] : memref<4x128x2xf32, #tpu.memory_space<vmem>>, vector<1x128x2xf32>
    %68 = vector.shape_cast %67 : vector<1x128x2xf32> to vector<128x2xf32>
    %69 = vector.shape_cast %66 : vector<128x2xf32> to vector<1x128x2xf32>
    tpu.vector_store %arg5[%c1_78, %c0_79, %c0_80], %69 {strides = array<i32>} : memref<4x128x2xf32, #tpu.memory_space<vmem>>, vector<1x128x2xf32>,
    %cst_81 = arith.constant 0.000000e+00 : f32
    %70 = vector.broadcast %cst_81 : f32 to vector<128x64xf32>
    %c0_82 = arith.constant 0 : index
    %c0_83 = arith.constant 0 : index
    %c0_84 = arith.constant 0 : index
    %71 = vector.load %arg1[%c0_82, %c0_83, %c0_84] : memref<4x128x128xbf16, #tpu.memory_space<vmem>>, vector<1x128x128xbf16>
    %72 = vector.shape_cast %71 : vector<1x128x128xbf16> to vector<128x128xbf16>
    %c0_85 = arith.constant 0 : index
    %c2_86 = arith.constant 2 : index
    %c0_87 = arith.constant 0 : index
    %c0_88 = arith.constant 0 : index
    %73 = vector.load %arg2[%c0_85, %c2_86, %c0_87, %c0_88] : memref<4x4x128x64xbf16, #tpu.memory_space<vmem>>, vector<1x1x128x64xbf16>
    %74 = vector.shape_cast %73 : vector<1x1x128x64xbf16> to vector<128x64xbf16>
    %cst_89 = arith.constant dense<0.000000e+00> : vector<128x64xf32>
    %75 = tpu.matmul %72, %74, %cst_89 {dimension_numbers = #tpu.dot_dimension_numbers<[1], [0], [0], [1], [0, 0, 1, 1], [], []>} : vector<128x128xbf16>, vector<128x64xbf16>, vector<128x64xf32> -> vector<128x64xf32>
    %76 = arith.addf %70, %75 : vector<128x64xf32>
    %c1_90 = arith.constant 1 : index
    %c0_91 = arith.constant 0 : index
    %c0_92 = arith.constant 0 : index
    %77 = vector.load %arg1[%c1_90, %c0_91, %c0_92] : memref<4x128x128xbf16, #tpu.memory_space<vmem>>, vector<1x128x128xbf16>
    %78 = vector.shape_cast %77 : vector<1x128x128xbf16> to vector<128x128xbf16>
    %c1_93 = arith.constant 1 : index
    %c2_94 = arith.constant 2 : index
    %c0_95 = arith.constant 0 : index
    %c0_96 = arith.constant 0 : index
    %79 = vector.load %arg2[%c1_93, %c2_94, %c0_95, %c0_96] : memref<4x4x128x64xbf16, #tpu.memory_space<vmem>>, vector<1x1x128x64xbf16>
    %80 = vector.shape_cast %79 : vector<1x1x128x64xbf16> to vector<128x64xbf16>
    %cst_97 = arith.constant dense<0.000000e+00> : vector<128x64xf32>
    %81 = tpu.matmul %78, %80, %cst_97 {dimension_numbers = #tpu.dot_dimension_numbers<[1], [0], [0], [1], [0, 0, 1, 1], [], []>} : vector<128x128xbf16>, vector<128x64xbf16>, vector<128x64xf32> -> vector<128x64xf32>
    %82 = arith.addf %76, %81 : vector<128x64xf32>
    %c2_98 = arith.constant 2 : index
    %c0_99 = arith.constant 0 : index
    %c0_100 = arith.constant 0 : index
    %83 = vector.load %arg1[%c2_98, %c0_99, %c0_100] : memref<4x128x128xbf16, #tpu.memory_space<vmem>>, vector<1x128x128xbf16>
    %84 = vector.shape_cast %83 : vector<1x128x128xbf16> to vector<128x128xbf16>
    %c2_101 = arith.constant 2 : index
    %c2_102 = arith.constant 2 : index
    %c0_103 = arith.constant 0 : index
    %c0_104 = arith.constant 0 : index
    %85 = vector.load %arg2[%c2_101, %c2_102, %c0_103, %c0_104] : memref<4x4x128x64xbf16, #tpu.memory_space<vmem>>, vector<1x1x128x64xbf16>
    %86 = vector.shape_cast %85 : vector<1x1x128x64xbf16> to vector<128x64xbf16>
    %cst_105 = arith.constant dense<0.000000e+00> : vector<128x64xf32>
    %87 = tpu.matmul %84, %86, %cst_105 {dimension_numbers = #tpu.dot_dimension_numbers<[1], [0], [0], [1], [0, 0, 1, 1], [], []>} : vector<128x128xbf16>, vector<128x64xbf16>, vector<128x64xf32> -> vector<128x64xf32>
    %88 = arith.addf %82, %87 : vector<128x64xf32>
    %c3_106 = arith.constant 3 : index
    %c0_107 = arith.constant 0 : index
    %c0_108 = arith.constant 0 : index
    %89 = vector.load %arg1[%c3_106, %c0_107, %c0_108] : memref<4x128x128xbf16, #tpu.memory_space<vmem>>, vector<1x128x128xbf16>
    %90 = vector.shape_cast %89 : vector<1x128x128xbf16> to vector<128x128xbf16>
    %c3_109 = arith.constant 3 : index
    %c2_110 = arith.constant 2 : index
    %c0_111 = arith.constant 0 : index
    %c0_112 = arith.constant 0 : index
    %91 = vector.load %arg2[%c3_109, %c2_110, %c0_111, %c0_112] : memref<4x4x128x64xbf16, #tpu.memory_space<vmem>>, vector<1x1x128x64xbf16>
    %92 = vector.shape_cast %91 : vector<1x1x128x64xbf16> to vector<128x64xbf16>
    %cst_113 = arith.constant dense<0.000000e+00> : vector<128x64xf32>
    %93 = tpu.matmul %90, %92, %cst_113 {dimension_numbers = #tpu.dot_dimension_numbers<[1], [0], [0], [1], [0, 0, 1, 1], [], []>} : vector<128x128xbf16>, vector<128x64xbf16>, vector<128x64xf32> -> vector<128x64xf32>
    %94 = arith.addf %88, %93 : vector<128x64xf32>
    %95 = arith.truncf %94 : vector<128x64xf32> to vector<128x64xbf16>
    %c2_114 = arith.constant 2 : index
    %c0_115 = arith.constant 0 : index
    %c0_116 = arith.constant 0 : index
    %96 = vector.load %arg4[%c2_114, %c0_115, %c0_116] : memref<4x128x64xbf16, #tpu.memory_space<vmem>>, vector<1x128x64xbf16>
    %97 = vector.shape_cast %96 : vector<1x128x64xbf16> to vector<128x64xbf16>
    %98 = vector.shape_cast %95 : vector<128x64xbf16> to vector<1x128x64xbf16>
    tpu.vector_store %arg4[%c2_114, %c0_115, %c0_116], %98 {strides = array<i32>} : memref<4x128x64xbf16, #tpu.memory_space<vmem>>, vector<1x128x64xbf16>,
    %c2_117 = arith.constant 2 : index
    %c0_118 = arith.constant 0 : index
    %c0_119 = arith.constant 0 : index
    %99 = vector.load %arg3[%c2_117, %c0_118, %c0_119] : memref<4x64x2xbf16, #tpu.memory_space<vmem>>, vector<1x64x2xbf16>
    %100 = vector.shape_cast %99 : vector<1x64x2xbf16> to vector<64x2xbf16>
    %cst_120 = arith.constant dense<0.000000e+00> : vector<128x2xf32>
    %101 = tpu.matmul %95, %100, %cst_120 {dimension_numbers = #tpu.dot_dimension_numbers<[1], [0], [0], [1], [0, 0, 1, 1], [], []>} : vector<128x64xbf16>, vector<64x2xbf16>, vector<128x2xf32> -> vector<128x2xf32>
    %c2_121 = arith.constant 2 : index
    %c0_122 = arith.constant 0 : index
    %c0_123 = arith.constant 0 : index
    %102 = vector.load %arg5[%c2_121, %c0_122, %c0_123] : memref<4x128x2xf32, #tpu.memory_space<vmem>>, vector<1x128x2xf32>
    %103 = vector.shape_cast %102 : vector<1x128x2xf32> to vector<128x2xf32>
    %104 = vector.shape_cast %101 : vector<128x2xf32> to vector<1x128x2xf32>
    tpu.vector_store %arg5[%c2_121, %c0_122, %c0_123], %104 {strides = array<i32>} : memref<4x128x2xf32, #tpu.memory_space<vmem>>, vector<1x128x2xf32>,
    %cst_124 = arith.constant 0.000000e+00 : f32
    %105 = vector.broadcast %cst_124 : f32 to vector<128x64xf32>
    %c0_125 = arith.constant 0 : index
    %c0_126 = arith.constant 0 : index
    %c0_127 = arith.constant 0 : index
    %106 = vector.load %arg1[%c0_125, %c0_126, %c0_127] : memref<4x128x128xbf16, #tpu.memory_space<vmem>>, vector<1x128x128xbf16>
    %107 = vector.shape_cast %106 : vector<1x128x128xbf16> to vector<128x128xbf16>
    %c0_128 = arith.constant 0 : index
    %c3_129 = arith.constant 3 : index
    %c0_130 = arith.constant 0 : index
    %c0_131 = arith.constant 0 : index
    %108 = vector.load %arg2[%c0_128, %c3_129, %c0_130, %c0_131] : memref<4x4x128x64xbf16, #tpu.memory_space<vmem>>, vector<1x1x128x64xbf16>
    %109 = vector.shape_cast %108 : vector<1x1x128x64xbf16> to vector<128x64xbf16>
    %cst_132 = arith.constant dense<0.000000e+00> : vector<128x64xf32>
    %110 = tpu.matmul %107, %109, %cst_132 {dimension_numbers = #tpu.dot_dimension_numbers<[1], [0], [0], [1], [0, 0, 1, 1], [], []>} : vector<128x128xbf16>, vector<128x64xbf16>, vector<128x64xf32> -> vector<128x64xf32>
    %111 = arith.addf %105, %110 : vector<128x64xf32>
    %c1_133 = arith.constant 1 : index
    %c0_134 = arith.constant 0 : index
    %c0_135 = arith.constant 0 : index
    %112 = vector.load %arg1[%c1_133, %c0_134, %c0_135] : memref<4x128x128xbf16, #tpu.memory_space<vmem>>, vector<1x128x128xbf16>
    %113 = vector.shape_cast %112 : vector<1x128x128xbf16> to vector<128x128xbf16>
    %c1_136 = arith.constant 1 : index
    %c3_137 = arith.constant 3 : index
    %c0_138 = arith.constant 0 : index
    %c0_139 = arith.constant 0 : index
    %114 = vector.load %arg2[%c1_136, %c3_137, %c0_138, %c0_139] : memref<4x4x128x64xbf16, #tpu.memory_space<vmem>>, vector<1x1x128x64xbf16>
    %115 = vector.shape_cast %114 : vector<1x1x128x64xbf16> to vector<128x64xbf16>
    %cst_140 = arith.constant dense<0.000000e+00> : vector<128x64xf32>
    %116 = tpu.matmul %113, %115, %cst_140 {dimension_numbers = #tpu.dot_dimension_numbers<[1], [0], [0], [1], [0, 0, 1, 1], [], []>} : vector<128x128xbf16>, vector<128x64xbf16>, vector<128x64xf32> -> vector<128x64xf32>
    %117 = arith.addf %111, %116 : vector<128x64xf32>
    %c2_141 = arith.constant 2 : index
    %c0_142 = arith.constant 0 : index
    %c0_143 = arith.constant 0 : index
    %118 = vector.load %arg1[%c2_141, %c0_142, %c0_143] : memref<4x128x128xbf16, #tpu.memory_space<vmem>>, vector<1x128x128xbf16>
    %119 = vector.shape_cast %118 : vector<1x128x128xbf16> to vector<128x128xbf16>
    %c2_144 = arith.constant 2 : index
    %c3_145 = arith.constant 3 : index
    %c0_146 = arith.constant 0 : index
    %c0_147 = arith.constant 0 : index
    %120 = vector.load %arg2[%c2_144, %c3_145, %c0_146, %c0_147] : memref<4x4x128x64xbf16, #tpu.memory_space<vmem>>, vector<1x1x128x64xbf16>
    %121 = vector.shape_cast %120 : vector<1x1x128x64xbf16> to vector<128x64xbf16>
    %cst_148 = arith.constant dense<0.000000e+00> : vector<128x64xf32>
    %122 = tpu.matmul %119, %121, %cst_148 {dimension_numbers = #tpu.dot_dimension_numbers<[1], [0], [0], [1], [0, 0, 1, 1], [], []>} : vector<128x128xbf16>, vector<128x64xbf16>, vector<128x64xf32> -> vector<128x64xf32>
    %123 = arith.addf %117, %122 : vector<128x64xf32>
    %c3_149 = arith.constant 3 : index
    %c0_150 = arith.constant 0 : index
    %c0_151 = arith.constant 0 : index
    %124 = vector.load %arg1[%c3_149, %c0_150, %c0_151] : memref<4x128x128xbf16, #tpu.memory_space<vmem>>, vector<1x128x128xbf16>
    %125 = vector.shape_cast %124 : vector<1x128x128xbf16> to vector<128x128xbf16>
    %c3_152 = arith.constant 3 : index
    %c3_153 = arith.constant 3 : index
    %c0_154 = arith.constant 0 : index
    %c0_155 = arith.constant 0 : index
    %126 = vector.load %arg2[%c3_152, %c3_153, %c0_154, %c0_155] : memref<4x4x128x64xbf16, #tpu.memory_space<vmem>>, vector<1x1x128x64xbf16>
    %127 = vector.shape_cast %126 : vector<1x1x128x64xbf16> to vector<128x64xbf16>
    %cst_156 = arith.constant dense<0.000000e+00> : vector<128x64xf32>
    %128 = tpu.matmul %125, %127, %cst_156 {dimension_numbers = #tpu.dot_dimension_numbers<[1], [0], [0], [1], [0, 0, 1, 1], [], []>} : vector<128x128xbf16>, vector<128x64xbf16>, vector<128x64xf32> -> vector<128x64xf32>
    %129 = arith.addf %123, %128 : vector<128x64xf32>
    %130 = arith.truncf %129 : vector<128x64xf32> to vector<128x64xbf16>
    %c3_157 = arith.constant 3 : index
    %c0_158 = arith.constant 0 : index
    %c0_159 = arith.constant 0 : index
    %131 = vector.load %arg4[%c3_157, %c0_158, %c0_159] : memref<4x128x64xbf16, #tpu.memory_space<vmem>>, vector<1x128x64xbf16>
    %132 = vector.shape_cast %131 : vector<1x128x64xbf16> to vector<128x64xbf16>
    %133 = vector.shape_cast %130 : vector<128x64xbf16> to vector<1x128x64xbf16>
    tpu.vector_store %arg4[%c3_157, %c0_158, %c0_159], %133 {strides = array<i32>} : memref<4x128x64xbf16, #tpu.memory_space<vmem>>, vector<1x128x64xbf16>,
    %c3_160 = arith.constant 3 : index
    %c0_161 = arith.constant 0 : index
    %c0_162 = arith.constant 0 : index
    %134 = vector.load %arg3[%c3_160, %c0_161, %c0_162] : memref<4x64x2xbf16, #tpu.memory_space<vmem>>, vector<1x64x2xbf16>
    %135 = vector.shape_cast %134 : vector<1x64x2xbf16> to vector<64x2xbf16>
    %cst_163 = arith.constant dense<0.000000e+00> : vector<128x2xf32>
    %136 = tpu.matmul %130, %135, %cst_163 {dimension_numbers = #tpu.dot_dimension_numbers<[1], [0], [0], [1], [0, 0, 1, 1], [], []>} : vector<128x64xbf16>, vector<64x2xbf16>, vector<128x2xf32> -> vector<128x2xf32>
    %c3_164 = arith.constant 3 : index
    %c0_165 = arith.constant 0 : index
    %c0_166 = arith.constant 0 : index
    %137 = vector.load %arg5[%c3_164, %c0_165, %c0_166] : memref<4x128x2xf32, #tpu.memory_space<vmem>>, vector<1x128x2xf32>
    %138 = vector.shape_cast %137 : vector<1x128x2xf32> to vector<128x2xf32>
    %139 = vector.shape_cast %136 : vector<128x2xf32> to vector<1x128x2xf32>
    tpu.vector_store %arg5[%c3_164, %c0_165, %c0_166], %139 {strides = array<i32>} : memref<4x128x2xf32, #tpu.memory_space<vmem>>, vector<1x128x2xf32>,
    return
  }
  func.func @transform_0(%arg0: i32) -> (i32, i32, i32) {
    %c0_i32 = arith.constant 0 : i32
    %c0_i32_0 = arith.constant 0 : i32
    %c0_i32_1 = arith.constant 0 : i32
    return %c0_i32, %arg0, %c0_i32_0 : i32, i32, i32
  }
  func.func @transform_1(%arg0: i32) -> (i32, i32, i32, i32) {
    %c0_i32 = arith.constant 0 : i32
    %c0_i32_0 = arith.constant 0 : i32
    %c0_i32_1 = arith.constant 0 : i32
    %c0_i32_2 = arith.constant 0 : i32
    %c0_i32_3 = arith.constant 0 : i32
    return %c0_i32, %c0_i32_0, %c0_i32_1, %c0_i32_2 : i32, i32, i32, i32
  }
  func.func @transform_2(%arg0: i32) -> (i32, i32, i32) {
    %c0_i32 = arith.constant 0 : i32
    %c0_i32_0 = arith.constant 0 : i32
    %c0_i32_1 = arith.constant 0 : i32
    %c0_i32_2 = arith.constant 0 : i32
    return %c0_i32, %c0_i32_0, %c0_i32_1 : i32, i32, i32
  }
  func.func @transform_3(%arg0: i32) -> (i32, i32, i32) {
    %c0_i32 = arith.constant 0 : i32
    %c0_i32_0 = arith.constant 0 : i32
    %c0_i32_1 = arith.constant 0 : i32
    return %c0_i32, %arg0, %c0_i32_0 : i32, i32, i32
  }
  func.func @transform_4(%arg0: i32) -> (i32, i32, i32) {
    %c0_i32 = arith.constant 0 : i32
    %c0_i32_0 = arith.constant 0 : i32
    %c0_i32_1 = arith.constant 0 : i32
    return %c0_i32, %arg0, %c0_i32_0 : i32, i32, i32
  }
}

module attributes {stable_mosaic.version = 11 : i64} {
  func.func @_attn_kernel(%arg0: i32, %arg1: memref<4x128x1xf32, #tpu.memory_space<vmem>>, %arg2: memref<128x128xi8, #tpu.memory_space<vmem>>, %arg3: memref<4x1x128xf32, #tpu.memory_space<vmem>>, %arg4: memref<4x128x64xbf16, #tpu.memory_space<vmem>>, %arg5: memref<4x1x64xf32, #tpu.memory_space<vmem>>, %arg6: memref<4x128x64xbf16, #tpu.memory_space<vmem>>) attributes {dimension_semantics = [#tpu.dimension_semantics<parallel>], iteration_bounds = array<i64: 1>, scalar_prefetch = 0 : i64, scratch_operands = 0 : i64, tpu.core_type = #tpu.core_type<tc>, window_params = [{transform_indices = @transform_0, window_bounds = array<i64: 4, 128, 1>}, {transform_indices = @transform_1, window_bounds = array<i64: 128, 128>}, {pipeline_mode = #tpu.pipeline_mode<synchronous>, transform_indices = @transform_2, window_bounds = array<i64: 4, 1, 128>}, {pipeline_mode = #tpu.pipeline_mode<synchronous>, transform_indices = @transform_3, window_bounds = array<i64: 4, 128, 64>}, {pipeline_mode = #tpu.pipeline_mode<synchronous>, transform_indices = @transform_4, window_bounds = array<i64: 4, 1, 64>}, {transform_indices = @transform_5, window_bounds = array<i64: 4, 128, 64>}]} {
    %c0 = arith.constant 0 : index
    %c0_0 = arith.constant 0 : index
    %0 = vector.load %arg2[%c0, %c0_0] : memref<128x128xi8, #tpu.memory_space<vmem>>, vector<128x128xi8>
    %1 = arith.sitofp %0 : vector<128x128xi8> to vector<128x128xf32>
    %cst = arith.constant 0.000000e+00 : f32
    %2 = vector.broadcast %cst : f32 to vector<128x128xf32>
    %3 = arith.cmpf ogt, %1, %2 : vector<128x128xf32>
    %cst_1 = arith.constant 0.000000e+00 : f32
    %cst_2 = arith.constant -1.000000e+30 : f32
    %4 = vector.broadcast %cst_1 : f32 to vector<128x128xf32>
    %5 = vector.broadcast %cst_2 : f32 to vector<128x128xf32>
    %6 = arith.select %3, %4, %5 : vector<128x128xi1>, vector<128x128xf32>
    %c0_i32 = arith.constant 0 : i32
    %c4_i32 = arith.constant 4 : i32
    %7 = arith.addi %c0_i32, %c4_i32 : i32
    %c1_i32 = arith.constant 1 : i32
    scf.for %arg7 = %c0_i32 to %7 step %c1_i32  : i32 {
      %8 = arith.index_cast %arg7 : i32 to index
      %c0_4 = arith.constant 0 : index
      %c0_5 = arith.constant 0 : index
      %9 = vector.load %arg1[%8, %c0_4, %c0_5] : memref<4x128x1xf32, #tpu.memory_space<vmem>>, vector<1x128x1xf32>
      %10 = vector.shape_cast %9 : vector<1x128x1xf32> to vector<128x1xf32>
      %11 = arith.index_cast %arg7 : i32 to index
      %c0_6 = arith.constant 0 : index
      %c0_7 = arith.constant 0 : index
      %12 = vector.load %arg3[%11, %c0_6, %c0_7] : memref<4x1x128xf32, #tpu.memory_space<vmem>>, vector<1x1x128xf32>
      %13 = vector.shape_cast %12 : vector<1x1x128xf32> to vector<1x128xf32>
      %14 = vector.broadcast %10 : vector<128x1xf32> to vector<128x128xf32>
      %15 = vector.broadcast %13 : vector<1x128xf32> to vector<128x128xf32>
      %16 = arith.addf %14, %15 : vector<128x128xf32>
      %cst_8 = arith.constant 2.000000e-01 : f32
      %17 = vector.broadcast %cst_8 : f32 to vector<128x128xf32>
      %18 = arith.mulf %17, %16 : vector<128x128xf32>
      %19 = arith.maximumf %16, %18 : vector<128x128xf32>
      %20 = arith.addf %19, %6 : vector<128x128xf32>
      %cst_9 = arith.constant dense<0xFF800000> : vector<128xf32>
      %21 = vector.multi_reduction <maximumf>, %20, %cst_9 [1] : vector<128x128xf32> to vector<128xf32>
      %22 = vector.shape_cast %21 : vector<128xf32> to vector<128x1xf32>
      %23 = vector.broadcast %22 : vector<128x1xf32> to vector<128x128xf32>
      %24 = arith.subf %20, %23 : vector<128x128xf32>
      %25 = math.exp %24 : vector<128x128xf32>
      %cst_10 = arith.constant dense<0.000000e+00> : vector<128xf32>
      %26 = vector.multi_reduction <add>, %25, %cst_10 [1] : vector<128x128xf32> to vector<128xf32>
      %27 = vector.shape_cast %26 : vector<128xf32> to vector<128x1xf32>
      %28 = arith.truncf %25 : vector<128x128xf32> to vector<128x128xbf16>
      %29 = arith.index_cast %arg7 : i32 to index
      %c0_11 = arith.constant 0 : index
      %c0_12 = arith.constant 0 : index
      %30 = vector.load %arg4[%29, %c0_11, %c0_12] : memref<4x128x64xbf16, #tpu.memory_space<vmem>>, vector<1x128x64xbf16>
      %31 = vector.shape_cast %30 : vector<1x128x64xbf16> to vector<128x64xbf16>
      %cst_13 = arith.constant dense<0.000000e+00> : vector<128x64xf32>
      %32 = tpu.matmul %28, %31, %cst_13 {dimension_numbers = #tpu.dot_dimension_numbers<[1], [0], [0], [1], [0, 0, 1, 1], [], []>} : vector<128x128xbf16>, vector<128x64xbf16>, vector<128x64xf32> -> vector<128x64xf32>
      %33 = tpu.reciprocal %27 {approx = true} : vector<128x1xf32> -> vector<128x1xf32>
      %34 = vector.broadcast %33 : vector<128x1xf32> to vector<128x64xf32>
      %35 = arith.mulf %32, %34 : vector<128x64xf32>
      %36 = arith.index_cast %arg7 : i32 to index
      %c0_14 = arith.constant 0 : index
      %c0_15 = arith.constant 0 : index
      %37 = vector.load %arg5[%36, %c0_14, %c0_15] : memref<4x1x64xf32, #tpu.memory_space<vmem>>, vector<1x1x64xf32>
      %38 = vector.shape_cast %37 : vector<1x1x64xf32> to vector<1x64xf32>
      %39 = vector.broadcast %38 : vector<1x64xf32> to vector<128x64xf32>
      %40 = arith.addf %35, %39 : vector<128x64xf32>
      %cst_16 = arith.constant 0.000000e+00 : f32
      %41 = vector.broadcast %cst_16 : f32 to vector<128x64xf32>
      %42 = arith.cmpf ogt, %40, %41 : vector<128x64xf32>
      %43 = math.exp %40 : vector<128x64xf32>
      %cst_17 = arith.constant 1.000000e+00 : f32
      %44 = vector.broadcast %cst_17 : f32 to vector<128x64xf32>
      %45 = arith.subf %43, %44 : vector<128x64xf32>
      %46 = arith.select %42, %40, %45 : vector<128x64xi1>, vector<128x64xf32>
      %47 = arith.truncf %46 : vector<128x64xf32> to vector<128x64xbf16>
      %48 = arith.index_cast %arg7 : i32 to index
      %c0_18 = arith.constant 0 : index
      %c0_19 = arith.constant 0 : index
      %49 = vector.load %arg6[%48, %c0_18, %c0_19] : memref<4x128x64xbf16, #tpu.memory_space<vmem>>, vector<1x128x64xbf16>
      %50 = vector.shape_cast %49 : vector<1x128x64xbf16> to vector<128x64xbf16>
      %51 = vector.shape_cast %47 : vector<128x64xbf16> to vector<1x128x64xbf16>
      tpu.vector_store %arg6[%48, %c0_18, %c0_19], %51 {strides = array<i32>} : memref<4x128x64xbf16, #tpu.memory_space<vmem>>, vector<1x128x64xbf16>,
    }
    %c4_i32_3 = arith.constant 4 : i32
    return
  }
  func.func @transform_0(%arg0: i32) -> (i32, i32, i32) {
    %c0_i32 = arith.constant 0 : i32
    %c0_i32_0 = arith.constant 0 : i32
    %c0_i32_1 = arith.constant 0 : i32
    return %c0_i32, %arg0, %c0_i32_0 : i32, i32, i32
  }
  func.func @transform_1(%arg0: i32) -> (i32, i32) {
    %c0_i32 = arith.constant 0 : i32
    %c0_i32_0 = arith.constant 0 : i32
    return %arg0, %c0_i32 : i32, i32
  }
  func.func @transform_2(%arg0: i32) -> (i32, i32, i32) {
    %c0_i32 = arith.constant 0 : i32
    %c0_i32_0 = arith.constant 0 : i32
    %c0_i32_1 = arith.constant 0 : i32
    %c0_i32_2 = arith.constant 0 : i32
    return %c0_i32, %c0_i32_0, %c0_i32_1 : i32, i32, i32
  }
  func.func @transform_3(%arg0: i32) -> (i32, i32, i32) {
    %c0_i32 = arith.constant 0 : i32
    %c0_i32_0 = arith.constant 0 : i32
    %c0_i32_1 = arith.constant 0 : i32
    %c0_i32_2 = arith.constant 0 : i32
    return %c0_i32, %c0_i32_0, %c0_i32_1 : i32, i32, i32
  }
  func.func @transform_4(%arg0: i32) -> (i32, i32, i32) {
    %c0_i32 = arith.constant 0 : i32
    %c0_i32_0 = arith.constant 0 : i32
    %c0_i32_1 = arith.constant 0 : i32
    %c0_i32_2 = arith.constant 0 : i32
    return %c0_i32, %c0_i32_0, %c0_i32_1 : i32, i32, i32
  }
  func.func @transform_5(%arg0: i32) -> (i32, i32, i32) {
    %c0_i32 = arith.constant 0 : i32
    %c0_i32_0 = arith.constant 0 : i32
    %c0_i32_1 = arith.constant 0 : i32
    return %c0_i32, %arg0, %c0_i32_0 : i32, i32, i32
  }
}

module attributes {stable_mosaic.version = 11 : i64} {
  func.func @_fc_kernel(%arg0: i32, %arg1: memref<4x128x64xbf16, #tpu.memory_space<vmem>>, %arg2: memref<4x64x128xbf16, #tpu.memory_space<vmem>>, %arg3: memref<1x128xf32, #tpu.memory_space<vmem>>, %arg4: memref<128x128xf32, #tpu.memory_space<vmem>>) attributes {dimension_semantics = [#tpu.dimension_semantics<parallel>], iteration_bounds = array<i64: 1>, scalar_prefetch = 0 : i64, scratch_operands = 0 : i64, tpu.core_type = #tpu.core_type<tc>, window_params = [{transform_indices = @transform_0, window_bounds = array<i64: 4, 128, 64>}, {pipeline_mode = #tpu.pipeline_mode<synchronous>, transform_indices = @transform_1, window_bounds = array<i64: 4, 64, 128>}, {pipeline_mode = #tpu.pipeline_mode<synchronous>, transform_indices = @transform_2, window_bounds = array<i64: 1, 128>}, {transform_indices = @transform_3, window_bounds = array<i64: 128, 128>}]} {
    %cst = arith.constant 0.000000e+00 : f32
    %0 = vector.broadcast %cst : f32 to vector<128x128xf32>
    %c0 = arith.constant 0 : index
    %c0_0 = arith.constant 0 : index
    %c0_1 = arith.constant 0 : index
    %1 = vector.load %arg1[%c0, %c0_0, %c0_1] : memref<4x128x64xbf16, #tpu.memory_space<vmem>>, vector<1x128x64xbf16>
    %2 = vector.shape_cast %1 : vector<1x128x64xbf16> to vector<128x64xbf16>
    %c0_2 = arith.constant 0 : index
    %c0_3 = arith.constant 0 : index
    %c0_4 = arith.constant 0 : index
    %3 = vector.load %arg2[%c0_2, %c0_3, %c0_4] : memref<4x64x128xbf16, #tpu.memory_space<vmem>>, vector<1x64x128xbf16>
    %4 = vector.shape_cast %3 : vector<1x64x128xbf16> to vector<64x128xbf16>
    %cst_5 = arith.constant dense<0.000000e+00> : vector<128x128xf32>
    %5 = tpu.matmul %2, %4, %cst_5 {dimension_numbers = #tpu.dot_dimension_numbers<[1], [0], [0], [1], [0, 0, 1, 1], [], []>} : vector<128x64xbf16>, vector<64x128xbf16>, vector<128x128xf32> -> vector<128x128xf32>
    %6 = arith.addf %0, %5 : vector<128x128xf32>
    %c1 = arith.constant 1 : index
    %c0_6 = arith.constant 0 : index
    %c0_7 = arith.constant 0 : index
    %7 = vector.load %arg1[%c1, %c0_6, %c0_7] : memref<4x128x64xbf16, #tpu.memory_space<vmem>>, vector<1x128x64xbf16>
    %8 = vector.shape_cast %7 : vector<1x128x64xbf16> to vector<128x64xbf16>
    %c1_8 = arith.constant 1 : index
    %c0_9 = arith.constant 0 : index
    %c0_10 = arith.constant 0 : index
    %9 = vector.load %arg2[%c1_8, %c0_9, %c0_10] : memref<4x64x128xbf16, #tpu.memory_space<vmem>>, vector<1x64x128xbf16>
    %10 = vector.shape_cast %9 : vector<1x64x128xbf16> to vector<64x128xbf16>
    %cst_11 = arith.constant dense<0.000000e+00> : vector<128x128xf32>
    %11 = tpu.matmul %8, %10, %cst_11 {dimension_numbers = #tpu.dot_dimension_numbers<[1], [0], [0], [1], [0, 0, 1, 1], [], []>} : vector<128x64xbf16>, vector<64x128xbf16>, vector<128x128xf32> -> vector<128x128xf32>
    %12 = arith.addf %6, %11 : vector<128x128xf32>
    %c2 = arith.constant 2 : index
    %c0_12 = arith.constant 0 : index
    %c0_13 = arith.constant 0 : index
    %13 = vector.load %arg1[%c2, %c0_12, %c0_13] : memref<4x128x64xbf16, #tpu.memory_space<vmem>>, vector<1x128x64xbf16>
    %14 = vector.shape_cast %13 : vector<1x128x64xbf16> to vector<128x64xbf16>
    %c2_14 = arith.constant 2 : index
    %c0_15 = arith.constant 0 : index
    %c0_16 = arith.constant 0 : index
    %15 = vector.load %arg2[%c2_14, %c0_15, %c0_16] : memref<4x64x128xbf16, #tpu.memory_space<vmem>>, vector<1x64x128xbf16>
    %16 = vector.shape_cast %15 : vector<1x64x128xbf16> to vector<64x128xbf16>
    %cst_17 = arith.constant dense<0.000000e+00> : vector<128x128xf32>
    %17 = tpu.matmul %14, %16, %cst_17 {dimension_numbers = #tpu.dot_dimension_numbers<[1], [0], [0], [1], [0, 0, 1, 1], [], []>} : vector<128x64xbf16>, vector<64x128xbf16>, vector<128x128xf32> -> vector<128x128xf32>
    %18 = arith.addf %12, %17 : vector<128x128xf32>
    %c3 = arith.constant 3 : index
    %c0_18 = arith.constant 0 : index
    %c0_19 = arith.constant 0 : index
    %19 = vector.load %arg1[%c3, %c0_18, %c0_19] : memref<4x128x64xbf16, #tpu.memory_space<vmem>>, vector<1x128x64xbf16>
    %20 = vector.shape_cast %19 : vector<1x128x64xbf16> to vector<128x64xbf16>
    %c3_20 = arith.constant 3 : index
    %c0_21 = arith.constant 0 : index
    %c0_22 = arith.constant 0 : index
    %21 = vector.load %arg2[%c3_20, %c0_21, %c0_22] : memref<4x64x128xbf16, #tpu.memory_space<vmem>>, vector<1x64x128xbf16>
    %22 = vector.shape_cast %21 : vector<1x64x128xbf16> to vector<64x128xbf16>
    %cst_23 = arith.constant dense<0.000000e+00> : vector<128x128xf32>
    %23 = tpu.matmul %20, %22, %cst_23 {dimension_numbers = #tpu.dot_dimension_numbers<[1], [0], [0], [1], [0, 0, 1, 1], [], []>} : vector<128x64xbf16>, vector<64x128xbf16>, vector<128x128xf32> -> vector<128x128xf32>
    %24 = arith.addf %18, %23 : vector<128x128xf32>
    %c0_24 = arith.constant 0 : index
    %c0_25 = arith.constant 0 : index
    %25 = vector.load %arg3[%c0_24, %c0_25] : memref<1x128xf32, #tpu.memory_space<vmem>>, vector<1x128xf32>
    %26 = vector.broadcast %25 : vector<1x128xf32> to vector<128x128xf32>
    %27 = arith.addf %24, %26 : vector<128x128xf32>
    %c0_26 = arith.constant 0 : index
    %c0_27 = arith.constant 0 : index
    %28 = vector.load %arg4[%c0_26, %c0_27] : memref<128x128xf32, #tpu.memory_space<vmem>>, vector<128x128xf32>
    tpu.vector_store %arg4[%c0_26, %c0_27], %27 {strides = array<i32>} : memref<128x128xf32, #tpu.memory_space<vmem>>, vector<128x128xf32>,
    return
  }
  func.func @transform_0(%arg0: i32) -> (i32, i32, i32) {
    %c0_i32 = arith.constant 0 : i32
    %c0_i32_0 = arith.constant 0 : i32
    %c0_i32_1 = arith.constant 0 : i32
    return %c0_i32, %arg0, %c0_i32_0 : i32, i32, i32
  }
  func.func @transform_1(%arg0: i32) -> (i32, i32, i32) {
    %c0_i32 = arith.constant 0 : i32
    %c0_i32_0 = arith.constant 0 : i32
    %c0_i32_1 = arith.constant 0 : i32
    %c0_i32_2 = arith.constant 0 : i32
    return %c0_i32, %c0_i32_0, %c0_i32_1 : i32, i32, i32
  }
  func.func @transform_2(%arg0: i32) -> (i32, i32) {
    %c0_i32 = arith.constant 0 : i32
    %c0_i32_0 = arith.constant 0 : i32
    %c0_i32_1 = arith.constant 0 : i32
    return %c0_i32, %c0_i32_0 : i32, i32
  }
  func.func @transform_3(%arg0: i32) -> (i32, i32) {
    %c0_i32 = arith.constant 0 : i32
    %c0_i32_0 = arith.constant 0 : i32
    return %arg0, %c0_i32 : i32, i32
  }
}

</mosaic_0001>

<llo_original>
// kernel: gat_model_forward.6
$region0: #{gat_model_forward.6}
  #allocation0 [shape = 'u32[]', space=smem, size = 0x4, offset = 0x4, fixed_abs, tag = 'smem constant byte address 0x4 - core index']
  #allocation1 [shape = 'u32[144,128]{1,0:T(1,128)}', space=vmem, size = 0x12000, scoped, tag = 'internal scratch']
  %s0 = inlined_call_operand.vmem [shape: f32[4,128,1], index: 0, kind: input, shape index: {}]
  %s1 = inlined_call_operand.vmem [shape: s8[128,128], index: 1, kind: input, shape index: {}]
  %s2 = inlined_call_operand.vmem [shape: f32[4,1,128], index: 2, kind: input, shape index: {}]
  %s3 = inlined_call_operand.vmem [shape: bf16[4,128,128], index: 3, kind: input, shape index: {}]
  %s4 = inlined_call_operand.vmem [shape: f32[4,1,128], index: 4, kind: input, shape index: {}]
  %s5 = inlined_call_operand.vmem [shape: bf16[4,128,128], index: 5, kind: output, shape index: {}]
  %s6 = sld [smem:[#allocation0]]
  $region37: #{gat_model_forward.6} parent=0
    _
  %s8 = ssub.s32 1, %s6
  %s9 = scalar_select 0, %s8, %s6
  // Predicated region
  $region2: #{gat_model_forward.6} parent=0 // pred_check
    _
  $region3: #{gat_model_forward.6} parent=0 // pred_check_branch
    %11 = sbr.rel (0) target = $region5
  $region4: #{gat_model_forward.6} parent=0 // pred_region
    _
  $region5: #{gat_model_forward.6} parent=0 // pred_fallthru
    _
  // Predicated region
  $region6: #{gat_model_forward.6} parent=0 // pred_check
    _
  $region7: #{gat_model_forward.6} parent=0 // pred_check_branch
    %13 = sbr.rel (0) target = $region9
  $region8: #{gat_model_forward.6} parent=0 // pred_region
    _
  $region9: #{gat_model_forward.6} parent=0 // pred_fallthru
    _
  // Predicated region
  $region10: #{gat_model_forward.6} parent=0 // pred_check
    _
  $region11: #{gat_model_forward.6} parent=0 // pred_check_branch
    %15 = sbr.rel (0) target = $region13
  $region12: #{gat_model_forward.6} parent=0 // pred_region
    _
  $region13: #{gat_model_forward.6} parent=0 // pred_fallthru
    _
  // Predicated region
  $region14: #{gat_model_forward.6} parent=0 // pred_check
    _
  $region15: #{gat_model_forward.6} parent=0 // pred_check_branch
    %17 = sbr.rel (0) target = $region17
  $region16: #{gat_model_forward.6} parent=0 // pred_region
    _
  $region17: #{gat_model_forward.6} parent=0 // pred_fallthru
    _
  // Predicated region
  $region18: #{gat_model_forward.6} parent=0 // pred_check
    _
  $region19: #{gat_model_forward.6} parent=0 // pred_check_branch
    %19 = sbr.rel (0) target = $region21
  $region20: #{gat_model_forward.6} parent=0 // pred_region
    _
  $region21: #{gat_model_forward.6} parent=0 // pred_fallthru
    _
  %v21 = vld [vmem:[%s1] sm:$0xff]
  %v22 = vld [vmem:[%s1 + $0x8] sm:$0xff]
  %v23 = vld [vmem:[%s1 + $0x10] sm:$0xff]
  %v24 = vld [vmem:[%s1 + $0x18] sm:$0xff]
  %v25 = vunpack.c.0.s8 %v21
  %v26 = vunpack.c.1.s8 %v21
  %v27 = vunpack.c.2.s8 %v21
  %v28 = vunpack.c.3.s8 %v21
  %v29 = vunpack.c.0.s8 %v22
  %v30 = vunpack.c.1.s8 %v22
  %v31 = vunpack.c.2.s8 %v22
  %v32 = vunpack.c.3.s8 %v22
  %v33 = vunpack.c.0.s8 %v23
  %v34 = vunpack.c.1.s8 %v23
  %v35 = vunpack.c.2.s8 %v23
  %v36 = vunpack.c.3.s8 %v23
  %v37 = vunpack.c.0.s8 %v24
  %v38 = vunpack.c.1.s8 %v24
  %v39 = vunpack.c.2.s8 %v24
  %v40 = vunpack.c.3.s8 %v24
  %v41 = vcvt.s32.f32 %v25
  %v42 = vcvt.s32.f32 %v26
  %v43 = vcvt.s32.f32 %v27
  %v44 = vcvt.s32.f32 %v28
  %v45 = vcvt.s32.f32 %v29
  %v46 = vcvt.s32.f32 %v30
  %v47 = vcvt.s32.f32 %v31
  %v48 = vcvt.s32.f32 %v32
  %v49 = vcvt.s32.f32 %v33
  %v50 = vcvt.s32.f32 %v34
  %v51 = vcvt.s32.f32 %v35
  %v52 = vcvt.s32.f32 %v36
  %v53 = vcvt.s32.f32 %v37
  %v54 = vcvt.s32.f32 %v38
  %v55 = vcvt.s32.f32 %v39
  %v56 = vcvt.s32.f32 %v40
  %vm57 = vcmp.gt.f32.partialorder %v41, 0.0
  %vm58 = vcmp.gt.f32.partialorder %v42, 0.0
  %vm59 = vcmp.gt.f32.partialorder %v43, 0.0
  %vm60 = vcmp.gt.f32.partialorder %v44, 0.0
  %vm61 = vcmp.gt.f32.partialorder %v45, 0.0
  %vm62 = vcmp.gt.f32.partialorder %v46, 0.0
  %vm63 = vcmp.gt.f32.partialorder %v47, 0.0
  %vm64 = vcmp.gt.f32.partialorder %v48, 0.0
  %vm65 = vcmp.gt.f32.partialorder %v49, 0.0
  %vm66 = vcmp.gt.f32.partialorder %v50, 0.0
  %vm67 = vcmp.gt.f32.partialorder %v51, 0.0
  %vm68 = vcmp.gt.f32.partialorder %v52, 0.0
  %vm69 = vcmp.gt.f32.partialorder %v53, 0.0
  %vm70 = vcmp.gt.f32.partialorder %v54, 0.0
  %vm71 = vcmp.gt.f32.partialorder %v55, 0.0
  %vm72 = vcmp.gt.f32.partialorder %v56, 0.0
  %v73 = vsel %vm57, 0.0, -1e+30
  %v74 = vsel %vm58, 0.0, -1e+30
  %v75 = vsel %vm59, 0.0, -1e+30
  %v76 = vsel %vm60, 0.0, -1e+30
  %v77 = vsel %vm61, 0.0, -1e+30
  %v78 = vsel %vm62, 0.0, -1e+30
  %v79 = vsel %vm63, 0.0, -1e+30
  %v80 = vsel %vm64, 0.0, -1e+30
  %v81 = vsel %vm65, 0.0, -1e+30
  %v82 = vsel %vm66, 0.0, -1e+30
  %v83 = vsel %vm67, 0.0, -1e+30
  %v84 = vsel %vm68, 0.0, -1e+30
  %v85 = vsel %vm69, 0.0, -1e+30
  %v86 = vsel %vm70, 0.0, -1e+30
  %v87 = vsel %vm71, 0.0, -1e+30
  %v88 = vsel %vm72, 0.0, -1e+30
  loop: start=0, step=1, limit=4
  $region22: #{gat_model_forward.6} parent=0 // loop_pre_header
    _
  $region23: #{gat_model_forward.6} parent=0 // loop_header
    %s90 = sphi 0, %s94
    %p91 = scmp.ge.s32.totalorder %s90, 4
  $region24: #{gat_model_forward.6} parent=0 // loop_header_branch
    %93 = sbr.rel (%p91) target = $region28
  $region25: #{gat_model_forward.6} parent=0 // loop_body
    %s95 = smul.u32 %s90, 128
    %s96 = scalar_lea.vmem %s0, %s95
    %v97 = vld [vmem:[%s96] sm:$0xff]
    %v98 = vld [vmem:[%s96 + $0x8] sm:$0xff]
    %v99 = vld [vmem:[%s96 + $0x10] sm:$0xff]
    %v100 = vld [vmem:[%s96 + $0x18] sm:$0xff]
    %v101 = vld [vmem:[%s96 + $0x20] sm:$0xff]
    %v102 = vld [vmem:[%s96 + $0x28] sm:$0xff]
    %v103 = vld [vmem:[%s96 + $0x30] sm:$0xff]
    %v104 = vld [vmem:[%s96 + $0x38] sm:$0xff]
    %v105 = vld [vmem:[%s96 + $0x40] sm:$0xff]
    %v106 = vld [vmem:[%s96 + $0x48] sm:$0xff]
    %v107 = vld [vmem:[%s96 + $0x50] sm:$0xff]
    %v108 = vld [vmem:[%s96 + $0x58] sm:$0xff]
    %v109 = vld [vmem:[%s96 + $0x60] sm:$0xff]
    %v110 = vld [vmem:[%s96 + $0x68] sm:$0xff]
    %v111 = vld [vmem:[%s96 + $0x70] sm:$0xff]
    %v112 = vld [vmem:[%s96 + $0x78] sm:$0xff]
    %s113 = scalar_lea.vmem %s2, %s90
    %v114 = vld [vmem:[%s113] sm:$0x1]
    %116 = vset.pattern.permute.xlu0 0
    %117 = vperm.xlu0 %116, %v97
    %v118 = vpop.permute.xlu0 %117
    %121 = vset.pattern.permute.xlu0 0
    %122 = vperm.xlu0 %121, %v98
    %v123 = vpop.permute.xlu0 %122
    %126 = vset.pattern.permute.xlu0 0
    %127 = vperm.xlu0 %126, %v99
    %v128 = vpop.permute.xlu0 %127
    %131 = vset.pattern.permute.xlu0 0
    %132 = vperm.xlu0 %131, %v100
    %v133 = vpop.permute.xlu0 %132
    %136 = vset.pattern.permute.xlu0 0
    %137 = vperm.xlu0 %136, %v101
    %v138 = vpop.permute.xlu0 %137
    %141 = vset.pattern.permute.xlu0 0
    %142 = vperm.xlu0 %141, %v102
    %v143 = vpop.permute.xlu0 %142
    %146 = vset.pattern.permute.xlu0 0
    %147 = vperm.xlu0 %146, %v103
    %v148 = vpop.permute.xlu0 %147
    %151 = vset.pattern.permute.xlu0 0
    %152 = vperm.xlu0 %151, %v104
    %v153 = vpop.permute.xlu0 %152
    %156 = vset.pattern.permute.xlu0 0
    %157 = vperm.xlu0 %156, %v105
    %v158 = vpop.permute.xlu0 %157
    %161 = vset.pattern.permute.xlu0 0
    %162 = vperm.xlu0 %161, %v106
    %v163 = vpop.permute.xlu0 %162
    %166 = vset.pattern.permute.xlu0 0
    %167 = vperm.xlu0 %166, %v107
    %v168 = vpop.permute.xlu0 %167
    %171 = vset.pattern.permute.xlu0 0
    %172 = vperm.xlu0 %171, %v108
    %v173 = vpop.permute.xlu0 %172
    %176 = vset.pattern.permute.xlu0 0
    %177 = vperm.xlu0 %176, %v109
    %v178 = vpop.permute.xlu0 %177
    %181 = vset.pattern.permute.xlu0 0
    %182 = vperm.xlu0 %181, %v110
    %v183 = vpop.permute.xlu0 %182
    %186 = vset.pattern.permute.xlu0 0
    %187 = vperm.xlu0 %186, %v111
    %v188 = vpop.permute.xlu0 %187
    %191 = vset.pattern.permute.xlu0 0
    %192 = vperm.xlu0 %191, %v112
    %v193 = vpop.permute.xlu0 %192
    %v196 = vlaneseq
    %v197 = vshrl.u32 %v196, 7
    %v198 = vsub.s32 0, %v197
    %v199 = vrot.slane %v114, %v198
    %v201 = vadd.f32 %v118, %v199
    %v202 = vadd.f32 %v123, %v199
    %v203 = vadd.f32 %v128, %v199
    %v204 = vadd.f32 %v133, %v199
    %v205 = vadd.f32 %v138, %v199
    %v206 = vadd.f32 %v143, %v199
    %v207 = vadd.f32 %v148, %v199
    %v208 = vadd.f32 %v153, %v199
    %v209 = vadd.f32 %v158, %v199
    %v210 = vadd.f32 %v163, %v199
    %v211 = vadd.f32 %v168, %v199
    %v212 = vadd.f32 %v173, %v199
    %v213 = vadd.f32 %v178, %v199
    %v214 = vadd.f32 %v183, %v199
    %v215 = vadd.f32 %v188, %v199
    %v216 = vadd.f32 %v193, %v199
    %v217 = vmul.f32 %v201, 0.2
    %v218 = vmul.f32 %v202, 0.2
    %v219 = vmul.f32 %v203, 0.2
    %v220 = vmul.f32 %v204, 0.2
    %v221 = vmul.f32 %v205, 0.2
    %v222 = vmul.f32 %v206, 0.2
    %v223 = vmul.f32 %v207, 0.2
    %v224 = vmul.f32 %v208, 0.2
    %v225 = vmul.f32 %v209, 0.2
    %v226 = vmul.f32 %v210, 0.2
    %v227 = vmul.f32 %v211, 0.2
    %v228 = vmul.f32 %v212, 0.2
    %v229 = vmul.f32 %v213, 0.2
    %v230 = vmul.f32 %v214, 0.2
    %v231 = vmul.f32 %v215, 0.2
    %v232 = vmul.f32 %v216, 0.2
    %v233 = vmax.f32 %v201, %v217
    %v234 = vmax.f32 %v202, %v218
    %v235 = vmax.f32 %v203, %v219
    %v236 = vmax.f32 %v204, %v220
    %v237 = vmax.f32 %v205, %v221
    %v238 = vmax.f32 %v206, %v222
    %v239 = vmax.f32 %v207, %v223
    %v240 = vmax.f32 %v208, %v224
    %v241 = vmax.f32 %v209, %v225
    %v242 = vmax.f32 %v210, %v226
    %v243 = vmax.f32 %v211, %v227
    %v244 = vmax.f32 %v212, %v228
    %v245 = vmax.f32 %v213, %v229
    %v246 = vmax.f32 %v214, %v230
    %v247 = vmax.f32 %v215, %v231
    %v248 = vmax.f32 %v216, %v232
    %v249 = vadd.f32 %v233, %v73
    %v250 = vadd.f32 %v234, %v74
    %v251 = vadd.f32 %v235, %v75
    %v252 = vadd.f32 %v236, %v76
    %v253 = vadd.f32 %v237, %v77
    %v254 = vadd.f32 %v238, %v78
    %v255 = vadd.f32 %v239, %v79
    %v256 = vadd.f32 %v240, %v80
    %v257 = vadd.f32 %v241, %v81
    %v258 = vadd.f32 %v242, %v82
    %v259 = vadd.f32 %v243, %v83
    %v260 = vadd.f32 %v244, %v84
    %v261 = vadd.f32 %v245, %v85
    %v262 = vadd.f32 %v246, %v86
    %v263 = vadd.f32 %v247, %v87
    %v264 = vadd.f32 %v248, %v88
    %265 = vmax.xlane.f32.xlu0 %v249
    %v266 = vpop.xlane.xlu0 %265
    %267 = vmax.xlane.f32.xlu0 %v250
    %v268 = vpop.xlane.xlu0 %267
    %269 = vmax.xlane.f32.xlu0 %v251
    %v270 = vpop.xlane.xlu0 %269
    %271 = vmax.xlane.f32.xlu0 %v252
    %v272 = vpop.xlane.xlu0 %271
    %273 = vmax.xlane.f32.xlu0 %v253
    %v274 = vpop.xlane.xlu0 %273
    %275 = vmax.xlane.f32.xlu0 %v254
    %v276 = vpop.xlane.xlu0 %275
    %277 = vmax.xlane.f32.xlu0 %v255
    %v278 = vpop.xlane.xlu0 %277
    %279 = vmax.xlane.f32.xlu0 %v256
    %v280 = vpop.xlane.xlu0 %279
    %281 = vmax.xlane.f32.xlu0 %v257
    %v282 = vpop.xlane.xlu0 %281
    %283 = vmax.xlane.f32.xlu0 %v258
    %v284 = vpop.xlane.xlu0 %283
    %285 = vmax.xlane.f32.xlu0 %v259
    %v286 = vpop.xlane.xlu0 %285
    %287 = vmax.xlane.f32.xlu0 %v260
    %v288 = vpop.xlane.xlu0 %287
    %289 = vmax.xlane.f32.xlu0 %v261
    %v290 = vpop.xlane.xlu0 %289
    %291 = vmax.xlane.f32.xlu0 %v262
    %v292 = vpop.xlane.xlu0 %291
    %293 = vmax.xlane.f32.xlu0 %v263
    %v294 = vpop.xlane.xlu0 %293
    %295 = vmax.xlane.f32.xlu0 %v264
    %v296 = vpop.xlane.xlu0 %295
    %v297 = vsub.f32 %v249, %v266
    %v298 = vsub.f32 %v250, %v268
    %v299 = vsub.f32 %v251, %v270
    %v300 = vsub.f32 %v252, %v272
    %v301 = vsub.f32 %v253, %v274
    %v302 = vsub.f32 %v254, %v276
    %v303 = vsub.f32 %v255, %v278
    %v304 = vsub.f32 %v256, %v280
    %v305 = vsub.f32 %v257, %v282
    %v306 = vsub.f32 %v258, %v284
    %v307 = vsub.f32 %v259, %v286
    %v308 = vsub.f32 %v260, %v288
    %v309 = vsub.f32 %v261, %v290
    %v310 = vsub.f32 %v262, %v292
    %v311 = vsub.f32 %v263, %v294
    %v312 = vsub.f32 %v264, %v296
    %v313 = vmul.f32 %v297, 1.442695
    %v314 = vpow.pop %v313
    %v315 = vmul.f32 %v298, 1.442695
    %v316 = vpow.pop %v315
    %v317 = vmul.f32 %v299, 1.442695
    %v318 = vpow.pop %v317
    %v319 = vmul.f32 %v300, 1.442695
    %v320 = vpow.pop %v319
    %v321 = vmul.f32 %v301, 1.442695
    %v322 = vpow.pop %v321
    %v323 = vmul.f32 %v302, 1.442695
    %v324 = vpow.pop %v323
    %v325 = vmul.f32 %v303, 1.442695
    %v326 = vpow.pop %v325
    %v327 = vmul.f32 %v304, 1.442695
    %v328 = vpow.pop %v327
    %v329 = vmul.f32 %v305, 1.442695
    %v330 = vpow.pop %v329
    %v331 = vmul.f32 %v306, 1.442695
    %v332 = vpow.pop %v331
    %v333 = vmul.f32 %v307, 1.442695
    %v334 = vpow.pop %v333
    %v335 = vmul.f32 %v308, 1.442695
    %v336 = vpow.pop %v335
    %v337 = vmul.f32 %v309, 1.442695
    %v338 = vpow.pop %v337
    %v339 = vmul.f32 %v310, 1.442695
    %v340 = vpow.pop %v339
    %v341 = vmul.f32 %v311, 1.442695
    %v342 = vpow.pop %v341
    %v343 = vmul.f32 %v312, 1.442695
    %v344 = vpow.pop %v343
    %345 = vadd.xlane.f32.xlu0 %v314
    %v346 = vpop.xlane.xlu0 %345
    %347 = vadd.xlane.f32.xlu0 %v316
    %v348 = vpop.xlane.xlu0 %347
    %349 = vadd.xlane.f32.xlu0 %v318
    %v350 = vpop.xlane.xlu0 %349
    %351 = vadd.xlane.f32.xlu0 %v320
    %v352 = vpop.xlane.xlu0 %351
    %353 = vadd.xlane.f32.xlu0 %v322
    %v354 = vpop.xlane.xlu0 %353
    %355 = vadd.xlane.f32.xlu0 %v324
    %v356 = vpop.xlane.xlu0 %355
    %357 = vadd.xlane.f32.xlu0 %v326
    %v358 = vpop.xlane.xlu0 %357
    %359 = vadd.xlane.f32.xlu0 %v328
    %v360 = vpop.xlane.xlu0 %359
    %361 = vadd.xlane.f32.xlu0 %v330
    %v362 = vpop.xlane.xlu0 %361
    %363 = vadd.xlane.f32.xlu0 %v332
    %v364 = vpop.xlane.xlu0 %363
    %365 = vadd.xlane.f32.xlu0 %v334
    %v366 = vpop.xlane.xlu0 %365
    %367 = vadd.xlane.f32.xlu0 %v336
    %v368 = vpop.xlane.xlu0 %367
    %369 = vadd.xlane.f32.xlu0 %v338
    %v370 = vpop.xlane.xlu0 %369
    %371 = vadd.xlane.f32.xlu0 %v340
    %v372 = vpop.xlane.xlu0 %371
    %373 = vadd.xlane.f32.xlu0 %v342
    %v374 = vpop.xlane.xlu0 %373
    %375 = vadd.xlane.f32.xlu0 %v344
    %v376 = vpop.xlane.xlu0 %375
    %v377 = vpack.c.bf16 %v316, %v314
    %v378 = vpack.c.bf16 %v320, %v318
    %v379 = vpack.c.bf16 %v324, %v322
    %v380 = vpack.c.bf16 %v328, %v326
    %v381 = vpack.c.bf16 %v332, %v330
    %v382 = vpack.c.bf16 %v336, %v334
    %v383 = vpack.c.bf16 %v340, %v338
    %v384 = vpack.c.bf16 %v344, %v342
    %s385 = smul.u32 %s90, 16
    %s386 = smul.addr %s385, 4
    %s387 = scalar_lea.vmem %s3, %s386
    %v388 = vld [vmem:[%s387] sm:$0xf]
    %v389 = vld [vmem:[%s387 + $0x4] sm:$0xf]
    %v390 = vld [vmem:[%s387 + $0x8] sm:$0xf]
    %v391 = vld [vmem:[%s387 + $0xc] sm:$0xf]
    %v392 = vld [vmem:[%s387 + $0x10] sm:$0xf]
    %v393 = vld [vmem:[%s387 + $0x14] sm:$0xf]
    %v394 = vld [vmem:[%s387 + $0x18] sm:$0xf]
    %v395 = vld [vmem:[%s387 + $0x1c] sm:$0xf]
    %v396 = vld [vmem:[%s387 + $0x20] sm:$0xf]
    %v397 = vld [vmem:[%s387 + $0x24] sm:$0xf]
    %v398 = vld [vmem:[%s387 + $0x28] sm:$0xf]
    %v399 = vld [vmem:[%s387 + $0x2c] sm:$0xf]
    %v400 = vld [vmem:[%s387 + $0x30] sm:$0xf]
    %v401 = vld [vmem:[%s387 + $0x34] sm:$0xf]
    %v402 = vld [vmem:[%s387 + $0x38] sm:$0xf]
    %v403 = vld [vmem:[%s387 + $0x3c] sm:$0xf]
    %v420 = vunpack.c.l.b16 %v388
    %v421 = vunpack.c.l.b16 %v389
    %v422 = vunpack.c.l.b16 %v390
    %v423 = vunpack.c.l.b16 %v391
    %v424 = vunpack.c.l.b16 %v392
    %v425 = vunpack.c.l.b16 %v393
    %v426 = vunpack.c.l.b16 %v394
    %v427 = vunpack.c.l.b16 %v395
    %v428 = vunpack.c.l.b16 %v396
    %v429 = vunpack.c.l.b16 %v397
    %v430 = vunpack.c.l.b16 %v398
    %v431 = vunpack.c.l.b16 %v399
    %v432 = vunpack.c.l.b16 %v400
    %v433 = vunpack.c.l.b16 %v401
    %v434 = vunpack.c.l.b16 %v402
    %v435 = vunpack.c.l.b16 %v403
    %v436 = vpack.c.b16 %v421, %v420
    %v437 = vpack.c.b16 %v423, %v422
    %v438 = vpack.c.b16 %v425, %v424
    %v439 = vpack.c.b16 %v427, %v426
    %v440 = vpack.c.b16 %v429, %v428
    %v441 = vpack.c.b16 %v431, %v430
    %v442 = vpack.c.b16 %v433, %v432
    %v443 = vpack.c.b16 %v435, %v434
    %452 = vmatprep.subr.bf16.mxu0 0
    %453 = vmatpush1.bf16.msra.mxu0 %v436
    %454 = vmatprep.subr.bf16.mxu0 0
    %455 = vmatpush1.bf16.msra.mxu0 %v437
    %456 = vmatprep.subr.bf16.mxu0 0
    %457 = vmatpush1.bf16.msra.mxu0 %v438
    %458 = vmatprep.subr.bf16.mxu0 0
    %459 = vmatpush1.bf16.msra.mxu0 %v439
    %460 = vmatprep.subr.bf16.mxu0 0
    %461 = vmatpush1.bf16.msra.mxu0 %v440
    %462 = vmatprep.subr.bf16.mxu0 0
    %463 = vmatpush1.bf16.msra.mxu0 %v441
    %464 = vmatprep.subr.bf16.mxu0 0
    %465 = vmatpush1.bf16.msra.mxu0 %v442
    %466 = vmatprep.subr.bf16.mxu0 0
    %467 = vmatpush1.bf16.msra.mxu0 %v443
    %468 = vmatprep.subr.bf16.mxu0 0
    %469 = vmatpush1.bf16.msra.mxu0 0
    %470 = vmatprep.subr.bf16.mxu0 0
    %471 = vmatpush1.bf16.msra.mxu0 0
    %472 = vmatprep.subr.bf16.mxu0 0
    %473 = vmatpush1.bf16.msra.mxu0 0
    %474 = vmatprep.subr.bf16.mxu0 0
    %475 = vmatpush1.bf16.msra.mxu0 0
    %476 = vmatprep.subr.bf16.mxu0 0
    %477 = vmatpush1.bf16.msra.mxu0 0
    %478 = vmatprep.subr.bf16.mxu0 0
    %479 = vmatpush1.bf16.msra.mxu0 0
    %480 = vmatprep.subr.bf16.mxu0 0
    %481 = vmatpush1.bf16.msra.mxu0 0
    %482 = vmatprep.subr.bf16.mxu0 0
    %483 = vmatpush1.bf16.msra.mxu0 0
    %484 = vmatprep.mubr.bf16.mxu0 0
    %485 = vmatmul.mubr.bf16.gmra.mrb[0].mxu0 %v377
    %v486 = vpop.f32.mrb[0].mxu0
    %v487 = vadd.f32 0.0, %v486
    %v488 = vpop.f32.mrb[0].mxu0
    %v489 = vpop.f32.mrb[0].mxu0
    %v490 = vadd.f32 0.0, %v489
    %v491 = vpop.f32.mrb[0].mxu0
    %492 = vmatprep.mubr.bf16.mxu0 0
    %493 = vmatmul.mubr.bf16.gmra.mrb[0].mxu0 %v378
    %v494 = vpop.f32.mrb[0].mxu0
    %v495 = vadd.f32 0.0, %v494
    %v496 = vpop.f32.mrb[0].mxu0
    %v497 = vpop.f32.mrb[0].mxu0
    %v498 = vadd.f32 0.0, %v497
    %v499 = vpop.f32.mrb[0].mxu0
    %500 = vmatprep.mubr.bf16.mxu0 0
    %501 = vmatmul.mubr.bf16.gmra.mrb[0].mxu0 %v379
    %v502 = vpop.f32.mrb[0].mxu0
    %v503 = vadd.f32 0.0, %v502
    %v504 = vpop.f32.mrb[0].mxu0
    %v505 = vpop.f32.mrb[0].mxu0
    %v506 = vadd.f32 0.0, %v505
    %v507 = vpop.f32.mrb[0].mxu0
    %508 = vmatprep.mubr.bf16.mxu0 0
    %509 = vmatmul.mubr.bf16.gmra.mrb[0].mxu0 %v380
    %v510 = vpop.f32.mrb[0].mxu0
    %v511 = vadd.f32 0.0, %v510
    %v512 = vpop.f32.mrb[0].mxu0
    %v513 = vpop.f32.mrb[0].mxu0
    %v514 = vadd.f32 0.0, %v513
    %v515 = vpop.f32.mrb[0].mxu0
    %516 = vmatprep.mubr.bf16.mxu0 0
    %517 = vmatmul.mubr.bf16.gmra.mrb[0].mxu0 %v381
    %v518 = vpop.f32.mrb[0].mxu0
    %v519 = vadd.f32 0.0, %v518
    %v520 = vpop.f32.mrb[0].mxu0
    %v521 = vpop.f32.mrb[0].mxu0
    %v522 = vadd.f32 0.0, %v521
    %v523 = vpop.f32.mrb[0].mxu0
    %524 = vmatprep.mubr.bf16.mxu0 0
    %525 = vmatmul.mubr.bf16.gmra.mrb[0].mxu0 %v382
    %v526 = vpop.f32.mrb[0].mxu0
    %v527 = vadd.f32 0.0, %v526
    %v528 = vpop.f32.mrb[0].mxu0
    %v529 = vpop.f32.mrb[0].mxu0
    %v530 = vadd.f32 0.0, %v529
    %v531 = vpop.f32.mrb[0].mxu0
    %532 = vmatprep.mubr.bf16.mxu0 0
    %533 = vmatmul.mubr.bf16.gmra.mrb[0].mxu0 %v383
    %v534 = vpop.f32.mrb[0].mxu0
    %v535 = vadd.f32 0.0, %v534
    %v536 = vpop.f32.mrb[0].mxu0
    %v537 = vpop.f32.mrb[0].mxu0
    %v538 = vadd.f32 0.0, %v537
    %v539 = vpop.f32.mrb[0].mxu0
    %540 = vmatprep.mubr.bf16.mxu0 0
    %541 = vmatmul.mubr.bf16.gmra.mrb[0].mxu0 %v384
    %v542 = vpop.f32.mrb[0].mxu0
    %v543 = vadd.f32 0.0, %v542
    %v544 = vpop.f32.mrb[0].mxu0
    %v545 = vpop.f32.mrb[0].mxu0
    %v546 = vadd.f32 0.0, %v545
    %v547 = vpop.f32.mrb[0].mxu0
    %548 = vdwg.mxu0
    %v549 = vrcp.pop %v346
    %v550 = vrcp.pop %v348
    %v551 = vrcp.pop %v350
    %v552 = vrcp.pop %v352
    %v553 = vrcp.pop %v354
    %v554 = vrcp.pop %v356
    %v555 = vrcp.pop %v358
    %v556 = vrcp.pop %v360
    %v557 = vrcp.pop %v362
    %v558 = vrcp.pop %v364
    %v559 = vrcp.pop %v366
    %v560 = vrcp.pop %v368
    %v561 = vrcp.pop %v370
    %v562 = vrcp.pop %v372
    %v563 = vrcp.pop %v374
    %v564 = vrcp.pop %v376
    %v565 = vmul.f32 %v487, %v549
    %v566 = vmul.f32 %v490, %v550
    %v567 = vmul.f32 %v495, %v551
    %v568 = vmul.f32 %v498, %v552
    %v569 = vmul.f32 %v503, %v553
    %v570 = vmul.f32 %v506, %v554
    %v571 = vmul.f32 %v511, %v555
    %v572 = vmul.f32 %v514, %v556
    %v573 = vmul.f32 %v519, %v557
    %v574 = vmul.f32 %v522, %v558
    %v575 = vmul.f32 %v527, %v559
    %v576 = vmul.f32 %v530, %v560
    %v577 = vmul.f32 %v535, %v561
    %v578 = vmul.f32 %v538, %v562
    %v579 = vmul.f32 %v543, %v563
    %v580 = vmul.f32 %v546, %v564
    %s581 = scalar_lea.vmem %s4, %s90
    %v582 = vld [vmem:[%s581] sm:$0x1]
    %v584 = vlaneseq
    %v585 = vshrl.u32 %v584, 7
    %v586 = vsub.s32 0, %v585
    %v587 = vrot.slane %v582, %v586
    %v589 = vadd.f32 %v565, %v587
    %v590 = vadd.f32 %v566, %v587
    %v591 = vadd.f32 %v567, %v587
    %v592 = vadd.f32 %v568, %v587
    %v593 = vadd.f32 %v569, %v587
    %v594 = vadd.f32 %v570, %v587
    %v595 = vadd.f32 %v571, %v587
    %v596 = vadd.f32 %v572, %v587
    %v597 = vadd.f32 %v573, %v587
    %v598 = vadd.f32 %v574, %v587
    %v599 = vadd.f32 %v575, %v587
    %v600 = vadd.f32 %v576, %v587
    %v601 = vadd.f32 %v577, %v587
    %v602 = vadd.f32 %v578, %v587
    %v603 = vadd.f32 %v579, %v587
    %v604 = vadd.f32 %v580, %v587
    %vm605 = vcmp.gt.f32.partialorder %v589, 0.0
    %vm606 = vcmp.gt.f32.partialorder %v590, 0.0
    %vm607 = vcmp.gt.f32.partialorder %v591, 0.0
    %vm608 = vcmp.gt.f32.partialorder %v592, 0.0
    %vm609 = vcmp.gt.f32.partialorder %v593, 0.0
    %vm610 = vcmp.gt.f32.partialorder %v594, 0.0
    %vm611 = vcmp.gt.f32.partialorder %v595, 0.0
    %vm612 = vcmp.gt.f32.partialorder %v596, 0.0
    %vm613 = vcmp.gt.f32.partialorder %v597, 0.0
    %vm614 = vcmp.gt.f32.partialorder %v598, 0.0
    %vm615 = vcmp.gt.f32.partialorder %v599, 0.0
    %vm616 = vcmp.gt.f32.partialorder %v600, 0.0
    %vm617 = vcmp.gt.f32.partialorder %v601, 0.0
    %vm618 = vcmp.gt.f32.partialorder %v602, 0.0
    %vm619 = vcmp.gt.f32.partialorder %v603, 0.0
    %vm620 = vcmp.gt.f32.partialorder %v604, 0.0
    %v621 = vmul.f32 %v589, 1.442695
    %v622 = vpow.pop %v621
    %v623 = vmul.f32 %v590, 1.442695
    %v624 = vpow.pop %v623
    %v625 = vmul.f32 %v591, 1.442695
    %v626 = vpow.pop %v625
    %v627 = vmul.f32 %v592, 1.442695
    %v628 = vpow.pop %v627
    %v629 = vmul.f32 %v593, 1.442695
    %v630 = vpow.pop %v629
    %v631 = vmul.f32 %v594, 1.442695
    %v632 = vpow.pop %v631
    %v633 = vmul.f32 %v595, 1.442695
    %v634 = vpow.pop %v633
    %v635 = vmul.f32 %v596, 1.442695
    %v636 = vpow.pop %v635
    %v637 = vmul.f32 %v597, 1.442695
    %v638 = vpow.pop %v637
    %v639 = vmul.f32 %v598, 1.442695
    %v640 = vpow.pop %v639
    %v641 = vmul.f32 %v599, 1.442695
    %v642 = vpow.pop %v641
    %v643 = vmul.f32 %v600, 1.442695
    %v644 = vpow.pop %v643
    %v645 = vmul.f32 %v601, 1.442695
    %v646 = vpow.pop %v645
    %v647 = vmul.f32 %v602, 1.442695
    %v648 = vpow.pop %v647
    %v649 = vmul.f32 %v603, 1.442695
    %v650 = vpow.pop %v649
    %v651 = vmul.f32 %v604, 1.442695
    %v652 = vpow.pop %v651
    %v653 = vsub.f32 %v622, 1.0
    %v654 = vsub.f32 %v624, 1.0
    %v655 = vsub.f32 %v626, 1.0
    %v656 = vsub.f32 %v628, 1.0
    %v657 = vsub.f32 %v630, 1.0
    %v658 = vsub.f32 %v632, 1.0
    %v659 = vsub.f32 %v634, 1.0
    %v660 = vsub.f32 %v636, 1.0
    %v661 = vsub.f32 %v638, 1.0
    %v662 = vsub.f32 %v640, 1.0
    %v663 = vsub.f32 %v642, 1.0
    %v664 = vsub.f32 %v644, 1.0
    %v665 = vsub.f32 %v646, 1.0
    %v666 = vsub.f32 %v648, 1.0
    %v667 = vsub.f32 %v650, 1.0
    %v668 = vsub.f32 %v652, 1.0
    %v669 = vsel %vm605, %v589, %v653
    %v670 = vsel %vm606, %v590, %v654
    %v671 = vsel %vm607, %v591, %v655
    %v672 = vsel %vm608, %v592, %v656
    %v673 = vsel %vm609, %v593, %v657
    %v674 = vsel %vm610, %v594, %v658
    %v675 = vsel %vm611, %v595, %v659
    %v676 = vsel %vm612, %v596, %v660
    %v677 = vsel %vm613, %v597, %v661
    %v678 = vsel %vm614, %v598, %v662
    %v679 = vsel %vm615, %v599, %v663
    %v680 = vsel %vm616, %v600, %v664
    %v681 = vsel %vm617, %v601, %v665
    %v682 = vsel %vm618, %v602, %v666
    %v683 = vsel %vm619, %v603, %v667
    %v684 = vsel %vm620, %v604, %v668
    %v685 = vpack.c.bf16 %v670, %v669
    %v686 = vpack.c.bf16 %v672, %v671
    %v687 = vpack.c.bf16 %v674, %v673
    %v688 = vpack.c.bf16 %v676, %v675
    %v689 = vpack.c.bf16 %v678, %v677
    %v690 = vpack.c.bf16 %v680, %v679
    %v691 = vpack.c.bf16 %v682, %v681
    %v692 = vpack.c.bf16 %v684, %v683
    %v701 = vunpack.c.l.b16 %v685
    %v702 = vunpack.c.h.b16 %v685
    %v703 = vunpack.c.l.b16 %v686
    %v704 = vunpack.c.h.b16 %v686
    %v705 = vunpack.c.l.b16 %v687
    %v706 = vunpack.c.h.b16 %v687
    %v707 = vunpack.c.l.b16 %v688
    %v708 = vunpack.c.h.b16 %v688
    %v709 = vunpack.c.l.b16 %v689
    %v710 = vunpack.c.h.b16 %v689
    %v711 = vunpack.c.l.b16 %v690
    %v712 = vunpack.c.h.b16 %v690
    %v713 = vunpack.c.l.b16 %v691
    %v714 = vunpack.c.h.b16 %v691
    %v715 = vunpack.c.l.b16 %v692
    %v716 = vunpack.c.h.b16 %v692
    %v717 = vpack.c.b16 %v701, %v701
    %v718 = vpack.c.b16 %v702, %v702
    %v719 = vpack.c.b16 %v703, %v703
    %v720 = vpack.c.b16 %v704, %v704
    %v721 = vpack.c.b16 %v705, %v705
    %v722 = vpack.c.b16 %v706, %v706
    %v723 = vpack.c.b16 %v707, %v707
    %v724 = vpack.c.b16 %v708, %v708
    %v725 = vpack.c.b16 %v709, %v709
    %v726 = vpack.c.b16 %v710, %v710
    %v727 = vpack.c.b16 %v711, %v711
    %v728 = vpack.c.b16 %v712, %v712
    %v729 = vpack.c.b16 %v713, %v713
    %v730 = vpack.c.b16 %v714, %v714
    %v731 = vpack.c.b16 %v715, %v715
    %v732 = vpack.c.b16 %v716, %v716
    %s749 = smul.addr %s385, 4
    %s750 = scalar_lea.vmem %s5, %s749
    %751 = vst [vmem:[%s750] sm:$0xf] %v717
    %752 = vst [vmem:[%s750 + $0x4] sm:$0xf] %v718
    %753 = vst [vmem:[%s750 + $0x8] sm:$0xf] %v719
    %754 = vst [vmem:[%s750 + $0xc] sm:$0xf] %v720
    %755 = vst [vmem:[%s750 + $0x10] sm:$0xf] %v721
    %756 = vst [vmem:[%s750 + $0x14] sm:$0xf] %v722
    %757 = vst [vmem:[%s750 + $0x18] sm:$0xf] %v723
    %758 = vst [vmem:[%s750 + $0x1c] sm:$0xf] %v724
    %759 = vst [vmem:[%s750 + $0x20] sm:$0xf] %v725
    %760 = vst [vmem:[%s750 + $0x24] sm:$0xf] %v726
    %761 = vst [vmem:[%s750 + $0x28] sm:$0xf] %v727
    %762 = vst [vmem:[%s750 + $0x2c] sm:$0xf] %v728
    %763 = vst [vmem:[%s750 + $0x30] sm:$0xf] %v729
    %764 = vst [vmem:[%s750 + $0x34] sm:$0xf] %v730
    %765 = vst [vmem:[%s750 + $0x38] sm:$0xf] %v731
    %766 = vst [vmem:[%s750 + $0x3c] sm:$0xf] %v732
  $region26: #{gat_model_forward.6} parent=0 // loop_footer
    %s94 = sadd.s32 1, %s90
  $region27: #{gat_model_forward.6} parent=0 // loop_footer_branch
    %89 = sbr.rel target = $region23
  $region28: #{gat_model_forward.6} parent=0 // loop_exit
    _
  // Predicated region
  $region29: #{gat_model_forward.6} parent=0 // pred_check
    _
  $region30: #{gat_model_forward.6} parent=0 // pred_check_branch
    %768 = sbr.rel (0) target = $region32
  $region31: #{gat_model_forward.6} parent=0 // pred_region
    _
  $region32: #{gat_model_forward.6} parent=0 // pred_fallthru
    _
  // Predicated region
  $region33: #{gat_model_forward.6} parent=0 // pred_check
    _
  $region34: #{gat_model_forward.6} parent=0 // pred_check_branch
    %770 = sbr.rel (0) target = $region36
  $region35: #{gat_model_forward.6} parent=0 // pred_region
    _
  $region36: #{gat_model_forward.6} parent=0 // pred_fallthru
    _

// kernel: gat_model_forward.5
$region0: #{gat_model_forward.5}
  #allocation0 [shape = 'u32[]', space=smem, size = 0x4, offset = 0x4, fixed_abs, tag = 'smem constant byte address 0x4 - core index']
  #allocation1 [shape = 'u32[144,128]{1,0:T(1,128)}', space=vmem, size = 0x12000, scoped, tag = 'internal scratch']
  %s0 = inlined_call_operand.vmem [shape: bf16[1,128,128], index: 0, kind: input, shape index: {}]
  %s1 = inlined_call_operand.vmem [shape: bf16[1,4,128,128], index: 1, kind: input, shape index: {}]
  %s2 = inlined_call_operand.vmem [shape: bf16[4,128,2], index: 2, kind: input, shape index: {}]
  %s3 = inlined_call_operand.vmem [shape: bf16[4,128,128], index: 3, kind: output, shape index: {0}]
  %s4 = inlined_call_operand.vmem [shape: f32[4,128,2], index: 4, kind: output, shape index: {1}]
  %5 = xla_tuple %s3, %s4
  %s6 = sld [smem:[#allocation0]]
  $region30: #{gat_model_forward.5} parent=0
    _
  %s8 = ssub.s32 1, %s6
  %s9 = scalar_select 0, %s8, %s6
  // Predicated region
  $region2: #{gat_model_forward.5} parent=0 // pred_check
    _
  $region3: #{gat_model_forward.5} parent=0 // pred_check_branch
    %11 = sbr.rel (0) target = $region5
  $region4: #{gat_model_forward.5} parent=0 // pred_region
    _
  $region5: #{gat_model_forward.5} parent=0 // pred_fallthru
    _
  // Predicated region
  $region6: #{gat_model_forward.5} parent=0 // pred_check
    _
  $region7: #{gat_model_forward.5} parent=0 // pred_check_branch
    %13 = sbr.rel (0) target = $region9
  $region8: #{gat_model_forward.5} parent=0 // pred_region
    _
  $region9: #{gat_model_forward.5} parent=0 // pred_fallthru
    _
  // Predicated region
  $region10: #{gat_model_forward.5} parent=0 // pred_check
    _
  $region11: #{gat_model_forward.5} parent=0 // pred_check_branch
    %15 = sbr.rel (0) target = $region13
  $region12: #{gat_model_forward.5} parent=0 // pred_region
    _
  $region13: #{gat_model_forward.5} parent=0 // pred_fallthru
    _
  %v17 = vld [vmem:[%s0] sm:$0xf]
  %v18 = vld [vmem:[%s0 + $0x4] sm:$0xf]
  %v19 = vld [vmem:[%s0 + $0x8] sm:$0xf]
  %v20 = vld [vmem:[%s0 + $0xc] sm:$0xf]
  %v21 = vld [vmem:[%s0 + $0x10] sm:$0xf]
  %v22 = vld [vmem:[%s0 + $0x14] sm:$0xf]
  %v23 = vld [vmem:[%s0 + $0x18] sm:$0xf]
  %v24 = vld [vmem:[%s0 + $0x1c] sm:$0xf]
  %v25 = vld [vmem:[%s0 + $0x20] sm:$0xf]
  %v26 = vld [vmem:[%s0 + $0x24] sm:$0xf]
  %v27 = vld [vmem:[%s0 + $0x28] sm:$0xf]
  %v28 = vld [vmem:[%s0 + $0x2c] sm:$0xf]
  %v29 = vld [vmem:[%s0 + $0x30] sm:$0xf]
  %v30 = vld [vmem:[%s0 + $0x34] sm:$0xf]
  %v31 = vld [vmem:[%s0 + $0x38] sm:$0xf]
  %v32 = vld [vmem:[%s0 + $0x3c] sm:$0xf]
  %v33 = vld [vmem:[%s1] sm:$0xf]
  %v34 = vld [vmem:[%s1 + $0x4] sm:$0xf]
  %v35 = vld [vmem:[%s1 + $0x8] sm:$0xf]
  %v36 = vld [vmem:[%s1 + $0xc] sm:$0xf]
  %v37 = vld [vmem:[%s1 + $0x10] sm:$0xf]
  %v38 = vld [vmem:[%s1 + $0x14] sm:$0xf]
  %v39 = vld [vmem:[%s1 + $0x18] sm:$0xf]
  %v40 = vld [vmem:[%s1 + $0x1c] sm:$0xf]
  %v41 = vld [vmem:[%s1 + $0x20] sm:$0xf]
  %v42 = vld [vmem:[%s1 + $0x24] sm:$0xf]
  %v43 = vld [vmem:[%s1 + $0x28] sm:$0xf]
  %v44 = vld [vmem:[%s1 + $0x2c] sm:$0xf]
  %v45 = vld [vmem:[%s1 + $0x30] sm:$0xf]
  %v46 = vld [vmem:[%s1 + $0x34] sm:$0xf]
  %v47 = vld [vmem:[%s1 + $0x38] sm:$0xf]
  %v48 = vld [vmem:[%s1 + $0x3c] sm:$0xf]
  %v65 = vunpack.c.l.b16 %v17
  %v66 = vunpack.c.l.b16 %v18
  %v67 = vunpack.c.l.b16 %v19
  %v68 = vunpack.c.l.b16 %v20
  %v69 = vunpack.c.l.b16 %v21
  %v70 = vunpack.c.l.b16 %v22
  %v71 = vunpack.c.l.b16 %v23
  %v72 = vunpack.c.l.b16 %v24
  %v73 = vunpack.c.l.b16 %v25
  %v74 = vunpack.c.l.b16 %v26
  %v75 = vunpack.c.l.b16 %v27
  %v76 = vunpack.c.l.b16 %v28
  %v77 = vunpack.c.l.b16 %v29
  %v78 = vunpack.c.l.b16 %v30
  %v79 = vunpack.c.l.b16 %v31
  %v80 = vunpack.c.l.b16 %v32
  %v81 = vpack.c.b16 %v66, %v65
  %v82 = vpack.c.b16 %v68, %v67
  %v83 = vpack.c.b16 %v70, %v69
  %v84 = vpack.c.b16 %v72, %v71
  %v85 = vpack.c.b16 %v74, %v73
  %v86 = vpack.c.b16 %v76, %v75
  %v87 = vpack.c.b16 %v78, %v77
  %v88 = vpack.c.b16 %v80, %v79
  %v113 = vunpack.c.l.b16 %v33
  %v114 = vunpack.c.l.b16 %v34
  %v115 = vunpack.c.l.b16 %v35
  %v116 = vunpack.c.l.b16 %v36
  %v117 = vunpack.c.l.b16 %v37
  %v118 = vunpack.c.l.b16 %v38
  %v119 = vunpack.c.l.b16 %v39
  %v120 = vunpack.c.l.b16 %v40
  %v121 = vunpack.c.l.b16 %v41
  %v122 = vunpack.c.l.b16 %v42
  %v123 = vunpack.c.l.b16 %v43
  %v124 = vunpack.c.l.b16 %v44
  %v125 = vunpack.c.l.b16 %v45
  %v126 = vunpack.c.l.b16 %v46
  %v127 = vunpack.c.l.b16 %v47
  %v128 = vunpack.c.l.b16 %v48
  %v129 = vpack.c.b16 %v114, %v113
  %v130 = vpack.c.b16 %v116, %v115
  %v131 = vpack.c.b16 %v118, %v117
  %v132 = vpack.c.b16 %v120, %v119
  %v133 = vpack.c.b16 %v122, %v121
  %v134 = vpack.c.b16 %v124, %v123
  %v135 = vpack.c.b16 %v126, %v125
  %v136 = vpack.c.b16 %v128, %v127
  %145 = vmatprep.subr.bf16.mxu0 0
  %146 = vmatpush1.bf16.msra.mxu0 %v129
  %147 = vmatprep.subr.bf16.mxu0 0
  %148 = vmatpush1.bf16.msra.mxu0 %v130
  %149 = vmatprep.subr.bf16.mxu0 0
  %150 = vmatpush1.bf16.msra.mxu0 %v131
  %151 = vmatprep.subr.bf16.mxu0 0
  %152 = vmatpush1.bf16.msra.mxu0 %v132
  %153 = vmatprep.subr.bf16.mxu0 0
  %154 = vmatpush1.bf16.msra.mxu0 %v133
  %155 = vmatprep.subr.bf16.mxu0 0
  %156 = vmatpush1.bf16.msra.mxu0 %v134
  %157 = vmatprep.subr.bf16.mxu0 0
  %158 = vmatpush1.bf16.msra.mxu0 %v135
  %159 = vmatprep.subr.bf16.mxu0 0
  %160 = vmatpush1.bf16.msra.mxu0 %v136
  %161 = vmatprep.subr.bf16.mxu0 0
  %162 = vmatpush1.bf16.msra.mxu0 0
  %163 = vmatprep.subr.bf16.mxu0 0
  %164 = vmatpush1.bf16.msra.mxu0 0
  %165 = vmatprep.subr.bf16.mxu0 0
  %166 = vmatpush1.bf16.msra.mxu0 0
  %167 = vmatprep.subr.bf16.mxu0 0
  %168 = vmatpush1.bf16.msra.mxu0 0
  %169 = vmatprep.subr.bf16.mxu0 0
  %170 = vmatpush1.bf16.msra.mxu0 0
  %171 = vmatprep.subr.bf16.mxu0 0
  %172 = vmatpush1.bf16.msra.mxu0 0
  %173 = vmatprep.subr.bf16.mxu0 0
  %174 = vmatpush1.bf16.msra.mxu0 0
  %175 = vmatprep.subr.bf16.mxu0 0
  %176 = vmatpush1.bf16.msra.mxu0 0
  %177 = vmatprep.mubr.bf16.mxu0 0
  %178 = vmatmul.mubr.bf16.gmra.mrb[0].mxu0 %v81
  %v179 = vpop.f32.mrb[0].mxu0
  %v180 = vadd.f32 0.0, %v179
  %v181 = vpop.f32.mrb[0].mxu0
  %v182 = vpop.f32.mrb[0].mxu0
  %v183 = vadd.f32 0.0, %v182
  %v184 = vpop.f32.mrb[0].mxu0
  %185 = vmatprep.mubr.bf16.mxu0 0
  %186 = vmatmul.mubr.bf16.gmra.mrb[0].mxu0 %v82
  %v187 = vpop.f32.mrb[0].mxu0
  %v188 = vadd.f32 0.0, %v187
  %v189 = vpop.f32.mrb[0].mxu0
  %v190 = vpop.f32.mrb[0].mxu0
  %v191 = vadd.f32 0.0, %v190
  %v192 = vpop.f32.mrb[0].mxu0
  %193 = vmatprep.mubr.bf16.mxu0 0
  %194 = vmatmul.mubr.bf16.gmra.mrb[0].mxu0 %v83
  %v195 = vpop.f32.mrb[0].mxu0
  %v196 = vadd.f32 0.0, %v195
  %v197 = vpop.f32.mrb[0].mxu0
  %v198 = vpop.f32.mrb[0].mxu0
  %v199 = vadd.f32 0.0, %v198
  %v200 = vpop.f32.mrb[0].mxu0
  %201 = vmatprep.mubr.bf16.mxu0 0
  %202 = vmatmul.mubr.bf16.gmra.mrb[0].mxu0 %v84
  %v203 = vpop.f32.mrb[0].mxu0
  %v204 = vadd.f32 0.0, %v203
  %v205 = vpop.f32.mrb[0].mxu0
  %v206 = vpop.f32.mrb[0].mxu0
  %v207 = vadd.f32 0.0, %v206
  %v208 = vpop.f32.mrb[0].mxu0
  %209 = vmatprep.mubr.bf16.mxu0 0
  %210 = vmatmul.mubr.bf16.gmra.mrb[0].mxu0 %v85
  %v211 = vpop.f32.mrb[0].mxu0
  %v212 = vadd.f32 0.0, %v211
  %v213 = vpop.f32.mrb[0].mxu0
  %v214 = vpop.f32.mrb[0].mxu0
  %v215 = vadd.f32 0.0, %v214
  %v216 = vpop.f32.mrb[0].mxu0
  %217 = vmatprep.mubr.bf16.mxu0 0
  %218 = vmatmul.mubr.bf16.gmra.mrb[0].mxu0 %v86
  %v219 = vpop.f32.mrb[0].mxu0
  %v220 = vadd.f32 0.0, %v219
  %v221 = vpop.f32.mrb[0].mxu0
  %v222 = vpop.f32.mrb[0].mxu0
  %v223 = vadd.f32 0.0, %v222
  %v224 = vpop.f32.mrb[0].mxu0
  %225 = vmatprep.mubr.bf16.mxu0 0
  %226 = vmatmul.mubr.bf16.gmra.mrb[0].mxu0 %v87
  %v227 = vpop.f32.mrb[0].mxu0
  %v228 = vadd.f32 0.0, %v227
  %v229 = vpop.f32.mrb[0].mxu0
  %v230 = vpop.f32.mrb[0].mxu0
  %v231 = vadd.f32 0.0, %v230
  %v232 = vpop.f32.mrb[0].mxu0
  %233 = vmatprep.mubr.bf16.mxu0 0
  %234 = vmatmul.mubr.bf16.gmra.mrb[0].mxu0 %v88
  %v235 = vpop.f32.mrb[0].mxu0
  %v236 = vadd.f32 0.0, %v235
  %v237 = vpop.f32.mrb[0].mxu0
  %v238 = vpop.f32.mrb[0].mxu0
  %v239 = vadd.f32 0.0, %v238
  %v240 = vpop.f32.mrb[0].mxu0
  %241 = vdwg.mxu0
  %v242 = vpack.c.bf16 %v183, %v180
  %v243 = vpack.c.bf16 %v191, %v188
  %v244 = vpack.c.bf16 %v199, %v196
  %v245 = vpack.c.bf16 %v207, %v204
  %v246 = vpack.c.bf16 %v215, %v212
  %v247 = vpack.c.bf16 %v223, %v220
  %v248 = vpack.c.bf16 %v231, %v228
  %v249 = vpack.c.bf16 %v239, %v236
  %v258 = vunpack.c.l.b16 %v242
  %v259 = vunpack.c.h.b16 %v242
  %v260 = vunpack.c.l.b16 %v243
  %v261 = vunpack.c.h.b16 %v243
  %v262 = vunpack.c.l.b16 %v244
  %v263 = vunpack.c.h.b16 %v244
  %v264 = vunpack.c.l.b16 %v245
  %v265 = vunpack.c.h.b16 %v245
  %v266 = vunpack.c.l.b16 %v246
  %v267 = vunpack.c.h.b16 %v246
  %v268 = vunpack.c.l.b16 %v247
  %v269 = vunpack.c.h.b16 %v247
  %v270 = vunpack.c.l.b16 %v248
  %v271 = vunpack.c.h.b16 %v248
  %v272 = vunpack.c.l.b16 %v249
  %v273 = vunpack.c.h.b16 %v249
  %v274 = vpack.c.b16 %v258, %v258
  %v275 = vpack.c.b16 %v259, %v259
  %v276 = vpack.c.b16 %v260, %v260
  %v277 = vpack.c.b16 %v261, %v261
  %v278 = vpack.c.b16 %v262, %v262
  %v279 = vpack.c.b16 %v263, %v263
  %v280 = vpack.c.b16 %v264, %v264
  %v281 = vpack.c.b16 %v265, %v265
  %v282 = vpack.c.b16 %v266, %v266
  %v283 = vpack.c.b16 %v267, %v267
  %v284 = vpack.c.b16 %v268, %v268
  %v285 = vpack.c.b16 %v269, %v269
  %v286 = vpack.c.b16 %v270, %v270
  %v287 = vpack.c.b16 %v271, %v271
  %v288 = vpack.c.b16 %v272, %v272
  %v289 = vpack.c.b16 %v273, %v273
  %306 = vst [vmem:[%s3] sm:$0xf] %v274
  %307 = vst [vmem:[%s3 + $0x4] sm:$0xf] %v275
  %308 = vst [vmem:[%s3 + $0x8] sm:$0xf] %v276
  %309 = vst [vmem:[%s3 + $0xc] sm:$0xf] %v277
  %310 = vst [vmem:[%s3 + $0x10] sm:$0xf] %v278
  %311 = vst [vmem:[%s3 + $0x14] sm:$0xf] %v279
  %312 = vst [vmem:[%s3 + $0x18] sm:$0xf] %v280
  %313 = vst [vmem:[%s3 + $0x1c] sm:$0xf] %v281
  %314 = vst [vmem:[%s3 + $0x20] sm:$0xf] %v282
  %315 = vst [vmem:[%s3 + $0x24] sm:$0xf] %v283
  %316 = vst [vmem:[%s3 + $0x28] sm:$0xf] %v284
  %317 = vst [vmem:[%s3 + $0x2c] sm:$0xf] %v285
  %318 = vst [vmem:[%s3 + $0x30] sm:$0xf] %v286
  %319 = vst [vmem:[%s3 + $0x34] sm:$0xf] %v287
  %320 = vst [vmem:[%s3 + $0x38] sm:$0xf] %v288
  %321 = vst [vmem:[%s3 + $0x3c] sm:$0xf] %v289
  %v322 = vld [vmem:[%s2] sm:$0xf]
  %v323 = vld [vmem:[%s2 + $0x4] sm:$0xf]
  %v324 = vld [vmem:[%s2 + $0x8] sm:$0xf]
  %v325 = vld [vmem:[%s2 + $0xc] sm:$0xf]
  %v326 = vld [vmem:[%s2 + $0x10] sm:$0xf]
  %v327 = vld [vmem:[%s2 + $0x14] sm:$0xf]
  %v328 = vld [vmem:[%s2 + $0x18] sm:$0xf]
  %v329 = vld [vmem:[%s2 + $0x1c] sm:$0xf]
  %v330 = vld [vmem:[%s2 + $0x20] sm:$0xf]
  %v331 = vld [vmem:[%s2 + $0x24] sm:$0xf]
  %v332 = vld [vmem:[%s2 + $0x28] sm:$0xf]
  %v333 = vld [vmem:[%s2 + $0x2c] sm:$0xf]
  %v334 = vld [vmem:[%s2 + $0x30] sm:$0xf]
  %v335 = vld [vmem:[%s2 + $0x34] sm:$0xf]
  %v336 = vld [vmem:[%s2 + $0x38] sm:$0xf]
  %v337 = vld [vmem:[%s2 + $0x3c] sm:$0xf]
  %v354 = vunpack.c.l.b16 %v322
  %v355 = vunpack.c.l.b16 %v323
  %v356 = vunpack.c.l.b16 %v324
  %v357 = vunpack.c.l.b16 %v325
  %v358 = vunpack.c.l.b16 %v326
  %v359 = vunpack.c.l.b16 %v327
  %v360 = vunpack.c.l.b16 %v328
  %v361 = vunpack.c.l.b16 %v329
  %v362 = vunpack.c.l.b16 %v330
  %v363 = vunpack.c.l.b16 %v331
  %v364 = vunpack.c.l.b16 %v332
  %v365 = vunpack.c.l.b16 %v333
  %v366 = vunpack.c.l.b16 %v334
  %v367 = vunpack.c.l.b16 %v335
  %v368 = vunpack.c.l.b16 %v336
  %v369 = vunpack.c.l.b16 %v337
  %v370 = vpack.c.b16 %v355, %v354
  %v371 = vpack.c.b16 %v357, %v356
  %v372 = vpack.c.b16 %v359, %v358
  %v373 = vpack.c.b16 %v361, %v360
  %v374 = vpack.c.b16 %v363, %v362
  %v375 = vpack.c.b16 %v365, %v364
  %v376 = vpack.c.b16 %v367, %v366
  %v377 = vpack.c.b16 %v369, %v368
  %386 = vmatprep.subr.bf16.mxu0 0
  %387 = vmatpush1.bf16.msra.mxu0 %v370
  %388 = vmatprep.subr.bf16.mxu0 0
  %389 = vmatpush1.bf16.msra.mxu0 %v371
  %390 = vmatprep.subr.bf16.mxu0 0
  %391 = vmatpush1.bf16.msra.mxu0 %v372
  %392 = vmatprep.subr.bf16.mxu0 0
  %393 = vmatpush1.bf16.msra.mxu0 %v373
  %394 = vmatprep.subr.bf16.mxu0 0
  %395 = vmatpush1.bf16.msra.mxu0 %v374
  %396 = vmatprep.subr.bf16.mxu0 0
  %397 = vmatpush1.bf16.msra.mxu0 %v375
  %398 = vmatprep.subr.bf16.mxu0 0
  %399 = vmatpush1.bf16.msra.mxu0 %v376
  %400 = vmatprep.subr.bf16.mxu0 0
  %401 = vmatpush1.bf16.msra.mxu0 %v377
  %402 = vmatprep.subr.bf16.mxu0 0
  %403 = vmatpush1.bf16.msra.mxu0 0
  %404 = vmatprep.subr.bf16.mxu0 0
  %405 = vmatpush1.bf16.msra.mxu0 0
  %406 = vmatprep.subr.bf16.mxu0 0
  %407 = vmatpush1.bf16.msra.mxu0 0
  %408 = vmatprep.subr.bf16.mxu0 0
  %409 = vmatpush1.bf16.msra.mxu0 0
  %410 = vmatprep.subr.bf16.mxu0 0
  %411 = vmatpush1.bf16.msra.mxu0 0
  %412 = vmatprep.subr.bf16.mxu0 0
  %413 = vmatpush1.bf16.msra.mxu0 0
  %414 = vmatprep.subr.bf16.mxu0 0
  %415 = vmatpush1.bf16.msra.mxu0 0
  %416 = vmatprep.subr.bf16.mxu0 0
  %417 = vmatpush1.bf16.msra.mxu0 0
  %418 = vmatprep.mubr.bf16.mxu0 0
  %419 = vmatmul.mubr.bf16.gmra.mrb[0].mxu0 %v242
  %v420 = vpop.f32.mrb[0].mxu0
  %v421 = vadd.f32 0.0, %v420
  %v422 = vpop.f32.mrb[0].mxu0
  %v423 = vpop.f32.mrb[0].mxu0
  %v424 = vadd.f32 0.0, %v423
  %v425 = vpop.f32.mrb[0].mxu0
  %426 = vmatprep.mubr.bf16.mxu0 0
  %427 = vmatmul.mubr.bf16.gmra.mrb[0].mxu0 %v243
  %v428 = vpop.f32.mrb[0].mxu0
  %v429 = vadd.f32 0.0, %v428
  %v430 = vpop.f32.mrb[0].mxu0
  %v431 = vpop.f32.mrb[0].mxu0
  %v432 = vadd.f32 0.0, %v431
  %v433 = vpop.f32.mrb[0].mxu0
  %434 = vmatprep.mubr.bf16.mxu0 0
  %435 = vmatmul.mubr.bf16.gmra.mrb[0].mxu0 %v244
  %v436 = vpop.f32.mrb[0].mxu0
  %v437 = vadd.f32 0.0, %v436
  %v438 = vpop.f32.mrb[0].mxu0
  %v439 = vpop.f32.mrb[0].mxu0
  %v440 = vadd.f32 0.0, %v439
  %v441 = vpop.f32.mrb[0].mxu0
  %442 = vmatprep.mubr.bf16.mxu0 0
  %443 = vmatmul.mubr.bf16.gmra.mrb[0].mxu0 %v245
  %v444 = vpop.f32.mrb[0].mxu0
  %v445 = vadd.f32 0.0, %v444
  %v446 = vpop.f32.mrb[0].mxu0
  %v447 = vpop.f32.mrb[0].mxu0
  %v448 = vadd.f32 0.0, %v447
  %v449 = vpop.f32.mrb[0].mxu0
  %450 = vmatprep.mubr.bf16.mxu0 0
  %451 = vmatmul.mubr.bf16.gmra.mrb[0].mxu0 %v246
  %v452 = vpop.f32.mrb[0].mxu0
  %v453 = vadd.f32 0.0, %v452
  %v454 = vpop.f32.mrb[0].mxu0
  %v455 = vpop.f32.mrb[0].mxu0
  %v456 = vadd.f32 0.0, %v455
  %v457 = vpop.f32.mrb[0].mxu0
  %458 = vmatprep.mubr.bf16.mxu0 0
  %459 = vmatmul.mubr.bf16.gmra.mrb[0].mxu0 %v247
  %v460 = vpop.f32.mrb[0].mxu0
  %v461 = vadd.f32 0.0, %v460
  %v462 = vpop.f32.mrb[0].mxu0
  %v463 = vpop.f32.mrb[0].mxu0
  %v464 = vadd.f32 0.0, %v463
  %v465 = vpop.f32.mrb[0].mxu0
  %466 = vmatprep.mubr.bf16.mxu0 0
  %467 = vmatmul.mubr.bf16.gmra.mrb[0].mxu0 %v248
  %v468 = vpop.f32.mrb[0].mxu0
  %v469 = vadd.f32 0.0, %v468
  %v470 = vpop.f32.mrb[0].mxu0
  %v471 = vpop.f32.mrb[0].mxu0
  %v472 = vadd.f32 0.0, %v471
  %v473 = vpop.f32.mrb[0].mxu0
  %474 = vmatprep.mubr.bf16.mxu0 0
  %475 = vmatmul.mubr.bf16.gmra.mrb[0].mxu0 %v249
  %v476 = vpop.f32.mrb[0].mxu0
  %v477 = vadd.f32 0.0, %v476
  %v478 = vpop.f32.mrb[0].mxu0
  %v479 = vpop.f32.mrb[0].mxu0
  %v480 = vadd.f32 0.0, %v479
  %v481 = vpop.f32.mrb[0].mxu0
  %482 = vdwg.mxu0
  %vm483 = vcmask 15360
  %484 = vst.msk [vmem:[%s4] sm:$0xff] %vm483, %v421
  %485 = vst.msk [vmem:[%s4 + $0x8] sm:$0xff] %vm483, %v424
  %486 = vst.msk [vmem:[%s4 + $0x10] sm:$0xff] %vm483, %v429
  %487 = vst.msk [vmem:[%s4 + $0x18] sm:$0xff] %vm483, %v432
  %488 = vst.msk [vmem:[%s4 + $0x20] sm:$0xff] %vm483, %v437
  %489 = vst.msk [vmem:[%s4 + $0x28] sm:$0xff] %vm483, %v440
  %490 = vst.msk [vmem:[%s4 + $0x30] sm:$0xff] %vm483, %v445
  %491 = vst.msk [vmem:[%s4 + $0x38] sm:$0xff] %vm483, %v448
  %492 = vst.msk [vmem:[%s4 + $0x40] sm:$0xff] %vm483, %v453
  %493 = vst.msk [vmem:[%s4 + $0x48] sm:$0xff] %vm483, %v456
  %494 = vst.msk [vmem:[%s4 + $0x50] sm:$0xff] %vm483, %v461
  %495 = vst.msk [vmem:[%s4 + $0x58] sm:$0xff] %vm483, %v464
  %496 = vst.msk [vmem:[%s4 + $0x60] sm:$0xff] %vm483, %v469
  %497 = vst.msk [vmem:[%s4 + $0x68] sm:$0xff] %vm483, %v472
  %498 = vst.msk [vmem:[%s4 + $0x70] sm:$0xff] %vm483, %v477
  %499 = vst.msk [vmem:[%s4 + $0x78] sm:$0xff] %vm483, %v480
  %v500 = vld [vmem:[%s0] sm:$0xf]
  %v501 = vld [vmem:[%s0 + $0x4] sm:$0xf]
  %v502 = vld [vmem:[%s0 + $0x8] sm:$0xf]
  %v503 = vld [vmem:[%s0 + $0xc] sm:$0xf]
  %v504 = vld [vmem:[%s0 + $0x10] sm:$0xf]
  %v505 = vld [vmem:[%s0 + $0x14] sm:$0xf]
  %v506 = vld [vmem:[%s0 + $0x18] sm:$0xf]
  %v507 = vld [vmem:[%s0 + $0x1c] sm:$0xf]
  %v508 = vld [vmem:[%s0 + $0x20] sm:$0xf]
  %v509 = vld [vmem:[%s0 + $0x24] sm:$0xf]
  %v510 = vld [vmem:[%s0 + $0x28] sm:$0xf]
  %v511 = vld [vmem:[%s0 + $0x2c] sm:$0xf]
  %v512 = vld [vmem:[%s0 + $0x30] sm:$0xf]
  %v513 = vld [vmem:[%s0 + $0x34] sm:$0xf]
  %v514 = vld [vmem:[%s0 + $0x38] sm:$0xf]
  %v515 = vld [vmem:[%s0 + $0x3c] sm:$0xf]
  %s516 = scalar_lea.vmem %s1, 64
  %v517 = vld [vmem:[%s516] sm:$0xf]
  %v518 = vld [vmem:[%s516 + $0x4] sm:$0xf]
  %v519 = vld [vmem:[%s516 + $0x8] sm:$0xf]
  %v520 = vld [vmem:[%s516 + $0xc] sm:$0xf]
  %v521 = vld [vmem:[%s516 + $0x10] sm:$0xf]
  %v522 = vld [vmem:[%s516 + $0x14] sm:$0xf]
  %v523 = vld [vmem:[%s516 + $0x18] sm:$0xf]
  %v524 = vld [vmem:[%s516 + $0x1c] sm:$0xf]
  %v525 = vld [vmem:[%s516 + $0x20] sm:$0xf]
  %v526 = vld [vmem:[%s516 + $0x24] sm:$0xf]
  %v527 = vld [vmem:[%s516 + $0x28] sm:$0xf]
  %v528 = vld [vmem:[%s516 + $0x2c] sm:$0xf]
  %v529 = vld [vmem:[%s516 + $0x30] sm:$0xf]
  %v530 = vld [vmem:[%s516 + $0x34] sm:$0xf]
  %v531 = vld [vmem:[%s516 + $0x38] sm:$0xf]
  %v532 = vld [vmem:[%s516 + $0x3c] sm:$0xf]
  %v549 = vunpack.c.l.b16 %v500
  %v550 = vunpack.c.l.b16 %v501
  %v551 = vunpack.c.l.b16 %v502
  %v552 = vunpack.c.l.b16 %v503
  %v553 = vunpack.c.l.b16 %v504
  %v554 = vunpack.c.l.b16 %v505
  %v555 = vunpack.c.l.b16 %v506
  %v556 = vunpack.c.l.b16 %v507
  %v557 = vunpack.c.l.b16 %v508
  %v558 = vunpack.c.l.b16 %v509
  %v559 = vunpack.c.l.b16 %v510
  %v560 = vunpack.c.l.b16 %v511
  %v561 = vunpack.c.l.b16 %v512
  %v562 = vunpack.c.l.b16 %v513
  %v563 = vunpack.c.l.b16 %v514
  %v564 = vunpack.c.l.b16 %v515
  %v565 = vpack.c.b16 %v550, %v549
  %v566 = vpack.c.b16 %v552, %v551
  %v567 = vpack.c.b16 %v554, %v553
  %v568 = vpack.c.b16 %v556, %v555
  %v569 = vpack.c.b16 %v558, %v557
  %v570 = vpack.c.b16 %v560, %v559
  %v571 = vpack.c.b16 %v562, %v561
  %v572 = vpack.c.b16 %v564, %v563
  %v597 = vunpack.c.l.b16 %v517
  %v598 = vunpack.c.l.b16 %v518
  %v599 = vunpack.c.l.b16 %v519
  %v600 = vunpack.c.l.b16 %v520
  %v601 = vunpack.c.l.b16 %v521
  %v602 = vunpack.c.l.b16 %v522
  %v603 = vunpack.c.l.b16 %v523
  %v604 = vunpack.c.l.b16 %v524
  %v605 = vunpack.c.l.b16 %v525
  %v606 = vunpack.c.l.b16 %v526
  %v607 = vunpack.c.l.b16 %v527
  %v608 = vunpack.c.l.b16 %v528
  %v609 = vunpack.c.l.b16 %v529
  %v610 = vunpack.c.l.b16 %v530
  %v611 = vunpack.c.l.b16 %v531
  %v612 = vunpack.c.l.b16 %v532
  %v613 = vpack.c.b16 %v598, %v597
  %v614 = vpack.c.b16 %v600, %v599
  %v615 = vpack.c.b16 %v602, %v601
  %v616 = vpack.c.b16 %v604, %v603
  %v617 = vpack.c.b16 %v606, %v605
  %v618 = vpack.c.b16 %v608, %v607
  %v619 = vpack.c.b16 %v610, %v609
  %v620 = vpack.c.b16 %v612, %v611
  %629 = vmatprep.subr.bf16.mxu0 0
  %630 = vmatpush1.bf16.msra.mxu0 %v613
  %631 = vmatprep.subr.bf16.mxu0 0
  %632 = vmatpush1.bf16.msra.mxu0 %v614
  %633 = vmatprep.subr.bf16.mxu0 0
  %634 = vmatpush1.bf16.msra.mxu0 %v615
  %635 = vmatprep.subr.bf16.mxu0 0
  %636 = vmatpush1.bf16.msra.mxu0 %v616
  %637 = vmatprep.subr.bf16.mxu0 0
  %638 = vmatpush1.bf16.msra.mxu0 %v617
  %639 = vmatprep.subr.bf16.mxu0 0
  %640 = vmatpush1.bf16.msra.mxu0 %v618
  %641 = vmatprep.subr.bf16.mxu0 0
  %642 = vmatpush1.bf16.msra.mxu0 %v619
  %643 = vmatprep.subr.bf16.mxu0 0
  %644 = vmatpush1.bf16.msra.mxu0 %v620
  %645 = vmatprep.subr.bf16.mxu0 0
  %646 = vmatpush1.bf16.msra.mxu0 0
  %647 = vmatprep.subr.bf16.mxu0 0
  %648 = vmatpush1.bf16.msra.mxu0 0
  %649 = vmatprep.subr.bf16.mxu0 0
  %650 = vmatpush1.bf16.msra.mxu0 0
  %651 = vmatprep.subr.bf16.mxu0 0
  %652 = vmatpush1.bf16.msra.mxu0 0
  %653 = vmatprep.subr.bf16.mxu0 0
  %654 = vmatpush1.bf16.msra.mxu0 0
  %655 = vmatprep.subr.bf16.mxu0 0
  %656 = vmatpush1.bf16.msra.mxu0 0
  %657 = vmatprep.subr.bf16.mxu0 0
  %658 = vmatpush1.bf16.msra.mxu0 0
  %659 = vmatprep.subr.bf16.mxu0 0
  %660 = vmatpush1.bf16.msra.mxu0 0
  %661 = vmatprep.mubr.bf16.mxu0 0
  %662 = vmatmul.mubr.bf16.gmra.mrb[0].mxu0 %v565
  %v663 = vpop.f32.mrb[0].mxu0
  %v664 = vadd.f32 0.0, %v663
  %v665 = vpop.f32.mrb[0].mxu0
  %v666 = vpop.f32.mrb[0].mxu0
  %v667 = vadd.f32 0.0, %v666
  %v668 = vpop.f32.mrb[0].mxu0
  %669 = vmatprep.mubr.bf16.mxu0 0
  %670 = vmatmul.mubr.bf16.gmra.mrb[0].mxu0 %v566
  %v671 = vpop.f32.mrb[0].mxu0
  %v672 = vadd.f32 0.0, %v671
  %v673 = vpop.f32.mrb[0].mxu0
  %v674 = vpop.f32.mrb[0].mxu0
  %v675 = vadd.f32 0.0, %v674
  %v676 = vpop.f32.mrb[0].mxu0
  %677 = vmatprep.mubr.bf16.mxu0 0
  %678 = vmatmul.mubr.bf16.gmra.mrb[0].mxu0 %v567
  %v679 = vpop.f32.mrb[0].mxu0
  %v680 = vadd.f32 0.0, %v679
  %v681 = vpop.f32.mrb[0].mxu0
  %v682 = vpop.f32.mrb[0].mxu0
  %v683 = vadd.f32 0.0, %v682
  %v684 = vpop.f32.mrb[0].mxu0
  %685 = vmatprep.mubr.bf16.mxu0 0
  %686 = vmatmul.mubr.bf16.gmra.mrb[0].mxu0 %v568
  %v687 = vpop.f32.mrb[0].mxu0
  %v688 = vadd.f32 0.0, %v687
  %v689 = vpop.f32.mrb[0].mxu0
  %v690 = vpop.f32.mrb[0].mxu0
  %v691 = vadd.f32 0.0, %v690
  %v692 = vpop.f32.mrb[0].mxu0
  %693 = vmatprep.mubr.bf16.mxu0 0
  %694 = vmatmul.mubr.bf16.gmra.mrb[0].mxu0 %v569
  %v695 = vpop.f32.mrb[0].mxu0
  %v696 = vadd.f32 0.0, %v695
  %v697 = vpop.f32.mrb[0].mxu0
  %v698 = vpop.f32.mrb[0].mxu0
  %v699 = vadd.f32 0.0, %v698
  %v700 = vpop.f32.mrb[0].mxu0
  %701 = vmatprep.mubr.bf16.mxu0 0
  %702 = vmatmul.mubr.bf16.gmra.mrb[0].mxu0 %v570
  %v703 = vpop.f32.mrb[0].mxu0
  %v704 = vadd.f32 0.0, %v703
  %v705 = vpop.f32.mrb[0].mxu0
  %v706 = vpop.f32.mrb[0].mxu0
  %v707 = vadd.f32 0.0, %v706
  %v708 = vpop.f32.mrb[0].mxu0
  %709 = vmatprep.mubr.bf16.mxu0 0
  %710 = vmatmul.mubr.bf16.gmra.mrb[0].mxu0 %v571
  %v711 = vpop.f32.mrb[0].mxu0
  %v712 = vadd.f32 0.0, %v711
  %v713 = vpop.f32.mrb[0].mxu0
  %v714 = vpop.f32.mrb[0].mxu0
  %v715 = vadd.f32 0.0, %v714
  %v716 = vpop.f32.mrb[0].mxu0
  %717 = vmatprep.mubr.bf16.mxu0 0
  %718 = vmatmul.mubr.bf16.gmra.mrb[0].mxu0 %v572
  %v719 = vpop.f32.mrb[0].mxu0
  %v720 = vadd.f32 0.0, %v719
  %v721 = vpop.f32.mrb[0].mxu0
  %v722 = vpop.f32.mrb[0].mxu0
  %v723 = vadd.f32 0.0, %v722
  %v724 = vpop.f32.mrb[0].mxu0
  %725 = vdwg.mxu0
  %v726 = vpack.c.bf16 %v667, %v664
  %v727 = vpack.c.bf16 %v675, %v672
  %v728 = vpack.c.bf16 %v683, %v680
  %v729 = vpack.c.bf16 %v691, %v688
  %v730 = vpack.c.bf16 %v699, %v696
  %v731 = vpack.c.bf16 %v707, %v704
  %v732 = vpack.c.bf16 %v715, %v712
  %v733 = vpack.c.bf16 %v723, %v720
  %v742 = vunpack.c.l.b16 %v726
  %v743 = vunpack.c.h.b16 %v726
  %v744 = vunpack.c.l.b16 %v727
  %v745 = vunpack.c.h.b16 %v727
  %v746 = vunpack.c.l.b16 %v728
  %v747 = vunpack.c.h.b16 %v728
  %v748 = vunpack.c.l.b16 %v729
  %v749 = vunpack.c.h.b16 %v729
  %v750 = vunpack.c.l.b16 %v730
  %v751 = vunpack.c.h.b16 %v730
  %v752 = vunpack.c.l.b16 %v731
  %v753 = vunpack.c.h.b16 %v731
  %v754 = vunpack.c.l.b16 %v732
  %v755 = vunpack.c.h.b16 %v732
  %v756 = vunpack.c.l.b16 %v733
  %v757 = vunpack.c.h.b16 %v733
  %v758 = vpack.c.b16 %v742, %v742
  %v759 = vpack.c.b16 %v743, %v743
  %v760 = vpack.c.b16 %v744, %v744
  %v761 = vpack.c.b16 %v745, %v745
  %v762 = vpack.c.b16 %v746, %v746
  %v763 = vpack.c.b16 %v747, %v747
  %v764 = vpack.c.b16 %v748, %v748
  %v765 = vpack.c.b16 %v749, %v749
  %v766 = vpack.c.b16 %v750, %v750
  %v767 = vpack.c.b16 %v751, %v751
  %v768 = vpack.c.b16 %v752, %v752
  %v769 = vpack.c.b16 %v753, %v753
  %v770 = vpack.c.b16 %v754, %v754
  %v771 = vpack.c.b16 %v755, %v755
  %v772 = vpack.c.b16 %v756, %v756
  %v773 = vpack.c.b16 %v757, %v757
  %s790 = scalar_lea.vmem %s3, 64
  %791 = vst [vmem:[%s790] sm:$0xf] %v758
  %792 = vst [vmem:[%s790 + $0x4] sm:$0xf] %v759
  %793 = vst [vmem:[%s790 + $0x8] sm:$0xf] %v760
  %794 = vst [vmem:[%s790 + $0xc] sm:$0xf] %v761
  %795 = vst [vmem:[%s790 + $0x10] sm:$0xf] %v762
  %796 = vst [vmem:[%s790 + $0x14] sm:$0xf] %v763
  %797 = vst [vmem:[%s790 + $0x18] sm:$0xf] %v764
  %798 = vst [vmem:[%s790 + $0x1c] sm:$0xf] %v765
  %799 = vst [vmem:[%s790 + $0x20] sm:$0xf] %v766
  %800 = vst [vmem:[%s790 + $0x24] sm:$0xf] %v767
  %801 = vst [vmem:[%s790 + $0x28] sm:$0xf] %v768
  %802 = vst [vmem:[%s790 + $0x2c] sm:$0xf] %v769
  %803 = vst [vmem:[%s790 + $0x30] sm:$0xf] %v770
  %804 = vst [vmem:[%s790 + $0x34] sm:$0xf] %v771
  %805 = vst [vmem:[%s790 + $0x38] sm:$0xf] %v772
  %806 = vst [vmem:[%s790 + $0x3c] sm:$0xf] %v773
  %s807 = scalar_lea.vmem %s2, 64
  %v808 = vld [vmem:[%s807] sm:$0xf]
  %v809 = vld [vmem:[%s807 + $0x4] sm:$0xf]
  %v810 = vld [vmem:[%s807 + $0x8] sm:$0xf]
  %v811 = vld [vmem:[%s807 + $0xc] sm:$0xf]
  %v812 = vld [vmem:[%s807 + $0x10] sm:$0xf]
  %v813 = vld [vmem:[%s807 + $0x14] sm:$0xf]
  %v814 = vld [vmem:[%s807 + $0x18] sm:$0xf]
  %v815 = vld [vmem:[%s807 + $0x1c] sm:$0xf]
  %v816 = vld [vmem:[%s807 + $0x20] sm:$0xf]
  %v817 = vld [vmem:[%s807 + $0x24] sm:$0xf]
  %v818 = vld [vmem:[%s807 + $0x28] sm:$0xf]
  %v819 = vld [vmem:[%s807 + $0x2c] sm:$0xf]
  %v820 = vld [vmem:[%s807 + $0x30] sm:$0xf]
  %v821 = vld [vmem:[%s807 + $0x34] sm:$0xf]
  %v822 = vld [vmem:[%s807 + $0x38] sm:$0xf]
  %v823 = vld [vmem:[%s807 + $0x3c] sm:$0xf]
  %v840 = vunpack.c.l.b16 %v808
  %v841 = vunpack.c.l.b16 %v809
  %v842 = vunpack.c.l.b16 %v810
  %v843 = vunpack.c.l.b16 %v811
  %v844 = vunpack.c.l.b16 %v812
  %v845 = vunpack.c.l.b16 %v813
  %v846 = vunpack.c.l.b16 %v814
  %v847 = vunpack.c.l.b16 %v815
  %v848 = vunpack.c.l.b16 %v816
  %v849 = vunpack.c.l.b16 %v817
  %v850 = vunpack.c.l.b16 %v818
  %v851 = vunpack.c.l.b16 %v819
  %v852 = vunpack.c.l.b16 %v820
  %v853 = vunpack.c.l.b16 %v821
  %v854 = vunpack.c.l.b16 %v822
  %v855 = vunpack.c.l.b16 %v823
  %v856 = vpack.c.b16 %v841, %v840
  %v857 = vpack.c.b16 %v843, %v842
  %v858 = vpack.c.b16 %v845, %v844
  %v859 = vpack.c.b16 %v847, %v846
  %v860 = vpack.c.b16 %v849, %v848
  %v861 = vpack.c.b16 %v851, %v850
  %v862 = vpack.c.b16 %v853, %v852
  %v863 = vpack.c.b16 %v855, %v854
  %872 = vmatprep.subr.bf16.mxu0 0
  %873 = vmatpush1.bf16.msra.mxu0 %v856
  %874 = vmatprep.subr.bf16.mxu0 0
  %875 = vmatpush1.bf16.msra.mxu0 %v857
  %876 = vmatprep.subr.bf16.mxu0 0
  %877 = vmatpush1.bf16.msra.mxu0 %v858
  %878 = vmatprep.subr.bf16.mxu0 0
  %879 = vmatpush1.bf16.msra.mxu0 %v859
  %880 = vmatprep.subr.bf16.mxu0 0
  %881 = vmatpush1.bf16.msra.mxu0 %v860
  %882 = vmatprep.subr.bf16.mxu0 0
  %883 = vmatpush1.bf16.msra.mxu0 %v861
  %884 = vmatprep.subr.bf16.mxu0 0
  %885 = vmatpush1.bf16.msra.mxu0 %v862
  %886 = vmatprep.subr.bf16.mxu0 0
  %887 = vmatpush1.bf16.msra.mxu0 %v863
  %888 = vmatprep.subr.bf16.mxu0 0
  %889 = vmatpush1.bf16.msra.mxu0 0
  %890 = vmatprep.subr.bf16.mxu0 0
  %891 = vmatpush1.bf16.msra.mxu0 0
  %892 = vmatprep.subr.bf16.mxu0 0
  %893 = vmatpush1.bf16.msra.mxu0 0
  %894 = vmatprep.subr.bf16.mxu0 0
  %895 = vmatpush1.bf16.msra.mxu0 0
  %896 = vmatprep.subr.bf16.mxu0 0
  %897 = vmatpush1.bf16.msra.mxu0 0
  %898 = vmatprep.subr.bf16.mxu0 0
  %899 = vmatpush1.bf16.msra.mxu0 0
  %900 = vmatprep.subr.bf16.mxu0 0
  %901 = vmatpush1.bf16.msra.mxu0 0
  %902 = vmatprep.subr.bf16.mxu0 0
  %903 = vmatpush1.bf16.msra.mxu0 0
  %904 = vmatprep.mubr.bf16.mxu0 0
  %905 = vmatmul.mubr.bf16.gmra.mrb[0].mxu0 %v726
  %v906 = vpop.f32.mrb[0].mxu0
  %v907 = vadd.f32 0.0, %v906
  %v908 = vpop.f32.mrb[0].mxu0
  %v909 = vpop.f32.mrb[0].mxu0
  %v910 = vadd.f32 0.0, %v909
  %v911 = vpop.f32.mrb[0].mxu0
  %912 = vmatprep.mubr.bf16.mxu0 0
  %913 = vmatmul.mubr.bf16.gmra.mrb[0].mxu0 %v727
  %v914 = vpop.f32.mrb[0].mxu0
  %v915 = vadd.f32 0.0, %v914
  %v916 = vpop.f32.mrb[0].mxu0
  %v917 = vpop.f32.mrb[0].mxu0
  %v918 = vadd.f32 0.0, %v917
  %v919 = vpop.f32.mrb[0].mxu0
  %920 = vmatprep.mubr.bf16.mxu0 0
  %921 = vmatmul.mubr.bf16.gmra.mrb[0].mxu0 %v728
  %v922 = vpop.f32.mrb[0].mxu0
  %v923 = vadd.f32 0.0, %v922
  %v924 = vpop.f32.mrb[0].mxu0
  %v925 = vpop.f32.mrb[0].mxu0
  %v926 = vadd.f32 0.0, %v925
  %v927 = vpop.f32.mrb[0].mxu0
  %928 = vmatprep.mubr.bf16.mxu0 0
  %929 = vmatmul.mubr.bf16.gmra.mrb[0].mxu0 %v729
  %v930 = vpop.f32.mrb[0].mxu0
  %v931 = vadd.f32 0.0, %v930
  %v932 = vpop.f32.mrb[0].mxu0
  %v933 = vpop.f32.mrb[0].mxu0
  %v934 = vadd.f32 0.0, %v933
  %v935 = vpop.f32.mrb[0].mxu0
  %936 = vmatprep.mubr.bf16.mxu0 0
  %937 = vmatmul.mubr.bf16.gmra.mrb[0].mxu0 %v730
  %v938 = vpop.f32.mrb[0].mxu0
  %v939 = vadd.f32 0.0, %v938
  %v940 = vpop.f32.mrb[0].mxu0
  %v941 = vpop.f32.mrb[0].mxu0
  %v942 = vadd.f32 0.0, %v941
  %v943 = vpop.f32.mrb[0].mxu0
  %944 = vmatprep.mubr.bf16.mxu0 0
  %945 = vmatmul.mubr.bf16.gmra.mrb[0].mxu0 %v731
  %v946 = vpop.f32.mrb[0].mxu0
  %v947 = vadd.f32 0.0, %v946
  %v948 = vpop.f32.mrb[0].mxu0
  %v949 = vpop.f32.mrb[0].mxu0
  %v950 = vadd.f32 0.0, %v949
  %v951 = vpop.f32.mrb[0].mxu0
  %952 = vmatprep.mubr.bf16.mxu0 0
  %953 = vmatmul.mubr.bf16.gmra.mrb[0].mxu0 %v732
  %v954 = vpop.f32.mrb[0].mxu0
  %v955 = vadd.f32 0.0, %v954
  %v956 = vpop.f32.mrb[0].mxu0
  %v957 = vpop.f32.mrb[0].mxu0
  %v958 = vadd.f32 0.0, %v957
  %v959 = vpop.f32.mrb[0].mxu0
  %960 = vmatprep.mubr.bf16.mxu0 0
  %961 = vmatmul.mubr.bf16.gmra.mrb[0].mxu0 %v733
  %v962 = vpop.f32.mrb[0].mxu0
  %v963 = vadd.f32 0.0, %v962
  %v964 = vpop.f32.mrb[0].mxu0
  %v965 = vpop.f32.mrb[0].mxu0
  %v966 = vadd.f32 0.0, %v965
  %v967 = vpop.f32.mrb[0].mxu0
  %968 = vdwg.mxu0
  %s969 = scalar_lea.vmem %s4, 128
  %970 = vst.msk [vmem:[%s969] sm:$0xff] %vm483, %v907
  %971 = vst.msk [vmem:[%s969 + $0x8] sm:$0xff] %vm483, %v910
  %972 = vst.msk [vmem:[%s969 + $0x10] sm:$0xff] %vm483, %v915
  %973 = vst.msk [vmem:[%s969 + $0x18] sm:$0xff] %vm483, %v918
  %974 = vst.msk [vmem:[%s969 + $0x20] sm:$0xff] %vm483, %v923
  %975 = vst.msk [vmem:[%s969 + $0x28] sm:$0xff] %vm483, %v926
  %976 = vst.msk [vmem:[%s969 + $0x30] sm:$0xff] %vm483, %v931
  %977 = vst.msk [vmem:[%s969 + $0x38] sm:$0xff] %vm483, %v934
  %978 = vst.msk [vmem:[%s969 + $0x40] sm:$0xff] %vm483, %v939
  %979 = vst.msk [vmem:[%s969 + $0x48] sm:$0xff] %vm483, %v942
  %980 = vst.msk [vmem:[%s969 + $0x50] sm:$0xff] %vm483, %v947
  %981 = vst.msk [vmem:[%s969 + $0x58] sm:$0xff] %vm483, %v950
  %982 = vst.msk [vmem:[%s969 + $0x60] sm:$0xff] %vm483, %v955
  %983 = vst.msk [vmem:[%s969 + $0x68] sm:$0xff] %vm483, %v958
  %984 = vst.msk [vmem:[%s969 + $0x70] sm:$0xff] %vm483, %v963
  %985 = vst.msk [vmem:[%s969 + $0x78] sm:$0xff] %vm483, %v966
  %v986 = vld [vmem:[%s0] sm:$0xf]
  %v987 = vld [vmem:[%s0 + $0x4] sm:$0xf]
  %v988 = vld [vmem:[%s0 + $0x8] sm:$0xf]
  %v989 = vld [vmem:[%s0 + $0xc] sm:$0xf]
  %v990 = vld [vmem:[%s0 + $0x10] sm:$0xf]
  %v991 = vld [vmem:[%s0 + $0x14] sm:$0xf]
  %v992 = vld [vmem:[%s0 + $0x18] sm:$0xf]
  %v993 = vld [vmem:[%s0 + $0x1c] sm:$0xf]
  %v994 = vld [vmem:[%s0 + $0x20] sm:$0xf]
  %v995 = vld [vmem:[%s0 + $0x24] sm:$0xf]
  %v996 = vld [vmem:[%s0 + $0x28] sm:$0xf]
  %v997 = vld [vmem:[%s0 + $0x2c] sm:$0xf]
  %v998 = vld [vmem:[%s0 + $0x30] sm:$0xf]
  %v999 = vld [vmem:[%s0 + $0x34] sm:$0xf]
  %v1000 = vld [vmem:[%s0 + $0x38] sm:$0xf]
  %v1001 = vld [vmem:[%s0 + $0x3c] sm:$0xf]
  %s1002 = scalar_lea.vmem %s1, 128
  %v1003 = vld [vmem:[%s1002] sm:$0xf]
  %v1004 = vld [vmem:[%s1002 + $0x4] sm:$0xf]
  %v1005 = vld [vmem:[%s1002 + $0x8] sm:$0xf]
  %v1006 = vld [vmem:[%s1002 + $0xc] sm:$0xf]
  %v1007 = vld [vmem:[%s1002 + $0x10] sm:$0xf]
  %v1008 = vld [vmem:[%s1002 + $0x14] sm:$0xf]
  %v1009 = vld [vmem:[%s1002 + $0x18] sm:$0xf]
  %v1010 = vld [vmem:[%s1002 + $0x1c] sm:$0xf]
  %v1011 = vld [vmem:[%s1002 + $0x20] sm:$0xf]
  %v1012 = vld [vmem:[%s1002 + $0x24] sm:$0xf]
  %v1013 = vld [vmem:[%s1002 + $0x28] sm:$0xf]
  %v1014 = vld [vmem:[%s1002 + $0x2c] sm:$0xf]
  %v1015 = vld [vmem:[%s1002 + $0x30] sm:$0xf]
  %v1016 = vld [vmem:[%s1002 + $0x34] sm:$0xf]
  %v1017 = vld [vmem:[%s1002 + $0x38] sm:$0xf]
  %v1018 = vld [vmem:[%s1002 + $0x3c] sm:$0xf]
  %v1035 = vunpack.c.l.b16 %v986
  %v1036 = vunpack.c.l.b16 %v987
  %v1037 = vunpack.c.l.b16 %v988
  %v1038 = vunpack.c.l.b16 %v989
  %v1039 = vunpack.c.l.b16 %v990
  %v1040 = vunpack.c.l.b16 %v991
  %v1041 = vunpack.c.l.b16 %v992
  %v1042 = vunpack.c.l.b16 %v993
  %v1043 = vunpack.c.l.b16 %v994
  %v1044 = vunpack.c.l.b16 %v995
  %v1045 = vunpack.c.l.b16 %v996
  %v1046 = vunpack.c.l.b16 %v997
  %v1047 = vunpack.c.l.b16 %v998
  %v1048 = vunpack.c.l.b16 %v999
  %v1049 = vunpack.c.l.b16 %v1000
  %v1050 = vunpack.c.l.b16 %v1001
  %v1051 = vpack.c.b16 %v1036, %v1035
  %v1052 = vpack.c.b16 %v1038, %v1037
  %v1053 = vpack.c.b16 %v1040, %v1039
  %v1054 = vpack.c.b16 %v1042, %v1041
  %v1055 = vpack.c.b16 %v1044, %v1043
  %v1056 = vpack.c.b16 %v1046, %v1045
  %v1057 = vpack.c.b16 %v1048, %v1047
  %v1058 = vpack.c.b16 %v1050, %v1049
  %v1083 = vunpack.c.l.b16 %v1003
  %v1084 = vunpack.c.l.b16 %v1004
  %v1085 = vunpack.c.l.b16 %v1005
  %v1086 = vunpack.c.l.b16 %v1006
  %v1087 = vunpack.c.l.b16 %v1007
  %v1088 = vunpack.c.l.b16 %v1008
  %v1089 = vunpack.c.l.b16 %v1009
  %v1090 = vunpack.c.l.b16 %v1010
  %v1091 = vunpack.c.l.b16 %v1011
  %v1092 = vunpack.c.l.b16 %v1012
  %v1093 = vunpack.c.l.b16 %v1013
  %v1094 = vunpack.c.l.b16 %v1014
  %v1095 = vunpack.c.l.b16 %v1015
  %v1096 = vunpack.c.l.b16 %v1016
  %v1097 = vunpack.c.l.b16 %v1017
  %v1098 = vunpack.c.l.b16 %v1018
  %v1099 = vpack.c.b16 %v1084, %v1083
  %v1100 = vpack.c.b16 %v1086, %v1085
  %v1101 = vpack.c.b16 %v1088, %v1087
  %v1102 = vpack.c.b16 %v1090, %v1089
  %v1103 = vpack.c.b16 %v1092, %v1091
  %v1104 = vpack.c.b16 %v1094, %v1093
  %v1105 = vpack.c.b16 %v1096, %v1095
  %v1106 = vpack.c.b16 %v1098, %v1097
  %1115 = vmatprep.subr.bf16.mxu0 0
  %1116 = vmatpush1.bf16.msra.mxu0 %v1099
  %1117 = vmatprep.subr.bf16.mxu0 0
  %1118 = vmatpush1.bf16.msra.mxu0 %v1100
  %1119 = vmatprep.subr.bf16.mxu0 0
  %1120 = vmatpush1.bf16.msra.mxu0 %v1101
  %1121 = vmatprep.subr.bf16.mxu0 0
  %1122 = vmatpush1.bf16.msra.mxu0 %v1102
  %1123 = vmatprep.subr.bf16.mxu0 0
  %1124 = vmatpush1.bf16.msra.mxu0 %v1103
  %1125 = vmatprep.subr.bf16.mxu0 0
  %1126 = vmatpush1.bf16.msra.mxu0 %v1104
  %1127 = vmatprep.subr.bf16.mxu0 0
  %1128 = vmatpush1.bf16.msra.mxu0 %v1105
  %1129 = vmatprep.subr.bf16.mxu0 0
  %1130 = vmatpush1.bf16.msra.mxu0 %v1106
  %1131 = vmatprep.subr.bf16.mxu0 0
  %1132 = vmatpush1.bf16.msra.mxu0 0
  %1133 = vmatprep.subr.bf16.mxu0 0
  %1134 = vmatpush1.bf16.msra.mxu0 0
  %1135 = vmatprep.subr.bf16.mxu0 0
  %1136 = vmatpush1.bf16.msra.mxu0 0
  %1137 = vmatprep.subr.bf16.mxu0 0
  %1138 = vmatpush1.bf16.msra.mxu0 0
  %1139 = vmatprep.subr.bf16.mxu0 0
  %1140 = vmatpush1.bf16.msra.mxu0 0
  %1141 = vmatprep.subr.bf16.mxu0 0
  %1142 = vmatpush1.bf16.msra.mxu0 0
  %1143 = vmatprep.subr.bf16.mxu0 0
  %1144 = vmatpush1.bf16.msra.mxu0 0
  %1145 = vmatprep.subr.bf16.mxu0 0
  %1146 = vmatpush1.bf16.msra.mxu0 0
  %1147 = vmatprep.mubr.bf16.mxu0 0
  %1148 = vmatmul.mubr.bf16.gmra.mrb[0].mxu0 %v1051
  %v1149 = vpop.f32.mrb[0].mxu0
  %v1150 = vadd.f32 0.0, %v1149
  %v1151 = vpop.f32.mrb[0].mxu0
  %v1152 = vpop.f32.mrb[0].mxu0
  %v1153 = vadd.f32 0.0, %v1152
  %v1154 = vpop.f32.mrb[0].mxu0
  %1155 = vmatprep.mubr.bf16.mxu0 0
  %1156 = vmatmul.mubr.bf16.gmra.mrb[0].mxu0 %v1052
  %v1157 = vpop.f32.mrb[0].mxu0
  %v1158 = vadd.f32 0.0, %v1157
  %v1159 = vpop.f32.mrb[0].mxu0
  %v1160 = vpop.f32.mrb[0].mxu0
  %v1161 = vadd.f32 0.0, %v1160
  %v1162 = vpop.f32.mrb[0].mxu0
  %1163 = vmatprep.mubr.bf16.mxu0 0
  %1164 = vmatmul.mubr.bf16.gmra.mrb[0].mxu0 %v1053
  %v1165 = vpop.f32.mrb[0].mxu0
  %v1166 = vadd.f32 0.0, %v1165
  %v1167 = vpop.f32.mrb[0].mxu0
  %v1168 = vpop.f32.mrb[0].mxu0
  %v1169 = vadd.f32 0.0, %v1168
  %v1170 = vpop.f32.mrb[0].mxu0
  %1171 = vmatprep.mubr.bf16.mxu0 0
  %1172 = vmatmul.mubr.bf16.gmra.mrb[0].mxu0 %v1054
  %v1173 = vpop.f32.mrb[0].mxu0
  %v1174 = vadd.f32 0.0, %v1173
  %v1175 = vpop.f32.mrb[0].mxu0
  %v1176 = vpop.f32.mrb[0].mxu0
  %v1177 = vadd.f32 0.0, %v1176
  %v1178 = vpop.f32.mrb[0].mxu0
  %1179 = vmatprep.mubr.bf16.mxu0 0
  %1180 = vmatmul.mubr.bf16.gmra.mrb[0].mxu0 %v1055
  %v1181 = vpop.f32.mrb[0].mxu0
  %v1182 = vadd.f32 0.0, %v1181
  %v1183 = vpop.f32.mrb[0].mxu0
  %v1184 = vpop.f32.mrb[0].mxu0
  %v1185 = vadd.f32 0.0, %v1184
  %v1186 = vpop.f32.mrb[0].mxu0
  %1187 = vmatprep.mubr.bf16.mxu0 0
  %1188 = vmatmul.mubr.bf16.gmra.mrb[0].mxu0 %v1056
  %v1189 = vpop.f32.mrb[0].mxu0
  %v1190 = vadd.f32 0.0, %v1189
  %v1191 = vpop.f32.mrb[0].mxu0
  %v1192 = vpop.f32.mrb[0].mxu0
  %v1193 = vadd.f32 0.0, %v1192
  %v1194 = vpop.f32.mrb[0].mxu0
  %1195 = vmatprep.mubr.bf16.mxu0 0
  %1196 = vmatmul.mubr.bf16.gmra.mrb[0].mxu0 %v1057
  %v1197 = vpop.f32.mrb[0].mxu0
  %v1198 = vadd.f32 0.0, %v1197
  %v1199 = vpop.f32.mrb[0].mxu0
  %v1200 = vpop.f32.mrb[0].mxu0
  %v1201 = vadd.f32 0.0, %v1200
  %v1202 = vpop.f32.mrb[0].mxu0
  %1203 = vmatprep.mubr.bf16.mxu0 0
  %1204 = vmatmul.mubr.bf16.gmra.mrb[0].mxu0 %v1058
  %v1205 = vpop.f32.mrb[0].mxu0
  %v1206 = vadd.f32 0.0, %v1205
  %v1207 = vpop.f32.mrb[0].mxu0
  %v1208 = vpop.f32.mrb[0].mxu0
  %v1209 = vadd.f32 0.0, %v1208
  %v1210 = vpop.f32.mrb[0].mxu0
  %1211 = vdwg.mxu0
  %v1212 = vpack.c.bf16 %v1153, %v1150
  %v1213 = vpack.c.bf16 %v1161, %v1158
  %v1214 = vpack.c.bf16 %v1169, %v1166
  %v1215 = vpack.c.bf16 %v1177, %v1174
  %v1216 = vpack.c.bf16 %v1185, %v1182
  %v1217 = vpack.c.bf16 %v1193, %v1190
  %v1218 = vpack.c.bf16 %v1201, %v1198
  %v1219 = vpack.c.bf16 %v1209, %v1206
  %v1228 = vunpack.c.l.b16 %v1212
  %v1229 = vunpack.c.h.b16 %v1212
  %v1230 = vunpack.c.l.b16 %v1213
  %v1231 = vunpack.c.h.b16 %v1213
  %v1232 = vunpack.c.l.b16 %v1214
  %v1233 = vunpack.c.h.b16 %v1214
  %v1234 = vunpack.c.l.b16 %v1215
  %v1235 = vunpack.c.h.b16 %v1215
  %v1236 = vunpack.c.l.b16 %v1216
  %v1237 = vunpack.c.h.b16 %v1216
  %v1238 = vunpack.c.l.b16 %v1217
  %v1239 = vunpack.c.h.b16 %v1217
  %v1240 = vunpack.c.l.b16 %v1218
  %v1241 = vunpack.c.h.b16 %v1218
  %v1242 = vunpack.c.l.b16 %v1219
  %v1243 = vunpack.c.h.b16 %v1219
  %v1244 = vpack.c.b16 %v1228, %v1228
  %v1245 = vpack.c.b16 %v1229, %v1229
  %v1246 = vpack.c.b16 %v1230, %v1230
  %v1247 = vpack.c.b16 %v1231, %v1231
  %v1248 = vpack.c.b16 %v1232, %v1232
  %v1249 = vpack.c.b16 %v1233, %v1233
  %v1250 = vpack.c.b16 %v1234, %v1234
  %v1251 = vpack.c.b16 %v1235, %v1235
  %v1252 = vpack.c.b16 %v1236, %v1236
  %v1253 = vpack.c.b16 %v1237, %v1237
  %v1254 = vpack.c.b16 %v1238, %v1238
  %v1255 = vpack.c.b16 %v1239, %v1239
  %v1256 = vpack.c.b16 %v1240, %v1240
  %v1257 = vpack.c.b16 %v1241, %v1241
  %v1258 = vpack.c.b16 %v1242, %v1242
  %v1259 = vpack.c.b16 %v1243, %v1243
  %s1276 = scalar_lea.vmem %s3, 128
  %1277 = vst [vmem:[%s1276] sm:$0xf] %v1244
  %1278 = vst [vmem:[%s1276 + $0x4] sm:$0xf] %v1245
  %1279 = vst [vmem:[%s1276 + $0x8] sm:$0xf] %v1246
  %1280 = vst [vmem:[%s1276 + $0xc] sm:$0xf] %v1247
  %1281 = vst [vmem:[%s1276 + $0x10] sm:$0xf] %v1248
  %1282 = vst [vmem:[%s1276 + $0x14] sm:$0xf] %v1249
  %1283 = vst [vmem:[%s1276 + $0x18] sm:$0xf] %v1250
  %1284 = vst [vmem:[%s1276 + $0x1c] sm:$0xf] %v1251
  %1285 = vst [vmem:[%s1276 + $0x20] sm:$0xf] %v1252
  %1286 = vst [vmem:[%s1276 + $0x24] sm:$0xf] %v1253
  %1287 = vst [vmem:[%s1276 + $0x28] sm:$0xf] %v1254
  %1288 = vst [vmem:[%s1276 + $0x2c] sm:$0xf] %v1255
  %1289 = vst [vmem:[%s1276 + $0x30] sm:$0xf] %v1256
  %1290 = vst [vmem:[%s1276 + $0x34] sm:$0xf] %v1257
  %1291 = vst [vmem:[%s1276 + $0x38] sm:$0xf] %v1258
  %1292 = vst [vmem:[%s1276 + $0x3c] sm:$0xf] %v1259
  %s1293 = scalar_lea.vmem %s2, 128
  %v1294 = vld [vmem:[%s1293] sm:$0xf]
  %v1295 = vld [vmem:[%s1293 + $0x4] sm:$0xf]
  %v1296 = vld [vmem:[%s1293 + $0x8] sm:$0xf]
  %v1297 = vld [vmem:[%s1293 + $0xc] sm:$0xf]
  %v1298 = vld [vmem:[%s1293 + $0x10] sm:$0xf]
  %v1299 = vld [vmem:[%s1293 + $0x14] sm:$0xf]
  %v1300 = vld [vmem:[%s1293 + $0x18] sm:$0xf]
  %v1301 = vld [vmem:[%s1293 + $0x1c] sm:$0xf]
  %v1302 = vld [vmem:[%s1293 + $0x20] sm:$0xf]
  %v1303 = vld [vmem:[%s1293 + $0x24] sm:$0xf]
  %v1304 = vld [vmem:[%s1293 + $0x28] sm:$0xf]
  %v1305 = vld [vmem:[%s1293 + $0x2c] sm:$0xf]
  %v1306 = vld [vmem:[%s1293 + $0x30] sm:$0xf]
  %v1307 = vld [vmem:[%s1293 + $0x34] sm:$0xf]
  %v1308 = vld [vmem:[%s1293 + $0x38] sm:$0xf]
  %v1309 = vld [vmem:[%s1293 + $0x3c] sm:$0xf]
  %v1326 = vunpack.c.l.b16 %v1294
  %v1327 = vunpack.c.l.b16 %v1295
  %v1328 = vunpack.c.l.b16 %v1296
  %v1329 = vunpack.c.l.b16 %v1297
  %v1330 = vunpack.c.l.b16 %v1298
  %v1331 = vunpack.c.l.b16 %v1299
  %v1332 = vunpack.c.l.b16 %v1300
  %v1333 = vunpack.c.l.b16 %v1301
  %v1334 = vunpack.c.l.b16 %v1302
  %v1335 = vunpack.c.l.b16 %v1303
  %v1336 = vunpack.c.l.b16 %v1304
  %v1337 = vunpack.c.l.b16 %v1305
  %v1338 = vunpack.c.l.b16 %v1306
  %v1339 = vunpack.c.l.b16 %v1307
  %v1340 = vunpack.c.l.b16 %v1308
  %v1341 = vunpack.c.l.b16 %v1309
  %v1342 = vpack.c.b16 %v1327, %v1326
  %v1343 = vpack.c.b16 %v1329, %v1328
  %v1344 = vpack.c.b16 %v1331, %v1330
  %v1345 = vpack.c.b16 %v1333, %v1332
  %v1346 = vpack.c.b16 %v1335, %v1334
  %v1347 = vpack.c.b16 %v1337, %v1336
  %v1348 = vpack.c.b16 %v1339, %v1338
  %v1349 = vpack.c.b16 %v1341, %v1340
  %1358 = vmatprep.subr.bf16.mxu0 0
  %1359 = vmatpush1.bf16.msra.mxu0 %v1342
  %1360 = vmatprep.subr.bf16.mxu0 0
  %1361 = vmatpush1.bf16.msra.mxu0 %v1343
  %1362 = vmatprep.subr.bf16.mxu0 0
  %1363 = vmatpush1.bf16.msra.mxu0 %v1344
  %1364 = vmatprep.subr.bf16.mxu0 0
  %1365 = vmatpush1.bf16.msra.mxu0 %v1345
  %1366 = vmatprep.subr.bf16.mxu0 0
  %1367 = vmatpush1.bf16.msra.mxu0 %v1346
  %1368 = vmatprep.subr.bf16.mxu0 0
  %1369 = vmatpush1.bf16.msra.mxu0 %v1347
  %1370 = vmatprep.subr.bf16.mxu0 0
  %1371 = vmatpush1.bf16.msra.mxu0 %v1348
  %1372 = vmatprep.subr.bf16.mxu0 0
  %1373 = vmatpush1.bf16.msra.mxu0 %v1349
  %1374 = vmatprep.subr.bf16.mxu0 0
  %1375 = vmatpush1.bf16.msra.mxu0 0
  %1376 = vmatprep.subr.bf16.mxu0 0
  %1377 = vmatpush1.bf16.msra.mxu0 0
  %1378 = vmatprep.subr.bf16.mxu0 0
  %1379 = vmatpush1.bf16.msra.mxu0 0
  %1380 = vmatprep.subr.bf16.mxu0 0
  %1381 = vmatpush1.bf16.msra.mxu0 0
  %1382 = vmatprep.subr.bf16.mxu0 0
  %1383 = vmatpush1.bf16.msra.mxu0 0
  %1384 = vmatprep.subr.bf16.mxu0 0
  %1385 = vmatpush1.bf16.msra.mxu0 0
  %1386 = vmatprep.subr.bf16.mxu0 0
  %1387 = vmatpush1.bf16.msra.mxu0 0
  %1388 = vmatprep.subr.bf16.mxu0 0
  %1389 = vmatpush1.bf16.msra.mxu0 0
  %1390 = vmatprep.mubr.bf16.mxu0 0
  %1391 = vmatmul.mubr.bf16.gmra.mrb[0].mxu0 %v1212
  %v1392 = vpop.f32.mrb[0].mxu0
  %v1393 = vadd.f32 0.0, %v1392
  %v1394 = vpop.f32.mrb[0].mxu0
  %v1395 = vpop.f32.mrb[0].mxu0
  %v1396 = vadd.f32 0.0, %v1395
  %v1397 = vpop.f32.mrb[0].mxu0
  %1398 = vmatprep.mubr.bf16.mxu0 0
  %1399 = vmatmul.mubr.bf16.gmra.mrb[0].mxu0 %v1213
  %v1400 = vpop.f32.mrb[0].mxu0
  %v1401 = vadd.f32 0.0, %v1400
  %v1402 = vpop.f32.mrb[0].mxu0
  %v1403 = vpop.f32.mrb[0].mxu0
  %v1404 = vadd.f32 0.0, %v1403
  %v1405 = vpop.f32.mrb[0].mxu0
  %1406 = vmatprep.mubr.bf16.mxu0 0
  %1407 = vmatmul.mubr.bf16.gmra.mrb[0].mxu0 %v1214
  %v1408 = vpop.f32.mrb[0].mxu0
  %v1409 = vadd.f32 0.0, %v1408
  %v1410 = vpop.f32.mrb[0].mxu0
  %v1411 = vpop.f32.mrb[0].mxu0
  %v1412 = vadd.f32 0.0, %v1411
  %v1413 = vpop.f32.mrb[0].mxu0
  %1414 = vmatprep.mubr.bf16.mxu0 0
  %1415 = vmatmul.mubr.bf16.gmra.mrb[0].mxu0 %v1215
  %v1416 = vpop.f32.mrb[0].mxu0
  %v1417 = vadd.f32 0.0, %v1416
  %v1418 = vpop.f32.mrb[0].mxu0
  %v1419 = vpop.f32.mrb[0].mxu0
  %v1420 = vadd.f32 0.0, %v1419
  %v1421 = vpop.f32.mrb[0].mxu0
  %1422 = vmatprep.mubr.bf16.mxu0 0
  %1423 = vmatmul.mubr.bf16.gmra.mrb[0].mxu0 %v1216
  %v1424 = vpop.f32.mrb[0].mxu0
  %v1425 = vadd.f32 0.0, %v1424
  %v1426 = vpop.f32.mrb[0].mxu0
  %v1427 = vpop.f32.mrb[0].mxu0
  %v1428 = vadd.f32 0.0, %v1427
  %v1429 = vpop.f32.mrb[0].mxu0
  %1430 = vmatprep.mubr.bf16.mxu0 0
  %1431 = vmatmul.mubr.bf16.gmra.mrb[0].mxu0 %v1217
  %v1432 = vpop.f32.mrb[0].mxu0
  %v1433 = vadd.f32 0.0, %v1432
  %v1434 = vpop.f32.mrb[0].mxu0
  %v1435 = vpop.f32.mrb[0].mxu0
  %v1436 = vadd.f32 0.0, %v1435
  %v1437 = vpop.f32.mrb[0].mxu0
  %1438 = vmatprep.mubr.bf16.mxu0 0
  %1439 = vmatmul.mubr.bf16.gmra.mrb[0].mxu0 %v1218
  %v1440 = vpop.f32.mrb[0].mxu0
  %v1441 = vadd.f32 0.0, %v1440
  %v1442 = vpop.f32.mrb[0].mxu0
  %v1443 = vpop.f32.mrb[0].mxu0
  %v1444 = vadd.f32 0.0, %v1443
  %v1445 = vpop.f32.mrb[0].mxu0
  %1446 = vmatprep.mubr.bf16.mxu0 0
  %1447 = vmatmul.mubr.bf16.gmra.mrb[0].mxu0 %v1219
  %v1448 = vpop.f32.mrb[0].mxu0
  %v1449 = vadd.f32 0.0, %v1448
  %v1450 = vpop.f32.mrb[0].mxu0
  %v1451 = vpop.f32.mrb[0].mxu0
  %v1452 = vadd.f32 0.0, %v1451
  %v1453 = vpop.f32.mrb[0].mxu0
  %1454 = vdwg.mxu0
  %s1455 = scalar_lea.vmem %s4, 256
  %1456 = vst.msk [vmem:[%s1455] sm:$0xff] %vm483, %v1393
  %1457 = vst.msk [vmem:[%s1455 + $0x8] sm:$0xff] %vm483, %v1396
  %1458 = vst.msk [vmem:[%s1455 + $0x10] sm:$0xff] %vm483, %v1401
  %1459 = vst.msk [vmem:[%s1455 + $0x18] sm:$0xff] %vm483, %v1404
  %1460 = vst.msk [vmem:[%s1455 + $0x20] sm:$0xff] %vm483, %v1409
  %1461 = vst.msk [vmem:[%s1455 + $0x28] sm:$0xff] %vm483, %v1412
  %1462 = vst.msk [vmem:[%s1455 + $0x30] sm:$0xff] %vm483, %v1417
  %1463 = vst.msk [vmem:[%s1455 + $0x38] sm:$0xff] %vm483, %v1420
  %1464 = vst.msk [vmem:[%s1455 + $0x40] sm:$0xff] %vm483, %v1425
  %1465 = vst.msk [vmem:[%s1455 + $0x48] sm:$0xff] %vm483, %v1428
  %1466 = vst.msk [vmem:[%s1455 + $0x50] sm:$0xff] %vm483, %v1433
  %1467 = vst.msk [vmem:[%s1455 + $0x58] sm:$0xff] %vm483, %v1436
  %1468 = vst.msk [vmem:[%s1455 + $0x60] sm:$0xff] %vm483, %v1441
  %1469 = vst.msk [vmem:[%s1455 + $0x68] sm:$0xff] %vm483, %v1444
  %1470 = vst.msk [vmem:[%s1455 + $0x70] sm:$0xff] %vm483, %v1449
  %1471 = vst.msk [vmem:[%s1455 + $0x78] sm:$0xff] %vm483, %v1452
  %v1472 = vld [vmem:[%s0] sm:$0xf]
  %v1473 = vld [vmem:[%s0 + $0x4] sm:$0xf]
  %v1474 = vld [vmem:[%s0 + $0x8] sm:$0xf]
  %v1475 = vld [vmem:[%s0 + $0xc] sm:$0xf]
  %v1476 = vld [vmem:[%s0 + $0x10] sm:$0xf]
  %v1477 = vld [vmem:[%s0 + $0x14] sm:$0xf]
  %v1478 = vld [vmem:[%s0 + $0x18] sm:$0xf]
  %v1479 = vld [vmem:[%s0 + $0x1c] sm:$0xf]
  %v1480 = vld [vmem:[%s0 + $0x20] sm:$0xf]
  %v1481 = vld [vmem:[%s0 + $0x24] sm:$0xf]
  %v1482 = vld [vmem:[%s0 + $0x28] sm:$0xf]
  %v1483 = vld [vmem:[%s0 + $0x2c] sm:$0xf]
  %v1484 = vld [vmem:[%s0 + $0x30] sm:$0xf]
  %v1485 = vld [vmem:[%s0 + $0x34] sm:$0xf]
  %v1486 = vld [vmem:[%s0 + $0x38] sm:$0xf]
  %v1487 = vld [vmem:[%s0 + $0x3c] sm:$0xf]
  %s1488 = scalar_lea.vmem %s1, 192
  %v1489 = vld [vmem:[%s1488] sm:$0xf]
  %v1490 = vld [vmem:[%s1488 + $0x4] sm:$0xf]
  %v1491 = vld [vmem:[%s1488 + $0x8] sm:$0xf]
  %v1492 = vld [vmem:[%s1488 + $0xc] sm:$0xf]
  %v1493 = vld [vmem:[%s1488 + $0x10] sm:$0xf]
  %v1494 = vld [vmem:[%s1488 + $0x14] sm:$0xf]
  %v1495 = vld [vmem:[%s1488 + $0x18] sm:$0xf]
  %v1496 = vld [vmem:[%s1488 + $0x1c] sm:$0xf]
  %v1497 = vld [vmem:[%s1488 + $0x20] sm:$0xf]
  %v1498 = vld [vmem:[%s1488 + $0x24] sm:$0xf]
  %v1499 = vld [vmem:[%s1488 + $0x28] sm:$0xf]
  %v1500 = vld [vmem:[%s1488 + $0x2c] sm:$0xf]
  %v1501 = vld [vmem:[%s1488 + $0x30] sm:$0xf]
  %v1502 = vld [vmem:[%s1488 + $0x34] sm:$0xf]
  %v1503 = vld [vmem:[%s1488 + $0x38] sm:$0xf]
  %v1504 = vld [vmem:[%s1488 + $0x3c] sm:$0xf]
  %v1521 = vunpack.c.l.b16 %v1472
  %v1522 = vunpack.c.l.b16 %v1473
  %v1523 = vunpack.c.l.b16 %v1474
  %v1524 = vunpack.c.l.b16 %v1475
  %v1525 = vunpack.c.l.b16 %v1476
  %v1526 = vunpack.c.l.b16 %v1477
  %v1527 = vunpack.c.l.b16 %v1478
  %v1528 = vunpack.c.l.b16 %v1479
  %v1529 = vunpack.c.l.b16 %v1480
  %v1530 = vunpack.c.l.b16 %v1481
  %v1531 = vunpack.c.l.b16 %v1482
  %v1532 = vunpack.c.l.b16 %v1483
  %v1533 = vunpack.c.l.b16 %v1484
  %v1534 = vunpack.c.l.b16 %v1485
  %v1535 = vunpack.c.l.b16 %v1486
  %v1536 = vunpack.c.l.b16 %v1487
  %v1537 = vpack.c.b16 %v1522, %v1521
  %v1538 = vpack.c.b16 %v1524, %v1523
  %v1539 = vpack.c.b16 %v1526, %v1525
  %v1540 = vpack.c.b16 %v1528, %v1527
  %v1541 = vpack.c.b16 %v1530, %v1529
  %v1542 = vpack.c.b16 %v1532, %v1531
  %v1543 = vpack.c.b16 %v1534, %v1533
  %v1544 = vpack.c.b16 %v1536, %v1535
  %v1569 = vunpack.c.l.b16 %v1489
  %v1570 = vunpack.c.l.b16 %v1490
  %v1571 = vunpack.c.l.b16 %v1491
  %v1572 = vunpack.c.l.b16 %v1492
  %v1573 = vunpack.c.l.b16 %v1493
  %v1574 = vunpack.c.l.b16 %v1494
  %v1575 = vunpack.c.l.b16 %v1495
  %v1576 = vunpack.c.l.b16 %v1496
  %v1577 = vunpack.c.l.b16 %v1497
  %v1578 = vunpack.c.l.b16 %v1498
  %v1579 = vunpack.c.l.b16 %v1499
  %v1580 = vunpack.c.l.b16 %v1500
  %v1581 = vunpack.c.l.b16 %v1501
  %v1582 = vunpack.c.l.b16 %v1502
  %v1583 = vunpack.c.l.b16 %v1503
  %v1584 = vunpack.c.l.b16 %v1504
  %v1585 = vpack.c.b16 %v1570, %v1569
  %v1586 = vpack.c.b16 %v1572, %v1571
  %v1587 = vpack.c.b16 %v1574, %v1573
  %v1588 = vpack.c.b16 %v1576, %v1575
  %v1589 = vpack.c.b16 %v1578, %v1577
  %v1590 = vpack.c.b16 %v1580, %v1579
  %v1591 = vpack.c.b16 %v1582, %v1581
  %v1592 = vpack.c.b16 %v1584, %v1583
  %1601 = vmatprep.subr.bf16.mxu0 0
  %1602 = vmatpush1.bf16.msra.mxu0 %v1585
  %1603 = vmatprep.subr.bf16.mxu0 0
  %1604 = vmatpush1.bf16.msra.mxu0 %v1586
  %1605 = vmatprep.subr.bf16.mxu0 0
  %1606 = vmatpush1.bf16.msra.mxu0 %v1587
  %1607 = vmatprep.subr.bf16.mxu0 0
  %1608 = vmatpush1.bf16.msra.mxu0 %v1588
  %1609 = vmatprep.subr.bf16.mxu0 0
  %1610 = vmatpush1.bf16.msra.mxu0 %v1589
  %1611 = vmatprep.subr.bf16.mxu0 0
  %1612 = vmatpush1.bf16.msra.mxu0 %v1590
  %1613 = vmatprep.subr.bf16.mxu0 0
  %1614 = vmatpush1.bf16.msra.mxu0 %v1591
  %1615 = vmatprep.subr.bf16.mxu0 0
  %1616 = vmatpush1.bf16.msra.mxu0 %v1592
  %1617 = vmatprep.subr.bf16.mxu0 0
  %1618 = vmatpush1.bf16.msra.mxu0 0
  %1619 = vmatprep.subr.bf16.mxu0 0
  %1620 = vmatpush1.bf16.msra.mxu0 0
  %1621 = vmatprep.subr.bf16.mxu0 0
  %1622 = vmatpush1.bf16.msra.mxu0 0
  %1623 = vmatprep.subr.bf16.mxu0 0
  %1624 = vmatpush1.bf16.msra.mxu0 0
  %1625 = vmatprep.subr.bf16.mxu0 0
  %1626 = vmatpush1.bf16.msra.mxu0 0
  %1627 = vmatprep.subr.bf16.mxu0 0
  %1628 = vmatpush1.bf16.msra.mxu0 0
  %1629 = vmatprep.subr.bf16.mxu0 0
  %1630 = vmatpush1.bf16.msra.mxu0 0
  %1631 = vmatprep.subr.bf16.mxu0 0
  %1632 = vmatpush1.bf16.msra.mxu0 0
  %1633 = vmatprep.mubr.bf16.mxu0 0
  %1634 = vmatmul.mubr.bf16.gmra.mrb[0].mxu0 %v1537
  %v1635 = vpop.f32.mrb[0].mxu0
  %v1636 = vadd.f32 0.0, %v1635
  %v1637 = vpop.f32.mrb[0].mxu0
  %v1638 = vpop.f32.mrb[0].mxu0
  %v1639 = vadd.f32 0.0, %v1638
  %v1640 = vpop.f32.mrb[0].mxu0
  %1641 = vmatprep.mubr.bf16.mxu0 0
  %1642 = vmatmul.mubr.bf16.gmra.mrb[0].mxu0 %v1538
  %v1643 = vpop.f32.mrb[0].mxu0
  %v1644 = vadd.f32 0.0, %v1643
  %v1645 = vpop.f32.mrb[0].mxu0
  %v1646 = vpop.f32.mrb[0].mxu0
  %v1647 = vadd.f32 0.0, %v1646
  %v1648 = vpop.f32.mrb[0].mxu0
  %1649 = vmatprep.mubr.bf16.mxu0 0
  %1650 = vmatmul.mubr.bf16.gmra.mrb[0].mxu0 %v1539
  %v1651 = vpop.f32.mrb[0].mxu0
  %v1652 = vadd.f32 0.0, %v1651
  %v1653 = vpop.f32.mrb[0].mxu0
  %v1654 = vpop.f32.mrb[0].mxu0
  %v1655 = vadd.f32 0.0, %v1654
  %v1656 = vpop.f32.mrb[0].mxu0
  %1657 = vmatprep.mubr.bf16.mxu0 0
  %1658 = vmatmul.mubr.bf16.gmra.mrb[0].mxu0 %v1540
  %v1659 = vpop.f32.mrb[0].mxu0
  %v1660 = vadd.f32 0.0, %v1659
  %v1661 = vpop.f32.mrb[0].mxu0
  %v1662 = vpop.f32.mrb[0].mxu0
  %v1663 = vadd.f32 0.0, %v1662
  %v1664 = vpop.f32.mrb[0].mxu0
  %1665 = vmatprep.mubr.bf16.mxu0 0
  %1666 = vmatmul.mubr.bf16.gmra.mrb[0].mxu0 %v1541
  %v1667 = vpop.f32.mrb[0].mxu0
  %v1668 = vadd.f32 0.0, %v1667
  %v1669 = vpop.f32.mrb[0].mxu0
  %v1670 = vpop.f32.mrb[0].mxu0
  %v1671 = vadd.f32 0.0, %v1670
  %v1672 = vpop.f32.mrb[0].mxu0
  %1673 = vmatprep.mubr.bf16.mxu0 0
  %1674 = vmatmul.mubr.bf16.gmra.mrb[0].mxu0 %v1542
  %v1675 = vpop.f32.mrb[0].mxu0
  %v1676 = vadd.f32 0.0, %v1675
  %v1677 = vpop.f32.mrb[0].mxu0
  %v1678 = vpop.f32.mrb[0].mxu0
  %v1679 = vadd.f32 0.0, %v1678
  %v1680 = vpop.f32.mrb[0].mxu0
  %1681 = vmatprep.mubr.bf16.mxu0 0
  %1682 = vmatmul.mubr.bf16.gmra.mrb[0].mxu0 %v1543
  %v1683 = vpop.f32.mrb[0].mxu0
  %v1684 = vadd.f32 0.0, %v1683
  %v1685 = vpop.f32.mrb[0].mxu0
  %v1686 = vpop.f32.mrb[0].mxu0
  %v1687 = vadd.f32 0.0, %v1686
  %v1688 = vpop.f32.mrb[0].mxu0
  %1689 = vmatprep.mubr.bf16.mxu0 0
  %1690 = vmatmul.mubr.bf16.gmra.mrb[0].mxu0 %v1544
  %v1691 = vpop.f32.mrb[0].mxu0
  %v1692 = vadd.f32 0.0, %v1691
  %v1693 = vpop.f32.mrb[0].mxu0
  %v1694 = vpop.f32.mrb[0].mxu0
  %v1695 = vadd.f32 0.0, %v1694
  %v1696 = vpop.f32.mrb[0].mxu0
  %1697 = vdwg.mxu0
  %v1698 = vpack.c.bf16 %v1639, %v1636
  %v1699 = vpack.c.bf16 %v1647, %v1644
  %v1700 = vpack.c.bf16 %v1655, %v1652
  %v1701 = vpack.c.bf16 %v1663, %v1660
  %v1702 = vpack.c.bf16 %v1671, %v1668
  %v1703 = vpack.c.bf16 %v1679, %v1676
  %v1704 = vpack.c.bf16 %v1687, %v1684
  %v1705 = vpack.c.bf16 %v1695, %v1692
  %v1714 = vunpack.c.l.b16 %v1698
  %v1715 = vunpack.c.h.b16 %v1698
  %v1716 = vunpack.c.l.b16 %v1699
  %v1717 = vunpack.c.h.b16 %v1699
  %v1718 = vunpack.c.l.b16 %v1700
  %v1719 = vunpack.c.h.b16 %v1700
  %v1720 = vunpack.c.l.b16 %v1701
  %v1721 = vunpack.c.h.b16 %v1701
  %v1722 = vunpack.c.l.b16 %v1702
  %v1723 = vunpack.c.h.b16 %v1702
  %v1724 = vunpack.c.l.b16 %v1703
  %v1725 = vunpack.c.h.b16 %v1703
  %v1726 = vunpack.c.l.b16 %v1704
  %v1727 = vunpack.c.h.b16 %v1704
  %v1728 = vunpack.c.l.b16 %v1705
  %v1729 = vunpack.c.h.b16 %v1705
  %v1730 = vpack.c.b16 %v1714, %v1714
  %v1731 = vpack.c.b16 %v1715, %v1715
  %v1732 = vpack.c.b16 %v1716, %v1716
  %v1733 = vpack.c.b16 %v1717, %v1717
  %v1734 = vpack.c.b16 %v1718, %v1718
  %v1735 = vpack.c.b16 %v1719, %v1719
  %v1736 = vpack.c.b16 %v1720, %v1720
  %v1737 = vpack.c.b16 %v1721, %v1721
  %v1738 = vpack.c.b16 %v1722, %v1722
  %v1739 = vpack.c.b16 %v1723, %v1723
  %v1740 = vpack.c.b16 %v1724, %v1724
  %v1741 = vpack.c.b16 %v1725, %v1725
  %v1742 = vpack.c.b16 %v1726, %v1726
  %v1743 = vpack.c.b16 %v1727, %v1727
  %v1744 = vpack.c.b16 %v1728, %v1728
  %v1745 = vpack.c.b16 %v1729, %v1729
  %s1762 = scalar_lea.vmem %s3, 192
  %1763 = vst [vmem:[%s1762] sm:$0xf] %v1730
  %1764 = vst [vmem:[%s1762 + $0x4] sm:$0xf] %v1731
  %1765 = vst [vmem:[%s1762 + $0x8] sm:$0xf] %v1732
  %1766 = vst [vmem:[%s1762 + $0xc] sm:$0xf] %v1733
  %1767 = vst [vmem:[%s1762 + $0x10] sm:$0xf] %v1734
  %1768 = vst [vmem:[%s1762 + $0x14] sm:$0xf] %v1735
  %1769 = vst [vmem:[%s1762 + $0x18] sm:$0xf] %v1736
  %1770 = vst [vmem:[%s1762 + $0x1c] sm:$0xf] %v1737
  %1771 = vst [vmem:[%s1762 + $0x20] sm:$0xf] %v1738
  %1772 = vst [vmem:[%s1762 + $0x24] sm:$0xf] %v1739
  %1773 = vst [vmem:[%s1762 + $0x28] sm:$0xf] %v1740
  %1774 = vst [vmem:[%s1762 + $0x2c] sm:$0xf] %v1741
  %1775 = vst [vmem:[%s1762 + $0x30] sm:$0xf] %v1742
  %1776 = vst [vmem:[%s1762 + $0x34] sm:$0xf] %v1743
  %1777 = vst [vmem:[%s1762 + $0x38] sm:$0xf] %v1744
  %1778 = vst [vmem:[%s1762 + $0x3c] sm:$0xf] %v1745
  %s1779 = scalar_lea.vmem %s2, 192
  %v1780 = vld [vmem:[%s1779] sm:$0xf]
  %v1781 = vld [vmem:[%s1779 + $0x4] sm:$0xf]
  %v1782 = vld [vmem:[%s1779 + $0x8] sm:$0xf]
  %v1783 = vld [vmem:[%s1779 + $0xc] sm:$0xf]
  %v1784 = vld [vmem:[%s1779 + $0x10] sm:$0xf]
  %v1785 = vld [vmem:[%s1779 + $0x14] sm:$0xf]
  %v1786 = vld [vmem:[%s1779 + $0x18] sm:$0xf]
  %v1787 = vld [vmem:[%s1779 + $0x1c] sm:$0xf]
  %v1788 = vld [vmem:[%s1779 + $0x20] sm:$0xf]
  %v1789 = vld [vmem:[%s1779 + $0x24] sm:$0xf]
  %v1790 = vld [vmem:[%s1779 + $0x28] sm:$0xf]
  %v1791 = vld [vmem:[%s1779 + $0x2c] sm:$0xf]
  %v1792 = vld [vmem:[%s1779 + $0x30] sm:$0xf]
  %v1793 = vld [vmem:[%s1779 + $0x34] sm:$0xf]
  %v1794 = vld [vmem:[%s1779 + $0x38] sm:$0xf]
  %v1795 = vld [vmem:[%s1779 + $0x3c] sm:$0xf]
  %v1812 = vunpack.c.l.b16 %v1780
  %v1813 = vunpack.c.l.b16 %v1781
  %v1814 = vunpack.c.l.b16 %v1782
  %v1815 = vunpack.c.l.b16 %v1783
  %v1816 = vunpack.c.l.b16 %v1784
  %v1817 = vunpack.c.l.b16 %v1785
  %v1818 = vunpack.c.l.b16 %v1786
  %v1819 = vunpack.c.l.b16 %v1787
  %v1820 = vunpack.c.l.b16 %v1788
  %v1821 = vunpack.c.l.b16 %v1789
  %v1822 = vunpack.c.l.b16 %v1790
  %v1823 = vunpack.c.l.b16 %v1791
  %v1824 = vunpack.c.l.b16 %v1792
  %v1825 = vunpack.c.l.b16 %v1793
  %v1826 = vunpack.c.l.b16 %v1794
  %v1827 = vunpack.c.l.b16 %v1795
  %v1828 = vpack.c.b16 %v1813, %v1812
  %v1829 = vpack.c.b16 %v1815, %v1814
  %v1830 = vpack.c.b16 %v1817, %v1816
  %v1831 = vpack.c.b16 %v1819, %v1818
  %v1832 = vpack.c.b16 %v1821, %v1820
  %v1833 = vpack.c.b16 %v1823, %v1822
  %v1834 = vpack.c.b16 %v1825, %v1824
  %v1835 = vpack.c.b16 %v1827, %v1826
  %1844 = vmatprep.subr.bf16.mxu0 0
  %1845 = vmatpush1.bf16.msra.mxu0 %v1828
  %1846 = vmatprep.subr.bf16.mxu0 0
  %1847 = vmatpush1.bf16.msra.mxu0 %v1829
  %1848 = vmatprep.subr.bf16.mxu0 0
  %1849 = vmatpush1.bf16.msra.mxu0 %v1830
  %1850 = vmatprep.subr.bf16.mxu0 0
  %1851 = vmatpush1.bf16.msra.mxu0 %v1831
  %1852 = vmatprep.subr.bf16.mxu0 0
  %1853 = vmatpush1.bf16.msra.mxu0 %v1832
  %1854 = vmatprep.subr.bf16.mxu0 0
  %1855 = vmatpush1.bf16.msra.mxu0 %v1833
  %1856 = vmatprep.subr.bf16.mxu0 0
  %1857 = vmatpush1.bf16.msra.mxu0 %v1834
  %1858 = vmatprep.subr.bf16.mxu0 0
  %1859 = vmatpush1.bf16.msra.mxu0 %v1835
  %1860 = vmatprep.subr.bf16.mxu0 0
  %1861 = vmatpush1.bf16.msra.mxu0 0
  %1862 = vmatprep.subr.bf16.mxu0 0
  %1863 = vmatpush1.bf16.msra.mxu0 0
  %1864 = vmatprep.subr.bf16.mxu0 0
  %1865 = vmatpush1.bf16.msra.mxu0 0
  %1866 = vmatprep.subr.bf16.mxu0 0
  %1867 = vmatpush1.bf16.msra.mxu0 0
  %1868 = vmatprep.subr.bf16.mxu0 0
  %1869 = vmatpush1.bf16.msra.mxu0 0
  %1870 = vmatprep.subr.bf16.mxu0 0
  %1871 = vmatpush1.bf16.msra.mxu0 0
  %1872 = vmatprep.subr.bf16.mxu0 0
  %1873 = vmatpush1.bf16.msra.mxu0 0
  %1874 = vmatprep.subr.bf16.mxu0 0
  %1875 = vmatpush1.bf16.msra.mxu0 0
  %1876 = vmatprep.mubr.bf16.mxu0 0
  %1877 = vmatmul.mubr.bf16.gmra.mrb[0].mxu0 %v1698
  %v1878 = vpop.f32.mrb[0].mxu0
  %v1879 = vadd.f32 0.0, %v1878
  %v1880 = vpop.f32.mrb[0].mxu0
  %v1881 = vpop.f32.mrb[0].mxu0
  %v1882 = vadd.f32 0.0, %v1881
  %v1883 = vpop.f32.mrb[0].mxu0
  %1884 = vmatprep.mubr.bf16.mxu0 0
  %1885 = vmatmul.mubr.bf16.gmra.mrb[0].mxu0 %v1699
  %v1886 = vpop.f32.mrb[0].mxu0
  %v1887 = vadd.f32 0.0, %v1886
  %v1888 = vpop.f32.mrb[0].mxu0
  %v1889 = vpop.f32.mrb[0].mxu0
  %v1890 = vadd.f32 0.0, %v1889
  %v1891 = vpop.f32.mrb[0].mxu0
  %1892 = vmatprep.mubr.bf16.mxu0 0
  %1893 = vmatmul.mubr.bf16.gmra.mrb[0].mxu0 %v1700
  %v1894 = vpop.f32.mrb[0].mxu0
  %v1895 = vadd.f32 0.0, %v1894
  %v1896 = vpop.f32.mrb[0].mxu0
  %v1897 = vpop.f32.mrb[0].mxu0
  %v1898 = vadd.f32 0.0, %v1897
  %v1899 = vpop.f32.mrb[0].mxu0
  %1900 = vmatprep.mubr.bf16.mxu0 0
  %1901 = vmatmul.mubr.bf16.gmra.mrb[0].mxu0 %v1701
  %v1902 = vpop.f32.mrb[0].mxu0
  %v1903 = vadd.f32 0.0, %v1902
  %v1904 = vpop.f32.mrb[0].mxu0
  %v1905 = vpop.f32.mrb[0].mxu0
  %v1906 = vadd.f32 0.0, %v1905
  %v1907 = vpop.f32.mrb[0].mxu0
  %1908 = vmatprep.mubr.bf16.mxu0 0
  %1909 = vmatmul.mubr.bf16.gmra.mrb[0].mxu0 %v1702
  %v1910 = vpop.f32.mrb[0].mxu0
  %v1911 = vadd.f32 0.0, %v1910
  %v1912 = vpop.f32.mrb[0].mxu0
  %v1913 = vpop.f32.mrb[0].mxu0
  %v1914 = vadd.f32 0.0, %v1913
  %v1915 = vpop.f32.mrb[0].mxu0
  %1916 = vmatprep.mubr.bf16.mxu0 0
  %1917 = vmatmul.mubr.bf16.gmra.mrb[0].mxu0 %v1703
  %v1918 = vpop.f32.mrb[0].mxu0
  %v1919 = vadd.f32 0.0, %v1918
  %v1920 = vpop.f32.mrb[0].mxu0
  %v1921 = vpop.f32.mrb[0].mxu0
  %v1922 = vadd.f32 0.0, %v1921
  %v1923 = vpop.f32.mrb[0].mxu0
  %1924 = vmatprep.mubr.bf16.mxu0 0
  %1925 = vmatmul.mubr.bf16.gmra.mrb[0].mxu0 %v1704
  %v1926 = vpop.f32.mrb[0].mxu0
  %v1927 = vadd.f32 0.0, %v1926
  %v1928 = vpop.f32.mrb[0].mxu0
  %v1929 = vpop.f32.mrb[0].mxu0
  %v1930 = vadd.f32 0.0, %v1929
  %v1931 = vpop.f32.mrb[0].mxu0
  %1932 = vmatprep.mubr.bf16.mxu0 0
  %1933 = vmatmul.mubr.bf16.gmra.mrb[0].mxu0 %v1705
  %v1934 = vpop.f32.mrb[0].mxu0
  %v1935 = vadd.f32 0.0, %v1934
  %v1936 = vpop.f32.mrb[0].mxu0
  %v1937 = vpop.f32.mrb[0].mxu0
  %v1938 = vadd.f32 0.0, %v1937
  %v1939 = vpop.f32.mrb[0].mxu0
  %1940 = vdwg.mxu0
  %s1941 = scalar_lea.vmem %s4, 384
  %1942 = vst.msk [vmem:[%s1941] sm:$0xff] %vm483, %v1879
  %1943 = vst.msk [vmem:[%s1941 + $0x8] sm:$0xff] %vm483, %v1882
  %1944 = vst.msk [vmem:[%s1941 + $0x10] sm:$0xff] %vm483, %v1887
  %1945 = vst.msk [vmem:[%s1941 + $0x18] sm:$0xff] %vm483, %v1890
  %1946 = vst.msk [vmem:[%s1941 + $0x20] sm:$0xff] %vm483, %v1895
  %1947 = vst.msk [vmem:[%s1941 + $0x28] sm:$0xff] %vm483, %v1898
  %1948 = vst.msk [vmem:[%s1941 + $0x30] sm:$0xff] %vm483, %v1903
  %1949 = vst.msk [vmem:[%s1941 + $0x38] sm:$0xff] %vm483, %v1906
  %1950 = vst.msk [vmem:[%s1941 + $0x40] sm:$0xff] %vm483, %v1911
  %1951 = vst.msk [vmem:[%s1941 + $0x48] sm:$0xff] %vm483, %v1914
  %1952 = vst.msk [vmem:[%s1941 + $0x50] sm:$0xff] %vm483, %v1919
  %1953 = vst.msk [vmem:[%s1941 + $0x58] sm:$0xff] %vm483, %v1922
  %1954 = vst.msk [vmem:[%s1941 + $0x60] sm:$0xff] %vm483, %v1927
  %1955 = vst.msk [vmem:[%s1941 + $0x68] sm:$0xff] %vm483, %v1930
  %1956 = vst.msk [vmem:[%s1941 + $0x70] sm:$0xff] %vm483, %v1935
  %1957 = vst.msk [vmem:[%s1941 + $0x78] sm:$0xff] %vm483, %v1938
  // Predicated region
  $region14: #{gat_model_forward.5} parent=0 // pred_check
    _
  $region15: #{gat_model_forward.5} parent=0 // pred_check_branch
    %1959 = sbr.rel (0) target = $region17
  $region16: #{gat_model_forward.5} parent=0 // pred_region
    _
  $region17: #{gat_model_forward.5} parent=0 // pred_fallthru
    _
  // Predicated region
  $region18: #{gat_model_forward.5} parent=0 // pred_check
    _
  $region19: #{gat_model_forward.5} parent=0 // pred_check_branch
    %1961 = sbr.rel (0) target = $region21
  $region20: #{gat_model_forward.5} parent=0 // pred_region
    _
  $region21: #{gat_model_forward.5} parent=0 // pred_fallthru
    _
  // Predicated region
  $region22: #{gat_model_forward.5} parent=0 // pred_check
    _
  $region23: #{gat_model_forward.5} parent=0 // pred_check_branch
    %1963 = sbr.rel (0) target = $region25
  $region24: #{gat_model_forward.5} parent=0 // pred_region
    _
  $region25: #{gat_model_forward.5} parent=0 // pred_fallthru
    _
  // Predicated region
  $region26: #{gat_model_forward.5} parent=0 // pred_check
    _
  $region27: #{gat_model_forward.5} parent=0 // pred_check_branch
    %1965 = sbr.rel (0) target = $region29
  $region28: #{gat_model_forward.5} parent=0 // pred_region
    _
  $region29: #{gat_model_forward.5} parent=0 // pred_fallthru
    _

// kernel: gat_model_forward.8
$region0: #{gat_model_forward.8}
  #allocation0 [shape = 'u32[]', space=smem, size = 0x4, offset = 0x4, fixed_abs, tag = 'smem constant byte address 0x4 - core index']
  #allocation1 [shape = 'u32[144,128]{1,0:T(1,128)}', space=vmem, size = 0x12000, scoped, tag = 'internal scratch']
  %s0 = inlined_call_operand.vmem [shape: f32[4,128,1], index: 0, kind: input, shape index: {}]
  %s1 = inlined_call_operand.vmem [shape: s8[128,128], index: 1, kind: input, shape index: {}]
  %s2 = inlined_call_operand.vmem [shape: f32[4,1,128], index: 2, kind: input, shape index: {}]
  %s3 = inlined_call_operand.vmem [shape: bf16[4,128,64], index: 3, kind: input, shape index: {}]
  %s4 = inlined_call_operand.vmem [shape: f32[4,1,64], index: 4, kind: input, shape index: {}]
  %s5 = inlined_call_operand.vmem [shape: bf16[4,128,64], index: 5, kind: output, shape index: {}]
  %s6 = sld [smem:[#allocation0]]
  $region37: #{gat_model_forward.8} parent=0
    _
  %s8 = ssub.s32 1, %s6
  %s9 = scalar_select 0, %s8, %s6
  // Predicated region
  $region2: #{gat_model_forward.8} parent=0 // pred_check
    _
  $region3: #{gat_model_forward.8} parent=0 // pred_check_branch
    %11 = sbr.rel (0) target = $region5
  $region4: #{gat_model_forward.8} parent=0 // pred_region
    _
  $region5: #{gat_model_forward.8} parent=0 // pred_fallthru
    _
  // Predicated region
  $region6: #{gat_model_forward.8} parent=0 // pred_check
    _
  $region7: #{gat_model_forward.8} parent=0 // pred_check_branch
    %13 = sbr.rel (0) target = $region9
  $region8: #{gat_model_forward.8} parent=0 // pred_region
    _
  $region9: #{gat_model_forward.8} parent=0 // pred_fallthru
    _
  // Predicated region
  $region10: #{gat_model_forward.8} parent=0 // pred_check
    _
  $region11: #{gat_model_forward.8} parent=0 // pred_check_branch
    %15 = sbr.rel (0) target = $region13
  $region12: #{gat_model_forward.8} parent=0 // pred_region
    _
  $region13: #{gat_model_forward.8} parent=0 // pred_fallthru
    _
  // Predicated region
  $region14: #{gat_model_forward.8} parent=0 // pred_check
    _
  $region15: #{gat_model_forward.8} parent=0 // pred_check_branch
    %17 = sbr.rel (0) target = $region17
  $region16: #{gat_model_forward.8} parent=0 // pred_region
    _
  $region17: #{gat_model_forward.8} parent=0 // pred_fallthru
    _
  // Predicated region
  $region18: #{gat_model_forward.8} parent=0 // pred_check
    _
  $region19: #{gat_model_forward.8} parent=0 // pred_check_branch
    %19 = sbr.rel (0) target = $region21
  $region20: #{gat_model_forward.8} parent=0 // pred_region
    _
  $region21: #{gat_model_forward.8} parent=0 // pred_fallthru
    _
  %v21 = vld [vmem:[%s1] sm:$0xff]
  %v22 = vld [vmem:[%s1 + $0x8] sm:$0xff]
  %v23 = vld [vmem:[%s1 + $0x10] sm:$0xff]
  %v24 = vld [vmem:[%s1 + $0x18] sm:$0xff]
  %v25 = vunpack.c.0.s8 %v21
  %v26 = vunpack.c.1.s8 %v21
  %v27 = vunpack.c.2.s8 %v21
  %v28 = vunpack.c.3.s8 %v21
  %v29 = vunpack.c.0.s8 %v22
  %v30 = vunpack.c.1.s8 %v22
  %v31 = vunpack.c.2.s8 %v22
  %v32 = vunpack.c.3.s8 %v22
  %v33 = vunpack.c.0.s8 %v23
  %v34 = vunpack.c.1.s8 %v23
  %v35 = vunpack.c.2.s8 %v23
  %v36 = vunpack.c.3.s8 %v23
  %v37 = vunpack.c.0.s8 %v24
  %v38 = vunpack.c.1.s8 %v24
  %v39 = vunpack.c.2.s8 %v24
  %v40 = vunpack.c.3.s8 %v24
  %v41 = vcvt.s32.f32 %v25
  %v42 = vcvt.s32.f32 %v26
  %v43 = vcvt.s32.f32 %v27
  %v44 = vcvt.s32.f32 %v28
  %v45 = vcvt.s32.f32 %v29
  %v46 = vcvt.s32.f32 %v30
  %v47 = vcvt.s32.f32 %v31
  %v48 = vcvt.s32.f32 %v32
  %v49 = vcvt.s32.f32 %v33
  %v50 = vcvt.s32.f32 %v34
  %v51 = vcvt.s32.f32 %v35
  %v52 = vcvt.s32.f32 %v36
  %v53 = vcvt.s32.f32 %v37
  %v54 = vcvt.s32.f32 %v38
  %v55 = vcvt.s32.f32 %v39
  %v56 = vcvt.s32.f32 %v40
  %vm57 = vcmp.gt.f32.partialorder %v41, 0.0
  %vm58 = vcmp.gt.f32.partialorder %v42, 0.0
  %vm59 = vcmp.gt.f32.partialorder %v43, 0.0
  %vm60 = vcmp.gt.f32.partialorder %v44, 0.0
  %vm61 = vcmp.gt.f32.partialorder %v45, 0.0
  %vm62 = vcmp.gt.f32.partialorder %v46, 0.0
  %vm63 = vcmp.gt.f32.partialorder %v47, 0.0
  %vm64 = vcmp.gt.f32.partialorder %v48, 0.0
  %vm65 = vcmp.gt.f32.partialorder %v49, 0.0
  %vm66 = vcmp.gt.f32.partialorder %v50, 0.0
  %vm67 = vcmp.gt.f32.partialorder %v51, 0.0
  %vm68 = vcmp.gt.f32.partialorder %v52, 0.0
  %vm69 = vcmp.gt.f32.partialorder %v53, 0.0
  %vm70 = vcmp.gt.f32.partialorder %v54, 0.0
  %vm71 = vcmp.gt.f32.partialorder %v55, 0.0
  %vm72 = vcmp.gt.f32.partialorder %v56, 0.0
  %v73 = vsel %vm57, 0.0, -1e+30
  %v74 = vsel %vm58, 0.0, -1e+30
  %v75 = vsel %vm59, 0.0, -1e+30
  %v76 = vsel %vm60, 0.0, -1e+30
  %v77 = vsel %vm61, 0.0, -1e+30
  %v78 = vsel %vm62, 0.0, -1e+30
  %v79 = vsel %vm63, 0.0, -1e+30
  %v80 = vsel %vm64, 0.0, -1e+30
  %v81 = vsel %vm65, 0.0, -1e+30
  %v82 = vsel %vm66, 0.0, -1e+30
  %v83 = vsel %vm67, 0.0, -1e+30
  %v84 = vsel %vm68, 0.0, -1e+30
  %v85 = vsel %vm69, 0.0, -1e+30
  %v86 = vsel %vm70, 0.0, -1e+30
  %v87 = vsel %vm71, 0.0, -1e+30
  %v88 = vsel %vm72, 0.0, -1e+30
  loop: start=0, step=1, limit=4
  $region22: #{gat_model_forward.8} parent=0 // loop_pre_header
    _
  $region23: #{gat_model_forward.8} parent=0 // loop_header
    %s90 = sphi 0, %s94
    %p91 = scmp.ge.s32.totalorder %s90, 4
  $region24: #{gat_model_forward.8} parent=0 // loop_header_branch
    %93 = sbr.rel (%p91) target = $region28
  $region25: #{gat_model_forward.8} parent=0 // loop_body
    %s95 = smul.u32 %s90, 128
    %s96 = scalar_lea.vmem %s0, %s95
    %v97 = vld [vmem:[%s96] sm:$0xff]
    %v98 = vld [vmem:[%s96 + $0x8] sm:$0xff]
    %v99 = vld [vmem:[%s96 + $0x10] sm:$0xff]
    %v100 = vld [vmem:[%s96 + $0x18] sm:$0xff]
    %v101 = vld [vmem:[%s96 + $0x20] sm:$0xff]
    %v102 = vld [vmem:[%s96 + $0x28] sm:$0xff]
    %v103 = vld [vmem:[%s96 + $0x30] sm:$0xff]
    %v104 = vld [vmem:[%s96 + $0x38] sm:$0xff]
    %v105 = vld [vmem:[%s96 + $0x40] sm:$0xff]
    %v106 = vld [vmem:[%s96 + $0x48] sm:$0xff]
    %v107 = vld [vmem:[%s96 + $0x50] sm:$0xff]
    %v108 = vld [vmem:[%s96 + $0x58] sm:$0xff]
    %v109 = vld [vmem:[%s96 + $0x60] sm:$0xff]
    %v110 = vld [vmem:[%s96 + $0x68] sm:$0xff]
    %v111 = vld [vmem:[%s96 + $0x70] sm:$0xff]
    %v112 = vld [vmem:[%s96 + $0x78] sm:$0xff]
    %s113 = scalar_lea.vmem %s2, %s90
    %v114 = vld [vmem:[%s113] sm:$0x1]
    %116 = vset.pattern.permute.xlu0 0
    %117 = vperm.xlu0 %116, %v97
    %v118 = vpop.permute.xlu0 %117
    %121 = vset.pattern.permute.xlu0 0
    %122 = vperm.xlu0 %121, %v98
    %v123 = vpop.permute.xlu0 %122
    %126 = vset.pattern.permute.xlu0 0
    %127 = vperm.xlu0 %126, %v99
    %v128 = vpop.permute.xlu0 %127
    %131 = vset.pattern.permute.xlu0 0
    %132 = vperm.xlu0 %131, %v100
    %v133 = vpop.permute.xlu0 %132
    %136 = vset.pattern.permute.xlu0 0
    %137 = vperm.xlu0 %136, %v101
    %v138 = vpop.permute.xlu0 %137
    %141 = vset.pattern.permute.xlu0 0
    %142 = vperm.xlu0 %141, %v102
    %v143 = vpop.permute.xlu0 %142
    %146 = vset.pattern.permute.xlu0 0
    %147 = vperm.xlu0 %146, %v103
    %v148 = vpop.permute.xlu0 %147
    %151 = vset.pattern.permute.xlu0 0
    %152 = vperm.xlu0 %151, %v104
    %v153 = vpop.permute.xlu0 %152
    %156 = vset.pattern.permute.xlu0 0
    %157 = vperm.xlu0 %156, %v105
    %v158 = vpop.permute.xlu0 %157
    %161 = vset.pattern.permute.xlu0 0
    %162 = vperm.xlu0 %161, %v106
    %v163 = vpop.permute.xlu0 %162
    %166 = vset.pattern.permute.xlu0 0
    %167 = vperm.xlu0 %166, %v107
    %v168 = vpop.permute.xlu0 %167
    %171 = vset.pattern.permute.xlu0 0
    %172 = vperm.xlu0 %171, %v108
    %v173 = vpop.permute.xlu0 %172
    %176 = vset.pattern.permute.xlu0 0
    %177 = vperm.xlu0 %176, %v109
    %v178 = vpop.permute.xlu0 %177
    %181 = vset.pattern.permute.xlu0 0
    %182 = vperm.xlu0 %181, %v110
    %v183 = vpop.permute.xlu0 %182
    %186 = vset.pattern.permute.xlu0 0
    %187 = vperm.xlu0 %186, %v111
    %v188 = vpop.permute.xlu0 %187
    %191 = vset.pattern.permute.xlu0 0
    %192 = vperm.xlu0 %191, %v112
    %v193 = vpop.permute.xlu0 %192
    %v196 = vlaneseq
    %v197 = vshrl.u32 %v196, 7
    %v198 = vsub.s32 0, %v197
    %v199 = vrot.slane %v114, %v198
    %v201 = vadd.f32 %v118, %v199
    %v202 = vadd.f32 %v123, %v199
    %v203 = vadd.f32 %v128, %v199
    %v204 = vadd.f32 %v133, %v199
    %v205 = vadd.f32 %v138, %v199
    %v206 = vadd.f32 %v143, %v199
    %v207 = vadd.f32 %v148, %v199
    %v208 = vadd.f32 %v153, %v199
    %v209 = vadd.f32 %v158, %v199
    %v210 = vadd.f32 %v163, %v199
    %v211 = vadd.f32 %v168, %v199
    %v212 = vadd.f32 %v173, %v199
    %v213 = vadd.f32 %v178, %v199
    %v214 = vadd.f32 %v183, %v199
    %v215 = vadd.f32 %v188, %v199
    %v216 = vadd.f32 %v193, %v199
    %v217 = vmul.f32 %v201, 0.2
    %v218 = vmul.f32 %v202, 0.2
    %v219 = vmul.f32 %v203, 0.2
    %v220 = vmul.f32 %v204, 0.2
    %v221 = vmul.f32 %v205, 0.2
    %v222 = vmul.f32 %v206, 0.2
    %v223 = vmul.f32 %v207, 0.2
    %v224 = vmul.f32 %v208, 0.2
    %v225 = vmul.f32 %v209, 0.2
    %v226 = vmul.f32 %v210, 0.2
    %v227 = vmul.f32 %v211, 0.2
    %v228 = vmul.f32 %v212, 0.2
    %v229 = vmul.f32 %v213, 0.2
    %v230 = vmul.f32 %v214, 0.2
    %v231 = vmul.f32 %v215, 0.2
    %v232 = vmul.f32 %v216, 0.2
    %v233 = vmax.f32 %v201, %v217
    %v234 = vmax.f32 %v202, %v218
    %v235 = vmax.f32 %v203, %v219
    %v236 = vmax.f32 %v204, %v220
    %v237 = vmax.f32 %v205, %v221
    %v238 = vmax.f32 %v206, %v222
    %v239 = vmax.f32 %v207, %v223
    %v240 = vmax.f32 %v208, %v224
    %v241 = vmax.f32 %v209, %v225
    %v242 = vmax.f32 %v210, %v226
    %v243 = vmax.f32 %v211, %v227
    %v244 = vmax.f32 %v212, %v228
    %v245 = vmax.f32 %v213, %v229
    %v246 = vmax.f32 %v214, %v230
    %v247 = vmax.f32 %v215, %v231
    %v248 = vmax.f32 %v216, %v232
    %v249 = vadd.f32 %v233, %v73
    %v250 = vadd.f32 %v234, %v74
    %v251 = vadd.f32 %v235, %v75
    %v252 = vadd.f32 %v236, %v76
    %v253 = vadd.f32 %v237, %v77
    %v254 = vadd.f32 %v238, %v78
    %v255 = vadd.f32 %v239, %v79
    %v256 = vadd.f32 %v240, %v80
    %v257 = vadd.f32 %v241, %v81
    %v258 = vadd.f32 %v242, %v82
    %v259 = vadd.f32 %v243, %v83
    %v260 = vadd.f32 %v244, %v84
    %v261 = vadd.f32 %v245, %v85
    %v262 = vadd.f32 %v246, %v86
    %v263 = vadd.f32 %v247, %v87
    %v264 = vadd.f32 %v248, %v88
    %265 = vmax.xlane.f32.xlu0 %v249
    %v266 = vpop.xlane.xlu0 %265
    %267 = vmax.xlane.f32.xlu0 %v250
    %v268 = vpop.xlane.xlu0 %267
    %269 = vmax.xlane.f32.xlu0 %v251
    %v270 = vpop.xlane.xlu0 %269
    %271 = vmax.xlane.f32.xlu0 %v252
    %v272 = vpop.xlane.xlu0 %271
    %273 = vmax.xlane.f32.xlu0 %v253
    %v274 = vpop.xlane.xlu0 %273
    %275 = vmax.xlane.f32.xlu0 %v254
    %v276 = vpop.xlane.xlu0 %275
    %277 = vmax.xlane.f32.xlu0 %v255
    %v278 = vpop.xlane.xlu0 %277
    %279 = vmax.xlane.f32.xlu0 %v256
    %v280 = vpop.xlane.xlu0 %279
    %281 = vmax.xlane.f32.xlu0 %v257
    %v282 = vpop.xlane.xlu0 %281
    %283 = vmax.xlane.f32.xlu0 %v258
    %v284 = vpop.xlane.xlu0 %283
    %285 = vmax.xlane.f32.xlu0 %v259
    %v286 = vpop.xlane.xlu0 %285
    %287 = vmax.xlane.f32.xlu0 %v260
    %v288 = vpop.xlane.xlu0 %287
    %289 = vmax.xlane.f32.xlu0 %v261
    %v290 = vpop.xlane.xlu0 %289
    %291 = vmax.xlane.f32.xlu0 %v262
    %v292 = vpop.xlane.xlu0 %291
    %293 = vmax.xlane.f32.xlu0 %v263
    %v294 = vpop.xlane.xlu0 %293
    %295 = vmax.xlane.f32.xlu0 %v264
    %v296 = vpop.xlane.xlu0 %295
    %v297 = vsub.f32 %v249, %v266
    %v298 = vsub.f32 %v250, %v268
    %v299 = vsub.f32 %v251, %v270
    %v300 = vsub.f32 %v252, %v272
    %v301 = vsub.f32 %v253, %v274
    %v302 = vsub.f32 %v254, %v276
    %v303 = vsub.f32 %v255, %v278
    %v304 = vsub.f32 %v256, %v280
    %v305 = vsub.f32 %v257, %v282
    %v306 = vsub.f32 %v258, %v284
    %v307 = vsub.f32 %v259, %v286
    %v308 = vsub.f32 %v260, %v288
    %v309 = vsub.f32 %v261, %v290
    %v310 = vsub.f32 %v262, %v292
    %v311 = vsub.f32 %v263, %v294
    %v312 = vsub.f32 %v264, %v296
    %v313 = vmul.f32 %v297, 1.442695
    %v314 = vpow.pop %v313
    %v315 = vmul.f32 %v298, 1.442695
    %v316 = vpow.pop %v315
    %v317 = vmul.f32 %v299, 1.442695
    %v318 = vpow.pop %v317
    %v319 = vmul.f32 %v300, 1.442695
    %v320 = vpow.pop %v319
    %v321 = vmul.f32 %v301, 1.442695
    %v322 = vpow.pop %v321
    %v323 = vmul.f32 %v302, 1.442695
    %v324 = vpow.pop %v323
    %v325 = vmul.f32 %v303, 1.442695
    %v326 = vpow.pop %v325
    %v327 = vmul.f32 %v304, 1.442695
    %v328 = vpow.pop %v327
    %v329 = vmul.f32 %v305, 1.442695
    %v330 = vpow.pop %v329
    %v331 = vmul.f32 %v306, 1.442695
    %v332 = vpow.pop %v331
    %v333 = vmul.f32 %v307, 1.442695
    %v334 = vpow.pop %v333
    %v335 = vmul.f32 %v308, 1.442695
    %v336 = vpow.pop %v335
    %v337 = vmul.f32 %v309, 1.442695
    %v338 = vpow.pop %v337
    %v339 = vmul.f32 %v310, 1.442695
    %v340 = vpow.pop %v339
    %v341 = vmul.f32 %v311, 1.442695
    %v342 = vpow.pop %v341
    %v343 = vmul.f32 %v312, 1.442695
    %v344 = vpow.pop %v343
    %345 = vadd.xlane.f32.xlu0 %v314
    %v346 = vpop.xlane.xlu0 %345
    %347 = vadd.xlane.f32.xlu0 %v316
    %v348 = vpop.xlane.xlu0 %347
    %349 = vadd.xlane.f32.xlu0 %v318
    %v350 = vpop.xlane.xlu0 %349
    %351 = vadd.xlane.f32.xlu0 %v320
    %v352 = vpop.xlane.xlu0 %351
    %353 = vadd.xlane.f32.xlu0 %v322
    %v354 = vpop.xlane.xlu0 %353
    %355 = vadd.xlane.f32.xlu0 %v324
    %v356 = vpop.xlane.xlu0 %355
    %357 = vadd.xlane.f32.xlu0 %v326
    %v358 = vpop.xlane.xlu0 %357
    %359 = vadd.xlane.f32.xlu0 %v328
    %v360 = vpop.xlane.xlu0 %359
    %361 = vadd.xlane.f32.xlu0 %v330
    %v362 = vpop.xlane.xlu0 %361
    %363 = vadd.xlane.f32.xlu0 %v332
    %v364 = vpop.xlane.xlu0 %363
    %365 = vadd.xlane.f32.xlu0 %v334
    %v366 = vpop.xlane.xlu0 %365
    %367 = vadd.xlane.f32.xlu0 %v336
    %v368 = vpop.xlane.xlu0 %367
    %369 = vadd.xlane.f32.xlu0 %v338
    %v370 = vpop.xlane.xlu0 %369
    %371 = vadd.xlane.f32.xlu0 %v340
    %v372 = vpop.xlane.xlu0 %371
    %373 = vadd.xlane.f32.xlu0 %v342
    %v374 = vpop.xlane.xlu0 %373
    %375 = vadd.xlane.f32.xlu0 %v344
    %v376 = vpop.xlane.xlu0 %375
    %v377 = vpack.c.bf16 %v316, %v314
    %v378 = vpack.c.bf16 %v320, %v318
    %v379 = vpack.c.bf16 %v324, %v322
    %v380 = vpack.c.bf16 %v328, %v326
    %v381 = vpack.c.bf16 %v332, %v330
    %v382 = vpack.c.bf16 %v336, %v334
    %v383 = vpack.c.bf16 %v340, %v338
    %v384 = vpack.c.bf16 %v344, %v342
    %s385 = smul.u32 %s90, 16
    %s386 = smul.addr %s385, 4
    %s387 = scalar_lea.vmem %s3, %s386
    %v388 = vld [vmem:[%s387] sm:$0xf]
    %v389 = vld [vmem:[%s387 + $0x4] sm:$0xf]
    %v390 = vld [vmem:[%s387 + $0x8] sm:$0xf]
    %v391 = vld [vmem:[%s387 + $0xc] sm:$0xf]
    %v392 = vld [vmem:[%s387 + $0x10] sm:$0xf]
    %v393 = vld [vmem:[%s387 + $0x14] sm:$0xf]
    %v394 = vld [vmem:[%s387 + $0x18] sm:$0xf]
    %v395 = vld [vmem:[%s387 + $0x1c] sm:$0xf]
    %v396 = vld [vmem:[%s387 + $0x20] sm:$0xf]
    %v397 = vld [vmem:[%s387 + $0x24] sm:$0xf]
    %v398 = vld [vmem:[%s387 + $0x28] sm:$0xf]
    %v399 = vld [vmem:[%s387 + $0x2c] sm:$0xf]
    %v400 = vld [vmem:[%s387 + $0x30] sm:$0xf]
    %v401 = vld [vmem:[%s387 + $0x34] sm:$0xf]
    %v402 = vld [vmem:[%s387 + $0x38] sm:$0xf]
    %v403 = vld [vmem:[%s387 + $0x3c] sm:$0xf]
    %v420 = vunpack.c.l.b16 %v388
    %v421 = vunpack.c.l.b16 %v389
    %v422 = vunpack.c.l.b16 %v390
    %v423 = vunpack.c.l.b16 %v391
    %v424 = vunpack.c.l.b16 %v392
    %v425 = vunpack.c.l.b16 %v393
    %v426 = vunpack.c.l.b16 %v394
    %v427 = vunpack.c.l.b16 %v395
    %v428 = vunpack.c.l.b16 %v396
    %v429 = vunpack.c.l.b16 %v397
    %v430 = vunpack.c.l.b16 %v398
    %v431 = vunpack.c.l.b16 %v399
    %v432 = vunpack.c.l.b16 %v400
    %v433 = vunpack.c.l.b16 %v401
    %v434 = vunpack.c.l.b16 %v402
    %v435 = vunpack.c.l.b16 %v403
    %v436 = vpack.c.b16 %v421, %v420
    %v437 = vpack.c.b16 %v423, %v422
    %v438 = vpack.c.b16 %v425, %v424
    %v439 = vpack.c.b16 %v427, %v426
    %v440 = vpack.c.b16 %v429, %v428
    %v441 = vpack.c.b16 %v431, %v430
    %v442 = vpack.c.b16 %v433, %v432
    %v443 = vpack.c.b16 %v435, %v434
    %452 = vmatprep.subr.bf16.mxu0 0
    %453 = vmatpush1.bf16.msra.mxu0 %v436
    %454 = vmatprep.subr.bf16.mxu0 0
    %455 = vmatpush1.bf16.msra.mxu0 %v437
    %456 = vmatprep.subr.bf16.mxu0 0
    %457 = vmatpush1.bf16.msra.mxu0 %v438
    %458 = vmatprep.subr.bf16.mxu0 0
    %459 = vmatpush1.bf16.msra.mxu0 %v439
    %460 = vmatprep.subr.bf16.mxu0 0
    %461 = vmatpush1.bf16.msra.mxu0 %v440
    %462 = vmatprep.subr.bf16.mxu0 0
    %463 = vmatpush1.bf16.msra.mxu0 %v441
    %464 = vmatprep.subr.bf16.mxu0 0
    %465 = vmatpush1.bf16.msra.mxu0 %v442
    %466 = vmatprep.subr.bf16.mxu0 0
    %467 = vmatpush1.bf16.msra.mxu0 %v443
    %468 = vmatprep.subr.bf16.mxu0 0
    %469 = vmatpush1.bf16.msra.mxu0 0
    %470 = vmatprep.subr.bf16.mxu0 0
    %471 = vmatpush1.bf16.msra.mxu0 0
    %472 = vmatprep.subr.bf16.mxu0 0
    %473 = vmatpush1.bf16.msra.mxu0 0
    %474 = vmatprep.subr.bf16.mxu0 0
    %475 = vmatpush1.bf16.msra.mxu0 0
    %476 = vmatprep.subr.bf16.mxu0 0
    %477 = vmatpush1.bf16.msra.mxu0 0
    %478 = vmatprep.subr.bf16.mxu0 0
    %479 = vmatpush1.bf16.msra.mxu0 0
    %480 = vmatprep.subr.bf16.mxu0 0
    %481 = vmatpush1.bf16.msra.mxu0 0
    %482 = vmatprep.subr.bf16.mxu0 0
    %483 = vmatpush1.bf16.msra.mxu0 0
    %484 = vmatprep.mubr.bf16.mxu0 0
    %485 = vmatmul.mubr.bf16.gmra.mrb[0].mxu0 %v377
    %v486 = vpop.f32.mrb[0].mxu0
    %v487 = vadd.f32 0.0, %v486
    %v488 = vpop.f32.mrb[0].mxu0
    %v489 = vpop.f32.mrb[0].mxu0
    %v490 = vadd.f32 0.0, %v489
    %v491 = vpop.f32.mrb[0].mxu0
    %492 = vmatprep.mubr.bf16.mxu0 0
    %493 = vmatmul.mubr.bf16.gmra.mrb[0].mxu0 %v378
    %v494 = vpop.f32.mrb[0].mxu0
    %v495 = vadd.f32 0.0, %v494
    %v496 = vpop.f32.mrb[0].mxu0
    %v497 = vpop.f32.mrb[0].mxu0
    %v498 = vadd.f32 0.0, %v497
    %v499 = vpop.f32.mrb[0].mxu0
    %500 = vmatprep.mubr.bf16.mxu0 0
    %501 = vmatmul.mubr.bf16.gmra.mrb[0].mxu0 %v379
    %v502 = vpop.f32.mrb[0].mxu0
    %v503 = vadd.f32 0.0, %v502
    %v504 = vpop.f32.mrb[0].mxu0
    %v505 = vpop.f32.mrb[0].mxu0
    %v506 = vadd.f32 0.0, %v505
    %v507 = vpop.f32.mrb[0].mxu0
    %508 = vmatprep.mubr.bf16.mxu0 0
    %509 = vmatmul.mubr.bf16.gmra.mrb[0].mxu0 %v380
    %v510 = vpop.f32.mrb[0].mxu0
    %v511 = vadd.f32 0.0, %v510
    %v512 = vpop.f32.mrb[0].mxu0
    %v513 = vpop.f32.mrb[0].mxu0
    %v514 = vadd.f32 0.0, %v513
    %v515 = vpop.f32.mrb[0].mxu0
    %516 = vmatprep.mubr.bf16.mxu0 0
    %517 = vmatmul.mubr.bf16.gmra.mrb[0].mxu0 %v381
    %v518 = vpop.f32.mrb[0].mxu0
    %v519 = vadd.f32 0.0, %v518
    %v520 = vpop.f32.mrb[0].mxu0
    %v521 = vpop.f32.mrb[0].mxu0
    %v522 = vadd.f32 0.0, %v521
    %v523 = vpop.f32.mrb[0].mxu0
    %524 = vmatprep.mubr.bf16.mxu0 0
    %525 = vmatmul.mubr.bf16.gmra.mrb[0].mxu0 %v382
    %v526 = vpop.f32.mrb[0].mxu0
    %v527 = vadd.f32 0.0, %v526
    %v528 = vpop.f32.mrb[0].mxu0
    %v529 = vpop.f32.mrb[0].mxu0
    %v530 = vadd.f32 0.0, %v529
    %v531 = vpop.f32.mrb[0].mxu0
    %532 = vmatprep.mubr.bf16.mxu0 0
    %533 = vmatmul.mubr.bf16.gmra.mrb[0].mxu0 %v383
    %v534 = vpop.f32.mrb[0].mxu0
    %v535 = vadd.f32 0.0, %v534
    %v536 = vpop.f32.mrb[0].mxu0
    %v537 = vpop.f32.mrb[0].mxu0
    %v538 = vadd.f32 0.0, %v537
    %v539 = vpop.f32.mrb[0].mxu0
    %540 = vmatprep.mubr.bf16.mxu0 0
    %541 = vmatmul.mubr.bf16.gmra.mrb[0].mxu0 %v384
    %v542 = vpop.f32.mrb[0].mxu0
    %v543 = vadd.f32 0.0, %v542
    %v544 = vpop.f32.mrb[0].mxu0
    %v545 = vpop.f32.mrb[0].mxu0
    %v546 = vadd.f32 0.0, %v545
    %v547 = vpop.f32.mrb[0].mxu0
    %548 = vdwg.mxu0
    %v549 = vrcp.pop %v346
    %v550 = vrcp.pop %v348
    %v551 = vrcp.pop %v350
    %v552 = vrcp.pop %v352
    %v553 = vrcp.pop %v354
    %v554 = vrcp.pop %v356
    %v555 = vrcp.pop %v358
    %v556 = vrcp.pop %v360
    %v557 = vrcp.pop %v362
    %v558 = vrcp.pop %v364
    %v559 = vrcp.pop %v366
    %v560 = vrcp.pop %v368
    %v561 = vrcp.pop %v370
    %v562 = vrcp.pop %v372
    %v563 = vrcp.pop %v374
    %v564 = vrcp.pop %v376
    %v565 = vmul.f32 %v487, %v549
    %v566 = vmul.f32 %v490, %v550
    %v567 = vmul.f32 %v495, %v551
    %v568 = vmul.f32 %v498, %v552
    %v569 = vmul.f32 %v503, %v553
    %v570 = vmul.f32 %v506, %v554
    %v571 = vmul.f32 %v511, %v555
    %v572 = vmul.f32 %v514, %v556
    %v573 = vmul.f32 %v519, %v557
    %v574 = vmul.f32 %v522, %v558
    %v575 = vmul.f32 %v527, %v559
    %v576 = vmul.f32 %v530, %v560
    %v577 = vmul.f32 %v535, %v561
    %v578 = vmul.f32 %v538, %v562
    %v579 = vmul.f32 %v543, %v563
    %v580 = vmul.f32 %v546, %v564
    %s581 = scalar_lea.vmem %s4, %s90
    %v582 = vld [vmem:[%s581] sm:$0x1]
    %v584 = vlaneseq
    %v585 = vshrl.u32 %v584, 7
    %v586 = vsub.s32 0, %v585
    %v587 = vrot.slane %v582, %v586
    %v589 = vadd.f32 %v565, %v587
    %v590 = vadd.f32 %v566, %v587
    %v591 = vadd.f32 %v567, %v587
    %v592 = vadd.f32 %v568, %v587
    %v593 = vadd.f32 %v569, %v587
    %v594 = vadd.f32 %v570, %v587
    %v595 = vadd.f32 %v571, %v587
    %v596 = vadd.f32 %v572, %v587
    %v597 = vadd.f32 %v573, %v587
    %v598 = vadd.f32 %v574, %v587
    %v599 = vadd.f32 %v575, %v587
    %v600 = vadd.f32 %v576, %v587
    %v601 = vadd.f32 %v577, %v587
    %v602 = vadd.f32 %v578, %v587
    %v603 = vadd.f32 %v579, %v587
    %v604 = vadd.f32 %v580, %v587
    %vm605 = vcmp.gt.f32.partialorder %v589, 0.0
    %vm606 = vcmp.gt.f32.partialorder %v590, 0.0
    %vm607 = vcmp.gt.f32.partialorder %v591, 0.0
    %vm608 = vcmp.gt.f32.partialorder %v592, 0.0
    %vm609 = vcmp.gt.f32.partialorder %v593, 0.0
    %vm610 = vcmp.gt.f32.partialorder %v594, 0.0
    %vm611 = vcmp.gt.f32.partialorder %v595, 0.0
    %vm612 = vcmp.gt.f32.partialorder %v596, 0.0
    %vm613 = vcmp.gt.f32.partialorder %v597, 0.0
    %vm614 = vcmp.gt.f32.partialorder %v598, 0.0
    %vm615 = vcmp.gt.f32.partialorder %v599, 0.0
    %vm616 = vcmp.gt.f32.partialorder %v600, 0.0
    %vm617 = vcmp.gt.f32.partialorder %v601, 0.0
    %vm618 = vcmp.gt.f32.partialorder %v602, 0.0
    %vm619 = vcmp.gt.f32.partialorder %v603, 0.0
    %vm620 = vcmp.gt.f32.partialorder %v604, 0.0
    %v621 = vmul.f32 %v589, 1.442695
    %v622 = vpow.pop %v621
    %v623 = vmul.f32 %v590, 1.442695
    %v624 = vpow.pop %v623
    %v625 = vmul.f32 %v591, 1.442695
    %v626 = vpow.pop %v625
    %v627 = vmul.f32 %v592, 1.442695
    %v628 = vpow.pop %v627
    %v629 = vmul.f32 %v593, 1.442695
    %v630 = vpow.pop %v629
    %v631 = vmul.f32 %v594, 1.442695
    %v632 = vpow.pop %v631
    %v633 = vmul.f32 %v595, 1.442695
    %v634 = vpow.pop %v633
    %v635 = vmul.f32 %v596, 1.442695
    %v636 = vpow.pop %v635
    %v637 = vmul.f32 %v597, 1.442695
    %v638 = vpow.pop %v637
    %v639 = vmul.f32 %v598, 1.442695
    %v640 = vpow.pop %v639
    %v641 = vmul.f32 %v599, 1.442695
    %v642 = vpow.pop %v641
    %v643 = vmul.f32 %v600, 1.442695
    %v644 = vpow.pop %v643
    %v645 = vmul.f32 %v601, 1.442695
    %v646 = vpow.pop %v645
    %v647 = vmul.f32 %v602, 1.442695
    %v648 = vpow.pop %v647
    %v649 = vmul.f32 %v603, 1.442695
    %v650 = vpow.pop %v649
    %v651 = vmul.f32 %v604, 1.442695
    %v652 = vpow.pop %v651
    %v653 = vsub.f32 %v622, 1.0
    %v654 = vsub.f32 %v624, 1.0
    %v655 = vsub.f32 %v626, 1.0
    %v656 = vsub.f32 %v628, 1.0
    %v657 = vsub.f32 %v630, 1.0
    %v658 = vsub.f32 %v632, 1.0
    %v659 = vsub.f32 %v634, 1.0
    %v660 = vsub.f32 %v636, 1.0
    %v661 = vsub.f32 %v638, 1.0
    %v662 = vsub.f32 %v640, 1.0
    %v663 = vsub.f32 %v642, 1.0
    %v664 = vsub.f32 %v644, 1.0
    %v665 = vsub.f32 %v646, 1.0
    %v666 = vsub.f32 %v648, 1.0
    %v667 = vsub.f32 %v650, 1.0
    %v668 = vsub.f32 %v652, 1.0
    %v669 = vsel %vm605, %v589, %v653
    %v670 = vsel %vm606, %v590, %v654
    %v671 = vsel %vm607, %v591, %v655
    %v672 = vsel %vm608, %v592, %v656
    %v673 = vsel %vm609, %v593, %v657
    %v674 = vsel %vm610, %v594, %v658
    %v675 = vsel %vm611, %v595, %v659
    %v676 = vsel %vm612, %v596, %v660
    %v677 = vsel %vm613, %v597, %v661
    %v678 = vsel %vm614, %v598, %v662
    %v679 = vsel %vm615, %v599, %v663
    %v680 = vsel %vm616, %v600, %v664
    %v681 = vsel %vm617, %v601, %v665
    %v682 = vsel %vm618, %v602, %v666
    %v683 = vsel %vm619, %v603, %v667
    %v684 = vsel %vm620, %v604, %v668
    %v685 = vpack.c.bf16 %v670, %v669
    %v686 = vpack.c.bf16 %v672, %v671
    %v687 = vpack.c.bf16 %v674, %v673
    %v688 = vpack.c.bf16 %v676, %v675
    %v689 = vpack.c.bf16 %v678, %v677
    %v690 = vpack.c.bf16 %v680, %v679
    %v691 = vpack.c.bf16 %v682, %v681
    %v692 = vpack.c.bf16 %v684, %v683
    %v701 = vunpack.c.l.b16 %v685
    %v702 = vunpack.c.h.b16 %v685
    %v703 = vunpack.c.l.b16 %v686
    %v704 = vunpack.c.h.b16 %v686
    %v705 = vunpack.c.l.b16 %v687
    %v706 = vunpack.c.h.b16 %v687
    %v707 = vunpack.c.l.b16 %v688
    %v708 = vunpack.c.h.b16 %v688
    %v709 = vunpack.c.l.b16 %v689
    %v710 = vunpack.c.h.b16 %v689
    %v711 = vunpack.c.l.b16 %v690
    %v712 = vunpack.c.h.b16 %v690
    %v713 = vunpack.c.l.b16 %v691
    %v714 = vunpack.c.h.b16 %v691
    %v715 = vunpack.c.l.b16 %v692
    %v716 = vunpack.c.h.b16 %v692
    %v717 = vpack.c.b16 %v701, %v701
    %v718 = vpack.c.b16 %v702, %v702
    %v719 = vpack.c.b16 %v703, %v703
    %v720 = vpack.c.b16 %v704, %v704
    %v721 = vpack.c.b16 %v705, %v705
    %v722 = vpack.c.b16 %v706, %v706
    %v723 = vpack.c.b16 %v707, %v707
    %v724 = vpack.c.b16 %v708, %v708
    %v725 = vpack.c.b16 %v709, %v709
    %v726 = vpack.c.b16 %v710, %v710
    %v727 = vpack.c.b16 %v711, %v711
    %v728 = vpack.c.b16 %v712, %v712
    %v729 = vpack.c.b16 %v713, %v713
    %v730 = vpack.c.b16 %v714, %v714
    %v731 = vpack.c.b16 %v715, %v715
    %v732 = vpack.c.b16 %v716, %v716
    %s749 = smul.addr %s385, 4
    %s750 = scalar_lea.vmem %s5, %s749
    %vm751 = vcmask 519168
    %752 = vst.msk [vmem:[%s750] sm:$0xf] %vm751, %v717
    %753 = vst.msk [vmem:[%s750 + $0x4] sm:$0xf] %vm751, %v718
    %754 = vst.msk [vmem:[%s750 + $0x8] sm:$0xf] %vm751, %v719
    %755 = vst.msk [vmem:[%s750 + $0xc] sm:$0xf] %vm751, %v720
    %756 = vst.msk [vmem:[%s750 + $0x10] sm:$0xf] %vm751, %v721
    %757 = vst.msk [vmem:[%s750 + $0x14] sm:$0xf] %vm751, %v722
    %758 = vst.msk [vmem:[%s750 + $0x18] sm:$0xf] %vm751, %v723
    %759 = vst.msk [vmem:[%s750 + $0x1c] sm:$0xf] %vm751, %v724
    %760 = vst.msk [vmem:[%s750 + $0x20] sm:$0xf] %vm751, %v725
    %761 = vst.msk [vmem:[%s750 + $0x24] sm:$0xf] %vm751, %v726
    %762 = vst.msk [vmem:[%s750 + $0x28] sm:$0xf] %vm751, %v727
    %763 = vst.msk [vmem:[%s750 + $0x2c] sm:$0xf] %vm751, %v728
    %764 = vst.msk [vmem:[%s750 + $0x30] sm:$0xf] %vm751, %v729
    %765 = vst.msk [vmem:[%s750 + $0x34] sm:$0xf] %vm751, %v730
    %766 = vst.msk [vmem:[%s750 + $0x38] sm:$0xf] %vm751, %v731
    %767 = vst.msk [vmem:[%s750 + $0x3c] sm:$0xf] %vm751, %v732
  $region26: #{gat_model_forward.8} parent=0 // loop_footer
    %s94 = sadd.s32 1, %s90
  $region27: #{gat_model_forward.8} parent=0 // loop_footer_branch
    %89 = sbr.rel target = $region23
  $region28: #{gat_model_forward.8} parent=0 // loop_exit
    _
  // Predicated region
  $region29: #{gat_model_forward.8} parent=0 // pred_check
    _
  $region30: #{gat_model_forward.8} parent=0 // pred_check_branch
    %769 = sbr.rel (0) target = $region32
  $region31: #{gat_model_forward.8} parent=0 // pred_region
    _
  $region32: #{gat_model_forward.8} parent=0 // pred_fallthru
    _
  // Predicated region
  $region33: #{gat_model_forward.8} parent=0 // pred_check
    _
  $region34: #{gat_model_forward.8} parent=0 // pred_check_branch
    %771 = sbr.rel (0) target = $region36
  $region35: #{gat_model_forward.8} parent=0 // pred_region
    _
  $region36: #{gat_model_forward.8} parent=0 // pred_fallthru
    _

// kernel: gat_model_forward.7
$region0: #{gat_model_forward.7}
  #allocation0 [shape = 'u32[]', space=smem, size = 0x4, offset = 0x4, fixed_abs, tag = 'smem constant byte address 0x4 - core index']
  #allocation1 [shape = 'u32[144,128]{1,0:T(1,128)}', space=vmem, size = 0x12000, scoped, tag = 'internal scratch']
  %s0 = inlined_call_operand.vmem [shape: bf16[4,128,128], index: 0, kind: input, shape index: {}]
  %s1 = inlined_call_operand.vmem [shape: bf16[4,4,128,64], index: 1, kind: input, shape index: {}]
  %s2 = inlined_call_operand.vmem [shape: bf16[4,64,2], index: 2, kind: input, shape index: {}]
  %s3 = inlined_call_operand.vmem [shape: bf16[4,128,64], index: 3, kind: output, shape index: {0}]
  %s4 = inlined_call_operand.vmem [shape: f32[4,128,2], index: 4, kind: output, shape index: {1}]
  %5 = xla_tuple %s3, %s4
  %s6 = sld [smem:[#allocation0]]
  $region30: #{gat_model_forward.7} parent=0
    _
  %s8 = ssub.s32 1, %s6
  %s9 = scalar_select 0, %s8, %s6
  // Predicated region
  $region2: #{gat_model_forward.7} parent=0 // pred_check
    _
  $region3: #{gat_model_forward.7} parent=0 // pred_check_branch
    %11 = sbr.rel (0) target = $region5
  $region4: #{gat_model_forward.7} parent=0 // pred_region
    _
  $region5: #{gat_model_forward.7} parent=0 // pred_fallthru
    _
  // Predicated region
  $region6: #{gat_model_forward.7} parent=0 // pred_check
    _
  $region7: #{gat_model_forward.7} parent=0 // pred_check_branch
    %13 = sbr.rel (0) target = $region9
  $region8: #{gat_model_forward.7} parent=0 // pred_region
    _
  $region9: #{gat_model_forward.7} parent=0 // pred_fallthru
    _
  // Predicated region
  $region10: #{gat_model_forward.7} parent=0 // pred_check
    _
  $region11: #{gat_model_forward.7} parent=0 // pred_check_branch
    %15 = sbr.rel (0) target = $region13
  $region12: #{gat_model_forward.7} parent=0 // pred_region
    _
  $region13: #{gat_model_forward.7} parent=0 // pred_fallthru
    _
  %v17 = vld [vmem:[%s0] sm:$0xf]
  %v18 = vld [vmem:[%s0 + $0x4] sm:$0xf]
  %v19 = vld [vmem:[%s0 + $0x8] sm:$0xf]
  %v20 = vld [vmem:[%s0 + $0xc] sm:$0xf]
  %v21 = vld [vmem:[%s0 + $0x10] sm:$0xf]
  %v22 = vld [vmem:[%s0 + $0x14] sm:$0xf]
  %v23 = vld [vmem:[%s0 + $0x18] sm:$0xf]
  %v24 = vld [vmem:[%s0 + $0x1c] sm:$0xf]
  %v25 = vld [vmem:[%s0 + $0x20] sm:$0xf]
  %v26 = vld [vmem:[%s0 + $0x24] sm:$0xf]
  %v27 = vld [vmem:[%s0 + $0x28] sm:$0xf]
  %v28 = vld [vmem:[%s0 + $0x2c] sm:$0xf]
  %v29 = vld [vmem:[%s0 + $0x30] sm:$0xf]
  %v30 = vld [vmem:[%s0 + $0x34] sm:$0xf]
  %v31 = vld [vmem:[%s0 + $0x38] sm:$0xf]
  %v32 = vld [vmem:[%s0 + $0x3c] sm:$0xf]
  %v33 = vld [vmem:[%s1] sm:$0xf]
  %v34 = vld [vmem:[%s1 + $0x4] sm:$0xf]
  %v35 = vld [vmem:[%s1 + $0x8] sm:$0xf]
  %v36 = vld [vmem:[%s1 + $0xc] sm:$0xf]
  %v37 = vld [vmem:[%s1 + $0x10] sm:$0xf]
  %v38 = vld [vmem:[%s1 + $0x14] sm:$0xf]
  %v39 = vld [vmem:[%s1 + $0x18] sm:$0xf]
  %v40 = vld [vmem:[%s1 + $0x1c] sm:$0xf]
  %v41 = vld [vmem:[%s1 + $0x20] sm:$0xf]
  %v42 = vld [vmem:[%s1 + $0x24] sm:$0xf]
  %v43 = vld [vmem:[%s1 + $0x28] sm:$0xf]
  %v44 = vld [vmem:[%s1 + $0x2c] sm:$0xf]
  %v45 = vld [vmem:[%s1 + $0x30] sm:$0xf]
  %v46 = vld [vmem:[%s1 + $0x34] sm:$0xf]
  %v47 = vld [vmem:[%s1 + $0x38] sm:$0xf]
  %v48 = vld [vmem:[%s1 + $0x3c] sm:$0xf]
  %s49 = scalar_lea.vmem %s0, 64
  %v50 = vld [vmem:[%s49] sm:$0xf]
  %v51 = vld [vmem:[%s49 + $0x4] sm:$0xf]
  %v52 = vld [vmem:[%s49 + $0x8] sm:$0xf]
  %v53 = vld [vmem:[%s49 + $0xc] sm:$0xf]
  %v54 = vld [vmem:[%s49 + $0x10] sm:$0xf]
  %v55 = vld [vmem:[%s49 + $0x14] sm:$0xf]
  %v56 = vld [vmem:[%s49 + $0x18] sm:$0xf]
  %v57 = vld [vmem:[%s49 + $0x1c] sm:$0xf]
  %v58 = vld [vmem:[%s49 + $0x20] sm:$0xf]
  %v59 = vld [vmem:[%s49 + $0x24] sm:$0xf]
  %v60 = vld [vmem:[%s49 + $0x28] sm:$0xf]
  %v61 = vld [vmem:[%s49 + $0x2c] sm:$0xf]
  %v62 = vld [vmem:[%s49 + $0x30] sm:$0xf]
  %v63 = vld [vmem:[%s49 + $0x34] sm:$0xf]
  %v64 = vld [vmem:[%s49 + $0x38] sm:$0xf]
  %v65 = vld [vmem:[%s49 + $0x3c] sm:$0xf]
  %s66 = scalar_lea.vmem %s1, 256
  %v67 = vld [vmem:[%s66] sm:$0xf]
  %v68 = vld [vmem:[%s66 + $0x4] sm:$0xf]
  %v69 = vld [vmem:[%s66 + $0x8] sm:$0xf]
  %v70 = vld [vmem:[%s66 + $0xc] sm:$0xf]
  %v71 = vld [vmem:[%s66 + $0x10] sm:$0xf]
  %v72 = vld [vmem:[%s66 + $0x14] sm:$0xf]
  %v73 = vld [vmem:[%s66 + $0x18] sm:$0xf]
  %v74 = vld [vmem:[%s66 + $0x1c] sm:$0xf]
  %v75 = vld [vmem:[%s66 + $0x20] sm:$0xf]
  %v76 = vld [vmem:[%s66 + $0x24] sm:$0xf]
  %v77 = vld [vmem:[%s66 + $0x28] sm:$0xf]
  %v78 = vld [vmem:[%s66 + $0x2c] sm:$0xf]
  %v79 = vld [vmem:[%s66 + $0x30] sm:$0xf]
  %v80 = vld [vmem:[%s66 + $0x34] sm:$0xf]
  %v81 = vld [vmem:[%s66 + $0x38] sm:$0xf]
  %v82 = vld [vmem:[%s66 + $0x3c] sm:$0xf]
  %v99 = vunpack.c.l.b16 %v50
  %v100 = vunpack.c.l.b16 %v51
  %v101 = vunpack.c.l.b16 %v52
  %v102 = vunpack.c.l.b16 %v53
  %v103 = vunpack.c.l.b16 %v54
  %v104 = vunpack.c.l.b16 %v55
  %v105 = vunpack.c.l.b16 %v56
  %v106 = vunpack.c.l.b16 %v57
  %v107 = vunpack.c.l.b16 %v58
  %v108 = vunpack.c.l.b16 %v59
  %v109 = vunpack.c.l.b16 %v60
  %v110 = vunpack.c.l.b16 %v61
  %v111 = vunpack.c.l.b16 %v62
  %v112 = vunpack.c.l.b16 %v63
  %v113 = vunpack.c.l.b16 %v64
  %v114 = vunpack.c.l.b16 %v65
  %v115 = vpack.c.b16 %v100, %v99
  %v116 = vpack.c.b16 %v102, %v101
  %v117 = vpack.c.b16 %v104, %v103
  %v118 = vpack.c.b16 %v106, %v105
  %v119 = vpack.c.b16 %v108, %v107
  %v120 = vpack.c.b16 %v110, %v109
  %v121 = vpack.c.b16 %v112, %v111
  %v122 = vpack.c.b16 %v114, %v113
  %v147 = vunpack.c.l.b16 %v67
  %v148 = vunpack.c.l.b16 %v68
  %v149 = vunpack.c.l.b16 %v69
  %v150 = vunpack.c.l.b16 %v70
  %v151 = vunpack.c.l.b16 %v71
  %v152 = vunpack.c.l.b16 %v72
  %v153 = vunpack.c.l.b16 %v73
  %v154 = vunpack.c.l.b16 %v74
  %v155 = vunpack.c.l.b16 %v75
  %v156 = vunpack.c.l.b16 %v76
  %v157 = vunpack.c.l.b16 %v77
  %v158 = vunpack.c.l.b16 %v78
  %v159 = vunpack.c.l.b16 %v79
  %v160 = vunpack.c.l.b16 %v80
  %v161 = vunpack.c.l.b16 %v81
  %v162 = vunpack.c.l.b16 %v82
  %v163 = vpack.c.b16 %v148, %v147
  %v164 = vpack.c.b16 %v150, %v149
  %v165 = vpack.c.b16 %v152, %v151
  %v166 = vpack.c.b16 %v154, %v153
  %v167 = vpack.c.b16 %v156, %v155
  %v168 = vpack.c.b16 %v158, %v157
  %v169 = vpack.c.b16 %v160, %v159
  %v170 = vpack.c.b16 %v162, %v161
  %179 = vmatprep.subr.bf16.mxu0 0
  %180 = vmatpush1.bf16.msra.mxu0 %v163
  %181 = vmatprep.subr.bf16.mxu0 0
  %182 = vmatpush1.bf16.msra.mxu0 %v164
  %183 = vmatprep.subr.bf16.mxu0 0
  %184 = vmatpush1.bf16.msra.mxu0 %v165
  %185 = vmatprep.subr.bf16.mxu0 0
  %186 = vmatpush1.bf16.msra.mxu0 %v166
  %187 = vmatprep.subr.bf16.mxu0 0
  %188 = vmatpush1.bf16.msra.mxu0 %v167
  %189 = vmatprep.subr.bf16.mxu0 0
  %190 = vmatpush1.bf16.msra.mxu0 %v168
  %191 = vmatprep.subr.bf16.mxu0 0
  %192 = vmatpush1.bf16.msra.mxu0 %v169
  %193 = vmatprep.subr.bf16.mxu0 0
  %194 = vmatpush1.bf16.msra.mxu0 %v170
  %195 = vmatprep.subr.bf16.mxu0 0
  %196 = vmatpush1.bf16.msra.mxu0 0
  %197 = vmatprep.subr.bf16.mxu0 0
  %198 = vmatpush1.bf16.msra.mxu0 0
  %199 = vmatprep.subr.bf16.mxu0 0
  %200 = vmatpush1.bf16.msra.mxu0 0
  %201 = vmatprep.subr.bf16.mxu0 0
  %202 = vmatpush1.bf16.msra.mxu0 0
  %203 = vmatprep.subr.bf16.mxu0 0
  %204 = vmatpush1.bf16.msra.mxu0 0
  %205 = vmatprep.subr.bf16.mxu0 0
  %206 = vmatpush1.bf16.msra.mxu0 0
  %207 = vmatprep.subr.bf16.mxu0 0
  %208 = vmatpush1.bf16.msra.mxu0 0
  %209 = vmatprep.subr.bf16.mxu0 0
  %210 = vmatpush1.bf16.msra.mxu0 0
  %211 = vmatprep.mubr.bf16.mxu0 0
  %212 = vmatmul.mubr.bf16.gmra.mrb[0].mxu0 %v115
  %v213 = vpop.f32.mrb[0].mxu0
  %v214 = vadd.f32 0.0, %v213
  %v215 = vpop.f32.mrb[0].mxu0
  %v216 = vpop.f32.mrb[0].mxu0
  %v217 = vadd.f32 0.0, %v216
  %v218 = vpop.f32.mrb[0].mxu0
  %219 = vmatprep.mubr.bf16.mxu0 0
  %220 = vmatmul.mubr.bf16.gmra.mrb[0].mxu0 %v116
  %v221 = vpop.f32.mrb[0].mxu0
  %v222 = vadd.f32 0.0, %v221
  %v223 = vpop.f32.mrb[0].mxu0
  %v224 = vpop.f32.mrb[0].mxu0
  %v225 = vadd.f32 0.0, %v224
  %v226 = vpop.f32.mrb[0].mxu0
  %227 = vmatprep.mubr.bf16.mxu0 0
  %228 = vmatmul.mubr.bf16.gmra.mrb[0].mxu0 %v117
  %v229 = vpop.f32.mrb[0].mxu0
  %v230 = vadd.f32 0.0, %v229
  %v231 = vpop.f32.mrb[0].mxu0
  %v232 = vpop.f32.mrb[0].mxu0
  %v233 = vadd.f32 0.0, %v232
  %v234 = vpop.f32.mrb[0].mxu0
  %235 = vmatprep.mubr.bf16.mxu0 0
  %236 = vmatmul.mubr.bf16.gmra.mrb[0].mxu0 %v118
  %v237 = vpop.f32.mrb[0].mxu0
  %v238 = vadd.f32 0.0, %v237
  %v239 = vpop.f32.mrb[0].mxu0
  %v240 = vpop.f32.mrb[0].mxu0
  %v241 = vadd.f32 0.0, %v240
  %v242 = vpop.f32.mrb[0].mxu0
  %243 = vmatprep.mubr.bf16.mxu0 0
  %244 = vmatmul.mubr.bf16.gmra.mrb[0].mxu0 %v119
  %v245 = vpop.f32.mrb[0].mxu0
  %v246 = vadd.f32 0.0, %v245
  %v247 = vpop.f32.mrb[0].mxu0
  %v248 = vpop.f32.mrb[0].mxu0
  %v249 = vadd.f32 0.0, %v248
  %v250 = vpop.f32.mrb[0].mxu0
  %251 = vmatprep.mubr.bf16.mxu0 0
  %252 = vmatmul.mubr.bf16.gmra.mrb[0].mxu0 %v120
  %v253 = vpop.f32.mrb[0].mxu0
  %v254 = vadd.f32 0.0, %v253
  %v255 = vpop.f32.mrb[0].mxu0
  %v256 = vpop.f32.mrb[0].mxu0
  %v257 = vadd.f32 0.0, %v256
  %v258 = vpop.f32.mrb[0].mxu0
  %259 = vmatprep.mubr.bf16.mxu0 0
  %260 = vmatmul.mubr.bf16.gmra.mrb[0].mxu0 %v121
  %v261 = vpop.f32.mrb[0].mxu0
  %v262 = vadd.f32 0.0, %v261
  %v263 = vpop.f32.mrb[0].mxu0
  %v264 = vpop.f32.mrb[0].mxu0
  %v265 = vadd.f32 0.0, %v264
  %v266 = vpop.f32.mrb[0].mxu0
  %267 = vmatprep.mubr.bf16.mxu0 0
  %268 = vmatmul.mubr.bf16.gmra.mrb[0].mxu0 %v122
  %v269 = vpop.f32.mrb[0].mxu0
  %v270 = vadd.f32 0.0, %v269
  %v271 = vpop.f32.mrb[0].mxu0
  %v272 = vpop.f32.mrb[0].mxu0
  %v273 = vadd.f32 0.0, %v272
  %v274 = vpop.f32.mrb[0].mxu0
  %275 = vdwg.mxu0
  %v292 = vunpack.c.l.b16 %v17
  %v293 = vunpack.c.l.b16 %v18
  %v294 = vunpack.c.l.b16 %v19
  %v295 = vunpack.c.l.b16 %v20
  %v296 = vunpack.c.l.b16 %v21
  %v297 = vunpack.c.l.b16 %v22
  %v298 = vunpack.c.l.b16 %v23
  %v299 = vunpack.c.l.b16 %v24
  %v300 = vunpack.c.l.b16 %v25
  %v301 = vunpack.c.l.b16 %v26
  %v302 = vunpack.c.l.b16 %v27
  %v303 = vunpack.c.l.b16 %v28
  %v304 = vunpack.c.l.b16 %v29
  %v305 = vunpack.c.l.b16 %v30
  %v306 = vunpack.c.l.b16 %v31
  %v307 = vunpack.c.l.b16 %v32
  %v308 = vpack.c.b16 %v293, %v292
  %v309 = vpack.c.b16 %v295, %v294
  %v310 = vpack.c.b16 %v297, %v296
  %v311 = vpack.c.b16 %v299, %v298
  %v312 = vpack.c.b16 %v301, %v300
  %v313 = vpack.c.b16 %v303, %v302
  %v314 = vpack.c.b16 %v305, %v304
  %v315 = vpack.c.b16 %v307, %v306
  %v340 = vunpack.c.l.b16 %v33
  %v341 = vunpack.c.l.b16 %v34
  %v342 = vunpack.c.l.b16 %v35
  %v343 = vunpack.c.l.b16 %v36
  %v344 = vunpack.c.l.b16 %v37
  %v345 = vunpack.c.l.b16 %v38
  %v346 = vunpack.c.l.b16 %v39
  %v347 = vunpack.c.l.b16 %v40
  %v348 = vunpack.c.l.b16 %v41
  %v349 = vunpack.c.l.b16 %v42
  %v350 = vunpack.c.l.b16 %v43
  %v351 = vunpack.c.l.b16 %v44
  %v352 = vunpack.c.l.b16 %v45
  %v353 = vunpack.c.l.b16 %v46
  %v354 = vunpack.c.l.b16 %v47
  %v355 = vunpack.c.l.b16 %v48
  %v356 = vpack.c.b16 %v341, %v340
  %v357 = vpack.c.b16 %v343, %v342
  %v358 = vpack.c.b16 %v345, %v344
  %v359 = vpack.c.b16 %v347, %v346
  %v360 = vpack.c.b16 %v349, %v348
  %v361 = vpack.c.b16 %v351, %v350
  %v362 = vpack.c.b16 %v353, %v352
  %v363 = vpack.c.b16 %v355, %v354
  %372 = vmatprep.subr.bf16.mxu0 0
  %373 = vmatpush1.bf16.msra.mxu0 %v356
  %374 = vmatprep.subr.bf16.mxu0 0
  %375 = vmatpush1.bf16.msra.mxu0 %v357
  %376 = vmatprep.subr.bf16.mxu0 0
  %377 = vmatpush1.bf16.msra.mxu0 %v358
  %378 = vmatprep.subr.bf16.mxu0 0
  %379 = vmatpush1.bf16.msra.mxu0 %v359
  %380 = vmatprep.subr.bf16.mxu0 0
  %381 = vmatpush1.bf16.msra.mxu0 %v360
  %382 = vmatprep.subr.bf16.mxu0 0
  %383 = vmatpush1.bf16.msra.mxu0 %v361
  %384 = vmatprep.subr.bf16.mxu0 0
  %385 = vmatpush1.bf16.msra.mxu0 %v362
  %386 = vmatprep.subr.bf16.mxu0 0
  %387 = vmatpush1.bf16.msra.mxu0 %v363
  %388 = vmatprep.subr.bf16.mxu0 0
  %389 = vmatpush1.bf16.msra.mxu0 0
  %390 = vmatprep.subr.bf16.mxu0 0
  %391 = vmatpush1.bf16.msra.mxu0 0
  %392 = vmatprep.subr.bf16.mxu0 0
  %393 = vmatpush1.bf16.msra.mxu0 0
  %394 = vmatprep.subr.bf16.mxu0 0
  %395 = vmatpush1.bf16.msra.mxu0 0
  %396 = vmatprep.subr.bf16.mxu0 0
  %397 = vmatpush1.bf16.msra.mxu0 0
  %398 = vmatprep.subr.bf16.mxu0 0
  %399 = vmatpush1.bf16.msra.mxu0 0
  %400 = vmatprep.subr.bf16.mxu0 0
  %401 = vmatpush1.bf16.msra.mxu0 0
  %402 = vmatprep.subr.bf16.mxu0 0
  %403 = vmatpush1.bf16.msra.mxu0 0
  %404 = vmatprep.mubr.bf16.mxu0 0
  %405 = vmatmul.mubr.bf16.gmra.mrb[0].mxu0 %v308
  %v406 = vpop.f32.mrb[0].mxu0
  %v407 = vadd.f32 %v214, %v406
  %v408 = vpop.f32.mrb[0].mxu0
  %v409 = vpop.f32.mrb[0].mxu0
  %v410 = vadd.f32 %v217, %v409
  %v411 = vpop.f32.mrb[0].mxu0
  %412 = vmatprep.mubr.bf16.mxu0 0
  %413 = vmatmul.mubr.bf16.gmra.mrb[0].mxu0 %v309
  %v414 = vpop.f32.mrb[0].mxu0
  %v415 = vadd.f32 %v222, %v414
  %v416 = vpop.f32.mrb[0].mxu0
  %v417 = vpop.f32.mrb[0].mxu0
  %v418 = vadd.f32 %v225, %v417
  %v419 = vpop.f32.mrb[0].mxu0
  %420 = vmatprep.mubr.bf16.mxu0 0
  %421 = vmatmul.mubr.bf16.gmra.mrb[0].mxu0 %v310
  %v422 = vpop.f32.mrb[0].mxu0
  %v423 = vadd.f32 %v230, %v422
  %v424 = vpop.f32.mrb[0].mxu0
  %v425 = vpop.f32.mrb[0].mxu0
  %v426 = vadd.f32 %v233, %v425
  %v427 = vpop.f32.mrb[0].mxu0
  %428 = vmatprep.mubr.bf16.mxu0 0
  %429 = vmatmul.mubr.bf16.gmra.mrb[0].mxu0 %v311
  %v430 = vpop.f32.mrb[0].mxu0
  %v431 = vadd.f32 %v238, %v430
  %v432 = vpop.f32.mrb[0].mxu0
  %v433 = vpop.f32.mrb[0].mxu0
  %v434 = vadd.f32 %v241, %v433
  %v435 = vpop.f32.mrb[0].mxu0
  %436 = vmatprep.mubr.bf16.mxu0 0
  %437 = vmatmul.mubr.bf16.gmra.mrb[0].mxu0 %v312
  %v438 = vpop.f32.mrb[0].mxu0
  %v439 = vadd.f32 %v246, %v438
  %v440 = vpop.f32.mrb[0].mxu0
  %v441 = vpop.f32.mrb[0].mxu0
  %v442 = vadd.f32 %v249, %v441
  %v443 = vpop.f32.mrb[0].mxu0
  %444 = vmatprep.mubr.bf16.mxu0 0
  %445 = vmatmul.mubr.bf16.gmra.mrb[0].mxu0 %v313
  %v446 = vpop.f32.mrb[0].mxu0
  %v447 = vadd.f32 %v254, %v446
  %v448 = vpop.f32.mrb[0].mxu0
  %v449 = vpop.f32.mrb[0].mxu0
  %v450 = vadd.f32 %v257, %v449
  %v451 = vpop.f32.mrb[0].mxu0
  %452 = vmatprep.mubr.bf16.mxu0 0
  %453 = vmatmul.mubr.bf16.gmra.mrb[0].mxu0 %v314
  %v454 = vpop.f32.mrb[0].mxu0
  %v455 = vadd.f32 %v262, %v454
  %v456 = vpop.f32.mrb[0].mxu0
  %v457 = vpop.f32.mrb[0].mxu0
  %v458 = vadd.f32 %v265, %v457
  %v459 = vpop.f32.mrb[0].mxu0
  %460 = vmatprep.mubr.bf16.mxu0 0
  %461 = vmatmul.mubr.bf16.gmra.mrb[0].mxu0 %v315
  %v462 = vpop.f32.mrb[0].mxu0
  %v463 = vadd.f32 %v270, %v462
  %v464 = vpop.f32.mrb[0].mxu0
  %v465 = vpop.f32.mrb[0].mxu0
  %v466 = vadd.f32 %v273, %v465
  %v467 = vpop.f32.mrb[0].mxu0
  %468 = vdwg.mxu0
  %s469 = scalar_lea.vmem %s0, 128
  %v470 = vld [vmem:[%s469] sm:$0xf]
  %v471 = vld [vmem:[%s469 + $0x4] sm:$0xf]
  %v472 = vld [vmem:[%s469 + $0x8] sm:$0xf]
  %v473 = vld [vmem:[%s469 + $0xc] sm:$0xf]
  %v474 = vld [vmem:[%s469 + $0x10] sm:$0xf]
  %v475 = vld [vmem:[%s469 + $0x14] sm:$0xf]
  %v476 = vld [vmem:[%s469 + $0x18] sm:$0xf]
  %v477 = vld [vmem:[%s469 + $0x1c] sm:$0xf]
  %v478 = vld [vmem:[%s469 + $0x20] sm:$0xf]
  %v479 = vld [vmem:[%s469 + $0x24] sm:$0xf]
  %v480 = vld [vmem:[%s469 + $0x28] sm:$0xf]
  %v481 = vld [vmem:[%s469 + $0x2c] sm:$0xf]
  %v482 = vld [vmem:[%s469 + $0x30] sm:$0xf]
  %v483 = vld [vmem:[%s469 + $0x34] sm:$0xf]
  %v484 = vld [vmem:[%s469 + $0x38] sm:$0xf]
  %v485 = vld [vmem:[%s469 + $0x3c] sm:$0xf]
  %s486 = scalar_lea.vmem %s1, 512
  %v487 = vld [vmem:[%s486] sm:$0xf]
  %v488 = vld [vmem:[%s486 + $0x4] sm:$0xf]
  %v489 = vld [vmem:[%s486 + $0x8] sm:$0xf]
  %v490 = vld [vmem:[%s486 + $0xc] sm:$0xf]
  %v491 = vld [vmem:[%s486 + $0x10] sm:$0xf]
  %v492 = vld [vmem:[%s486 + $0x14] sm:$0xf]
  %v493 = vld [vmem:[%s486 + $0x18] sm:$0xf]
  %v494 = vld [vmem:[%s486 + $0x1c] sm:$0xf]
  %v495 = vld [vmem:[%s486 + $0x20] sm:$0xf]
  %v496 = vld [vmem:[%s486 + $0x24] sm:$0xf]
  %v497 = vld [vmem:[%s486 + $0x28] sm:$0xf]
  %v498 = vld [vmem:[%s486 + $0x2c] sm:$0xf]
  %v499 = vld [vmem:[%s486 + $0x30] sm:$0xf]
  %v500 = vld [vmem:[%s486 + $0x34] sm:$0xf]
  %v501 = vld [vmem:[%s486 + $0x38] sm:$0xf]
  %v502 = vld [vmem:[%s486 + $0x3c] sm:$0xf]
  %v519 = vunpack.c.l.b16 %v470
  %v520 = vunpack.c.l.b16 %v471
  %v521 = vunpack.c.l.b16 %v472
  %v522 = vunpack.c.l.b16 %v473
  %v523 = vunpack.c.l.b16 %v474
  %v524 = vunpack.c.l.b16 %v475
  %v525 = vunpack.c.l.b16 %v476
  %v526 = vunpack.c.l.b16 %v477
  %v527 = vunpack.c.l.b16 %v478
  %v528 = vunpack.c.l.b16 %v479
  %v529 = vunpack.c.l.b16 %v480
  %v530 = vunpack.c.l.b16 %v481
  %v531 = vunpack.c.l.b16 %v482
  %v532 = vunpack.c.l.b16 %v483
  %v533 = vunpack.c.l.b16 %v484
  %v534 = vunpack.c.l.b16 %v485
  %v535 = vpack.c.b16 %v520, %v519
  %v536 = vpack.c.b16 %v522, %v521
  %v537 = vpack.c.b16 %v524, %v523
  %v538 = vpack.c.b16 %v526, %v525
  %v539 = vpack.c.b16 %v528, %v527
  %v540 = vpack.c.b16 %v530, %v529
  %v541 = vpack.c.b16 %v532, %v531
  %v542 = vpack.c.b16 %v534, %v533
  %v567 = vunpack.c.l.b16 %v487
  %v568 = vunpack.c.l.b16 %v488
  %v569 = vunpack.c.l.b16 %v489
  %v570 = vunpack.c.l.b16 %v490
  %v571 = vunpack.c.l.b16 %v491
  %v572 = vunpack.c.l.b16 %v492
  %v573 = vunpack.c.l.b16 %v493
  %v574 = vunpack.c.l.b16 %v494
  %v575 = vunpack.c.l.b16 %v495
  %v576 = vunpack.c.l.b16 %v496
  %v577 = vunpack.c.l.b16 %v497
  %v578 = vunpack.c.l.b16 %v498
  %v579 = vunpack.c.l.b16 %v499
  %v580 = vunpack.c.l.b16 %v500
  %v581 = vunpack.c.l.b16 %v501
  %v582 = vunpack.c.l.b16 %v502
  %v583 = vpack.c.b16 %v568, %v567
  %v584 = vpack.c.b16 %v570, %v569
  %v585 = vpack.c.b16 %v572, %v571
  %v586 = vpack.c.b16 %v574, %v573
  %v587 = vpack.c.b16 %v576, %v575
  %v588 = vpack.c.b16 %v578, %v577
  %v589 = vpack.c.b16 %v580, %v579
  %v590 = vpack.c.b16 %v582, %v581
  %599 = vmatprep.subr.bf16.mxu0 0
  %600 = vmatpush1.bf16.msra.mxu0 %v583
  %601 = vmatprep.subr.bf16.mxu0 0
  %602 = vmatpush1.bf16.msra.mxu0 %v584
  %603 = vmatprep.subr.bf16.mxu0 0
  %604 = vmatpush1.bf16.msra.mxu0 %v585
  %605 = vmatprep.subr.bf16.mxu0 0
  %606 = vmatpush1.bf16.msra.mxu0 %v586
  %607 = vmatprep.subr.bf16.mxu0 0
  %608 = vmatpush1.bf16.msra.mxu0 %v587
  %609 = vmatprep.subr.bf16.mxu0 0
  %610 = vmatpush1.bf16.msra.mxu0 %v588
  %611 = vmatprep.subr.bf16.mxu0 0
  %612 = vmatpush1.bf16.msra.mxu0 %v589
  %613 = vmatprep.subr.bf16.mxu0 0
  %614 = vmatpush1.bf16.msra.mxu0 %v590
  %615 = vmatprep.subr.bf16.mxu0 0
  %616 = vmatpush1.bf16.msra.mxu0 0
  %617 = vmatprep.subr.bf16.mxu0 0
  %618 = vmatpush1.bf16.msra.mxu0 0
  %619 = vmatprep.subr.bf16.mxu0 0
  %620 = vmatpush1.bf16.msra.mxu0 0
  %621 = vmatprep.subr.bf16.mxu0 0
  %622 = vmatpush1.bf16.msra.mxu0 0
  %623 = vmatprep.subr.bf16.mxu0 0
  %624 = vmatpush1.bf16.msra.mxu0 0
  %625 = vmatprep.subr.bf16.mxu0 0
  %626 = vmatpush1.bf16.msra.mxu0 0
  %627 = vmatprep.subr.bf16.mxu0 0
  %628 = vmatpush1.bf16.msra.mxu0 0
  %629 = vmatprep.subr.bf16.mxu0 0
  %630 = vmatpush1.bf16.msra.mxu0 0
  %631 = vmatprep.mubr.bf16.mxu0 0
  %632 = vmatmul.mubr.bf16.gmra.mrb[0].mxu0 %v535
  %v633 = vpop.f32.mrb[0].mxu0
  %v634 = vadd.f32 0.0, %v633
  %v635 = vpop.f32.mrb[0].mxu0
  %v636 = vpop.f32.mrb[0].mxu0
  %v637 = vadd.f32 0.0, %v636
  %v638 = vpop.f32.mrb[0].mxu0
  %639 = vmatprep.mubr.bf16.mxu0 0
  %640 = vmatmul.mubr.bf16.gmra.mrb[0].mxu0 %v536
  %v641 = vpop.f32.mrb[0].mxu0
  %v642 = vadd.f32 0.0, %v641
  %v643 = vpop.f32.mrb[0].mxu0
  %v644 = vpop.f32.mrb[0].mxu0
  %v645 = vadd.f32 0.0, %v644
  %v646 = vpop.f32.mrb[0].mxu0
  %647 = vmatprep.mubr.bf16.mxu0 0
  %648 = vmatmul.mubr.bf16.gmra.mrb[0].mxu0 %v537
  %v649 = vpop.f32.mrb[0].mxu0
  %v650 = vadd.f32 0.0, %v649
  %v651 = vpop.f32.mrb[0].mxu0
  %v652 = vpop.f32.mrb[0].mxu0
  %v653 = vadd.f32 0.0, %v652
  %v654 = vpop.f32.mrb[0].mxu0
  %655 = vmatprep.mubr.bf16.mxu0 0
  %656 = vmatmul.mubr.bf16.gmra.mrb[0].mxu0 %v538
  %v657 = vpop.f32.mrb[0].mxu0
  %v658 = vadd.f32 0.0, %v657
  %v659 = vpop.f32.mrb[0].mxu0
  %v660 = vpop.f32.mrb[0].mxu0
  %v661 = vadd.f32 0.0, %v660
  %v662 = vpop.f32.mrb[0].mxu0
  %663 = vmatprep.mubr.bf16.mxu0 0
  %664 = vmatmul.mubr.bf16.gmra.mrb[0].mxu0 %v539
  %v665 = vpop.f32.mrb[0].mxu0
  %v666 = vadd.f32 0.0, %v665
  %v667 = vpop.f32.mrb[0].mxu0
  %v668 = vpop.f32.mrb[0].mxu0
  %v669 = vadd.f32 0.0, %v668
  %v670 = vpop.f32.mrb[0].mxu0
  %671 = vmatprep.mubr.bf16.mxu0 0
  %672 = vmatmul.mubr.bf16.gmra.mrb[0].mxu0 %v540
  %v673 = vpop.f32.mrb[0].mxu0
  %v674 = vadd.f32 0.0, %v673
  %v675 = vpop.f32.mrb[0].mxu0
  %v676 = vpop.f32.mrb[0].mxu0
  %v677 = vadd.f32 0.0, %v676
  %v678 = vpop.f32.mrb[0].mxu0
  %679 = vmatprep.mubr.bf16.mxu0 0
  %680 = vmatmul.mubr.bf16.gmra.mrb[0].mxu0 %v541
  %v681 = vpop.f32.mrb[0].mxu0
  %v682 = vadd.f32 0.0, %v681
  %v683 = vpop.f32.mrb[0].mxu0
  %v684 = vpop.f32.mrb[0].mxu0
  %v685 = vadd.f32 0.0, %v684
  %v686 = vpop.f32.mrb[0].mxu0
  %687 = vmatprep.mubr.bf16.mxu0 0
  %688 = vmatmul.mubr.bf16.gmra.mrb[0].mxu0 %v542
  %v689 = vpop.f32.mrb[0].mxu0
  %v690 = vadd.f32 0.0, %v689
  %v691 = vpop.f32.mrb[0].mxu0
  %v692 = vpop.f32.mrb[0].mxu0
  %v693 = vadd.f32 0.0, %v692
  %v694 = vpop.f32.mrb[0].mxu0
  %695 = vdwg.mxu0
  %v696 = vadd.f32 %v407, %v634
  %v697 = vadd.f32 %v410, %v637
  %v698 = vadd.f32 %v415, %v642
  %v699 = vadd.f32 %v418, %v645
  %v700 = vadd.f32 %v423, %v650
  %v701 = vadd.f32 %v426, %v653
  %v702 = vadd.f32 %v431, %v658
  %v703 = vadd.f32 %v434, %v661
  %v704 = vadd.f32 %v439, %v666
  %v705 = vadd.f32 %v442, %v669
  %v706 = vadd.f32 %v447, %v674
  %v707 = vadd.f32 %v450, %v677
  %v708 = vadd.f32 %v455, %v682
  %v709 = vadd.f32 %v458, %v685
  %v710 = vadd.f32 %v463, %v690
  %v711 = vadd.f32 %v466, %v693
  %s712 = scalar_lea.vmem %s0, 192
  %v713 = vld [vmem:[%s712] sm:$0xf]
  %v714 = vld [vmem:[%s712 + $0x4] sm:$0xf]
  %v715 = vld [vmem:[%s712 + $0x8] sm:$0xf]
  %v716 = vld [vmem:[%s712 + $0xc] sm:$0xf]
  %v717 = vld [vmem:[%s712 + $0x10] sm:$0xf]
  %v718 = vld [vmem:[%s712 + $0x14] sm:$0xf]
  %v719 = vld [vmem:[%s712 + $0x18] sm:$0xf]
  %v720 = vld [vmem:[%s712 + $0x1c] sm:$0xf]
  %v721 = vld [vmem:[%s712 + $0x20] sm:$0xf]
  %v722 = vld [vmem:[%s712 + $0x24] sm:$0xf]
  %v723 = vld [vmem:[%s712 + $0x28] sm:$0xf]
  %v724 = vld [vmem:[%s712 + $0x2c] sm:$0xf]
  %v725 = vld [vmem:[%s712 + $0x30] sm:$0xf]
  %v726 = vld [vmem:[%s712 + $0x34] sm:$0xf]
  %v727 = vld [vmem:[%s712 + $0x38] sm:$0xf]
  %v728 = vld [vmem:[%s712 + $0x3c] sm:$0xf]
  %s729 = scalar_lea.vmem %s1, 768
  %v730 = vld [vmem:[%s729] sm:$0xf]
  %v731 = vld [vmem:[%s729 + $0x4] sm:$0xf]
  %v732 = vld [vmem:[%s729 + $0x8] sm:$0xf]
  %v733 = vld [vmem:[%s729 + $0xc] sm:$0xf]
  %v734 = vld [vmem:[%s729 + $0x10] sm:$0xf]
  %v735 = vld [vmem:[%s729 + $0x14] sm:$0xf]
  %v736 = vld [vmem:[%s729 + $0x18] sm:$0xf]
  %v737 = vld [vmem:[%s729 + $0x1c] sm:$0xf]
  %v738 = vld [vmem:[%s729 + $0x20] sm:$0xf]
  %v739 = vld [vmem:[%s729 + $0x24] sm:$0xf]
  %v740 = vld [vmem:[%s729 + $0x28] sm:$0xf]
  %v741 = vld [vmem:[%s729 + $0x2c] sm:$0xf]
  %v742 = vld [vmem:[%s729 + $0x30] sm:$0xf]
  %v743 = vld [vmem:[%s729 + $0x34] sm:$0xf]
  %v744 = vld [vmem:[%s729 + $0x38] sm:$0xf]
  %v745 = vld [vmem:[%s729 + $0x3c] sm:$0xf]
  %v762 = vunpack.c.l.b16 %v713
  %v763 = vunpack.c.l.b16 %v714
  %v764 = vunpack.c.l.b16 %v715
  %v765 = vunpack.c.l.b16 %v716
  %v766 = vunpack.c.l.b16 %v717
  %v767 = vunpack.c.l.b16 %v718
  %v768 = vunpack.c.l.b16 %v719
  %v769 = vunpack.c.l.b16 %v720
  %v770 = vunpack.c.l.b16 %v721
  %v771 = vunpack.c.l.b16 %v722
  %v772 = vunpack.c.l.b16 %v723
  %v773 = vunpack.c.l.b16 %v724
  %v774 = vunpack.c.l.b16 %v725
  %v775 = vunpack.c.l.b16 %v726
  %v776 = vunpack.c.l.b16 %v727
  %v777 = vunpack.c.l.b16 %v728
  %v778 = vpack.c.b16 %v763, %v762
  %v779 = vpack.c.b16 %v765, %v764
  %v780 = vpack.c.b16 %v767, %v766
  %v781 = vpack.c.b16 %v769, %v768
  %v782 = vpack.c.b16 %v771, %v770
  %v783 = vpack.c.b16 %v773, %v772
  %v784 = vpack.c.b16 %v775, %v774
  %v785 = vpack.c.b16 %v777, %v776
  %v810 = vunpack.c.l.b16 %v730
  %v811 = vunpack.c.l.b16 %v731
  %v812 = vunpack.c.l.b16 %v732
  %v813 = vunpack.c.l.b16 %v733
  %v814 = vunpack.c.l.b16 %v734
  %v815 = vunpack.c.l.b16 %v735
  %v816 = vunpack.c.l.b16 %v736
  %v817 = vunpack.c.l.b16 %v737
  %v818 = vunpack.c.l.b16 %v738
  %v819 = vunpack.c.l.b16 %v739
  %v820 = vunpack.c.l.b16 %v740
  %v821 = vunpack.c.l.b16 %v741
  %v822 = vunpack.c.l.b16 %v742
  %v823 = vunpack.c.l.b16 %v743
  %v824 = vunpack.c.l.b16 %v744
  %v825 = vunpack.c.l.b16 %v745
  %v826 = vpack.c.b16 %v811, %v810
  %v827 = vpack.c.b16 %v813, %v812
  %v828 = vpack.c.b16 %v815, %v814
  %v829 = vpack.c.b16 %v817, %v816
  %v830 = vpack.c.b16 %v819, %v818
  %v831 = vpack.c.b16 %v821, %v820
  %v832 = vpack.c.b16 %v823, %v822
  %v833 = vpack.c.b16 %v825, %v824
  %842 = vmatprep.subr.bf16.mxu0 0
  %843 = vmatpush1.bf16.msra.mxu0 %v826
  %844 = vmatprep.subr.bf16.mxu0 0
  %845 = vmatpush1.bf16.msra.mxu0 %v827
  %846 = vmatprep.subr.bf16.mxu0 0
  %847 = vmatpush1.bf16.msra.mxu0 %v828
  %848 = vmatprep.subr.bf16.mxu0 0
  %849 = vmatpush1.bf16.msra.mxu0 %v829
  %850 = vmatprep.subr.bf16.mxu0 0
  %851 = vmatpush1.bf16.msra.mxu0 %v830
  %852 = vmatprep.subr.bf16.mxu0 0
  %853 = vmatpush1.bf16.msra.mxu0 %v831
  %854 = vmatprep.subr.bf16.mxu0 0
  %855 = vmatpush1.bf16.msra.mxu0 %v832
  %856 = vmatprep.subr.bf16.mxu0 0
  %857 = vmatpush1.bf16.msra.mxu0 %v833
  %858 = vmatprep.subr.bf16.mxu0 0
  %859 = vmatpush1.bf16.msra.mxu0 0
  %860 = vmatprep.subr.bf16.mxu0 0
  %861 = vmatpush1.bf16.msra.mxu0 0
  %862 = vmatprep.subr.bf16.mxu0 0
  %863 = vmatpush1.bf16.msra.mxu0 0
  %864 = vmatprep.subr.bf16.mxu0 0
  %865 = vmatpush1.bf16.msra.mxu0 0
  %866 = vmatprep.subr.bf16.mxu0 0
  %867 = vmatpush1.bf16.msra.mxu0 0
  %868 = vmatprep.subr.bf16.mxu0 0
  %869 = vmatpush1.bf16.msra.mxu0 0
  %870 = vmatprep.subr.bf16.mxu0 0
  %871 = vmatpush1.bf16.msra.mxu0 0
  %872 = vmatprep.subr.bf16.mxu0 0
  %873 = vmatpush1.bf16.msra.mxu0 0
  %874 = vmatprep.mubr.bf16.mxu0 0
  %875 = vmatmul.mubr.bf16.gmra.mrb[0].mxu0 %v778
  %v876 = vpop.f32.mrb[0].mxu0
  %v877 = vadd.f32 0.0, %v876
  %v878 = vpop.f32.mrb[0].mxu0
  %v879 = vpop.f32.mrb[0].mxu0
  %v880 = vadd.f32 0.0, %v879
  %v881 = vpop.f32.mrb[0].mxu0
  %882 = vmatprep.mubr.bf16.mxu0 0
  %883 = vmatmul.mubr.bf16.gmra.mrb[0].mxu0 %v779
  %v884 = vpop.f32.mrb[0].mxu0
  %v885 = vadd.f32 0.0, %v884
  %v886 = vpop.f32.mrb[0].mxu0
  %v887 = vpop.f32.mrb[0].mxu0
  %v888 = vadd.f32 0.0, %v887
  %v889 = vpop.f32.mrb[0].mxu0
  %890 = vmatprep.mubr.bf16.mxu0 0
  %891 = vmatmul.mubr.bf16.gmra.mrb[0].mxu0 %v780
  %v892 = vpop.f32.mrb[0].mxu0
  %v893 = vadd.f32 0.0, %v892
  %v894 = vpop.f32.mrb[0].mxu0
  %v895 = vpop.f32.mrb[0].mxu0
  %v896 = vadd.f32 0.0, %v895
  %v897 = vpop.f32.mrb[0].mxu0
  %898 = vmatprep.mubr.bf16.mxu0 0
  %899 = vmatmul.mubr.bf16.gmra.mrb[0].mxu0 %v781
  %v900 = vpop.f32.mrb[0].mxu0
  %v901 = vadd.f32 0.0, %v900
  %v902 = vpop.f32.mrb[0].mxu0
  %v903 = vpop.f32.mrb[0].mxu0
  %v904 = vadd.f32 0.0, %v903
  %v905 = vpop.f32.mrb[0].mxu0
  %906 = vmatprep.mubr.bf16.mxu0 0
  %907 = vmatmul.mubr.bf16.gmra.mrb[0].mxu0 %v782
  %v908 = vpop.f32.mrb[0].mxu0
  %v909 = vadd.f32 0.0, %v908
  %v910 = vpop.f32.mrb[0].mxu0
  %v911 = vpop.f32.mrb[0].mxu0
  %v912 = vadd.f32 0.0, %v911
  %v913 = vpop.f32.mrb[0].mxu0
  %914 = vmatprep.mubr.bf16.mxu0 0
  %915 = vmatmul.mubr.bf16.gmra.mrb[0].mxu0 %v783
  %v916 = vpop.f32.mrb[0].mxu0
  %v917 = vadd.f32 0.0, %v916
  %v918 = vpop.f32.mrb[0].mxu0
  %v919 = vpop.f32.mrb[0].mxu0
  %v920 = vadd.f32 0.0, %v919
  %v921 = vpop.f32.mrb[0].mxu0
  %922 = vmatprep.mubr.bf16.mxu0 0
  %923 = vmatmul.mubr.bf16.gmra.mrb[0].mxu0 %v784
  %v924 = vpop.f32.mrb[0].mxu0
  %v925 = vadd.f32 0.0, %v924
  %v926 = vpop.f32.mrb[0].mxu0
  %v927 = vpop.f32.mrb[0].mxu0
  %v928 = vadd.f32 0.0, %v927
  %v929 = vpop.f32.mrb[0].mxu0
  %930 = vmatprep.mubr.bf16.mxu0 0
  %931 = vmatmul.mubr.bf16.gmra.mrb[0].mxu0 %v785
  %v932 = vpop.f32.mrb[0].mxu0
  %v933 = vadd.f32 0.0, %v932
  %v934 = vpop.f32.mrb[0].mxu0
  %v935 = vpop.f32.mrb[0].mxu0
  %v936 = vadd.f32 0.0, %v935
  %v937 = vpop.f32.mrb[0].mxu0
  %938 = vdwg.mxu0
  %v939 = vadd.f32 %v696, %v877
  %v940 = vadd.f32 %v697, %v880
  %v941 = vadd.f32 %v698, %v885
  %v942 = vadd.f32 %v699, %v888
  %v943 = vadd.f32 %v700, %v893
  %v944 = vadd.f32 %v701, %v896
  %v945 = vadd.f32 %v702, %v901
  %v946 = vadd.f32 %v703, %v904
  %v947 = vadd.f32 %v704, %v909
  %v948 = vadd.f32 %v705, %v912
  %v949 = vadd.f32 %v706, %v917
  %v950 = vadd.f32 %v707, %v920
  %v951 = vadd.f32 %v708, %v925
  %v952 = vadd.f32 %v709, %v928
  %v953 = vadd.f32 %v710, %v933
  %v954 = vadd.f32 %v711, %v936
  %v955 = vpack.c.bf16 %v940, %v939
  %v956 = vpack.c.bf16 %v942, %v941
  %v957 = vpack.c.bf16 %v944, %v943
  %v958 = vpack.c.bf16 %v946, %v945
  %v959 = vpack.c.bf16 %v948, %v947
  %v960 = vpack.c.bf16 %v950, %v949
  %v961 = vpack.c.bf16 %v952, %v951
  %v962 = vpack.c.bf16 %v954, %v953
  %v971 = vunpack.c.l.b16 %v955
  %v972 = vunpack.c.h.b16 %v955
  %v973 = vunpack.c.l.b16 %v956
  %v974 = vunpack.c.h.b16 %v956
  %v975 = vunpack.c.l.b16 %v957
  %v976 = vunpack.c.h.b16 %v957
  %v977 = vunpack.c.l.b16 %v958
  %v978 = vunpack.c.h.b16 %v958
  %v979 = vunpack.c.l.b16 %v959
  %v980 = vunpack.c.h.b16 %v959
  %v981 = vunpack.c.l.b16 %v960
  %v982 = vunpack.c.h.b16 %v960
  %v983 = vunpack.c.l.b16 %v961
  %v984 = vunpack.c.h.b16 %v961
  %v985 = vunpack.c.l.b16 %v962
  %v986 = vunpack.c.h.b16 %v962
  %v987 = vpack.c.b16 %v971, %v971
  %v988 = vpack.c.b16 %v972, %v972
  %v989 = vpack.c.b16 %v973, %v973
  %v990 = vpack.c.b16 %v974, %v974
  %v991 = vpack.c.b16 %v975, %v975
  %v992 = vpack.c.b16 %v976, %v976
  %v993 = vpack.c.b16 %v977, %v977
  %v994 = vpack.c.b16 %v978, %v978
  %v995 = vpack.c.b16 %v979, %v979
  %v996 = vpack.c.b16 %v980, %v980
  %v997 = vpack.c.b16 %v981, %v981
  %v998 = vpack.c.b16 %v982, %v982
  %v999 = vpack.c.b16 %v983, %v983
  %v1000 = vpack.c.b16 %v984, %v984
  %v1001 = vpack.c.b16 %v985, %v985
  %v1002 = vpack.c.b16 %v986, %v986
  %vm1019 = vcmask 519168
  %1020 = vst.msk [vmem:[%s3] sm:$0xf] %vm1019, %v987
  %1021 = vst.msk [vmem:[%s3 + $0x4] sm:$0xf] %vm1019, %v988
  %1022 = vst.msk [vmem:[%s3 + $0x8] sm:$0xf] %vm1019, %v989
  %1023 = vst.msk [vmem:[%s3 + $0xc] sm:$0xf] %vm1019, %v990
  %1024 = vst.msk [vmem:[%s3 + $0x10] sm:$0xf] %vm1019, %v991
  %1025 = vst.msk [vmem:[%s3 + $0x14] sm:$0xf] %vm1019, %v992
  %1026 = vst.msk [vmem:[%s3 + $0x18] sm:$0xf] %vm1019, %v993
  %1027 = vst.msk [vmem:[%s3 + $0x1c] sm:$0xf] %vm1019, %v994
  %1028 = vst.msk [vmem:[%s3 + $0x20] sm:$0xf] %vm1019, %v995
  %1029 = vst.msk [vmem:[%s3 + $0x24] sm:$0xf] %vm1019, %v996
  %1030 = vst.msk [vmem:[%s3 + $0x28] sm:$0xf] %vm1019, %v997
  %1031 = vst.msk [vmem:[%s3 + $0x2c] sm:$0xf] %vm1019, %v998
  %1032 = vst.msk [vmem:[%s3 + $0x30] sm:$0xf] %vm1019, %v999
  %1033 = vst.msk [vmem:[%s3 + $0x34] sm:$0xf] %vm1019, %v1000
  %1034 = vst.msk [vmem:[%s3 + $0x38] sm:$0xf] %vm1019, %v1001
  %1035 = vst.msk [vmem:[%s3 + $0x3c] sm:$0xf] %vm1019, %v1002
  %v1036 = vld [vmem:[%s2] sm:$0xf]
  %v1037 = vld [vmem:[%s2 + $0x4] sm:$0xf]
  %v1038 = vld [vmem:[%s2 + $0x8] sm:$0xf]
  %v1039 = vld [vmem:[%s2 + $0xc] sm:$0xf]
  %v1040 = vld [vmem:[%s2 + $0x10] sm:$0xf]
  %v1041 = vld [vmem:[%s2 + $0x14] sm:$0xf]
  %v1042 = vld [vmem:[%s2 + $0x18] sm:$0xf]
  %v1043 = vld [vmem:[%s2 + $0x1c] sm:$0xf]
  %v1052 = vunpack.c.l.b16 %v1036
  %v1053 = vunpack.c.l.b16 %v1037
  %v1054 = vunpack.c.l.b16 %v1038
  %v1055 = vunpack.c.l.b16 %v1039
  %v1056 = vunpack.c.l.b16 %v1040
  %v1057 = vunpack.c.l.b16 %v1041
  %v1058 = vunpack.c.l.b16 %v1042
  %v1059 = vunpack.c.l.b16 %v1043
  %v1060 = vpack.c.b16 %v1053, %v1052
  %v1061 = vpack.c.b16 %v1055, %v1054
  %v1062 = vpack.c.b16 %v1057, %v1056
  %v1063 = vpack.c.b16 %v1059, %v1058
  %vm1068 = vcmask 523264
  %v1070 = vsel %vm1068, %v955, 0
  %v1073 = vsel %vm1068, %v956, 0
  %v1076 = vsel %vm1068, %v957, 0
  %v1079 = vsel %vm1068, %v958, 0
  %v1082 = vsel %vm1068, %v959, 0
  %v1085 = vsel %vm1068, %v960, 0
  %v1088 = vsel %vm1068, %v961, 0
  %v1091 = vsel %vm1068, %v962, 0
  %1093 = vmatprep.subr.bf16.mxu0 0
  %1094 = vmatpush1.bf16.msra.mxu0 %v1060
  %1095 = vmatprep.subr.bf16.mxu0 0
  %1096 = vmatpush1.bf16.msra.mxu0 %v1061
  %1097 = vmatprep.subr.bf16.mxu0 0
  %1098 = vmatpush1.bf16.msra.mxu0 %v1062
  %1099 = vmatprep.subr.bf16.mxu0 0
  %1100 = vmatpush1.bf16.msra.mxu0 %v1063
  %1101 = vmatprep.subr.bf16.mxu0 0
  %1102 = vmatpush1.bf16.msra.mxu0 0
  %1103 = vmatprep.subr.bf16.mxu0 0
  %1104 = vmatpush1.bf16.msra.mxu0 0
  %1105 = vmatprep.subr.bf16.mxu0 0
  %1106 = vmatpush1.bf16.msra.mxu0 0
  %1107 = vmatprep.subr.bf16.mxu0 0
  %1108 = vmatpush1.bf16.msra.mxu0 0
  %1109 = vmatprep.subr.bf16.mxu0 0
  %1110 = vmatpush1.bf16.msra.mxu0 0
  %1111 = vmatprep.subr.bf16.mxu0 0
  %1112 = vmatpush1.bf16.msra.mxu0 0
  %1113 = vmatprep.subr.bf16.mxu0 0
  %1114 = vmatpush1.bf16.msra.mxu0 0
  %1115 = vmatprep.subr.bf16.mxu0 0
  %1116 = vmatpush1.bf16.msra.mxu0 0
  %1117 = vmatprep.subr.bf16.mxu0 0
  %1118 = vmatpush1.bf16.msra.mxu0 0
  %1119 = vmatprep.subr.bf16.mxu0 0
  %1120 = vmatpush1.bf16.msra.mxu0 0
  %1121 = vmatprep.subr.bf16.mxu0 0
  %1122 = vmatpush1.bf16.msra.mxu0 0
  %1123 = vmatprep.subr.bf16.mxu0 0
  %1124 = vmatpush1.bf16.msra.mxu0 0
  %1125 = vmatprep.mubr.bf16.mxu0 0
  %1126 = vmatmul.mubr.bf16.gmra.mrb[0].mxu0 %v1070
  %v1127 = vpop.f32.mrb[0].mxu0
  %v1128 = vadd.f32 0.0, %v1127
  %v1129 = vpop.f32.mrb[0].mxu0
  %v1130 = vpop.f32.mrb[0].mxu0
  %v1131 = vadd.f32 0.0, %v1130
  %v1132 = vpop.f32.mrb[0].mxu0
  %1133 = vmatprep.mubr.bf16.mxu0 0
  %1134 = vmatmul.mubr.bf16.gmra.mrb[0].mxu0 %v1073
  %v1135 = vpop.f32.mrb[0].mxu0
  %v1136 = vadd.f32 0.0, %v1135
  %v1137 = vpop.f32.mrb[0].mxu0
  %v1138 = vpop.f32.mrb[0].mxu0
  %v1139 = vadd.f32 0.0, %v1138
  %v1140 = vpop.f32.mrb[0].mxu0
  %1141 = vmatprep.mubr.bf16.mxu0 0
  %1142 = vmatmul.mubr.bf16.gmra.mrb[0].mxu0 %v1076
  %v1143 = vpop.f32.mrb[0].mxu0
  %v1144 = vadd.f32 0.0, %v1143
  %v1145 = vpop.f32.mrb[0].mxu0
  %v1146 = vpop.f32.mrb[0].mxu0
  %v1147 = vadd.f32 0.0, %v1146
  %v1148 = vpop.f32.mrb[0].mxu0
  %1149 = vmatprep.mubr.bf16.mxu0 0
  %1150 = vmatmul.mubr.bf16.gmra.mrb[0].mxu0 %v1079
  %v1151 = vpop.f32.mrb[0].mxu0
  %v1152 = vadd.f32 0.0, %v1151
  %v1153 = vpop.f32.mrb[0].mxu0
  %v1154 = vpop.f32.mrb[0].mxu0
  %v1155 = vadd.f32 0.0, %v1154
  %v1156 = vpop.f32.mrb[0].mxu0
  %1157 = vmatprep.mubr.bf16.mxu0 0
  %1158 = vmatmul.mubr.bf16.gmra.mrb[0].mxu0 %v1082
  %v1159 = vpop.f32.mrb[0].mxu0
  %v1160 = vadd.f32 0.0, %v1159
  %v1161 = vpop.f32.mrb[0].mxu0
  %v1162 = vpop.f32.mrb[0].mxu0
  %v1163 = vadd.f32 0.0, %v1162
  %v1164 = vpop.f32.mrb[0].mxu0
  %1165 = vmatprep.mubr.bf16.mxu0 0
  %1166 = vmatmul.mubr.bf16.gmra.mrb[0].mxu0 %v1085
  %v1167 = vpop.f32.mrb[0].mxu0
  %v1168 = vadd.f32 0.0, %v1167
  %v1169 = vpop.f32.mrb[0].mxu0
  %v1170 = vpop.f32.mrb[0].mxu0
  %v1171 = vadd.f32 0.0, %v1170
  %v1172 = vpop.f32.mrb[0].mxu0
  %1173 = vmatprep.mubr.bf16.mxu0 0
  %1174 = vmatmul.mubr.bf16.gmra.mrb[0].mxu0 %v1088
  %v1175 = vpop.f32.mrb[0].mxu0
  %v1176 = vadd.f32 0.0, %v1175
  %v1177 = vpop.f32.mrb[0].mxu0
  %v1178 = vpop.f32.mrb[0].mxu0
  %v1179 = vadd.f32 0.0, %v1178
  %v1180 = vpop.f32.mrb[0].mxu0
  %1181 = vmatprep.mubr.bf16.mxu0 0
  %1182 = vmatmul.mubr.bf16.gmra.mrb[0].mxu0 %v1091
  %v1183 = vpop.f32.mrb[0].mxu0
  %v1184 = vadd.f32 0.0, %v1183
  %v1185 = vpop.f32.mrb[0].mxu0
  %v1186 = vpop.f32.mrb[0].mxu0
  %v1187 = vadd.f32 0.0, %v1186
  %v1188 = vpop.f32.mrb[0].mxu0
  %1189 = vdwg.mxu0
  %vm1190 = vcmask 15360
  %1191 = vst.msk [vmem:[%s4] sm:$0xff] %vm1190, %v1128
  %1192 = vst.msk [vmem:[%s4 + $0x8] sm:$0xff] %vm1190, %v1131
  %1193 = vst.msk [vmem:[%s4 + $0x10] sm:$0xff] %vm1190, %v1136
  %1194 = vst.msk [vmem:[%s4 + $0x18] sm:$0xff] %vm1190, %v1139
  %1195 = vst.msk [vmem:[%s4 + $0x20] sm:$0xff] %vm1190, %v1144
  %1196 = vst.msk [vmem:[%s4 + $0x28] sm:$0xff] %vm1190, %v1147
  %1197 = vst.msk [vmem:[%s4 + $0x30] sm:$0xff] %vm1190, %v1152
  %1198 = vst.msk [vmem:[%s4 + $0x38] sm:$0xff] %vm1190, %v1155
  %1199 = vst.msk [vmem:[%s4 + $0x40] sm:$0xff] %vm1190, %v1160
  %1200 = vst.msk [vmem:[%s4 + $0x48] sm:$0xff] %vm1190, %v1163
  %1201 = vst.msk [vmem:[%s4 + $0x50] sm:$0xff] %vm1190, %v1168
  %1202 = vst.msk [vmem:[%s4 + $0x58] sm:$0xff] %vm1190, %v1171
  %1203 = vst.msk [vmem:[%s4 + $0x60] sm:$0xff] %vm1190, %v1176
  %1204 = vst.msk [vmem:[%s4 + $0x68] sm:$0xff] %vm1190, %v1179
  %1205 = vst.msk [vmem:[%s4 + $0x70] sm:$0xff] %vm1190, %v1184
  %1206 = vst.msk [vmem:[%s4 + $0x78] sm:$0xff] %vm1190, %v1187
  %v1207 = vld [vmem:[%s0] sm:$0xf]
  %v1208 = vld [vmem:[%s0 + $0x4] sm:$0xf]
  %v1209 = vld [vmem:[%s0 + $0x8] sm:$0xf]
  %v1210 = vld [vmem:[%s0 + $0xc] sm:$0xf]
  %v1211 = vld [vmem:[%s0 + $0x10] sm:$0xf]
  %v1212 = vld [vmem:[%s0 + $0x14] sm:$0xf]
  %v1213 = vld [vmem:[%s0 + $0x18] sm:$0xf]
  %v1214 = vld [vmem:[%s0 + $0x1c] sm:$0xf]
  %v1215 = vld [vmem:[%s0 + $0x20] sm:$0xf]
  %v1216 = vld [vmem:[%s0 + $0x24] sm:$0xf]
  %v1217 = vld [vmem:[%s0 + $0x28] sm:$0xf]
  %v1218 = vld [vmem:[%s0 + $0x2c] sm:$0xf]
  %v1219 = vld [vmem:[%s0 + $0x30] sm:$0xf]
  %v1220 = vld [vmem:[%s0 + $0x34] sm:$0xf]
  %v1221 = vld [vmem:[%s0 + $0x38] sm:$0xf]
  %v1222 = vld [vmem:[%s0 + $0x3c] sm:$0xf]
  %s1223 = scalar_lea.vmem %s1, 64
  %v1224 = vld [vmem:[%s1223] sm:$0xf]
  %v1225 = vld [vmem:[%s1223 + $0x4] sm:$0xf]
  %v1226 = vld [vmem:[%s1223 + $0x8] sm:$0xf]
  %v1227 = vld [vmem:[%s1223 + $0xc] sm:$0xf]
  %v1228 = vld [vmem:[%s1223 + $0x10] sm:$0xf]
  %v1229 = vld [vmem:[%s1223 + $0x14] sm:$0xf]
  %v1230 = vld [vmem:[%s1223 + $0x18] sm:$0xf]
  %v1231 = vld [vmem:[%s1223 + $0x1c] sm:$0xf]
  %v1232 = vld [vmem:[%s1223 + $0x20] sm:$0xf]
  %v1233 = vld [vmem:[%s1223 + $0x24] sm:$0xf]
  %v1234 = vld [vmem:[%s1223 + $0x28] sm:$0xf]
  %v1235 = vld [vmem:[%s1223 + $0x2c] sm:$0xf]
  %v1236 = vld [vmem:[%s1223 + $0x30] sm:$0xf]
  %v1237 = vld [vmem:[%s1223 + $0x34] sm:$0xf]
  %v1238 = vld [vmem:[%s1223 + $0x38] sm:$0xf]
  %v1239 = vld [vmem:[%s1223 + $0x3c] sm:$0xf]
  %v1240 = vld [vmem:[%s49] sm:$0xf]
  %v1241 = vld [vmem:[%s49 + $0x4] sm:$0xf]
  %v1242 = vld [vmem:[%s49 + $0x8] sm:$0xf]
  %v1243 = vld [vmem:[%s49 + $0xc] sm:$0xf]
  %v1244 = vld [vmem:[%s49 + $0x10] sm:$0xf]
  %v1245 = vld [vmem:[%s49 + $0x14] sm:$0xf]
  %v1246 = vld [vmem:[%s49 + $0x18] sm:$0xf]
  %v1247 = vld [vmem:[%s49 + $0x1c] sm:$0xf]
  %v1248 = vld [vmem:[%s49 + $0x20] sm:$0xf]
  %v1249 = vld [vmem:[%s49 + $0x24] sm:$0xf]
  %v1250 = vld [vmem:[%s49 + $0x28] sm:$0xf]
  %v1251 = vld [vmem:[%s49 + $0x2c] sm:$0xf]
  %v1252 = vld [vmem:[%s49 + $0x30] sm:$0xf]
  %v1253 = vld [vmem:[%s49 + $0x34] sm:$0xf]
  %v1254 = vld [vmem:[%s49 + $0x38] sm:$0xf]
  %v1255 = vld [vmem:[%s49 + $0x3c] sm:$0xf]
  %s1256 = scalar_lea.vmem %s1, 320
  %v1257 = vld [vmem:[%s1256] sm:$0xf]
  %v1258 = vld [vmem:[%s1256 + $0x4] sm:$0xf]
  %v1259 = vld [vmem:[%s1256 + $0x8] sm:$0xf]
  %v1260 = vld [vmem:[%s1256 + $0xc] sm:$0xf]
  %v1261 = vld [vmem:[%s1256 + $0x10] sm:$0xf]
  %v1262 = vld [vmem:[%s1256 + $0x14] sm:$0xf]
  %v1263 = vld [vmem:[%s1256 + $0x18] sm:$0xf]
  %v1264 = vld [vmem:[%s1256 + $0x1c] sm:$0xf]
  %v1265 = vld [vmem:[%s1256 + $0x20] sm:$0xf]
  %v1266 = vld [vmem:[%s1256 + $0x24] sm:$0xf]
  %v1267 = vld [vmem:[%s1256 + $0x28] sm:$0xf]
  %v1268 = vld [vmem:[%s1256 + $0x2c] sm:$0xf]
  %v1269 = vld [vmem:[%s1256 + $0x30] sm:$0xf]
  %v1270 = vld [vmem:[%s1256 + $0x34] sm:$0xf]
  %v1271 = vld [vmem:[%s1256 + $0x38] sm:$0xf]
  %v1272 = vld [vmem:[%s1256 + $0x3c] sm:$0xf]
  %v1289 = vunpack.c.l.b16 %v1240
  %v1290 = vunpack.c.l.b16 %v1241
  %v1291 = vunpack.c.l.b16 %v1242
  %v1292 = vunpack.c.l.b16 %v1243
  %v1293 = vunpack.c.l.b16 %v1244
  %v1294 = vunpack.c.l.b16 %v1245
  %v1295 = vunpack.c.l.b16 %v1246
  %v1296 = vunpack.c.l.b16 %v1247
  %v1297 = vunpack.c.l.b16 %v1248
  %v1298 = vunpack.c.l.b16 %v1249
  %v1299 = vunpack.c.l.b16 %v1250
  %v1300 = vunpack.c.l.b16 %v1251
  %v1301 = vunpack.c.l.b16 %v1252
  %v1302 = vunpack.c.l.b16 %v1253
  %v1303 = vunpack.c.l.b16 %v1254
  %v1304 = vunpack.c.l.b16 %v1255
  %v1305 = vpack.c.b16 %v1290, %v1289
  %v1306 = vpack.c.b16 %v1292, %v1291
  %v1307 = vpack.c.b16 %v1294, %v1293
  %v1308 = vpack.c.b16 %v1296, %v1295
  %v1309 = vpack.c.b16 %v1298, %v1297
  %v1310 = vpack.c.b16 %v1300, %v1299
  %v1311 = vpack.c.b16 %v1302, %v1301
  %v1312 = vpack.c.b16 %v1304, %v1303
  %v1337 = vunpack.c.l.b16 %v1257
  %v1338 = vunpack.c.l.b16 %v1258
  %v1339 = vunpack.c.l.b16 %v1259
  %v1340 = vunpack.c.l.b16 %v1260
  %v1341 = vunpack.c.l.b16 %v1261
  %v1342 = vunpack.c.l.b16 %v1262
  %v1343 = vunpack.c.l.b16 %v1263
  %v1344 = vunpack.c.l.b16 %v1264
  %v1345 = vunpack.c.l.b16 %v1265
  %v1346 = vunpack.c.l.b16 %v1266
  %v1347 = vunpack.c.l.b16 %v1267
  %v1348 = vunpack.c.l.b16 %v1268
  %v1349 = vunpack.c.l.b16 %v1269
  %v1350 = vunpack.c.l.b16 %v1270
  %v1351 = vunpack.c.l.b16 %v1271
  %v1352 = vunpack.c.l.b16 %v1272
  %v1353 = vpack.c.b16 %v1338, %v1337
  %v1354 = vpack.c.b16 %v1340, %v1339
  %v1355 = vpack.c.b16 %v1342, %v1341
  %v1356 = vpack.c.b16 %v1344, %v1343
  %v1357 = vpack.c.b16 %v1346, %v1345
  %v1358 = vpack.c.b16 %v1348, %v1347
  %v1359 = vpack.c.b16 %v1350, %v1349
  %v1360 = vpack.c.b16 %v1352, %v1351
  %1369 = vmatprep.subr.bf16.mxu0 0
  %1370 = vmatpush1.bf16.msra.mxu0 %v1353
  %1371 = vmatprep.subr.bf16.mxu0 0
  %1372 = vmatpush1.bf16.msra.mxu0 %v1354
  %1373 = vmatprep.subr.bf16.mxu0 0
  %1374 = vmatpush1.bf16.msra.mxu0 %v1355
  %1375 = vmatprep.subr.bf16.mxu0 0
  %1376 = vmatpush1.bf16.msra.mxu0 %v1356
  %1377 = vmatprep.subr.bf16.mxu0 0
  %1378 = vmatpush1.bf16.msra.mxu0 %v1357
  %1379 = vmatprep.subr.bf16.mxu0 0
  %1380 = vmatpush1.bf16.msra.mxu0 %v1358
  %1381 = vmatprep.subr.bf16.mxu0 0
  %1382 = vmatpush1.bf16.msra.mxu0 %v1359
  %1383 = vmatprep.subr.bf16.mxu0 0
  %1384 = vmatpush1.bf16.msra.mxu0 %v1360
  %1385 = vmatprep.subr.bf16.mxu0 0
  %1386 = vmatpush1.bf16.msra.mxu0 0
  %1387 = vmatprep.subr.bf16.mxu0 0
  %1388 = vmatpush1.bf16.msra.mxu0 0
  %1389 = vmatprep.subr.bf16.mxu0 0
  %1390 = vmatpush1.bf16.msra.mxu0 0
  %1391 = vmatprep.subr.bf16.mxu0 0
  %1392 = vmatpush1.bf16.msra.mxu0 0
  %1393 = vmatprep.subr.bf16.mxu0 0
  %1394 = vmatpush1.bf16.msra.mxu0 0
  %1395 = vmatprep.subr.bf16.mxu0 0
  %1396 = vmatpush1.bf16.msra.mxu0 0
  %1397 = vmatprep.subr.bf16.mxu0 0
  %1398 = vmatpush1.bf16.msra.mxu0 0
  %1399 = vmatprep.subr.bf16.mxu0 0
  %1400 = vmatpush1.bf16.msra.mxu0 0
  %1401 = vmatprep.mubr.bf16.mxu0 0
  %1402 = vmatmul.mubr.bf16.gmra.mrb[0].mxu0 %v1305
  %v1403 = vpop.f32.mrb[0].mxu0
  %v1404 = vadd.f32 0.0, %v1403
  %v1405 = vpop.f32.mrb[0].mxu0
  %v1406 = vpop.f32.mrb[0].mxu0
  %v1407 = vadd.f32 0.0, %v1406
  %v1408 = vpop.f32.mrb[0].mxu0
  %1409 = vmatprep.mubr.bf16.mxu0 0
  %1410 = vmatmul.mubr.bf16.gmra.mrb[0].mxu0 %v1306
  %v1411 = vpop.f32.mrb[0].mxu0
  %v1412 = vadd.f32 0.0, %v1411
  %v1413 = vpop.f32.mrb[0].mxu0
  %v1414 = vpop.f32.mrb[0].mxu0
  %v1415 = vadd.f32 0.0, %v1414
  %v1416 = vpop.f32.mrb[0].mxu0
  %1417 = vmatprep.mubr.bf16.mxu0 0
  %1418 = vmatmul.mubr.bf16.gmra.mrb[0].mxu0 %v1307
  %v1419 = vpop.f32.mrb[0].mxu0
  %v1420 = vadd.f32 0.0, %v1419
  %v1421 = vpop.f32.mrb[0].mxu0
  %v1422 = vpop.f32.mrb[0].mxu0
  %v1423 = vadd.f32 0.0, %v1422
  %v1424 = vpop.f32.mrb[0].mxu0
  %1425 = vmatprep.mubr.bf16.mxu0 0
  %1426 = vmatmul.mubr.bf16.gmra.mrb[0].mxu0 %v1308
  %v1427 = vpop.f32.mrb[0].mxu0
  %v1428 = vadd.f32 0.0, %v1427
  %v1429 = vpop.f32.mrb[0].mxu0
  %v1430 = vpop.f32.mrb[0].mxu0
  %v1431 = vadd.f32 0.0, %v1430
  %v1432 = vpop.f32.mrb[0].mxu0
  %1433 = vmatprep.mubr.bf16.mxu0 0
  %1434 = vmatmul.mubr.bf16.gmra.mrb[0].mxu0 %v1309
  %v1435 = vpop.f32.mrb[0].mxu0
  %v1436 = vadd.f32 0.0, %v1435
  %v1437 = vpop.f32.mrb[0].mxu0
  %v1438 = vpop.f32.mrb[0].mxu0
  %v1439 = vadd.f32 0.0, %v1438
  %v1440 = vpop.f32.mrb[0].mxu0
  %1441 = vmatprep.mubr.bf16.mxu0 0
  %1442 = vmatmul.mubr.bf16.gmra.mrb[0].mxu0 %v1310
  %v1443 = vpop.f32.mrb[0].mxu0
  %v1444 = vadd.f32 0.0, %v1443
  %v1445 = vpop.f32.mrb[0].mxu0
  %v1446 = vpop.f32.mrb[0].mxu0
  %v1447 = vadd.f32 0.0, %v1446
  %v1448 = vpop.f32.mrb[0].mxu0
  %1449 = vmatprep.mubr.bf16.mxu0 0
  %1450 = vmatmul.mubr.bf16.gmra.mrb[0].mxu0 %v1311
  %v1451 = vpop.f32.mrb[0].mxu0
  %v1452 = vadd.f32 0.0, %v1451
  %v1453 = vpop.f32.mrb[0].mxu0
  %v1454 = vpop.f32.mrb[0].mxu0
  %v1455 = vadd.f32 0.0, %v1454
  %v1456 = vpop.f32.mrb[0].mxu0
  %1457 = vmatprep.mubr.bf16.mxu0 0
  %1458 = vmatmul.mubr.bf16.gmra.mrb[0].mxu0 %v1312
  %v1459 = vpop.f32.mrb[0].mxu0
  %v1460 = vadd.f32 0.0, %v1459
  %v1461 = vpop.f32.mrb[0].mxu0
  %v1462 = vpop.f32.mrb[0].mxu0
  %v1463 = vadd.f32 0.0, %v1462
  %v1464 = vpop.f32.mrb[0].mxu0
  %1465 = vdwg.mxu0
  %v1482 = vunpack.c.l.b16 %v1207
  %v1483 = vunpack.c.l.b16 %v1208
  %v1484 = vunpack.c.l.b16 %v1209
  %v1485 = vunpack.c.l.b16 %v1210
  %v1486 = vunpack.c.l.b16 %v1211
  %v1487 = vunpack.c.l.b16 %v1212
  %v1488 = vunpack.c.l.b16 %v1213
  %v1489 = vunpack.c.l.b16 %v1214
  %v1490 = vunpack.c.l.b16 %v1215
  %v1491 = vunpack.c.l.b16 %v1216
  %v1492 = vunpack.c.l.b16 %v1217
  %v1493 = vunpack.c.l.b16 %v1218
  %v1494 = vunpack.c.l.b16 %v1219
  %v1495 = vunpack.c.l.b16 %v1220
  %v1496 = vunpack.c.l.b16 %v1221
  %v1497 = vunpack.c.l.b16 %v1222
  %v1498 = vpack.c.b16 %v1483, %v1482
  %v1499 = vpack.c.b16 %v1485, %v1484
  %v1500 = vpack.c.b16 %v1487, %v1486
  %v1501 = vpack.c.b16 %v1489, %v1488
  %v1502 = vpack.c.b16 %v1491, %v1490
  %v1503 = vpack.c.b16 %v1493, %v1492
  %v1504 = vpack.c.b16 %v1495, %v1494
  %v1505 = vpack.c.b16 %v1497, %v1496
  %v1530 = vunpack.c.l.b16 %v1224
  %v1531 = vunpack.c.l.b16 %v1225
  %v1532 = vunpack.c.l.b16 %v1226
  %v1533 = vunpack.c.l.b16 %v1227
  %v1534 = vunpack.c.l.b16 %v1228
  %v1535 = vunpack.c.l.b16 %v1229
  %v1536 = vunpack.c.l.b16 %v1230
  %v1537 = vunpack.c.l.b16 %v1231
  %v1538 = vunpack.c.l.b16 %v1232
  %v1539 = vunpack.c.l.b16 %v1233
  %v1540 = vunpack.c.l.b16 %v1234
  %v1541 = vunpack.c.l.b16 %v1235
  %v1542 = vunpack.c.l.b16 %v1236
  %v1543 = vunpack.c.l.b16 %v1237
  %v1544 = vunpack.c.l.b16 %v1238
  %v1545 = vunpack.c.l.b16 %v1239
  %v1546 = vpack.c.b16 %v1531, %v1530
  %v1547 = vpack.c.b16 %v1533, %v1532
  %v1548 = vpack.c.b16 %v1535, %v1534
  %v1549 = vpack.c.b16 %v1537, %v1536
  %v1550 = vpack.c.b16 %v1539, %v1538
  %v1551 = vpack.c.b16 %v1541, %v1540
  %v1552 = vpack.c.b16 %v1543, %v1542
  %v1553 = vpack.c.b16 %v1545, %v1544
  %1562 = vmatprep.subr.bf16.mxu0 0
  %1563 = vmatpush1.bf16.msra.mxu0 %v1546
  %1564 = vmatprep.subr.bf16.mxu0 0
  %1565 = vmatpush1.bf16.msra.mxu0 %v1547
  %1566 = vmatprep.subr.bf16.mxu0 0
  %1567 = vmatpush1.bf16.msra.mxu0 %v1548
  %1568 = vmatprep.subr.bf16.mxu0 0
  %1569 = vmatpush1.bf16.msra.mxu0 %v1549
  %1570 = vmatprep.subr.bf16.mxu0 0
  %1571 = vmatpush1.bf16.msra.mxu0 %v1550
  %1572 = vmatprep.subr.bf16.mxu0 0
  %1573 = vmatpush1.bf16.msra.mxu0 %v1551
  %1574 = vmatprep.subr.bf16.mxu0 0
  %1575 = vmatpush1.bf16.msra.mxu0 %v1552
  %1576 = vmatprep.subr.bf16.mxu0 0
  %1577 = vmatpush1.bf16.msra.mxu0 %v1553
  %1578 = vmatprep.subr.bf16.mxu0 0
  %1579 = vmatpush1.bf16.msra.mxu0 0
  %1580 = vmatprep.subr.bf16.mxu0 0
  %1581 = vmatpush1.bf16.msra.mxu0 0
  %1582 = vmatprep.subr.bf16.mxu0 0
  %1583 = vmatpush1.bf16.msra.mxu0 0
  %1584 = vmatprep.subr.bf16.mxu0 0
  %1585 = vmatpush1.bf16.msra.mxu0 0
  %1586 = vmatprep.subr.bf16.mxu0 0
  %1587 = vmatpush1.bf16.msra.mxu0 0
  %1588 = vmatprep.subr.bf16.mxu0 0
  %1589 = vmatpush1.bf16.msra.mxu0 0
  %1590 = vmatprep.subr.bf16.mxu0 0
  %1591 = vmatpush1.bf16.msra.mxu0 0
  %1592 = vmatprep.subr.bf16.mxu0 0
  %1593 = vmatpush1.bf16.msra.mxu0 0
  %1594 = vmatprep.mubr.bf16.mxu0 0
  %1595 = vmatmul.mubr.bf16.gmra.mrb[0].mxu0 %v1498
  %v1596 = vpop.f32.mrb[0].mxu0
  %v1597 = vadd.f32 %v1404, %v1596
  %v1598 = vpop.f32.mrb[0].mxu0
  %v1599 = vpop.f32.mrb[0].mxu0
  %v1600 = vadd.f32 %v1407, %v1599
  %v1601 = vpop.f32.mrb[0].mxu0
  %1602 = vmatprep.mubr.bf16.mxu0 0
  %1603 = vmatmul.mubr.bf16.gmra.mrb[0].mxu0 %v1499
  %v1604 = vpop.f32.mrb[0].mxu0
  %v1605 = vadd.f32 %v1412, %v1604
  %v1606 = vpop.f32.mrb[0].mxu0
  %v1607 = vpop.f32.mrb[0].mxu0
  %v1608 = vadd.f32 %v1415, %v1607
  %v1609 = vpop.f32.mrb[0].mxu0
  %1610 = vmatprep.mubr.bf16.mxu0 0
  %1611 = vmatmul.mubr.bf16.gmra.mrb[0].mxu0 %v1500
  %v1612 = vpop.f32.mrb[0].mxu0
  %v1613 = vadd.f32 %v1420, %v1612
  %v1614 = vpop.f32.mrb[0].mxu0
  %v1615 = vpop.f32.mrb[0].mxu0
  %v1616 = vadd.f32 %v1423, %v1615
  %v1617 = vpop.f32.mrb[0].mxu0
  %1618 = vmatprep.mubr.bf16.mxu0 0
  %1619 = vmatmul.mubr.bf16.gmra.mrb[0].mxu0 %v1501
  %v1620 = vpop.f32.mrb[0].mxu0
  %v1621 = vadd.f32 %v1428, %v1620
  %v1622 = vpop.f32.mrb[0].mxu0
  %v1623 = vpop.f32.mrb[0].mxu0
  %v1624 = vadd.f32 %v1431, %v1623
  %v1625 = vpop.f32.mrb[0].mxu0
  %1626 = vmatprep.mubr.bf16.mxu0 0
  %1627 = vmatmul.mubr.bf16.gmra.mrb[0].mxu0 %v1502
  %v1628 = vpop.f32.mrb[0].mxu0
  %v1629 = vadd.f32 %v1436, %v1628
  %v1630 = vpop.f32.mrb[0].mxu0
  %v1631 = vpop.f32.mrb[0].mxu0
  %v1632 = vadd.f32 %v1439, %v1631
  %v1633 = vpop.f32.mrb[0].mxu0
  %1634 = vmatprep.mubr.bf16.mxu0 0
  %1635 = vmatmul.mubr.bf16.gmra.mrb[0].mxu0 %v1503
  %v1636 = vpop.f32.mrb[0].mxu0
  %v1637 = vadd.f32 %v1444, %v1636
  %v1638 = vpop.f32.mrb[0].mxu0
  %v1639 = vpop.f32.mrb[0].mxu0
  %v1640 = vadd.f32 %v1447, %v1639
  %v1641 = vpop.f32.mrb[0].mxu0
  %1642 = vmatprep.mubr.bf16.mxu0 0
  %1643 = vmatmul.mubr.bf16.gmra.mrb[0].mxu0 %v1504
  %v1644 = vpop.f32.mrb[0].mxu0
  %v1645 = vadd.f32 %v1452, %v1644
  %v1646 = vpop.f32.mrb[0].mxu0
  %v1647 = vpop.f32.mrb[0].mxu0
  %v1648 = vadd.f32 %v1455, %v1647
  %v1649 = vpop.f32.mrb[0].mxu0
  %1650 = vmatprep.mubr.bf16.mxu0 0
  %1651 = vmatmul.mubr.bf16.gmra.mrb[0].mxu0 %v1505
  %v1652 = vpop.f32.mrb[0].mxu0
  %v1653 = vadd.f32 %v1460, %v1652
  %v1654 = vpop.f32.mrb[0].mxu0
  %v1655 = vpop.f32.mrb[0].mxu0
  %v1656 = vadd.f32 %v1463, %v1655
  %v1657 = vpop.f32.mrb[0].mxu0
  %1658 = vdwg.mxu0
  %v1659 = vld [vmem:[%s469] sm:$0xf]
  %v1660 = vld [vmem:[%s469 + $0x4] sm:$0xf]
  %v1661 = vld [vmem:[%s469 + $0x8] sm:$0xf]
  %v1662 = vld [vmem:[%s469 + $0xc] sm:$0xf]
  %v1663 = vld [vmem:[%s469 + $0x10] sm:$0xf]
  %v1664 = vld [vmem:[%s469 + $0x14] sm:$0xf]
  %v1665 = vld [vmem:[%s469 + $0x18] sm:$0xf]
  %v1666 = vld [vmem:[%s469 + $0x1c] sm:$0xf]
  %v1667 = vld [vmem:[%s469 + $0x20] sm:$0xf]
  %v1668 = vld [vmem:[%s469 + $0x24] sm:$0xf]
  %v1669 = vld [vmem:[%s469 + $0x28] sm:$0xf]
  %v1670 = vld [vmem:[%s469 + $0x2c] sm:$0xf]
  %v1671 = vld [vmem:[%s469 + $0x30] sm:$0xf]
  %v1672 = vld [vmem:[%s469 + $0x34] sm:$0xf]
  %v1673 = vld [vmem:[%s469 + $0x38] sm:$0xf]
  %v1674 = vld [vmem:[%s469 + $0x3c] sm:$0xf]
  %s1675 = scalar_lea.vmem %s1, 576
  %v1676 = vld [vmem:[%s1675] sm:$0xf]
  %v1677 = vld [vmem:[%s1675 + $0x4] sm:$0xf]
  %v1678 = vld [vmem:[%s1675 + $0x8] sm:$0xf]
  %v1679 = vld [vmem:[%s1675 + $0xc] sm:$0xf]
  %v1680 = vld [vmem:[%s1675 + $0x10] sm:$0xf]
  %v1681 = vld [vmem:[%s1675 + $0x14] sm:$0xf]
  %v1682 = vld [vmem:[%s1675 + $0x18] sm:$0xf]
  %v1683 = vld [vmem:[%s1675 + $0x1c] sm:$0xf]
  %v1684 = vld [vmem:[%s1675 + $0x20] sm:$0xf]
  %v1685 = vld [vmem:[%s1675 + $0x24] sm:$0xf]
  %v1686 = vld [vmem:[%s1675 + $0x28] sm:$0xf]
  %v1687 = vld [vmem:[%s1675 + $0x2c] sm:$0xf]
  %v1688 = vld [vmem:[%s1675 + $0x30] sm:$0xf]
  %v1689 = vld [vmem:[%s1675 + $0x34] sm:$0xf]
  %v1690 = vld [vmem:[%s1675 + $0x38] sm:$0xf]
  %v1691 = vld [vmem:[%s1675 + $0x3c] sm:$0xf]
  %v1708 = vunpack.c.l.b16 %v1659
  %v1709 = vunpack.c.l.b16 %v1660
  %v1710 = vunpack.c.l.b16 %v1661
  %v1711 = vunpack.c.l.b16 %v1662
  %v1712 = vunpack.c.l.b16 %v1663
  %v1713 = vunpack.c.l.b16 %v1664
  %v1714 = vunpack.c.l.b16 %v1665
  %v1715 = vunpack.c.l.b16 %v1666
  %v1716 = vunpack.c.l.b16 %v1667
  %v1717 = vunpack.c.l.b16 %v1668
  %v1718 = vunpack.c.l.b16 %v1669
  %v1719 = vunpack.c.l.b16 %v1670
  %v1720 = vunpack.c.l.b16 %v1671
  %v1721 = vunpack.c.l.b16 %v1672
  %v1722 = vunpack.c.l.b16 %v1673
  %v1723 = vunpack.c.l.b16 %v1674
  %v1724 = vpack.c.b16 %v1709, %v1708
  %v1725 = vpack.c.b16 %v1711, %v1710
  %v1726 = vpack.c.b16 %v1713, %v1712
  %v1727 = vpack.c.b16 %v1715, %v1714
  %v1728 = vpack.c.b16 %v1717, %v1716
  %v1729 = vpack.c.b16 %v1719, %v1718
  %v1730 = vpack.c.b16 %v1721, %v1720
  %v1731 = vpack.c.b16 %v1723, %v1722
  %v1756 = vunpack.c.l.b16 %v1676
  %v1757 = vunpack.c.l.b16 %v1677
  %v1758 = vunpack.c.l.b16 %v1678
  %v1759 = vunpack.c.l.b16 %v1679
  %v1760 = vunpack.c.l.b16 %v1680
  %v1761 = vunpack.c.l.b16 %v1681
  %v1762 = vunpack.c.l.b16 %v1682
  %v1763 = vunpack.c.l.b16 %v1683
  %v1764 = vunpack.c.l.b16 %v1684
  %v1765 = vunpack.c.l.b16 %v1685
  %v1766 = vunpack.c.l.b16 %v1686
  %v1767 = vunpack.c.l.b16 %v1687
  %v1768 = vunpack.c.l.b16 %v1688
  %v1769 = vunpack.c.l.b16 %v1689
  %v1770 = vunpack.c.l.b16 %v1690
  %v1771 = vunpack.c.l.b16 %v1691
  %v1772 = vpack.c.b16 %v1757, %v1756
  %v1773 = vpack.c.b16 %v1759, %v1758
  %v1774 = vpack.c.b16 %v1761, %v1760
  %v1775 = vpack.c.b16 %v1763, %v1762
  %v1776 = vpack.c.b16 %v1765, %v1764
  %v1777 = vpack.c.b16 %v1767, %v1766
  %v1778 = vpack.c.b16 %v1769, %v1768
  %v1779 = vpack.c.b16 %v1771, %v1770
  %1788 = vmatprep.subr.bf16.mxu0 0
  %1789 = vmatpush1.bf16.msra.mxu0 %v1772
  %1790 = vmatprep.subr.bf16.mxu0 0
  %1791 = vmatpush1.bf16.msra.mxu0 %v1773
  %1792 = vmatprep.subr.bf16.mxu0 0
  %1793 = vmatpush1.bf16.msra.mxu0 %v1774
  %1794 = vmatprep.subr.bf16.mxu0 0
  %1795 = vmatpush1.bf16.msra.mxu0 %v1775
  %1796 = vmatprep.subr.bf16.mxu0 0
  %1797 = vmatpush1.bf16.msra.mxu0 %v1776
  %1798 = vmatprep.subr.bf16.mxu0 0
  %1799 = vmatpush1.bf16.msra.mxu0 %v1777
  %1800 = vmatprep.subr.bf16.mxu0 0
  %1801 = vmatpush1.bf16.msra.mxu0 %v1778
  %1802 = vmatprep.subr.bf16.mxu0 0
  %1803 = vmatpush1.bf16.msra.mxu0 %v1779
  %1804 = vmatprep.subr.bf16.mxu0 0
  %1805 = vmatpush1.bf16.msra.mxu0 0
  %1806 = vmatprep.subr.bf16.mxu0 0
  %1807 = vmatpush1.bf16.msra.mxu0 0
  %1808 = vmatprep.subr.bf16.mxu0 0
  %1809 = vmatpush1.bf16.msra.mxu0 0
  %1810 = vmatprep.subr.bf16.mxu0 0
  %1811 = vmatpush1.bf16.msra.mxu0 0
  %1812 = vmatprep.subr.bf16.mxu0 0
  %1813 = vmatpush1.bf16.msra.mxu0 0
  %1814 = vmatprep.subr.bf16.mxu0 0
  %1815 = vmatpush1.bf16.msra.mxu0 0
  %1816 = vmatprep.subr.bf16.mxu0 0
  %1817 = vmatpush1.bf16.msra.mxu0 0
  %1818 = vmatprep.subr.bf16.mxu0 0
  %1819 = vmatpush1.bf16.msra.mxu0 0
  %1820 = vmatprep.mubr.bf16.mxu0 0
  %1821 = vmatmul.mubr.bf16.gmra.mrb[0].mxu0 %v1724
  %v1822 = vpop.f32.mrb[0].mxu0
  %v1823 = vadd.f32 0.0, %v1822
  %v1824 = vpop.f32.mrb[0].mxu0
  %v1825 = vpop.f32.mrb[0].mxu0
  %v1826 = vadd.f32 0.0, %v1825
  %v1827 = vpop.f32.mrb[0].mxu0
  %1828 = vmatprep.mubr.bf16.mxu0 0
  %1829 = vmatmul.mubr.bf16.gmra.mrb[0].mxu0 %v1725
  %v1830 = vpop.f32.mrb[0].mxu0
  %v1831 = vadd.f32 0.0, %v1830
  %v1832 = vpop.f32.mrb[0].mxu0
  %v1833 = vpop.f32.mrb[0].mxu0
  %v1834 = vadd.f32 0.0, %v1833
  %v1835 = vpop.f32.mrb[0].mxu0
  %1836 = vmatprep.mubr.bf16.mxu0 0
  %1837 = vmatmul.mubr.bf16.gmra.mrb[0].mxu0 %v1726
  %v1838 = vpop.f32.mrb[0].mxu0
  %v1839 = vadd.f32 0.0, %v1838
  %v1840 = vpop.f32.mrb[0].mxu0
  %v1841 = vpop.f32.mrb[0].mxu0
  %v1842 = vadd.f32 0.0, %v1841
  %v1843 = vpop.f32.mrb[0].mxu0
  %1844 = vmatprep.mubr.bf16.mxu0 0
  %1845 = vmatmul.mubr.bf16.gmra.mrb[0].mxu0 %v1727
  %v1846 = vpop.f32.mrb[0].mxu0
  %v1847 = vadd.f32 0.0, %v1846
  %v1848 = vpop.f32.mrb[0].mxu0
  %v1849 = vpop.f32.mrb[0].mxu0
  %v1850 = vadd.f32 0.0, %v1849
  %v1851 = vpop.f32.mrb[0].mxu0
  %1852 = vmatprep.mubr.bf16.mxu0 0
  %1853 = vmatmul.mubr.bf16.gmra.mrb[0].mxu0 %v1728
  %v1854 = vpop.f32.mrb[0].mxu0
  %v1855 = vadd.f32 0.0, %v1854
  %v1856 = vpop.f32.mrb[0].mxu0
  %v1857 = vpop.f32.mrb[0].mxu0
  %v1858 = vadd.f32 0.0, %v1857
  %v1859 = vpop.f32.mrb[0].mxu0
  %1860 = vmatprep.mubr.bf16.mxu0 0
  %1861 = vmatmul.mubr.bf16.gmra.mrb[0].mxu0 %v1729
  %v1862 = vpop.f32.mrb[0].mxu0
  %v1863 = vadd.f32 0.0, %v1862
  %v1864 = vpop.f32.mrb[0].mxu0
  %v1865 = vpop.f32.mrb[0].mxu0
  %v1866 = vadd.f32 0.0, %v1865
  %v1867 = vpop.f32.mrb[0].mxu0
  %1868 = vmatprep.mubr.bf16.mxu0 0
  %1869 = vmatmul.mubr.bf16.gmra.mrb[0].mxu0 %v1730
  %v1870 = vpop.f32.mrb[0].mxu0
  %v1871 = vadd.f32 0.0, %v1870
  %v1872 = vpop.f32.mrb[0].mxu0
  %v1873 = vpop.f32.mrb[0].mxu0
  %v1874 = vadd.f32 0.0, %v1873
  %v1875 = vpop.f32.mrb[0].mxu0
  %1876 = vmatprep.mubr.bf16.mxu0 0
  %1877 = vmatmul.mubr.bf16.gmra.mrb[0].mxu0 %v1731
  %v1878 = vpop.f32.mrb[0].mxu0
  %v1879 = vadd.f32 0.0, %v1878
  %v1880 = vpop.f32.mrb[0].mxu0
  %v1881 = vpop.f32.mrb[0].mxu0
  %v1882 = vadd.f32 0.0, %v1881
  %v1883 = vpop.f32.mrb[0].mxu0
  %1884 = vdwg.mxu0
  %v1885 = vadd.f32 %v1597, %v1823
  %v1886 = vadd.f32 %v1600, %v1826
  %v1887 = vadd.f32 %v1605, %v1831
  %v1888 = vadd.f32 %v1608, %v1834
  %v1889 = vadd.f32 %v1613, %v1839
  %v1890 = vadd.f32 %v1616, %v1842
  %v1891 = vadd.f32 %v1621, %v1847
  %v1892 = vadd.f32 %v1624, %v1850
  %v1893 = vadd.f32 %v1629, %v1855
  %v1894 = vadd.f32 %v1632, %v1858
  %v1895 = vadd.f32 %v1637, %v1863
  %v1896 = vadd.f32 %v1640, %v1866
  %v1897 = vadd.f32 %v1645, %v1871
  %v1898 = vadd.f32 %v1648, %v1874
  %v1899 = vadd.f32 %v1653, %v1879
  %v1900 = vadd.f32 %v1656, %v1882
  %v1901 = vld [vmem:[%s712] sm:$0xf]
  %v1902 = vld [vmem:[%s712 + $0x4] sm:$0xf]
  %v1903 = vld [vmem:[%s712 + $0x8] sm:$0xf]
  %v1904 = vld [vmem:[%s712 + $0xc] sm:$0xf]
  %v1905 = vld [vmem:[%s712 + $0x10] sm:$0xf]
  %v1906 = vld [vmem:[%s712 + $0x14] sm:$0xf]
  %v1907 = vld [vmem:[%s712 + $0x18] sm:$0xf]
  %v1908 = vld [vmem:[%s712 + $0x1c] sm:$0xf]
  %v1909 = vld [vmem:[%s712 + $0x20] sm:$0xf]
  %v1910 = vld [vmem:[%s712 + $0x24] sm:$0xf]
  %v1911 = vld [vmem:[%s712 + $0x28] sm:$0xf]
  %v1912 = vld [vmem:[%s712 + $0x2c] sm:$0xf]
  %v1913 = vld [vmem:[%s712 + $0x30] sm:$0xf]
  %v1914 = vld [vmem:[%s712 + $0x34] sm:$0xf]
  %v1915 = vld [vmem:[%s712 + $0x38] sm:$0xf]
  %v1916 = vld [vmem:[%s712 + $0x3c] sm:$0xf]
  %s1917 = scalar_lea.vmem %s1, 832
  %v1918 = vld [vmem:[%s1917] sm:$0xf]
  %v1919 = vld [vmem:[%s1917 + $0x4] sm:$0xf]
  %v1920 = vld [vmem:[%s1917 + $0x8] sm:$0xf]
  %v1921 = vld [vmem:[%s1917 + $0xc] sm:$0xf]
  %v1922 = vld [vmem:[%s1917 + $0x10] sm:$0xf]
  %v1923 = vld [vmem:[%s1917 + $0x14] sm:$0xf]
  %v1924 = vld [vmem:[%s1917 + $0x18] sm:$0xf]
  %v1925 = vld [vmem:[%s1917 + $0x1c] sm:$0xf]
  %v1926 = vld [vmem:[%s1917 + $0x20] sm:$0xf]
  %v1927 = vld [vmem:[%s1917 + $0x24] sm:$0xf]
  %v1928 = vld [vmem:[%s1917 + $0x28] sm:$0xf]
  %v1929 = vld [vmem:[%s1917 + $0x2c] sm:$0xf]
  %v1930 = vld [vmem:[%s1917 + $0x30] sm:$0xf]
  %v1931 = vld [vmem:[%s1917 + $0x34] sm:$0xf]
  %v1932 = vld [vmem:[%s1917 + $0x38] sm:$0xf]
  %v1933 = vld [vmem:[%s1917 + $0x3c] sm:$0xf]
  %v1950 = vunpack.c.l.b16 %v1901
  %v1951 = vunpack.c.l.b16 %v1902
  %v1952 = vunpack.c.l.b16 %v1903
  %v1953 = vunpack.c.l.b16 %v1904
  %v1954 = vunpack.c.l.b16 %v1905
  %v1955 = vunpack.c.l.b16 %v1906
  %v1956 = vunpack.c.l.b16 %v1907
  %v1957 = vunpack.c.l.b16 %v1908
  %v1958 = vunpack.c.l.b16 %v1909
  %v1959 = vunpack.c.l.b16 %v1910
  %v1960 = vunpack.c.l.b16 %v1911
  %v1961 = vunpack.c.l.b16 %v1912
  %v1962 = vunpack.c.l.b16 %v1913
  %v1963 = vunpack.c.l.b16 %v1914
  %v1964 = vunpack.c.l.b16 %v1915
  %v1965 = vunpack.c.l.b16 %v1916
  %v1966 = vpack.c.b16 %v1951, %v1950
  %v1967 = vpack.c.b16 %v1953, %v1952
  %v1968 = vpack.c.b16 %v1955, %v1954
  %v1969 = vpack.c.b16 %v1957, %v1956
  %v1970 = vpack.c.b16 %v1959, %v1958
  %v1971 = vpack.c.b16 %v1961, %v1960
  %v1972 = vpack.c.b16 %v1963, %v1962
  %v1973 = vpack.c.b16 %v1965, %v1964
  %v1998 = vunpack.c.l.b16 %v1918
  %v1999 = vunpack.c.l.b16 %v1919
  %v2000 = vunpack.c.l.b16 %v1920
  %v2001 = vunpack.c.l.b16 %v1921
  %v2002 = vunpack.c.l.b16 %v1922
  %v2003 = vunpack.c.l.b16 %v1923
  %v2004 = vunpack.c.l.b16 %v1924
  %v2005 = vunpack.c.l.b16 %v1925
  %v2006 = vunpack.c.l.b16 %v1926
  %v2007 = vunpack.c.l.b16 %v1927
  %v2008 = vunpack.c.l.b16 %v1928
  %v2009 = vunpack.c.l.b16 %v1929
  %v2010 = vunpack.c.l.b16 %v1930
  %v2011 = vunpack.c.l.b16 %v1931
  %v2012 = vunpack.c.l.b16 %v1932
  %v2013 = vunpack.c.l.b16 %v1933
  %v2014 = vpack.c.b16 %v1999, %v1998
  %v2015 = vpack.c.b16 %v2001, %v2000
  %v2016 = vpack.c.b16 %v2003, %v2002
  %v2017 = vpack.c.b16 %v2005, %v2004
  %v2018 = vpack.c.b16 %v2007, %v2006
  %v2019 = vpack.c.b16 %v2009, %v2008
  %v2020 = vpack.c.b16 %v2011, %v2010
  %v2021 = vpack.c.b16 %v2013, %v2012
  %2030 = vmatprep.subr.bf16.mxu0 0
  %2031 = vmatpush1.bf16.msra.mxu0 %v2014
  %2032 = vmatprep.subr.bf16.mxu0 0
  %2033 = vmatpush1.bf16.msra.mxu0 %v2015
  %2034 = vmatprep.subr.bf16.mxu0 0
  %2035 = vmatpush1.bf16.msra.mxu0 %v2016
  %2036 = vmatprep.subr.bf16.mxu0 0
  %2037 = vmatpush1.bf16.msra.mxu0 %v2017
  %2038 = vmatprep.subr.bf16.mxu0 0
  %2039 = vmatpush1.bf16.msra.mxu0 %v2018
  %2040 = vmatprep.subr.bf16.mxu0 0
  %2041 = vmatpush1.bf16.msra.mxu0 %v2019
  %2042 = vmatprep.subr.bf16.mxu0 0
  %2043 = vmatpush1.bf16.msra.mxu0 %v2020
  %2044 = vmatprep.subr.bf16.mxu0 0
  %2045 = vmatpush1.bf16.msra.mxu0 %v2021
  %2046 = vmatprep.subr.bf16.mxu0 0
  %2047 = vmatpush1.bf16.msra.mxu0 0
  %2048 = vmatprep.subr.bf16.mxu0 0
  %2049 = vmatpush1.bf16.msra.mxu0 0
  %2050 = vmatprep.subr.bf16.mxu0 0
  %2051 = vmatpush1.bf16.msra.mxu0 0
  %2052 = vmatprep.subr.bf16.mxu0 0
  %2053 = vmatpush1.bf16.msra.mxu0 0
  %2054 = vmatprep.subr.bf16.mxu0 0
  %2055 = vmatpush1.bf16.msra.mxu0 0
  %2056 = vmatprep.subr.bf16.mxu0 0
  %2057 = vmatpush1.bf16.msra.mxu0 0
  %2058 = vmatprep.subr.bf16.mxu0 0
  %2059 = vmatpush1.bf16.msra.mxu0 0
  %2060 = vmatprep.subr.bf16.mxu0 0
  %2061 = vmatpush1.bf16.msra.mxu0 0
  %2062 = vmatprep.mubr.bf16.mxu0 0
  %2063 = vmatmul.mubr.bf16.gmra.mrb[0].mxu0 %v1966
  %v2064 = vpop.f32.mrb[0].mxu0
  %v2065 = vadd.f32 0.0, %v2064
  %v2066 = vpop.f32.mrb[0].mxu0
  %v2067 = vpop.f32.mrb[0].mxu0
  %v2068 = vadd.f32 0.0, %v2067
  %v2069 = vpop.f32.mrb[0].mxu0
  %2070 = vmatprep.mubr.bf16.mxu0 0
  %2071 = vmatmul.mubr.bf16.gmra.mrb[0].mxu0 %v1967
  %v2072 = vpop.f32.mrb[0].mxu0
  %v2073 = vadd.f32 0.0, %v2072
  %v2074 = vpop.f32.mrb[0].mxu0
  %v2075 = vpop.f32.mrb[0].mxu0
  %v2076 = vadd.f32 0.0, %v2075
  %v2077 = vpop.f32.mrb[0].mxu0
  %2078 = vmatprep.mubr.bf16.mxu0 0
  %2079 = vmatmul.mubr.bf16.gmra.mrb[0].mxu0 %v1968
  %v2080 = vpop.f32.mrb[0].mxu0
  %v2081 = vadd.f32 0.0, %v2080
  %v2082 = vpop.f32.mrb[0].mxu0
  %v2083 = vpop.f32.mrb[0].mxu0
  %v2084 = vadd.f32 0.0, %v2083
  %v2085 = vpop.f32.mrb[0].mxu0
  %2086 = vmatprep.mubr.bf16.mxu0 0
  %2087 = vmatmul.mubr.bf16.gmra.mrb[0].mxu0 %v1969
  %v2088 = vpop.f32.mrb[0].mxu0
  %v2089 = vadd.f32 0.0, %v2088
  %v2090 = vpop.f32.mrb[0].mxu0
  %v2091 = vpop.f32.mrb[0].mxu0
  %v2092 = vadd.f32 0.0, %v2091
  %v2093 = vpop.f32.mrb[0].mxu0
  %2094 = vmatprep.mubr.bf16.mxu0 0
  %2095 = vmatmul.mubr.bf16.gmra.mrb[0].mxu0 %v1970
  %v2096 = vpop.f32.mrb[0].mxu0
  %v2097 = vadd.f32 0.0, %v2096
  %v2098 = vpop.f32.mrb[0].mxu0
  %v2099 = vpop.f32.mrb[0].mxu0
  %v2100 = vadd.f32 0.0, %v2099
  %v2101 = vpop.f32.mrb[0].mxu0
  %2102 = vmatprep.mubr.bf16.mxu0 0
  %2103 = vmatmul.mubr.bf16.gmra.mrb[0].mxu0 %v1971
  %v2104 = vpop.f32.mrb[0].mxu0
  %v2105 = vadd.f32 0.0, %v2104
  %v2106 = vpop.f32.mrb[0].mxu0
  %v2107 = vpop.f32.mrb[0].mxu0
  %v2108 = vadd.f32 0.0, %v2107
  %v2109 = vpop.f32.mrb[0].mxu0
  %2110 = vmatprep.mubr.bf16.mxu0 0
  %2111 = vmatmul.mubr.bf16.gmra.mrb[0].mxu0 %v1972
  %v2112 = vpop.f32.mrb[0].mxu0
  %v2113 = vadd.f32 0.0, %v2112
  %v2114 = vpop.f32.mrb[0].mxu0
  %v2115 = vpop.f32.mrb[0].mxu0
  %v2116 = vadd.f32 0.0, %v2115
  %v2117 = vpop.f32.mrb[0].mxu0
  %2118 = vmatprep.mubr.bf16.mxu0 0
  %2119 = vmatmul.mubr.bf16.gmra.mrb[0].mxu0 %v1973
  %v2120 = vpop.f32.mrb[0].mxu0
  %v2121 = vadd.f32 0.0, %v2120
  %v2122 = vpop.f32.mrb[0].mxu0
  %v2123 = vpop.f32.mrb[0].mxu0
  %v2124 = vadd.f32 0.0, %v2123
  %v2125 = vpop.f32.mrb[0].mxu0
  %2126 = vdwg.mxu0
  %v2127 = vadd.f32 %v1885, %v2065
  %v2128 = vadd.f32 %v1886, %v2068
  %v2129 = vadd.f32 %v1887, %v2073
  %v2130 = vadd.f32 %v1888, %v2076
  %v2131 = vadd.f32 %v1889, %v2081
  %v2132 = vadd.f32 %v1890, %v2084
  %v2133 = vadd.f32 %v1891, %v2089
  %v2134 = vadd.f32 %v1892, %v2092
  %v2135 = vadd.f32 %v1893, %v2097
  %v2136 = vadd.f32 %v1894, %v2100
  %v2137 = vadd.f32 %v1895, %v2105
  %v2138 = vadd.f32 %v1896, %v2108
  %v2139 = vadd.f32 %v1897, %v2113
  %v2140 = vadd.f32 %v1898, %v2116
  %v2141 = vadd.f32 %v1899, %v2121
  %v2142 = vadd.f32 %v1900, %v2124
  %v2143 = vpack.c.bf16 %v2128, %v2127
  %v2144 = vpack.c.bf16 %v2130, %v2129
  %v2145 = vpack.c.bf16 %v2132, %v2131
  %v2146 = vpack.c.bf16 %v2134, %v2133
  %v2147 = vpack.c.bf16 %v2136, %v2135
  %v2148 = vpack.c.bf16 %v2138, %v2137
  %v2149 = vpack.c.bf16 %v2140, %v2139
  %v2150 = vpack.c.bf16 %v2142, %v2141
  %v2159 = vunpack.c.l.b16 %v2143
  %v2160 = vunpack.c.h.b16 %v2143
  %v2161 = vunpack.c.l.b16 %v2144
  %v2162 = vunpack.c.h.b16 %v2144
  %v2163 = vunpack.c.l.b16 %v2145
  %v2164 = vunpack.c.h.b16 %v2145
  %v2165 = vunpack.c.l.b16 %v2146
  %v2166 = vunpack.c.h.b16 %v2146
  %v2167 = vunpack.c.l.b16 %v2147
  %v2168 = vunpack.c.h.b16 %v2147
  %v2169 = vunpack.c.l.b16 %v2148
  %v2170 = vunpack.c.h.b16 %v2148
  %v2171 = vunpack.c.l.b16 %v2149
  %v2172 = vunpack.c.h.b16 %v2149
  %v2173 = vunpack.c.l.b16 %v2150
  %v2174 = vunpack.c.h.b16 %v2150
  %v2175 = vpack.c.b16 %v2159, %v2159
  %v2176 = vpack.c.b16 %v2160, %v2160
  %v2177 = vpack.c.b16 %v2161, %v2161
  %v2178 = vpack.c.b16 %v2162, %v2162
  %v2179 = vpack.c.b16 %v2163, %v2163
  %v2180 = vpack.c.b16 %v2164, %v2164
  %v2181 = vpack.c.b16 %v2165, %v2165
  %v2182 = vpack.c.b16 %v2166, %v2166
  %v2183 = vpack.c.b16 %v2167, %v2167
  %v2184 = vpack.c.b16 %v2168, %v2168
  %v2185 = vpack.c.b16 %v2169, %v2169
  %v2186 = vpack.c.b16 %v2170, %v2170
  %v2187 = vpack.c.b16 %v2171, %v2171
  %v2188 = vpack.c.b16 %v2172, %v2172
  %v2189 = vpack.c.b16 %v2173, %v2173
  %v2190 = vpack.c.b16 %v2174, %v2174
  %s2207 = scalar_lea.vmem %s3, 64
  %2208 = vst.msk [vmem:[%s2207] sm:$0xf] %vm1019, %v2175
  %2209 = vst.msk [vmem:[%s2207 + $0x4] sm:$0xf] %vm1019, %v2176
  %2210 = vst.msk [vmem:[%s2207 + $0x8] sm:$0xf] %vm1019, %v2177
  %2211 = vst.msk [vmem:[%s2207 + $0xc] sm:$0xf] %vm1019, %v2178
  %2212 = vst.msk [vmem:[%s2207 + $0x10] sm:$0xf] %vm1019, %v2179
  %2213 = vst.msk [vmem:[%s2207 + $0x14] sm:$0xf] %vm1019, %v2180
  %2214 = vst.msk [vmem:[%s2207 + $0x18] sm:$0xf] %vm1019, %v2181
  %2215 = vst.msk [vmem:[%s2207 + $0x1c] sm:$0xf] %vm1019, %v2182
  %2216 = vst.msk [vmem:[%s2207 + $0x20] sm:$0xf] %vm1019, %v2183
  %2217 = vst.msk [vmem:[%s2207 + $0x24] sm:$0xf] %vm1019, %v2184
  %2218 = vst.msk [vmem:[%s2207 + $0x28] sm:$0xf] %vm1019, %v2185
  %2219 = vst.msk [vmem:[%s2207 + $0x2c] sm:$0xf] %vm1019, %v2186
  %2220 = vst.msk [vmem:[%s2207 + $0x30] sm:$0xf] %vm1019, %v2187
  %2221 = vst.msk [vmem:[%s2207 + $0x34] sm:$0xf] %vm1019, %v2188
  %2222 = vst.msk [vmem:[%s2207 + $0x38] sm:$0xf] %vm1019, %v2189
  %2223 = vst.msk [vmem:[%s2207 + $0x3c] sm:$0xf] %vm1019, %v2190
  %s2224 = scalar_lea.vmem %s2, 32
  %v2225 = vld [vmem:[%s2224] sm:$0xf]
  %v2226 = vld [vmem:[%s2224 + $0x4] sm:$0xf]
  %v2227 = vld [vmem:[%s2224 + $0x8] sm:$0xf]
  %v2228 = vld [vmem:[%s2224 + $0xc] sm:$0xf]
  %v2229 = vld [vmem:[%s2224 + $0x10] sm:$0xf]
  %v2230 = vld [vmem:[%s2224 + $0x14] sm:$0xf]
  %v2231 = vld [vmem:[%s2224 + $0x18] sm:$0xf]
  %v2232 = vld [vmem:[%s2224 + $0x1c] sm:$0xf]
  %v2241 = vunpack.c.l.b16 %v2225
  %v2242 = vunpack.c.l.b16 %v2226
  %v2243 = vunpack.c.l.b16 %v2227
  %v2244 = vunpack.c.l.b16 %v2228
  %v2245 = vunpack.c.l.b16 %v2229
  %v2246 = vunpack.c.l.b16 %v2230
  %v2247 = vunpack.c.l.b16 %v2231
  %v2248 = vunpack.c.l.b16 %v2232
  %v2249 = vpack.c.b16 %v2242, %v2241
  %v2250 = vpack.c.b16 %v2244, %v2243
  %v2251 = vpack.c.b16 %v2246, %v2245
  %v2252 = vpack.c.b16 %v2248, %v2247
  %v2258 = vsel %vm1068, %v2143, 0
  %v2261 = vsel %vm1068, %v2144, 0
  %v2264 = vsel %vm1068, %v2145, 0
  %v2267 = vsel %vm1068, %v2146, 0
  %v2270 = vsel %vm1068, %v2147, 0
  %v2273 = vsel %vm1068, %v2148, 0
  %v2276 = vsel %vm1068, %v2149, 0
  %v2279 = vsel %vm1068, %v2150, 0
  %2281 = vmatprep.subr.bf16.mxu0 0
  %2282 = vmatpush1.bf16.msra.mxu0 %v2249
  %2283 = vmatprep.subr.bf16.mxu0 0
  %2284 = vmatpush1.bf16.msra.mxu0 %v2250
  %2285 = vmatprep.subr.bf16.mxu0 0
  %2286 = vmatpush1.bf16.msra.mxu0 %v2251
  %2287 = vmatprep.subr.bf16.mxu0 0
  %2288 = vmatpush1.bf16.msra.mxu0 %v2252
  %2289 = vmatprep.subr.bf16.mxu0 0
  %2290 = vmatpush1.bf16.msra.mxu0 0
  %2291 = vmatprep.subr.bf16.mxu0 0
  %2292 = vmatpush1.bf16.msra.mxu0 0
  %2293 = vmatprep.subr.bf16.mxu0 0
  %2294 = vmatpush1.bf16.msra.mxu0 0
  %2295 = vmatprep.subr.bf16.mxu0 0
  %2296 = vmatpush1.bf16.msra.mxu0 0
  %2297 = vmatprep.subr.bf16.mxu0 0
  %2298 = vmatpush1.bf16.msra.mxu0 0
  %2299 = vmatprep.subr.bf16.mxu0 0
  %2300 = vmatpush1.bf16.msra.mxu0 0
  %2301 = vmatprep.subr.bf16.mxu0 0
  %2302 = vmatpush1.bf16.msra.mxu0 0
  %2303 = vmatprep.subr.bf16.mxu0 0
  %2304 = vmatpush1.bf16.msra.mxu0 0
  %2305 = vmatprep.subr.bf16.mxu0 0
  %2306 = vmatpush1.bf16.msra.mxu0 0
  %2307 = vmatprep.subr.bf16.mxu0 0
  %2308 = vmatpush1.bf16.msra.mxu0 0
  %2309 = vmatprep.subr.bf16.mxu0 0
  %2310 = vmatpush1.bf16.msra.mxu0 0
  %2311 = vmatprep.subr.bf16.mxu0 0
  %2312 = vmatpush1.bf16.msra.mxu0 0
  %2313 = vmatprep.mubr.bf16.mxu0 0
  %2314 = vmatmul.mubr.bf16.gmra.mrb[0].mxu0 %v2258
  %v2315 = vpop.f32.mrb[0].mxu0
  %v2316 = vadd.f32 0.0, %v2315
  %v2317 = vpop.f32.mrb[0].mxu0
  %v2318 = vpop.f32.mrb[0].mxu0
  %v2319 = vadd.f32 0.0, %v2318
  %v2320 = vpop.f32.mrb[0].mxu0
  %2321 = vmatprep.mubr.bf16.mxu0 0
  %2322 = vmatmul.mubr.bf16.gmra.mrb[0].mxu0 %v2261
  %v2323 = vpop.f32.mrb[0].mxu0
  %v2324 = vadd.f32 0.0, %v2323
  %v2325 = vpop.f32.mrb[0].mxu0
  %v2326 = vpop.f32.mrb[0].mxu0
  %v2327 = vadd.f32 0.0, %v2326
  %v2328 = vpop.f32.mrb[0].mxu0
  %2329 = vmatprep.mubr.bf16.mxu0 0
  %2330 = vmatmul.mubr.bf16.gmra.mrb[0].mxu0 %v2264
  %v2331 = vpop.f32.mrb[0].mxu0
  %v2332 = vadd.f32 0.0, %v2331
  %v2333 = vpop.f32.mrb[0].mxu0
  %v2334 = vpop.f32.mrb[0].mxu0
  %v2335 = vadd.f32 0.0, %v2334
  %v2336 = vpop.f32.mrb[0].mxu0
  %2337 = vmatprep.mubr.bf16.mxu0 0
  %2338 = vmatmul.mubr.bf16.gmra.mrb[0].mxu0 %v2267
  %v2339 = vpop.f32.mrb[0].mxu0
  %v2340 = vadd.f32 0.0, %v2339
  %v2341 = vpop.f32.mrb[0].mxu0
  %v2342 = vpop.f32.mrb[0].mxu0
  %v2343 = vadd.f32 0.0, %v2342
  %v2344 = vpop.f32.mrb[0].mxu0
  %2345 = vmatprep.mubr.bf16.mxu0 0
  %2346 = vmatmul.mubr.bf16.gmra.mrb[0].mxu0 %v2270
  %v2347 = vpop.f32.mrb[0].mxu0
  %v2348 = vadd.f32 0.0, %v2347
  %v2349 = vpop.f32.mrb[0].mxu0
  %v2350 = vpop.f32.mrb[0].mxu0
  %v2351 = vadd.f32 0.0, %v2350
  %v2352 = vpop.f32.mrb[0].mxu0
  %2353 = vmatprep.mubr.bf16.mxu0 0
  %2354 = vmatmul.mubr.bf16.gmra.mrb[0].mxu0 %v2273
  %v2355 = vpop.f32.mrb[0].mxu0
  %v2356 = vadd.f32 0.0, %v2355
  %v2357 = vpop.f32.mrb[0].mxu0
  %v2358 = vpop.f32.mrb[0].mxu0
  %v2359 = vadd.f32 0.0, %v2358
  %v2360 = vpop.f32.mrb[0].mxu0
  %2361 = vmatprep.mubr.bf16.mxu0 0
  %2362 = vmatmul.mubr.bf16.gmra.mrb[0].mxu0 %v2276
  %v2363 = vpop.f32.mrb[0].mxu0
  %v2364 = vadd.f32 0.0, %v2363
  %v2365 = vpop.f32.mrb[0].mxu0
  %v2366 = vpop.f32.mrb[0].mxu0
  %v2367 = vadd.f32 0.0, %v2366
  %v2368 = vpop.f32.mrb[0].mxu0
  %2369 = vmatprep.mubr.bf16.mxu0 0
  %2370 = vmatmul.mubr.bf16.gmra.mrb[0].mxu0 %v2279
  %v2371 = vpop.f32.mrb[0].mxu0
  %v2372 = vadd.f32 0.0, %v2371
  %v2373 = vpop.f32.mrb[0].mxu0
  %v2374 = vpop.f32.mrb[0].mxu0
  %v2375 = vadd.f32 0.0, %v2374
  %v2376 = vpop.f32.mrb[0].mxu0
  %2377 = vdwg.mxu0
  %s2378 = scalar_lea.vmem %s4, 128
  %2379 = vst.msk [vmem:[%s2378] sm:$0xff] %vm1190, %v2316
  %2380 = vst.msk [vmem:[%s2378 + $0x8] sm:$0xff] %vm1190, %v2319
  %2381 = vst.msk [vmem:[%s2378 + $0x10] sm:$0xff] %vm1190, %v2324
  %2382 = vst.msk [vmem:[%s2378 + $0x18] sm:$0xff] %vm1190, %v2327
  %2383 = vst.msk [vmem:[%s2378 + $0x20] sm:$0xff] %vm1190, %v2332
  %2384 = vst.msk [vmem:[%s2378 + $0x28] sm:$0xff] %vm1190, %v2335
  %2385 = vst.msk [vmem:[%s2378 + $0x30] sm:$0xff] %vm1190, %v2340
  %2386 = vst.msk [vmem:[%s2378 + $0x38] sm:$0xff] %vm1190, %v2343
  %2387 = vst.msk [vmem:[%s2378 + $0x40] sm:$0xff] %vm1190, %v2348
  %2388 = vst.msk [vmem:[%s2378 + $0x48] sm:$0xff] %vm1190, %v2351
  %2389 = vst.msk [vmem:[%s2378 + $0x50] sm:$0xff] %vm1190, %v2356
  %2390 = vst.msk [vmem:[%s2378 + $0x58] sm:$0xff] %vm1190, %v2359
  %2391 = vst.msk [vmem:[%s2378 + $0x60] sm:$0xff] %vm1190, %v2364
  %2392 = vst.msk [vmem:[%s2378 + $0x68] sm:$0xff] %vm1190, %v2367
  %2393 = vst.msk [vmem:[%s2378 + $0x70] sm:$0xff] %vm1190, %v2372
  %2394 = vst.msk [vmem:[%s2378 + $0x78] sm:$0xff] %vm1190, %v2375
  %v2395 = vld [vmem:[%s0] sm:$0xf]
  %v2396 = vld [vmem:[%s0 + $0x4] sm:$0xf]
  %v2397 = vld [vmem:[%s0 + $0x8] sm:$0xf]
  %v2398 = vld [vmem:[%s0 + $0xc] sm:$0xf]
  %v2399 = vld [vmem:[%s0 + $0x10] sm:$0xf]
  %v2400 = vld [vmem:[%s0 + $0x14] sm:$0xf]
  %v2401 = vld [vmem:[%s0 + $0x18] sm:$0xf]
  %v2402 = vld [vmem:[%s0 + $0x1c] sm:$0xf]
  %v2403 = vld [vmem:[%s0 + $0x20] sm:$0xf]
  %v2404 = vld [vmem:[%s0 + $0x24] sm:$0xf]
  %v2405 = vld [vmem:[%s0 + $0x28] sm:$0xf]
  %v2406 = vld [vmem:[%s0 + $0x2c] sm:$0xf]
  %v2407 = vld [vmem:[%s0 + $0x30] sm:$0xf]
  %v2408 = vld [vmem:[%s0 + $0x34] sm:$0xf]
  %v2409 = vld [vmem:[%s0 + $0x38] sm:$0xf]
  %v2410 = vld [vmem:[%s0 + $0x3c] sm:$0xf]
  %s2411 = scalar_lea.vmem %s1, 128
  %v2412 = vld [vmem:[%s2411] sm:$0xf]
  %v2413 = vld [vmem:[%s2411 + $0x4] sm:$0xf]
  %v2414 = vld [vmem:[%s2411 + $0x8] sm:$0xf]
  %v2415 = vld [vmem:[%s2411 + $0xc] sm:$0xf]
  %v2416 = vld [vmem:[%s2411 + $0x10] sm:$0xf]
  %v2417 = vld [vmem:[%s2411 + $0x14] sm:$0xf]
  %v2418 = vld [vmem:[%s2411 + $0x18] sm:$0xf]
  %v2419 = vld [vmem:[%s2411 + $0x1c] sm:$0xf]
  %v2420 = vld [vmem:[%s2411 + $0x20] sm:$0xf]
  %v2421 = vld [vmem:[%s2411 + $0x24] sm:$0xf]
  %v2422 = vld [vmem:[%s2411 + $0x28] sm:$0xf]
  %v2423 = vld [vmem:[%s2411 + $0x2c] sm:$0xf]
  %v2424 = vld [vmem:[%s2411 + $0x30] sm:$0xf]
  %v2425 = vld [vmem:[%s2411 + $0x34] sm:$0xf]
  %v2426 = vld [vmem:[%s2411 + $0x38] sm:$0xf]
  %v2427 = vld [vmem:[%s2411 + $0x3c] sm:$0xf]
  %v2428 = vld [vmem:[%s49] sm:$0xf]
  %v2429 = vld [vmem:[%s49 + $0x4] sm:$0xf]
  %v2430 = vld [vmem:[%s49 + $0x8] sm:$0xf]
  %v2431 = vld [vmem:[%s49 + $0xc] sm:$0xf]
  %v2432 = vld [vmem:[%s49 + $0x10] sm:$0xf]
  %v2433 = vld [vmem:[%s49 + $0x14] sm:$0xf]
  %v2434 = vld [vmem:[%s49 + $0x18] sm:$0xf]
  %v2435 = vld [vmem:[%s49 + $0x1c] sm:$0xf]
  %v2436 = vld [vmem:[%s49 + $0x20] sm:$0xf]
  %v2437 = vld [vmem:[%s49 + $0x24] sm:$0xf]
  %v2438 = vld [vmem:[%s49 + $0x28] sm:$0xf]
  %v2439 = vld [vmem:[%s49 + $0x2c] sm:$0xf]
  %v2440 = vld [vmem:[%s49 + $0x30] sm:$0xf]
  %v2441 = vld [vmem:[%s49 + $0x34] sm:$0xf]
  %v2442 = vld [vmem:[%s49 + $0x38] sm:$0xf]
  %v2443 = vld [vmem:[%s49 + $0x3c] sm:$0xf]
  %s2444 = scalar_lea.vmem %s1, 384
  %v2445 = vld [vmem:[%s2444] sm:$0xf]
  %v2446 = vld [vmem:[%s2444 + $0x4] sm:$0xf]
  %v2447 = vld [vmem:[%s2444 + $0x8] sm:$0xf]
  %v2448 = vld [vmem:[%s2444 + $0xc] sm:$0xf]
  %v2449 = vld [vmem:[%s2444 + $0x10] sm:$0xf]
  %v2450 = vld [vmem:[%s2444 + $0x14] sm:$0xf]
  %v2451 = vld [vmem:[%s2444 + $0x18] sm:$0xf]
  %v2452 = vld [vmem:[%s2444 + $0x1c] sm:$0xf]
  %v2453 = vld [vmem:[%s2444 + $0x20] sm:$0xf]
  %v2454 = vld [vmem:[%s2444 + $0x24] sm:$0xf]
  %v2455 = vld [vmem:[%s2444 + $0x28] sm:$0xf]
  %v2456 = vld [vmem:[%s2444 + $0x2c] sm:$0xf]
  %v2457 = vld [vmem:[%s2444 + $0x30] sm:$0xf]
  %v2458 = vld [vmem:[%s2444 + $0x34] sm:$0xf]
  %v2459 = vld [vmem:[%s2444 + $0x38] sm:$0xf]
  %v2460 = vld [vmem:[%s2444 + $0x3c] sm:$0xf]
  %v2477 = vunpack.c.l.b16 %v2428
  %v2478 = vunpack.c.l.b16 %v2429
  %v2479 = vunpack.c.l.b16 %v2430
  %v2480 = vunpack.c.l.b16 %v2431
  %v2481 = vunpack.c.l.b16 %v2432
  %v2482 = vunpack.c.l.b16 %v2433
  %v2483 = vunpack.c.l.b16 %v2434
  %v2484 = vunpack.c.l.b16 %v2435
  %v2485 = vunpack.c.l.b16 %v2436
  %v2486 = vunpack.c.l.b16 %v2437
  %v2487 = vunpack.c.l.b16 %v2438
  %v2488 = vunpack.c.l.b16 %v2439
  %v2489 = vunpack.c.l.b16 %v2440
  %v2490 = vunpack.c.l.b16 %v2441
  %v2491 = vunpack.c.l.b16 %v2442
  %v2492 = vunpack.c.l.b16 %v2443
  %v2493 = vpack.c.b16 %v2478, %v2477
  %v2494 = vpack.c.b16 %v2480, %v2479
  %v2495 = vpack.c.b16 %v2482, %v2481
  %v2496 = vpack.c.b16 %v2484, %v2483
  %v2497 = vpack.c.b16 %v2486, %v2485
  %v2498 = vpack.c.b16 %v2488, %v2487
  %v2499 = vpack.c.b16 %v2490, %v2489
  %v2500 = vpack.c.b16 %v2492, %v2491
  %v2525 = vunpack.c.l.b16 %v2445
  %v2526 = vunpack.c.l.b16 %v2446
  %v2527 = vunpack.c.l.b16 %v2447
  %v2528 = vunpack.c.l.b16 %v2448
  %v2529 = vunpack.c.l.b16 %v2449
  %v2530 = vunpack.c.l.b16 %v2450
  %v2531 = vunpack.c.l.b16 %v2451
  %v2532 = vunpack.c.l.b16 %v2452
  %v2533 = vunpack.c.l.b16 %v2453
  %v2534 = vunpack.c.l.b16 %v2454
  %v2535 = vunpack.c.l.b16 %v2455
  %v2536 = vunpack.c.l.b16 %v2456
  %v2537 = vunpack.c.l.b16 %v2457
  %v2538 = vunpack.c.l.b16 %v2458
  %v2539 = vunpack.c.l.b16 %v2459
  %v2540 = vunpack.c.l.b16 %v2460
  %v2541 = vpack.c.b16 %v2526, %v2525
  %v2542 = vpack.c.b16 %v2528, %v2527
  %v2543 = vpack.c.b16 %v2530, %v2529
  %v2544 = vpack.c.b16 %v2532, %v2531
  %v2545 = vpack.c.b16 %v2534, %v2533
  %v2546 = vpack.c.b16 %v2536, %v2535
  %v2547 = vpack.c.b16 %v2538, %v2537
  %v2548 = vpack.c.b16 %v2540, %v2539
  %2557 = vmatprep.subr.bf16.mxu0 0
  %2558 = vmatpush1.bf16.msra.mxu0 %v2541
  %2559 = vmatprep.subr.bf16.mxu0 0
  %2560 = vmatpush1.bf16.msra.mxu0 %v2542
  %2561 = vmatprep.subr.bf16.mxu0 0
  %2562 = vmatpush1.bf16.msra.mxu0 %v2543
  %2563 = vmatprep.subr.bf16.mxu0 0
  %2564 = vmatpush1.bf16.msra.mxu0 %v2544
  %2565 = vmatprep.subr.bf16.mxu0 0
  %2566 = vmatpush1.bf16.msra.mxu0 %v2545
  %2567 = vmatprep.subr.bf16.mxu0 0
  %2568 = vmatpush1.bf16.msra.mxu0 %v2546
  %2569 = vmatprep.subr.bf16.mxu0 0
  %2570 = vmatpush1.bf16.msra.mxu0 %v2547
  %2571 = vmatprep.subr.bf16.mxu0 0
  %2572 = vmatpush1.bf16.msra.mxu0 %v2548
  %2573 = vmatprep.subr.bf16.mxu0 0
  %2574 = vmatpush1.bf16.msra.mxu0 0
  %2575 = vmatprep.subr.bf16.mxu0 0
  %2576 = vmatpush1.bf16.msra.mxu0 0
  %2577 = vmatprep.subr.bf16.mxu0 0
  %2578 = vmatpush1.bf16.msra.mxu0 0
  %2579 = vmatprep.subr.bf16.mxu0 0
  %2580 = vmatpush1.bf16.msra.mxu0 0
  %2581 = vmatprep.subr.bf16.mxu0 0
  %2582 = vmatpush1.bf16.msra.mxu0 0
  %2583 = vmatprep.subr.bf16.mxu0 0
  %2584 = vmatpush1.bf16.msra.mxu0 0
  %2585 = vmatprep.subr.bf16.mxu0 0
  %2586 = vmatpush1.bf16.msra.mxu0 0
  %2587 = vmatprep.subr.bf16.mxu0 0
  %2588 = vmatpush1.bf16.msra.mxu0 0
  %2589 = vmatprep.mubr.bf16.mxu0 0
  %2590 = vmatmul.mubr.bf16.gmra.mrb[0].mxu0 %v2493
  %v2591 = vpop.f32.mrb[0].mxu0
  %v2592 = vadd.f32 0.0, %v2591
  %v2593 = vpop.f32.mrb[0].mxu0
  %v2594 = vpop.f32.mrb[0].mxu0
  %v2595 = vadd.f32 0.0, %v2594
  %v2596 = vpop.f32.mrb[0].mxu0
  %2597 = vmatprep.mubr.bf16.mxu0 0
  %2598 = vmatmul.mubr.bf16.gmra.mrb[0].mxu0 %v2494
  %v2599 = vpop.f32.mrb[0].mxu0
  %v2600 = vadd.f32 0.0, %v2599
  %v2601 = vpop.f32.mrb[0].mxu0
  %v2602 = vpop.f32.mrb[0].mxu0
  %v2603 = vadd.f32 0.0, %v2602
  %v2604 = vpop.f32.mrb[0].mxu0
  %2605 = vmatprep.mubr.bf16.mxu0 0
  %2606 = vmatmul.mubr.bf16.gmra.mrb[0].mxu0 %v2495
  %v2607 = vpop.f32.mrb[0].mxu0
  %v2608 = vadd.f32 0.0, %v2607
  %v2609 = vpop.f32.mrb[0].mxu0
  %v2610 = vpop.f32.mrb[0].mxu0
  %v2611 = vadd.f32 0.0, %v2610
  %v2612 = vpop.f32.mrb[0].mxu0
  %2613 = vmatprep.mubr.bf16.mxu0 0
  %2614 = vmatmul.mubr.bf16.gmra.mrb[0].mxu0 %v2496
  %v2615 = vpop.f32.mrb[0].mxu0
  %v2616 = vadd.f32 0.0, %v2615
  %v2617 = vpop.f32.mrb[0].mxu0
  %v2618 = vpop.f32.mrb[0].mxu0
  %v2619 = vadd.f32 0.0, %v2618
  %v2620 = vpop.f32.mrb[0].mxu0
  %2621 = vmatprep.mubr.bf16.mxu0 0
  %2622 = vmatmul.mubr.bf16.gmra.mrb[0].mxu0 %v2497
  %v2623 = vpop.f32.mrb[0].mxu0
  %v2624 = vadd.f32 0.0, %v2623
  %v2625 = vpop.f32.mrb[0].mxu0
  %v2626 = vpop.f32.mrb[0].mxu0
  %v2627 = vadd.f32 0.0, %v2626
  %v2628 = vpop.f32.mrb[0].mxu0
  %2629 = vmatprep.mubr.bf16.mxu0 0
  %2630 = vmatmul.mubr.bf16.gmra.mrb[0].mxu0 %v2498
  %v2631 = vpop.f32.mrb[0].mxu0
  %v2632 = vadd.f32 0.0, %v2631
  %v2633 = vpop.f32.mrb[0].mxu0
  %v2634 = vpop.f32.mrb[0].mxu0
  %v2635 = vadd.f32 0.0, %v2634
  %v2636 = vpop.f32.mrb[0].mxu0
  %2637 = vmatprep.mubr.bf16.mxu0 0
  %2638 = vmatmul.mubr.bf16.gmra.mrb[0].mxu0 %v2499
  %v2639 = vpop.f32.mrb[0].mxu0
  %v2640 = vadd.f32 0.0, %v2639
  %v2641 = vpop.f32.mrb[0].mxu0
  %v2642 = vpop.f32.mrb[0].mxu0
  %v2643 = vadd.f32 0.0, %v2642
  %v2644 = vpop.f32.mrb[0].mxu0
  %2645 = vmatprep.mubr.bf16.mxu0 0
  %2646 = vmatmul.mubr.bf16.gmra.mrb[0].mxu0 %v2500
  %v2647 = vpop.f32.mrb[0].mxu0
  %v2648 = vadd.f32 0.0, %v2647
  %v2649 = vpop.f32.mrb[0].mxu0
  %v2650 = vpop.f32.mrb[0].mxu0
  %v2651 = vadd.f32 0.0, %v2650
  %v2652 = vpop.f32.mrb[0].mxu0
  %2653 = vdwg.mxu0
  %v2670 = vunpack.c.l.b16 %v2395
  %v2671 = vunpack.c.l.b16 %v2396
  %v2672 = vunpack.c.l.b16 %v2397
  %v2673 = vunpack.c.l.b16 %v2398
  %v2674 = vunpack.c.l.b16 %v2399
  %v2675 = vunpack.c.l.b16 %v2400
  %v2676 = vunpack.c.l.b16 %v2401
  %v2677 = vunpack.c.l.b16 %v2402
  %v2678 = vunpack.c.l.b16 %v2403
  %v2679 = vunpack.c.l.b16 %v2404
  %v2680 = vunpack.c.l.b16 %v2405
  %v2681 = vunpack.c.l.b16 %v2406
  %v2682 = vunpack.c.l.b16 %v2407
  %v2683 = vunpack.c.l.b16 %v2408
  %v2684 = vunpack.c.l.b16 %v2409
  %v2685 = vunpack.c.l.b16 %v2410
  %v2686 = vpack.c.b16 %v2671, %v2670
  %v2687 = vpack.c.b16 %v2673, %v2672
  %v2688 = vpack.c.b16 %v2675, %v2674
  %v2689 = vpack.c.b16 %v2677, %v2676
  %v2690 = vpack.c.b16 %v2679, %v2678
  %v2691 = vpack.c.b16 %v2681, %v2680
  %v2692 = vpack.c.b16 %v2683, %v2682
  %v2693 = vpack.c.b16 %v2685, %v2684
  %v2718 = vunpack.c.l.b16 %v2412
  %v2719 = vunpack.c.l.b16 %v2413
  %v2720 = vunpack.c.l.b16 %v2414
  %v2721 = vunpack.c.l.b16 %v2415
  %v2722 = vunpack.c.l.b16 %v2416
  %v2723 = vunpack.c.l.b16 %v2417
  %v2724 = vunpack.c.l.b16 %v2418
  %v2725 = vunpack.c.l.b16 %v2419
  %v2726 = vunpack.c.l.b16 %v2420
  %v2727 = vunpack.c.l.b16 %v2421
  %v2728 = vunpack.c.l.b16 %v2422
  %v2729 = vunpack.c.l.b16 %v2423
  %v2730 = vunpack.c.l.b16 %v2424
  %v2731 = vunpack.c.l.b16 %v2425
  %v2732 = vunpack.c.l.b16 %v2426
  %v2733 = vunpack.c.l.b16 %v2427
  %v2734 = vpack.c.b16 %v2719, %v2718
  %v2735 = vpack.c.b16 %v2721, %v2720
  %v2736 = vpack.c.b16 %v2723, %v2722
  %v2737 = vpack.c.b16 %v2725, %v2724
  %v2738 = vpack.c.b16 %v2727, %v2726
  %v2739 = vpack.c.b16 %v2729, %v2728
  %v2740 = vpack.c.b16 %v2731, %v2730
  %v2741 = vpack.c.b16 %v2733, %v2732
  %2750 = vmatprep.subr.bf16.mxu0 0
  %2751 = vmatpush1.bf16.msra.mxu0 %v2734
  %2752 = vmatprep.subr.bf16.mxu0 0
  %2753 = vmatpush1.bf16.msra.mxu0 %v2735
  %2754 = vmatprep.subr.bf16.mxu0 0
  %2755 = vmatpush1.bf16.msra.mxu0 %v2736
  %2756 = vmatprep.subr.bf16.mxu0 0
  %2757 = vmatpush1.bf16.msra.mxu0 %v2737
  %2758 = vmatprep.subr.bf16.mxu0 0
  %2759 = vmatpush1.bf16.msra.mxu0 %v2738
  %2760 = vmatprep.subr.bf16.mxu0 0
  %2761 = vmatpush1.bf16.msra.mxu0 %v2739
  %2762 = vmatprep.subr.bf16.mxu0 0
  %2763 = vmatpush1.bf16.msra.mxu0 %v2740
  %2764 = vmatprep.subr.bf16.mxu0 0
  %2765 = vmatpush1.bf16.msra.mxu0 %v2741
  %2766 = vmatprep.subr.bf16.mxu0 0
  %2767 = vmatpush1.bf16.msra.mxu0 0
  %2768 = vmatprep.subr.bf16.mxu0 0
  %2769 = vmatpush1.bf16.msra.mxu0 0
  %2770 = vmatprep.subr.bf16.mxu0 0
  %2771 = vmatpush1.bf16.msra.mxu0 0
  %2772 = vmatprep.subr.bf16.mxu0 0
  %2773 = vmatpush1.bf16.msra.mxu0 0
  %2774 = vmatprep.subr.bf16.mxu0 0
  %2775 = vmatpush1.bf16.msra.mxu0 0
  %2776 = vmatprep.subr.bf16.mxu0 0
  %2777 = vmatpush1.bf16.msra.mxu0 0
  %2778 = vmatprep.subr.bf16.mxu0 0
  %2779 = vmatpush1.bf16.msra.mxu0 0
  %2780 = vmatprep.subr.bf16.mxu0 0
  %2781 = vmatpush1.bf16.msra.mxu0 0
  %2782 = vmatprep.mubr.bf16.mxu0 0
  %2783 = vmatmul.mubr.bf16.gmra.mrb[0].mxu0 %v2686
  %v2784 = vpop.f32.mrb[0].mxu0
  %v2785 = vadd.f32 %v2592, %v2784
  %v2786 = vpop.f32.mrb[0].mxu0
  %v2787 = vpop.f32.mrb[0].mxu0
  %v2788 = vadd.f32 %v2595, %v2787
  %v2789 = vpop.f32.mrb[0].mxu0
  %2790 = vmatprep.mubr.bf16.mxu0 0
  %2791 = vmatmul.mubr.bf16.gmra.mrb[0].mxu0 %v2687
  %v2792 = vpop.f32.mrb[0].mxu0
  %v2793 = vadd.f32 %v2600, %v2792
  %v2794 = vpop.f32.mrb[0].mxu0
  %v2795 = vpop.f32.mrb[0].mxu0
  %v2796 = vadd.f32 %v2603, %v2795
  %v2797 = vpop.f32.mrb[0].mxu0
  %2798 = vmatprep.mubr.bf16.mxu0 0
  %2799 = vmatmul.mubr.bf16.gmra.mrb[0].mxu0 %v2688
  %v2800 = vpop.f32.mrb[0].mxu0
  %v2801 = vadd.f32 %v2608, %v2800
  %v2802 = vpop.f32.mrb[0].mxu0
  %v2803 = vpop.f32.mrb[0].mxu0
  %v2804 = vadd.f32 %v2611, %v2803
  %v2805 = vpop.f32.mrb[0].mxu0
  %2806 = vmatprep.mubr.bf16.mxu0 0
  %2807 = vmatmul.mubr.bf16.gmra.mrb[0].mxu0 %v2689
  %v2808 = vpop.f32.mrb[0].mxu0
  %v2809 = vadd.f32 %v2616, %v2808
  %v2810 = vpop.f32.mrb[0].mxu0
  %v2811 = vpop.f32.mrb[0].mxu0
  %v2812 = vadd.f32 %v2619, %v2811
  %v2813 = vpop.f32.mrb[0].mxu0
  %2814 = vmatprep.mubr.bf16.mxu0 0
  %2815 = vmatmul.mubr.bf16.gmra.mrb[0].mxu0 %v2690
  %v2816 = vpop.f32.mrb[0].mxu0
  %v2817 = vadd.f32 %v2624, %v2816
  %v2818 = vpop.f32.mrb[0].mxu0
  %v2819 = vpop.f32.mrb[0].mxu0
  %v2820 = vadd.f32 %v2627, %v2819
  %v2821 = vpop.f32.mrb[0].mxu0
  %2822 = vmatprep.mubr.bf16.mxu0 0
  %2823 = vmatmul.mubr.bf16.gmra.mrb[0].mxu0 %v2691
  %v2824 = vpop.f32.mrb[0].mxu0
  %v2825 = vadd.f32 %v2632, %v2824
  %v2826 = vpop.f32.mrb[0].mxu0
  %v2827 = vpop.f32.mrb[0].mxu0
  %v2828 = vadd.f32 %v2635, %v2827
  %v2829 = vpop.f32.mrb[0].mxu0
  %2830 = vmatprep.mubr.bf16.mxu0 0
  %2831 = vmatmul.mubr.bf16.gmra.mrb[0].mxu0 %v2692
  %v2832 = vpop.f32.mrb[0].mxu0
  %v2833 = vadd.f32 %v2640, %v2832
  %v2834 = vpop.f32.mrb[0].mxu0
  %v2835 = vpop.f32.mrb[0].mxu0
  %v2836 = vadd.f32 %v2643, %v2835
  %v2837 = vpop.f32.mrb[0].mxu0
  %2838 = vmatprep.mubr.bf16.mxu0 0
  %2839 = vmatmul.mubr.bf16.gmra.mrb[0].mxu0 %v2693
  %v2840 = vpop.f32.mrb[0].mxu0
  %v2841 = vadd.f32 %v2648, %v2840
  %v2842 = vpop.f32.mrb[0].mxu0
  %v2843 = vpop.f32.mrb[0].mxu0
  %v2844 = vadd.f32 %v2651, %v2843
  %v2845 = vpop.f32.mrb[0].mxu0
  %2846 = vdwg.mxu0
  %v2847 = vld [vmem:[%s469] sm:$0xf]
  %v2848 = vld [vmem:[%s469 + $0x4] sm:$0xf]
  %v2849 = vld [vmem:[%s469 + $0x8] sm:$0xf]
  %v2850 = vld [vmem:[%s469 + $0xc] sm:$0xf]
  %v2851 = vld [vmem:[%s469 + $0x10] sm:$0xf]
  %v2852 = vld [vmem:[%s469 + $0x14] sm:$0xf]
  %v2853 = vld [vmem:[%s469 + $0x18] sm:$0xf]
  %v2854 = vld [vmem:[%s469 + $0x1c] sm:$0xf]
  %v2855 = vld [vmem:[%s469 + $0x20] sm:$0xf]
  %v2856 = vld [vmem:[%s469 + $0x24] sm:$0xf]
  %v2857 = vld [vmem:[%s469 + $0x28] sm:$0xf]
  %v2858 = vld [vmem:[%s469 + $0x2c] sm:$0xf]
  %v2859 = vld [vmem:[%s469 + $0x30] sm:$0xf]
  %v2860 = vld [vmem:[%s469 + $0x34] sm:$0xf]
  %v2861 = vld [vmem:[%s469 + $0x38] sm:$0xf]
  %v2862 = vld [vmem:[%s469 + $0x3c] sm:$0xf]
  %s2863 = scalar_lea.vmem %s1, 640
  %v2864 = vld [vmem:[%s2863] sm:$0xf]
  %v2865 = vld [vmem:[%s2863 + $0x4] sm:$0xf]
  %v2866 = vld [vmem:[%s2863 + $0x8] sm:$0xf]
  %v2867 = vld [vmem:[%s2863 + $0xc] sm:$0xf]
  %v2868 = vld [vmem:[%s2863 + $0x10] sm:$0xf]
  %v2869 = vld [vmem:[%s2863 + $0x14] sm:$0xf]
  %v2870 = vld [vmem:[%s2863 + $0x18] sm:$0xf]
  %v2871 = vld [vmem:[%s2863 + $0x1c] sm:$0xf]
  %v2872 = vld [vmem:[%s2863 + $0x20] sm:$0xf]
  %v2873 = vld [vmem:[%s2863 + $0x24] sm:$0xf]
  %v2874 = vld [vmem:[%s2863 + $0x28] sm:$0xf]
  %v2875 = vld [vmem:[%s2863 + $0x2c] sm:$0xf]
  %v2876 = vld [vmem:[%s2863 + $0x30] sm:$0xf]
  %v2877 = vld [vmem:[%s2863 + $0x34] sm:$0xf]
  %v2878 = vld [vmem:[%s2863 + $0x38] sm:$0xf]
  %v2879 = vld [vmem:[%s2863 + $0x3c] sm:$0xf]
  %v2896 = vunpack.c.l.b16 %v2847
  %v2897 = vunpack.c.l.b16 %v2848
  %v2898 = vunpack.c.l.b16 %v2849
  %v2899 = vunpack.c.l.b16 %v2850
  %v2900 = vunpack.c.l.b16 %v2851
  %v2901 = vunpack.c.l.b16 %v2852
  %v2902 = vunpack.c.l.b16 %v2853
  %v2903 = vunpack.c.l.b16 %v2854
  %v2904 = vunpack.c.l.b16 %v2855
  %v2905 = vunpack.c.l.b16 %v2856
  %v2906 = vunpack.c.l.b16 %v2857
  %v2907 = vunpack.c.l.b16 %v2858
  %v2908 = vunpack.c.l.b16 %v2859
  %v2909 = vunpack.c.l.b16 %v2860
  %v2910 = vunpack.c.l.b16 %v2861
  %v2911 = vunpack.c.l.b16 %v2862
  %v2912 = vpack.c.b16 %v2897, %v2896
  %v2913 = vpack.c.b16 %v2899, %v2898
  %v2914 = vpack.c.b16 %v2901, %v2900
  %v2915 = vpack.c.b16 %v2903, %v2902
  %v2916 = vpack.c.b16 %v2905, %v2904
  %v2917 = vpack.c.b16 %v2907, %v2906
  %v2918 = vpack.c.b16 %v2909, %v2908
  %v2919 = vpack.c.b16 %v2911, %v2910
  %v2944 = vunpack.c.l.b16 %v2864
  %v2945 = vunpack.c.l.b16 %v2865
  %v2946 = vunpack.c.l.b16 %v2866
  %v2947 = vunpack.c.l.b16 %v2867
  %v2948 = vunpack.c.l.b16 %v2868
  %v2949 = vunpack.c.l.b16 %v2869
  %v2950 = vunpack.c.l.b16 %v2870
  %v2951 = vunpack.c.l.b16 %v2871
  %v2952 = vunpack.c.l.b16 %v2872
  %v2953 = vunpack.c.l.b16 %v2873
  %v2954 = vunpack.c.l.b16 %v2874
  %v2955 = vunpack.c.l.b16 %v2875
  %v2956 = vunpack.c.l.b16 %v2876
  %v2957 = vunpack.c.l.b16 %v2877
  %v2958 = vunpack.c.l.b16 %v2878
  %v2959 = vunpack.c.l.b16 %v2879
  %v2960 = vpack.c.b16 %v2945, %v2944
  %v2961 = vpack.c.b16 %v2947, %v2946
  %v2962 = vpack.c.b16 %v2949, %v2948
  %v2963 = vpack.c.b16 %v2951, %v2950
  %v2964 = vpack.c.b16 %v2953, %v2952
  %v2965 = vpack.c.b16 %v2955, %v2954
  %v2966 = vpack.c.b16 %v2957, %v2956
  %v2967 = vpack.c.b16 %v2959, %v2958
  %2976 = vmatprep.subr.bf16.mxu0 0
  %2977 = vmatpush1.bf16.msra.mxu0 %v2960
  %2978 = vmatprep.subr.bf16.mxu0 0
  %2979 = vmatpush1.bf16.msra.mxu0 %v2961
  %2980 = vmatprep.subr.bf16.mxu0 0
  %2981 = vmatpush1.bf16.msra.mxu0 %v2962
  %2982 = vmatprep.subr.bf16.mxu0 0
  %2983 = vmatpush1.bf16.msra.mxu0 %v2963
  %2984 = vmatprep.subr.bf16.mxu0 0
  %2985 = vmatpush1.bf16.msra.mxu0 %v2964
  %2986 = vmatprep.subr.bf16.mxu0 0
  %2987 = vmatpush1.bf16.msra.mxu0 %v2965
  %2988 = vmatprep.subr.bf16.mxu0 0
  %2989 = vmatpush1.bf16.msra.mxu0 %v2966
  %2990 = vmatprep.subr.bf16.mxu0 0
  %2991 = vmatpush1.bf16.msra.mxu0 %v2967
  %2992 = vmatprep.subr.bf16.mxu0 0
  %2993 = vmatpush1.bf16.msra.mxu0 0
  %2994 = vmatprep.subr.bf16.mxu0 0
  %2995 = vmatpush1.bf16.msra.mxu0 0
  %2996 = vmatprep.subr.bf16.mxu0 0
  %2997 = vmatpush1.bf16.msra.mxu0 0
  %2998 = vmatprep.subr.bf16.mxu0 0
  %2999 = vmatpush1.bf16.msra.mxu0 0
  %3000 = vmatprep.subr.bf16.mxu0 0
  %3001 = vmatpush1.bf16.msra.mxu0 0
  %3002 = vmatprep.subr.bf16.mxu0 0
  %3003 = vmatpush1.bf16.msra.mxu0 0
  %3004 = vmatprep.subr.bf16.mxu0 0
  %3005 = vmatpush1.bf16.msra.mxu0 0
  %3006 = vmatprep.subr.bf16.mxu0 0
  %3007 = vmatpush1.bf16.msra.mxu0 0
  %3008 = vmatprep.mubr.bf16.mxu0 0
  %3009 = vmatmul.mubr.bf16.gmra.mrb[0].mxu0 %v2912
  %v3010 = vpop.f32.mrb[0].mxu0
  %v3011 = vadd.f32 0.0, %v3010
  %v3012 = vpop.f32.mrb[0].mxu0
  %v3013 = vpop.f32.mrb[0].mxu0
  %v3014 = vadd.f32 0.0, %v3013
  %v3015 = vpop.f32.mrb[0].mxu0
  %3016 = vmatprep.mubr.bf16.mxu0 0
  %3017 = vmatmul.mubr.bf16.gmra.mrb[0].mxu0 %v2913
  %v3018 = vpop.f32.mrb[0].mxu0
  %v3019 = vadd.f32 0.0, %v3018
  %v3020 = vpop.f32.mrb[0].mxu0
  %v3021 = vpop.f32.mrb[0].mxu0
  %v3022 = vadd.f32 0.0, %v3021
  %v3023 = vpop.f32.mrb[0].mxu0
  %3024 = vmatprep.mubr.bf16.mxu0 0
  %3025 = vmatmul.mubr.bf16.gmra.mrb[0].mxu0 %v2914
  %v3026 = vpop.f32.mrb[0].mxu0
  %v3027 = vadd.f32 0.0, %v3026
  %v3028 = vpop.f32.mrb[0].mxu0
  %v3029 = vpop.f32.mrb[0].mxu0
  %v3030 = vadd.f32 0.0, %v3029
  %v3031 = vpop.f32.mrb[0].mxu0
  %3032 = vmatprep.mubr.bf16.mxu0 0
  %3033 = vmatmul.mubr.bf16.gmra.mrb[0].mxu0 %v2915
  %v3034 = vpop.f32.mrb[0].mxu0
  %v3035 = vadd.f32 0.0, %v3034
  %v3036 = vpop.f32.mrb[0].mxu0
  %v3037 = vpop.f32.mrb[0].mxu0
  %v3038 = vadd.f32 0.0, %v3037
  %v3039 = vpop.f32.mrb[0].mxu0
  %3040 = vmatprep.mubr.bf16.mxu0 0
  %3041 = vmatmul.mubr.bf16.gmra.mrb[0].mxu0 %v2916
  %v3042 = vpop.f32.mrb[0].mxu0
  %v3043 = vadd.f32 0.0, %v3042
  %v3044 = vpop.f32.mrb[0].mxu0
  %v3045 = vpop.f32.mrb[0].mxu0
  %v3046 = vadd.f32 0.0, %v3045
  %v3047 = vpop.f32.mrb[0].mxu0
  %3048 = vmatprep.mubr.bf16.mxu0 0
  %3049 = vmatmul.mubr.bf16.gmra.mrb[0].mxu0 %v2917
  %v3050 = vpop.f32.mrb[0].mxu0
  %v3051 = vadd.f32 0.0, %v3050
  %v3052 = vpop.f32.mrb[0].mxu0
  %v3053 = vpop.f32.mrb[0].mxu0
  %v3054 = vadd.f32 0.0, %v3053
  %v3055 = vpop.f32.mrb[0].mxu0
  %3056 = vmatprep.mubr.bf16.mxu0 0
  %3057 = vmatmul.mubr.bf16.gmra.mrb[0].mxu0 %v2918
  %v3058 = vpop.f32.mrb[0].mxu0
  %v3059 = vadd.f32 0.0, %v3058
  %v3060 = vpop.f32.mrb[0].mxu0
  %v3061 = vpop.f32.mrb[0].mxu0
  %v3062 = vadd.f32 0.0, %v3061
  %v3063 = vpop.f32.mrb[0].mxu0
  %3064 = vmatprep.mubr.bf16.mxu0 0
  %3065 = vmatmul.mubr.bf16.gmra.mrb[0].mxu0 %v2919
  %v3066 = vpop.f32.mrb[0].mxu0
  %v3067 = vadd.f32 0.0, %v3066
  %v3068 = vpop.f32.mrb[0].mxu0
  %v3069 = vpop.f32.mrb[0].mxu0
  %v3070 = vadd.f32 0.0, %v3069
  %v3071 = vpop.f32.mrb[0].mxu0
  %3072 = vdwg.mxu0
  %v3073 = vadd.f32 %v2785, %v3011
  %v3074 = vadd.f32 %v2788, %v3014
  %v3075 = vadd.f32 %v2793, %v3019
  %v3076 = vadd.f32 %v2796, %v3022
  %v3077 = vadd.f32 %v2801, %v3027
  %v3078 = vadd.f32 %v2804, %v3030
  %v3079 = vadd.f32 %v2809, %v3035
  %v3080 = vadd.f32 %v2812, %v3038
  %v3081 = vadd.f32 %v2817, %v3043
  %v3082 = vadd.f32 %v2820, %v3046
  %v3083 = vadd.f32 %v2825, %v3051
  %v3084 = vadd.f32 %v2828, %v3054
  %v3085 = vadd.f32 %v2833, %v3059
  %v3086 = vadd.f32 %v2836, %v3062
  %v3087 = vadd.f32 %v2841, %v3067
  %v3088 = vadd.f32 %v2844, %v3070
  %v3089 = vld [vmem:[%s712] sm:$0xf]
  %v3090 = vld [vmem:[%s712 + $0x4] sm:$0xf]
  %v3091 = vld [vmem:[%s712 + $0x8] sm:$0xf]
  %v3092 = vld [vmem:[%s712 + $0xc] sm:$0xf]
  %v3093 = vld [vmem:[%s712 + $0x10] sm:$0xf]
  %v3094 = vld [vmem:[%s712 + $0x14] sm:$0xf]
  %v3095 = vld [vmem:[%s712 + $0x18] sm:$0xf]
  %v3096 = vld [vmem:[%s712 + $0x1c] sm:$0xf]
  %v3097 = vld [vmem:[%s712 + $0x20] sm:$0xf]
  %v3098 = vld [vmem:[%s712 + $0x24] sm:$0xf]
  %v3099 = vld [vmem:[%s712 + $0x28] sm:$0xf]
  %v3100 = vld [vmem:[%s712 + $0x2c] sm:$0xf]
  %v3101 = vld [vmem:[%s712 + $0x30] sm:$0xf]
  %v3102 = vld [vmem:[%s712 + $0x34] sm:$0xf]
  %v3103 = vld [vmem:[%s712 + $0x38] sm:$0xf]
  %v3104 = vld [vmem:[%s712 + $0x3c] sm:$0xf]
  %s3105 = scalar_lea.vmem %s1, 896
  %v3106 = vld [vmem:[%s3105] sm:$0xf]
  %v3107 = vld [vmem:[%s3105 + $0x4] sm:$0xf]
  %v3108 = vld [vmem:[%s3105 + $0x8] sm:$0xf]
  %v3109 = vld [vmem:[%s3105 + $0xc] sm:$0xf]
  %v3110 = vld [vmem:[%s3105 + $0x10] sm:$0xf]
  %v3111 = vld [vmem:[%s3105 + $0x14] sm:$0xf]
  %v3112 = vld [vmem:[%s3105 + $0x18] sm:$0xf]
  %v3113 = vld [vmem:[%s3105 + $0x1c] sm:$0xf]
  %v3114 = vld [vmem:[%s3105 + $0x20] sm:$0xf]
  %v3115 = vld [vmem:[%s3105 + $0x24] sm:$0xf]
  %v3116 = vld [vmem:[%s3105 + $0x28] sm:$0xf]
  %v3117 = vld [vmem:[%s3105 + $0x2c] sm:$0xf]
  %v3118 = vld [vmem:[%s3105 + $0x30] sm:$0xf]
  %v3119 = vld [vmem:[%s3105 + $0x34] sm:$0xf]
  %v3120 = vld [vmem:[%s3105 + $0x38] sm:$0xf]
  %v3121 = vld [vmem:[%s3105 + $0x3c] sm:$0xf]
  %v3138 = vunpack.c.l.b16 %v3089
  %v3139 = vunpack.c.l.b16 %v3090
  %v3140 = vunpack.c.l.b16 %v3091
  %v3141 = vunpack.c.l.b16 %v3092
  %v3142 = vunpack.c.l.b16 %v3093
  %v3143 = vunpack.c.l.b16 %v3094
  %v3144 = vunpack.c.l.b16 %v3095
  %v3145 = vunpack.c.l.b16 %v3096
  %v3146 = vunpack.c.l.b16 %v3097
  %v3147 = vunpack.c.l.b16 %v3098
  %v3148 = vunpack.c.l.b16 %v3099
  %v3149 = vunpack.c.l.b16 %v3100
  %v3150 = vunpack.c.l.b16 %v3101
  %v3151 = vunpack.c.l.b16 %v3102
  %v3152 = vunpack.c.l.b16 %v3103
  %v3153 = vunpack.c.l.b16 %v3104
  %v3154 = vpack.c.b16 %v3139, %v3138
  %v3155 = vpack.c.b16 %v3141, %v3140
  %v3156 = vpack.c.b16 %v3143, %v3142
  %v3157 = vpack.c.b16 %v3145, %v3144
  %v3158 = vpack.c.b16 %v3147, %v3146
  %v3159 = vpack.c.b16 %v3149, %v3148
  %v3160 = vpack.c.b16 %v3151, %v3150
  %v3161 = vpack.c.b16 %v3153, %v3152
  %v3186 = vunpack.c.l.b16 %v3106
  %v3187 = vunpack.c.l.b16 %v3107
  %v3188 = vunpack.c.l.b16 %v3108
  %v3189 = vunpack.c.l.b16 %v3109
  %v3190 = vunpack.c.l.b16 %v3110
  %v3191 = vunpack.c.l.b16 %v3111
  %v3192 = vunpack.c.l.b16 %v3112
  %v3193 = vunpack.c.l.b16 %v3113
  %v3194 = vunpack.c.l.b16 %v3114
  %v3195 = vunpack.c.l.b16 %v3115
  %v3196 = vunpack.c.l.b16 %v3116
  %v3197 = vunpack.c.l.b16 %v3117
  %v3198 = vunpack.c.l.b16 %v3118
  %v3199 = vunpack.c.l.b16 %v3119
  %v3200 = vunpack.c.l.b16 %v3120
  %v3201 = vunpack.c.l.b16 %v3121
  %v3202 = vpack.c.b16 %v3187, %v3186
  %v3203 = vpack.c.b16 %v3189, %v3188
  %v3204 = vpack.c.b16 %v3191, %v3190
  %v3205 = vpack.c.b16 %v3193, %v3192
  %v3206 = vpack.c.b16 %v3195, %v3194
  %v3207 = vpack.c.b16 %v3197, %v3196
  %v3208 = vpack.c.b16 %v3199, %v3198
  %v3209 = vpack.c.b16 %v3201, %v3200
  %3218 = vmatprep.subr.bf16.mxu0 0
  %3219 = vmatpush1.bf16.msra.mxu0 %v3202
  %3220 = vmatprep.subr.bf16.mxu0 0
  %3221 = vmatpush1.bf16.msra.mxu0 %v3203
  %3222 = vmatprep.subr.bf16.mxu0 0
  %3223 = vmatpush1.bf16.msra.mxu0 %v3204
  %3224 = vmatprep.subr.bf16.mxu0 0
  %3225 = vmatpush1.bf16.msra.mxu0 %v3205
  %3226 = vmatprep.subr.bf16.mxu0 0
  %3227 = vmatpush1.bf16.msra.mxu0 %v3206
  %3228 = vmatprep.subr.bf16.mxu0 0
  %3229 = vmatpush1.bf16.msra.mxu0 %v3207
  %3230 = vmatprep.subr.bf16.mxu0 0
  %3231 = vmatpush1.bf16.msra.mxu0 %v3208
  %3232 = vmatprep.subr.bf16.mxu0 0
  %3233 = vmatpush1.bf16.msra.mxu0 %v3209
  %3234 = vmatprep.subr.bf16.mxu0 0
  %3235 = vmatpush1.bf16.msra.mxu0 0
  %3236 = vmatprep.subr.bf16.mxu0 0
  %3237 = vmatpush1.bf16.msra.mxu0 0
  %3238 = vmatprep.subr.bf16.mxu0 0
  %3239 = vmatpush1.bf16.msra.mxu0 0
  %3240 = vmatprep.subr.bf16.mxu0 0
  %3241 = vmatpush1.bf16.msra.mxu0 0
  %3242 = vmatprep.subr.bf16.mxu0 0
  %3243 = vmatpush1.bf16.msra.mxu0 0
  %3244 = vmatprep.subr.bf16.mxu0 0
  %3245 = vmatpush1.bf16.msra.mxu0 0
  %3246 = vmatprep.subr.bf16.mxu0 0
  %3247 = vmatpush1.bf16.msra.mxu0 0
  %3248 = vmatprep.subr.bf16.mxu0 0
  %3249 = vmatpush1.bf16.msra.mxu0 0
  %3250 = vmatprep.mubr.bf16.mxu0 0
  %3251 = vmatmul.mubr.bf16.gmra.mrb[0].mxu0 %v3154
  %v3252 = vpop.f32.mrb[0].mxu0
  %v3253 = vadd.f32 0.0, %v3252
  %v3254 = vpop.f32.mrb[0].mxu0
  %v3255 = vpop.f32.mrb[0].mxu0
  %v3256 = vadd.f32 0.0, %v3255
  %v3257 = vpop.f32.mrb[0].mxu0
  %3258 = vmatprep.mubr.bf16.mxu0 0
  %3259 = vmatmul.mubr.bf16.gmra.mrb[0].mxu0 %v3155
  %v3260 = vpop.f32.mrb[0].mxu0
  %v3261 = vadd.f32 0.0, %v3260
  %v3262 = vpop.f32.mrb[0].mxu0
  %v3263 = vpop.f32.mrb[0].mxu0
  %v3264 = vadd.f32 0.0, %v3263
  %v3265 = vpop.f32.mrb[0].mxu0
  %3266 = vmatprep.mubr.bf16.mxu0 0
  %3267 = vmatmul.mubr.bf16.gmra.mrb[0].mxu0 %v3156
  %v3268 = vpop.f32.mrb[0].mxu0
  %v3269 = vadd.f32 0.0, %v3268
  %v3270 = vpop.f32.mrb[0].mxu0
  %v3271 = vpop.f32.mrb[0].mxu0
  %v3272 = vadd.f32 0.0, %v3271
  %v3273 = vpop.f32.mrb[0].mxu0
  %3274 = vmatprep.mubr.bf16.mxu0 0
  %3275 = vmatmul.mubr.bf16.gmra.mrb[0].mxu0 %v3157
  %v3276 = vpop.f32.mrb[0].mxu0
  %v3277 = vadd.f32 0.0, %v3276
  %v3278 = vpop.f32.mrb[0].mxu0
  %v3279 = vpop.f32.mrb[0].mxu0
  %v3280 = vadd.f32 0.0, %v3279
  %v3281 = vpop.f32.mrb[0].mxu0
  %3282 = vmatprep.mubr.bf16.mxu0 0
  %3283 = vmatmul.mubr.bf16.gmra.mrb[0].mxu0 %v3158
  %v3284 = vpop.f32.mrb[0].mxu0
  %v3285 = vadd.f32 0.0, %v3284
  %v3286 = vpop.f32.mrb[0].mxu0
  %v3287 = vpop.f32.mrb[0].mxu0
  %v3288 = vadd.f32 0.0, %v3287
  %v3289 = vpop.f32.mrb[0].mxu0
  %3290 = vmatprep.mubr.bf16.mxu0 0
  %3291 = vmatmul.mubr.bf16.gmra.mrb[0].mxu0 %v3159
  %v3292 = vpop.f32.mrb[0].mxu0
  %v3293 = vadd.f32 0.0, %v3292
  %v3294 = vpop.f32.mrb[0].mxu0
  %v3295 = vpop.f32.mrb[0].mxu0
  %v3296 = vadd.f32 0.0, %v3295
  %v3297 = vpop.f32.mrb[0].mxu0
  %3298 = vmatprep.mubr.bf16.mxu0 0
  %3299 = vmatmul.mubr.bf16.gmra.mrb[0].mxu0 %v3160
  %v3300 = vpop.f32.mrb[0].mxu0
  %v3301 = vadd.f32 0.0, %v3300
  %v3302 = vpop.f32.mrb[0].mxu0
  %v3303 = vpop.f32.mrb[0].mxu0
  %v3304 = vadd.f32 0.0, %v3303
  %v3305 = vpop.f32.mrb[0].mxu0
  %3306 = vmatprep.mubr.bf16.mxu0 0
  %3307 = vmatmul.mubr.bf16.gmra.mrb[0].mxu0 %v3161
  %v3308 = vpop.f32.mrb[0].mxu0
  %v3309 = vadd.f32 0.0, %v3308
  %v3310 = vpop.f32.mrb[0].mxu0
  %v3311 = vpop.f32.mrb[0].mxu0
  %v3312 = vadd.f32 0.0, %v3311
  %v3313 = vpop.f32.mrb[0].mxu0
  %3314 = vdwg.mxu0
  %v3315 = vadd.f32 %v3073, %v3253
  %v3316 = vadd.f32 %v3074, %v3256
  %v3317 = vadd.f32 %v3075, %v3261
  %v3318 = vadd.f32 %v3076, %v3264
  %v3319 = vadd.f32 %v3077, %v3269
  %v3320 = vadd.f32 %v3078, %v3272
  %v3321 = vadd.f32 %v3079, %v3277
  %v3322 = vadd.f32 %v3080, %v3280
  %v3323 = vadd.f32 %v3081, %v3285
  %v3324 = vadd.f32 %v3082, %v3288
  %v3325 = vadd.f32 %v3083, %v3293
  %v3326 = vadd.f32 %v3084, %v3296
  %v3327 = vadd.f32 %v3085, %v3301
  %v3328 = vadd.f32 %v3086, %v3304
  %v3329 = vadd.f32 %v3087, %v3309
  %v3330 = vadd.f32 %v3088, %v3312
  %v3331 = vpack.c.bf16 %v3316, %v3315
  %v3332 = vpack.c.bf16 %v3318, %v3317
  %v3333 = vpack.c.bf16 %v3320, %v3319
  %v3334 = vpack.c.bf16 %v3322, %v3321
  %v3335 = vpack.c.bf16 %v3324, %v3323
  %v3336 = vpack.c.bf16 %v3326, %v3325
  %v3337 = vpack.c.bf16 %v3328, %v3327
  %v3338 = vpack.c.bf16 %v3330, %v3329
  %v3347 = vunpack.c.l.b16 %v3331
  %v3348 = vunpack.c.h.b16 %v3331
  %v3349 = vunpack.c.l.b16 %v3332
  %v3350 = vunpack.c.h.b16 %v3332
  %v3351 = vunpack.c.l.b16 %v3333
  %v3352 = vunpack.c.h.b16 %v3333
  %v3353 = vunpack.c.l.b16 %v3334
  %v3354 = vunpack.c.h.b16 %v3334
  %v3355 = vunpack.c.l.b16 %v3335
  %v3356 = vunpack.c.h.b16 %v3335
  %v3357 = vunpack.c.l.b16 %v3336
  %v3358 = vunpack.c.h.b16 %v3336
  %v3359 = vunpack.c.l.b16 %v3337
  %v3360 = vunpack.c.h.b16 %v3337
  %v3361 = vunpack.c.l.b16 %v3338
  %v3362 = vunpack.c.h.b16 %v3338
  %v3363 = vpack.c.b16 %v3347, %v3347
  %v3364 = vpack.c.b16 %v3348, %v3348
  %v3365 = vpack.c.b16 %v3349, %v3349
  %v3366 = vpack.c.b16 %v3350, %v3350
  %v3367 = vpack.c.b16 %v3351, %v3351
  %v3368 = vpack.c.b16 %v3352, %v3352
  %v3369 = vpack.c.b16 %v3353, %v3353
  %v3370 = vpack.c.b16 %v3354, %v3354
  %v3371 = vpack.c.b16 %v3355, %v3355
  %v3372 = vpack.c.b16 %v3356, %v3356
  %v3373 = vpack.c.b16 %v3357, %v3357
  %v3374 = vpack.c.b16 %v3358, %v3358
  %v3375 = vpack.c.b16 %v3359, %v3359
  %v3376 = vpack.c.b16 %v3360, %v3360
  %v3377 = vpack.c.b16 %v3361, %v3361
  %v3378 = vpack.c.b16 %v3362, %v3362
  %s3395 = scalar_lea.vmem %s3, 128
  %3396 = vst.msk [vmem:[%s3395] sm:$0xf] %vm1019, %v3363
  %3397 = vst.msk [vmem:[%s3395 + $0x4] sm:$0xf] %vm1019, %v3364
  %3398 = vst.msk [vmem:[%s3395 + $0x8] sm:$0xf] %vm1019, %v3365
  %3399 = vst.msk [vmem:[%s3395 + $0xc] sm:$0xf] %vm1019, %v3366
  %3400 = vst.msk [vmem:[%s3395 + $0x10] sm:$0xf] %vm1019, %v3367
  %3401 = vst.msk [vmem:[%s3395 + $0x14] sm:$0xf] %vm1019, %v3368
  %3402 = vst.msk [vmem:[%s3395 + $0x18] sm:$0xf] %vm1019, %v3369
  %3403 = vst.msk [vmem:[%s3395 + $0x1c] sm:$0xf] %vm1019, %v3370
  %3404 = vst.msk [vmem:[%s3395 + $0x20] sm:$0xf] %vm1019, %v3371
  %3405 = vst.msk [vmem:[%s3395 + $0x24] sm:$0xf] %vm1019, %v3372
  %3406 = vst.msk [vmem:[%s3395 + $0x28] sm:$0xf] %vm1019, %v3373
  %3407 = vst.msk [vmem:[%s3395 + $0x2c] sm:$0xf] %vm1019, %v3374
  %3408 = vst.msk [vmem:[%s3395 + $0x30] sm:$0xf] %vm1019, %v3375
  %3409 = vst.msk [vmem:[%s3395 + $0x34] sm:$0xf] %vm1019, %v3376
  %3410 = vst.msk [vmem:[%s3395 + $0x38] sm:$0xf] %vm1019, %v3377
  %3411 = vst.msk [vmem:[%s3395 + $0x3c] sm:$0xf] %vm1019, %v3378
  %s3412 = scalar_lea.vmem %s2, 64
  %v3413 = vld [vmem:[%s3412] sm:$0xf]
  %v3414 = vld [vmem:[%s3412 + $0x4] sm:$0xf]
  %v3415 = vld [vmem:[%s3412 + $0x8] sm:$0xf]
  %v3416 = vld [vmem:[%s3412 + $0xc] sm:$0xf]
  %v3417 = vld [vmem:[%s3412 + $0x10] sm:$0xf]
  %v3418 = vld [vmem:[%s3412 + $0x14] sm:$0xf]
  %v3419 = vld [vmem:[%s3412 + $0x18] sm:$0xf]
  %v3420 = vld [vmem:[%s3412 + $0x1c] sm:$0xf]
  %v3429 = vunpack.c.l.b16 %v3413
  %v3430 = vunpack.c.l.b16 %v3414
  %v3431 = vunpack.c.l.b16 %v3415
  %v3432 = vunpack.c.l.b16 %v3416
  %v3433 = vunpack.c.l.b16 %v3417
  %v3434 = vunpack.c.l.b16 %v3418
  %v3435 = vunpack.c.l.b16 %v3419
  %v3436 = vunpack.c.l.b16 %v3420
  %v3437 = vpack.c.b16 %v3430, %v3429
  %v3438 = vpack.c.b16 %v3432, %v3431
  %v3439 = vpack.c.b16 %v3434, %v3433
  %v3440 = vpack.c.b16 %v3436, %v3435
  %v3446 = vsel %vm1068, %v3331, 0
  %v3449 = vsel %vm1068, %v3332, 0
  %v3452 = vsel %vm1068, %v3333, 0
  %v3455 = vsel %vm1068, %v3334, 0
  %v3458 = vsel %vm1068, %v3335, 0
  %v3461 = vsel %vm1068, %v3336, 0
  %v3464 = vsel %vm1068, %v3337, 0
  %v3467 = vsel %vm1068, %v3338, 0
  %3469 = vmatprep.subr.bf16.mxu0 0
  %3470 = vmatpush1.bf16.msra.mxu0 %v3437
  %3471 = vmatprep.subr.bf16.mxu0 0
  %3472 = vmatpush1.bf16.msra.mxu0 %v3438
  %3473 = vmatprep.subr.bf16.mxu0 0
  %3474 = vmatpush1.bf16.msra.mxu0 %v3439
  %3475 = vmatprep.subr.bf16.mxu0 0
  %3476 = vmatpush1.bf16.msra.mxu0 %v3440
  %3477 = vmatprep.subr.bf16.mxu0 0
  %3478 = vmatpush1.bf16.msra.mxu0 0
  %3479 = vmatprep.subr.bf16.mxu0 0
  %3480 = vmatpush1.bf16.msra.mxu0 0
  %3481 = vmatprep.subr.bf16.mxu0 0
  %3482 = vmatpush1.bf16.msra.mxu0 0
  %3483 = vmatprep.subr.bf16.mxu0 0
  %3484 = vmatpush1.bf16.msra.mxu0 0
  %3485 = vmatprep.subr.bf16.mxu0 0
  %3486 = vmatpush1.bf16.msra.mxu0 0
  %3487 = vmatprep.subr.bf16.mxu0 0
  %3488 = vmatpush1.bf16.msra.mxu0 0
  %3489 = vmatprep.subr.bf16.mxu0 0
  %3490 = vmatpush1.bf16.msra.mxu0 0
  %3491 = vmatprep.subr.bf16.mxu0 0
  %3492 = vmatpush1.bf16.msra.mxu0 0
  %3493 = vmatprep.subr.bf16.mxu0 0
  %3494 = vmatpush1.bf16.msra.mxu0 0
  %3495 = vmatprep.subr.bf16.mxu0 0
  %3496 = vmatpush1.bf16.msra.mxu0 0
  %3497 = vmatprep.subr.bf16.mxu0 0
  %3498 = vmatpush1.bf16.msra.mxu0 0
  %3499 = vmatprep.subr.bf16.mxu0 0
  %3500 = vmatpush1.bf16.msra.mxu0 0
  %3501 = vmatprep.mubr.bf16.mxu0 0
  %3502 = vmatmul.mubr.bf16.gmra.mrb[0].mxu0 %v3446
  %v3503 = vpop.f32.mrb[0].mxu0
  %v3504 = vadd.f32 0.0, %v3503
  %v3505 = vpop.f32.mrb[0].mxu0
  %v3506 = vpop.f32.mrb[0].mxu0
  %v3507 = vadd.f32 0.0, %v3506
  %v3508 = vpop.f32.mrb[0].mxu0
  %3509 = vmatprep.mubr.bf16.mxu0 0
  %3510 = vmatmul.mubr.bf16.gmra.mrb[0].mxu0 %v3449
  %v3511 = vpop.f32.mrb[0].mxu0
  %v3512 = vadd.f32 0.0, %v3511
  %v3513 = vpop.f32.mrb[0].mxu0
  %v3514 = vpop.f32.mrb[0].mxu0
  %v3515 = vadd.f32 0.0, %v3514
  %v3516 = vpop.f32.mrb[0].mxu0
  %3517 = vmatprep.mubr.bf16.mxu0 0
  %3518 = vmatmul.mubr.bf16.gmra.mrb[0].mxu0 %v3452
  %v3519 = vpop.f32.mrb[0].mxu0
  %v3520 = vadd.f32 0.0, %v3519
  %v3521 = vpop.f32.mrb[0].mxu0
  %v3522 = vpop.f32.mrb[0].mxu0
  %v3523 = vadd.f32 0.0, %v3522
  %v3524 = vpop.f32.mrb[0].mxu0
  %3525 = vmatprep.mubr.bf16.mxu0 0
  %3526 = vmatmul.mubr.bf16.gmra.mrb[0].mxu0 %v3455
  %v3527 = vpop.f32.mrb[0].mxu0
  %v3528 = vadd.f32 0.0, %v3527
  %v3529 = vpop.f32.mrb[0].mxu0
  %v3530 = vpop.f32.mrb[0].mxu0
  %v3531 = vadd.f32 0.0, %v3530
  %v3532 = vpop.f32.mrb[0].mxu0
  %3533 = vmatprep.mubr.bf16.mxu0 0
  %3534 = vmatmul.mubr.bf16.gmra.mrb[0].mxu0 %v3458
  %v3535 = vpop.f32.mrb[0].mxu0
  %v3536 = vadd.f32 0.0, %v3535
  %v3537 = vpop.f32.mrb[0].mxu0
  %v3538 = vpop.f32.mrb[0].mxu0
  %v3539 = vadd.f32 0.0, %v3538
  %v3540 = vpop.f32.mrb[0].mxu0
  %3541 = vmatprep.mubr.bf16.mxu0 0
  %3542 = vmatmul.mubr.bf16.gmra.mrb[0].mxu0 %v3461
  %v3543 = vpop.f32.mrb[0].mxu0
  %v3544 = vadd.f32 0.0, %v3543
  %v3545 = vpop.f32.mrb[0].mxu0
  %v3546 = vpop.f32.mrb[0].mxu0
  %v3547 = vadd.f32 0.0, %v3546
  %v3548 = vpop.f32.mrb[0].mxu0
  %3549 = vmatprep.mubr.bf16.mxu0 0
  %3550 = vmatmul.mubr.bf16.gmra.mrb[0].mxu0 %v3464
  %v3551 = vpop.f32.mrb[0].mxu0
  %v3552 = vadd.f32 0.0, %v3551
  %v3553 = vpop.f32.mrb[0].mxu0
  %v3554 = vpop.f32.mrb[0].mxu0
  %v3555 = vadd.f32 0.0, %v3554
  %v3556 = vpop.f32.mrb[0].mxu0
  %3557 = vmatprep.mubr.bf16.mxu0 0
  %3558 = vmatmul.mubr.bf16.gmra.mrb[0].mxu0 %v3467
  %v3559 = vpop.f32.mrb[0].mxu0
  %v3560 = vadd.f32 0.0, %v3559
  %v3561 = vpop.f32.mrb[0].mxu0
  %v3562 = vpop.f32.mrb[0].mxu0
  %v3563 = vadd.f32 0.0, %v3562
  %v3564 = vpop.f32.mrb[0].mxu0
  %3565 = vdwg.mxu0
  %s3566 = scalar_lea.vmem %s4, 256
  %3567 = vst.msk [vmem:[%s3566] sm:$0xff] %vm1190, %v3504
  %3568 = vst.msk [vmem:[%s3566 + $0x8] sm:$0xff] %vm1190, %v3507
  %3569 = vst.msk [vmem:[%s3566 + $0x10] sm:$0xff] %vm1190, %v3512
  %3570 = vst.msk [vmem:[%s3566 + $0x18] sm:$0xff] %vm1190, %v3515
  %3571 = vst.msk [vmem:[%s3566 + $0x20] sm:$0xff] %vm1190, %v3520
  %3572 = vst.msk [vmem:[%s3566 + $0x28] sm:$0xff] %vm1190, %v3523
  %3573 = vst.msk [vmem:[%s3566 + $0x30] sm:$0xff] %vm1190, %v3528
  %3574 = vst.msk [vmem:[%s3566 + $0x38] sm:$0xff] %vm1190, %v3531
  %3575 = vst.msk [vmem:[%s3566 + $0x40] sm:$0xff] %vm1190, %v3536
  %3576 = vst.msk [vmem:[%s3566 + $0x48] sm:$0xff] %vm1190, %v3539
  %3577 = vst.msk [vmem:[%s3566 + $0x50] sm:$0xff] %vm1190, %v3544
  %3578 = vst.msk [vmem:[%s3566 + $0x58] sm:$0xff] %vm1190, %v3547
  %3579 = vst.msk [vmem:[%s3566 + $0x60] sm:$0xff] %vm1190, %v3552
  %3580 = vst.msk [vmem:[%s3566 + $0x68] sm:$0xff] %vm1190, %v3555
  %3581 = vst.msk [vmem:[%s3566 + $0x70] sm:$0xff] %vm1190, %v3560
  %3582 = vst.msk [vmem:[%s3566 + $0x78] sm:$0xff] %vm1190, %v3563
  %v3583 = vld [vmem:[%s0] sm:$0xf]
  %v3584 = vld [vmem:[%s0 + $0x4] sm:$0xf]
  %v3585 = vld [vmem:[%s0 + $0x8] sm:$0xf]
  %v3586 = vld [vmem:[%s0 + $0xc] sm:$0xf]
  %v3587 = vld [vmem:[%s0 + $0x10] sm:$0xf]
  %v3588 = vld [vmem:[%s0 + $0x14] sm:$0xf]
  %v3589 = vld [vmem:[%s0 + $0x18] sm:$0xf]
  %v3590 = vld [vmem:[%s0 + $0x1c] sm:$0xf]
  %v3591 = vld [vmem:[%s0 + $0x20] sm:$0xf]
  %v3592 = vld [vmem:[%s0 + $0x24] sm:$0xf]
  %v3593 = vld [vmem:[%s0 + $0x28] sm:$0xf]
  %v3594 = vld [vmem:[%s0 + $0x2c] sm:$0xf]
  %v3595 = vld [vmem:[%s0 + $0x30] sm:$0xf]
  %v3596 = vld [vmem:[%s0 + $0x34] sm:$0xf]
  %v3597 = vld [vmem:[%s0 + $0x38] sm:$0xf]
  %v3598 = vld [vmem:[%s0 + $0x3c] sm:$0xf]
  %s3599 = scalar_lea.vmem %s1, 192
  %v3600 = vld [vmem:[%s3599] sm:$0xf]
  %v3601 = vld [vmem:[%s3599 + $0x4] sm:$0xf]
  %v3602 = vld [vmem:[%s3599 + $0x8] sm:$0xf]
  %v3603 = vld [vmem:[%s3599 + $0xc] sm:$0xf]
  %v3604 = vld [vmem:[%s3599 + $0x10] sm:$0xf]
  %v3605 = vld [vmem:[%s3599 + $0x14] sm:$0xf]
  %v3606 = vld [vmem:[%s3599 + $0x18] sm:$0xf]
  %v3607 = vld [vmem:[%s3599 + $0x1c] sm:$0xf]
  %v3608 = vld [vmem:[%s3599 + $0x20] sm:$0xf]
  %v3609 = vld [vmem:[%s3599 + $0x24] sm:$0xf]
  %v3610 = vld [vmem:[%s3599 + $0x28] sm:$0xf]
  %v3611 = vld [vmem:[%s3599 + $0x2c] sm:$0xf]
  %v3612 = vld [vmem:[%s3599 + $0x30] sm:$0xf]
  %v3613 = vld [vmem:[%s3599 + $0x34] sm:$0xf]
  %v3614 = vld [vmem:[%s3599 + $0x38] sm:$0xf]
  %v3615 = vld [vmem:[%s3599 + $0x3c] sm:$0xf]
  %v3616 = vld [vmem:[%s49] sm:$0xf]
  %v3617 = vld [vmem:[%s49 + $0x4] sm:$0xf]
  %v3618 = vld [vmem:[%s49 + $0x8] sm:$0xf]
  %v3619 = vld [vmem:[%s49 + $0xc] sm:$0xf]
  %v3620 = vld [vmem:[%s49 + $0x10] sm:$0xf]
  %v3621 = vld [vmem:[%s49 + $0x14] sm:$0xf]
  %v3622 = vld [vmem:[%s49 + $0x18] sm:$0xf]
  %v3623 = vld [vmem:[%s49 + $0x1c] sm:$0xf]
  %v3624 = vld [vmem:[%s49 + $0x20] sm:$0xf]
  %v3625 = vld [vmem:[%s49 + $0x24] sm:$0xf]
  %v3626 = vld [vmem:[%s49 + $0x28] sm:$0xf]
  %v3627 = vld [vmem:[%s49 + $0x2c] sm:$0xf]
  %v3628 = vld [vmem:[%s49 + $0x30] sm:$0xf]
  %v3629 = vld [vmem:[%s49 + $0x34] sm:$0xf]
  %v3630 = vld [vmem:[%s49 + $0x38] sm:$0xf]
  %v3631 = vld [vmem:[%s49 + $0x3c] sm:$0xf]
  %s3632 = scalar_lea.vmem %s1, 448
  %v3633 = vld [vmem:[%s3632] sm:$0xf]
  %v3634 = vld [vmem:[%s3632 + $0x4] sm:$0xf]
  %v3635 = vld [vmem:[%s3632 + $0x8] sm:$0xf]
  %v3636 = vld [vmem:[%s3632 + $0xc] sm:$0xf]
  %v3637 = vld [vmem:[%s3632 + $0x10] sm:$0xf]
  %v3638 = vld [vmem:[%s3632 + $0x14] sm:$0xf]
  %v3639 = vld [vmem:[%s3632 + $0x18] sm:$0xf]
  %v3640 = vld [vmem:[%s3632 + $0x1c] sm:$0xf]
  %v3641 = vld [vmem:[%s3632 + $0x20] sm:$0xf]
  %v3642 = vld [vmem:[%s3632 + $0x24] sm:$0xf]
  %v3643 = vld [vmem:[%s3632 + $0x28] sm:$0xf]
  %v3644 = vld [vmem:[%s3632 + $0x2c] sm:$0xf]
  %v3645 = vld [vmem:[%s3632 + $0x30] sm:$0xf]
  %v3646 = vld [vmem:[%s3632 + $0x34] sm:$0xf]
  %v3647 = vld [vmem:[%s3632 + $0x38] sm:$0xf]
  %v3648 = vld [vmem:[%s3632 + $0x3c] sm:$0xf]
  %v3665 = vunpack.c.l.b16 %v3616
  %v3666 = vunpack.c.l.b16 %v3617
  %v3667 = vunpack.c.l.b16 %v3618
  %v3668 = vunpack.c.l.b16 %v3619
  %v3669 = vunpack.c.l.b16 %v3620
  %v3670 = vunpack.c.l.b16 %v3621
  %v3671 = vunpack.c.l.b16 %v3622
  %v3672 = vunpack.c.l.b16 %v3623
  %v3673 = vunpack.c.l.b16 %v3624
  %v3674 = vunpack.c.l.b16 %v3625
  %v3675 = vunpack.c.l.b16 %v3626
  %v3676 = vunpack.c.l.b16 %v3627
  %v3677 = vunpack.c.l.b16 %v3628
  %v3678 = vunpack.c.l.b16 %v3629
  %v3679 = vunpack.c.l.b16 %v3630
  %v3680 = vunpack.c.l.b16 %v3631
  %v3681 = vpack.c.b16 %v3666, %v3665
  %v3682 = vpack.c.b16 %v3668, %v3667
  %v3683 = vpack.c.b16 %v3670, %v3669
  %v3684 = vpack.c.b16 %v3672, %v3671
  %v3685 = vpack.c.b16 %v3674, %v3673
  %v3686 = vpack.c.b16 %v3676, %v3675
  %v3687 = vpack.c.b16 %v3678, %v3677
  %v3688 = vpack.c.b16 %v3680, %v3679
  %v3713 = vunpack.c.l.b16 %v3633
  %v3714 = vunpack.c.l.b16 %v3634
  %v3715 = vunpack.c.l.b16 %v3635
  %v3716 = vunpack.c.l.b16 %v3636
  %v3717 = vunpack.c.l.b16 %v3637
  %v3718 = vunpack.c.l.b16 %v3638
  %v3719 = vunpack.c.l.b16 %v3639
  %v3720 = vunpack.c.l.b16 %v3640
  %v3721 = vunpack.c.l.b16 %v3641
  %v3722 = vunpack.c.l.b16 %v3642
  %v3723 = vunpack.c.l.b16 %v3643
  %v3724 = vunpack.c.l.b16 %v3644
  %v3725 = vunpack.c.l.b16 %v3645
  %v3726 = vunpack.c.l.b16 %v3646
  %v3727 = vunpack.c.l.b16 %v3647
  %v3728 = vunpack.c.l.b16 %v3648
  %v3729 = vpack.c.b16 %v3714, %v3713
  %v3730 = vpack.c.b16 %v3716, %v3715
  %v3731 = vpack.c.b16 %v3718, %v3717
  %v3732 = vpack.c.b16 %v3720, %v3719
  %v3733 = vpack.c.b16 %v3722, %v3721
  %v3734 = vpack.c.b16 %v3724, %v3723
  %v3735 = vpack.c.b16 %v3726, %v3725
  %v3736 = vpack.c.b16 %v3728, %v3727
  %3745 = vmatprep.subr.bf16.mxu0 0
  %3746 = vmatpush1.bf16.msra.mxu0 %v3729
  %3747 = vmatprep.subr.bf16.mxu0 0
  %3748 = vmatpush1.bf16.msra.mxu0 %v3730
  %3749 = vmatprep.subr.bf16.mxu0 0
  %3750 = vmatpush1.bf16.msra.mxu0 %v3731
  %3751 = vmatprep.subr.bf16.mxu0 0
  %3752 = vmatpush1.bf16.msra.mxu0 %v3732
  %3753 = vmatprep.subr.bf16.mxu0 0
  %3754 = vmatpush1.bf16.msra.mxu0 %v3733
  %3755 = vmatprep.subr.bf16.mxu0 0
  %3756 = vmatpush1.bf16.msra.mxu0 %v3734
  %3757 = vmatprep.subr.bf16.mxu0 0
  %3758 = vmatpush1.bf16.msra.mxu0 %v3735
  %3759 = vmatprep.subr.bf16.mxu0 0
  %3760 = vmatpush1.bf16.msra.mxu0 %v3736
  %3761 = vmatprep.subr.bf16.mxu0 0
  %3762 = vmatpush1.bf16.msra.mxu0 0
  %3763 = vmatprep.subr.bf16.mxu0 0
  %3764 = vmatpush1.bf16.msra.mxu0 0
  %3765 = vmatprep.subr.bf16.mxu0 0
  %3766 = vmatpush1.bf16.msra.mxu0 0
  %3767 = vmatprep.subr.bf16.mxu0 0
  %3768 = vmatpush1.bf16.msra.mxu0 0
  %3769 = vmatprep.subr.bf16.mxu0 0
  %3770 = vmatpush1.bf16.msra.mxu0 0
  %3771 = vmatprep.subr.bf16.mxu0 0
  %3772 = vmatpush1.bf16.msra.mxu0 0
  %3773 = vmatprep.subr.bf16.mxu0 0
  %3774 = vmatpush1.bf16.msra.mxu0 0
  %3775 = vmatprep.subr.bf16.mxu0 0
  %3776 = vmatpush1.bf16.msra.mxu0 0
  %3777 = vmatprep.mubr.bf16.mxu0 0
  %3778 = vmatmul.mubr.bf16.gmra.mrb[0].mxu0 %v3681
  %v3779 = vpop.f32.mrb[0].mxu0
  %v3780 = vadd.f32 0.0, %v3779
  %v3781 = vpop.f32.mrb[0].mxu0
  %v3782 = vpop.f32.mrb[0].mxu0
  %v3783 = vadd.f32 0.0, %v3782
  %v3784 = vpop.f32.mrb[0].mxu0
  %3785 = vmatprep.mubr.bf16.mxu0 0
  %3786 = vmatmul.mubr.bf16.gmra.mrb[0].mxu0 %v3682
  %v3787 = vpop.f32.mrb[0].mxu0
  %v3788 = vadd.f32 0.0, %v3787
  %v3789 = vpop.f32.mrb[0].mxu0
  %v3790 = vpop.f32.mrb[0].mxu0
  %v3791 = vadd.f32 0.0, %v3790
  %v3792 = vpop.f32.mrb[0].mxu0
  %3793 = vmatprep.mubr.bf16.mxu0 0
  %3794 = vmatmul.mubr.bf16.gmra.mrb[0].mxu0 %v3683
  %v3795 = vpop.f32.mrb[0].mxu0
  %v3796 = vadd.f32 0.0, %v3795
  %v3797 = vpop.f32.mrb[0].mxu0
  %v3798 = vpop.f32.mrb[0].mxu0
  %v3799 = vadd.f32 0.0, %v3798
  %v3800 = vpop.f32.mrb[0].mxu0
  %3801 = vmatprep.mubr.bf16.mxu0 0
  %3802 = vmatmul.mubr.bf16.gmra.mrb[0].mxu0 %v3684
  %v3803 = vpop.f32.mrb[0].mxu0
  %v3804 = vadd.f32 0.0, %v3803
  %v3805 = vpop.f32.mrb[0].mxu0
  %v3806 = vpop.f32.mrb[0].mxu0
  %v3807 = vadd.f32 0.0, %v3806
  %v3808 = vpop.f32.mrb[0].mxu0
  %3809 = vmatprep.mubr.bf16.mxu0 0
  %3810 = vmatmul.mubr.bf16.gmra.mrb[0].mxu0 %v3685
  %v3811 = vpop.f32.mrb[0].mxu0
  %v3812 = vadd.f32 0.0, %v3811
  %v3813 = vpop.f32.mrb[0].mxu0
  %v3814 = vpop.f32.mrb[0].mxu0
  %v3815 = vadd.f32 0.0, %v3814
  %v3816 = vpop.f32.mrb[0].mxu0
  %3817 = vmatprep.mubr.bf16.mxu0 0
  %3818 = vmatmul.mubr.bf16.gmra.mrb[0].mxu0 %v3686
  %v3819 = vpop.f32.mrb[0].mxu0
  %v3820 = vadd.f32 0.0, %v3819
  %v3821 = vpop.f32.mrb[0].mxu0
  %v3822 = vpop.f32.mrb[0].mxu0
  %v3823 = vadd.f32 0.0, %v3822
  %v3824 = vpop.f32.mrb[0].mxu0
  %3825 = vmatprep.mubr.bf16.mxu0 0
  %3826 = vmatmul.mubr.bf16.gmra.mrb[0].mxu0 %v3687
  %v3827 = vpop.f32.mrb[0].mxu0
  %v3828 = vadd.f32 0.0, %v3827
  %v3829 = vpop.f32.mrb[0].mxu0
  %v3830 = vpop.f32.mrb[0].mxu0
  %v3831 = vadd.f32 0.0, %v3830
  %v3832 = vpop.f32.mrb[0].mxu0
  %3833 = vmatprep.mubr.bf16.mxu0 0
  %3834 = vmatmul.mubr.bf16.gmra.mrb[0].mxu0 %v3688
  %v3835 = vpop.f32.mrb[0].mxu0
  %v3836 = vadd.f32 0.0, %v3835
  %v3837 = vpop.f32.mrb[0].mxu0
  %v3838 = vpop.f32.mrb[0].mxu0
  %v3839 = vadd.f32 0.0, %v3838
  %v3840 = vpop.f32.mrb[0].mxu0
  %3841 = vdwg.mxu0
  %v3858 = vunpack.c.l.b16 %v3583
  %v3859 = vunpack.c.l.b16 %v3584
  %v3860 = vunpack.c.l.b16 %v3585
  %v3861 = vunpack.c.l.b16 %v3586
  %v3862 = vunpack.c.l.b16 %v3587
  %v3863 = vunpack.c.l.b16 %v3588
  %v3864 = vunpack.c.l.b16 %v3589
  %v3865 = vunpack.c.l.b16 %v3590
  %v3866 = vunpack.c.l.b16 %v3591
  %v3867 = vunpack.c.l.b16 %v3592
  %v3868 = vunpack.c.l.b16 %v3593
  %v3869 = vunpack.c.l.b16 %v3594
  %v3870 = vunpack.c.l.b16 %v3595
  %v3871 = vunpack.c.l.b16 %v3596
  %v3872 = vunpack.c.l.b16 %v3597
  %v3873 = vunpack.c.l.b16 %v3598
  %v3874 = vpack.c.b16 %v3859, %v3858
  %v3875 = vpack.c.b16 %v3861, %v3860
  %v3876 = vpack.c.b16 %v3863, %v3862
  %v3877 = vpack.c.b16 %v3865, %v3864
  %v3878 = vpack.c.b16 %v3867, %v3866
  %v3879 = vpack.c.b16 %v3869, %v3868
  %v3880 = vpack.c.b16 %v3871, %v3870
  %v3881 = vpack.c.b16 %v3873, %v3872
  %v3906 = vunpack.c.l.b16 %v3600
  %v3907 = vunpack.c.l.b16 %v3601
  %v3908 = vunpack.c.l.b16 %v3602
  %v3909 = vunpack.c.l.b16 %v3603
  %v3910 = vunpack.c.l.b16 %v3604
  %v3911 = vunpack.c.l.b16 %v3605
  %v3912 = vunpack.c.l.b16 %v3606
  %v3913 = vunpack.c.l.b16 %v3607
  %v3914 = vunpack.c.l.b16 %v3608
  %v3915 = vunpack.c.l.b16 %v3609
  %v3916 = vunpack.c.l.b16 %v3610
  %v3917 = vunpack.c.l.b16 %v3611
  %v3918 = vunpack.c.l.b16 %v3612
  %v3919 = vunpack.c.l.b16 %v3613
  %v3920 = vunpack.c.l.b16 %v3614
  %v3921 = vunpack.c.l.b16 %v3615
  %v3922 = vpack.c.b16 %v3907, %v3906
  %v3923 = vpack.c.b16 %v3909, %v3908
  %v3924 = vpack.c.b16 %v3911, %v3910
  %v3925 = vpack.c.b16 %v3913, %v3912
  %v3926 = vpack.c.b16 %v3915, %v3914
  %v3927 = vpack.c.b16 %v3917, %v3916
  %v3928 = vpack.c.b16 %v3919, %v3918
  %v3929 = vpack.c.b16 %v3921, %v3920
  %3938 = vmatprep.subr.bf16.mxu0 0
  %3939 = vmatpush1.bf16.msra.mxu0 %v3922
  %3940 = vmatprep.subr.bf16.mxu0 0
  %3941 = vmatpush1.bf16.msra.mxu0 %v3923
  %3942 = vmatprep.subr.bf16.mxu0 0
  %3943 = vmatpush1.bf16.msra.mxu0 %v3924
  %3944 = vmatprep.subr.bf16.mxu0 0
  %3945 = vmatpush1.bf16.msra.mxu0 %v3925
  %3946 = vmatprep.subr.bf16.mxu0 0
  %3947 = vmatpush1.bf16.msra.mxu0 %v3926
  %3948 = vmatprep.subr.bf16.mxu0 0
  %3949 = vmatpush1.bf16.msra.mxu0 %v3927
  %3950 = vmatprep.subr.bf16.mxu0 0
  %3951 = vmatpush1.bf16.msra.mxu0 %v3928
  %3952 = vmatprep.subr.bf16.mxu0 0
  %3953 = vmatpush1.bf16.msra.mxu0 %v3929
  %3954 = vmatprep.subr.bf16.mxu0 0
  %3955 = vmatpush1.bf16.msra.mxu0 0
  %3956 = vmatprep.subr.bf16.mxu0 0
  %3957 = vmatpush1.bf16.msra.mxu0 0
  %3958 = vmatprep.subr.bf16.mxu0 0
  %3959 = vmatpush1.bf16.msra.mxu0 0
  %3960 = vmatprep.subr.bf16.mxu0 0
  %3961 = vmatpush1.bf16.msra.mxu0 0
  %3962 = vmatprep.subr.bf16.mxu0 0
  %3963 = vmatpush1.bf16.msra.mxu0 0
  %3964 = vmatprep.subr.bf16.mxu0 0
  %3965 = vmatpush1.bf16.msra.mxu0 0
  %3966 = vmatprep.subr.bf16.mxu0 0
  %3967 = vmatpush1.bf16.msra.mxu0 0
  %3968 = vmatprep.subr.bf16.mxu0 0
  %3969 = vmatpush1.bf16.msra.mxu0 0
  %3970 = vmatprep.mubr.bf16.mxu0 0
  %3971 = vmatmul.mubr.bf16.gmra.mrb[0].mxu0 %v3874
  %v3972 = vpop.f32.mrb[0].mxu0
  %v3973 = vadd.f32 %v3780, %v3972
  %v3974 = vpop.f32.mrb[0].mxu0
  %v3975 = vpop.f32.mrb[0].mxu0
  %v3976 = vadd.f32 %v3783, %v3975
  %v3977 = vpop.f32.mrb[0].mxu0
  %3978 = vmatprep.mubr.bf16.mxu0 0
  %3979 = vmatmul.mubr.bf16.gmra.mrb[0].mxu0 %v3875
  %v3980 = vpop.f32.mrb[0].mxu0
  %v3981 = vadd.f32 %v3788, %v3980
  %v3982 = vpop.f32.mrb[0].mxu0
  %v3983 = vpop.f32.mrb[0].mxu0
  %v3984 = vadd.f32 %v3791, %v3983
  %v3985 = vpop.f32.mrb[0].mxu0
  %3986 = vmatprep.mubr.bf16.mxu0 0
  %3987 = vmatmul.mubr.bf16.gmra.mrb[0].mxu0 %v3876
  %v3988 = vpop.f32.mrb[0].mxu0
  %v3989 = vadd.f32 %v3796, %v3988
  %v3990 = vpop.f32.mrb[0].mxu0
  %v3991 = vpop.f32.mrb[0].mxu0
  %v3992 = vadd.f32 %v3799, %v3991
  %v3993 = vpop.f32.mrb[0].mxu0
  %3994 = vmatprep.mubr.bf16.mxu0 0
  %3995 = vmatmul.mubr.bf16.gmra.mrb[0].mxu0 %v3877
  %v3996 = vpop.f32.mrb[0].mxu0
  %v3997 = vadd.f32 %v3804, %v3996
  %v3998 = vpop.f32.mrb[0].mxu0
  %v3999 = vpop.f32.mrb[0].mxu0
  %v4000 = vadd.f32 %v3807, %v3999
  %v4001 = vpop.f32.mrb[0].mxu0
  %4002 = vmatprep.mubr.bf16.mxu0 0
  %4003 = vmatmul.mubr.bf16.gmra.mrb[0].mxu0 %v3878
  %v4004 = vpop.f32.mrb[0].mxu0
  %v4005 = vadd.f32 %v3812, %v4004
  %v4006 = vpop.f32.mrb[0].mxu0
  %v4007 = vpop.f32.mrb[0].mxu0
  %v4008 = vadd.f32 %v3815, %v4007
  %v4009 = vpop.f32.mrb[0].mxu0
  %4010 = vmatprep.mubr.bf16.mxu0 0
  %4011 = vmatmul.mubr.bf16.gmra.mrb[0].mxu0 %v3879
  %v4012 = vpop.f32.mrb[0].mxu0
  %v4013 = vadd.f32 %v3820, %v4012
  %v4014 = vpop.f32.mrb[0].mxu0
  %v4015 = vpop.f32.mrb[0].mxu0
  %v4016 = vadd.f32 %v3823, %v4015
  %v4017 = vpop.f32.mrb[0].mxu0
  %4018 = vmatprep.mubr.bf16.mxu0 0
  %4019 = vmatmul.mubr.bf16.gmra.mrb[0].mxu0 %v3880
  %v4020 = vpop.f32.mrb[0].mxu0
  %v4021 = vadd.f32 %v3828, %v4020
  %v4022 = vpop.f32.mrb[0].mxu0
  %v4023 = vpop.f32.mrb[0].mxu0
  %v4024 = vadd.f32 %v3831, %v4023
  %v4025 = vpop.f32.mrb[0].mxu0
  %4026 = vmatprep.mubr.bf16.mxu0 0
  %4027 = vmatmul.mubr.bf16.gmra.mrb[0].mxu0 %v3881
  %v4028 = vpop.f32.mrb[0].mxu0
  %v4029 = vadd.f32 %v3836, %v4028
  %v4030 = vpop.f32.mrb[0].mxu0
  %v4031 = vpop.f32.mrb[0].mxu0
  %v4032 = vadd.f32 %v3839, %v4031
  %v4033 = vpop.f32.mrb[0].mxu0
  %4034 = vdwg.mxu0
  %v4035 = vld [vmem:[%s469] sm:$0xf]
  %v4036 = vld [vmem:[%s469 + $0x4] sm:$0xf]
  %v4037 = vld [vmem:[%s469 + $0x8] sm:$0xf]
  %v4038 = vld [vmem:[%s469 + $0xc] sm:$0xf]
  %v4039 = vld [vmem:[%s469 + $0x10] sm:$0xf]
  %v4040 = vld [vmem:[%s469 + $0x14] sm:$0xf]
  %v4041 = vld [vmem:[%s469 + $0x18] sm:$0xf]
  %v4042 = vld [vmem:[%s469 + $0x1c] sm:$0xf]
  %v4043 = vld [vmem:[%s469 + $0x20] sm:$0xf]
  %v4044 = vld [vmem:[%s469 + $0x24] sm:$0xf]
  %v4045 = vld [vmem:[%s469 + $0x28] sm:$0xf]
  %v4046 = vld [vmem:[%s469 + $0x2c] sm:$0xf]
  %v4047 = vld [vmem:[%s469 + $0x30] sm:$0xf]
  %v4048 = vld [vmem:[%s469 + $0x34] sm:$0xf]
  %v4049 = vld [vmem:[%s469 + $0x38] sm:$0xf]
  %v4050 = vld [vmem:[%s469 + $0x3c] sm:$0xf]
  %s4051 = scalar_lea.vmem %s1, 704
  %v4052 = vld [vmem:[%s4051] sm:$0xf]
  %v4053 = vld [vmem:[%s4051 + $0x4] sm:$0xf]
  %v4054 = vld [vmem:[%s4051 + $0x8] sm:$0xf]
  %v4055 = vld [vmem:[%s4051 + $0xc] sm:$0xf]
  %v4056 = vld [vmem:[%s4051 + $0x10] sm:$0xf]
  %v4057 = vld [vmem:[%s4051 + $0x14] sm:$0xf]
  %v4058 = vld [vmem:[%s4051 + $0x18] sm:$0xf]
  %v4059 = vld [vmem:[%s4051 + $0x1c] sm:$0xf]
  %v4060 = vld [vmem:[%s4051 + $0x20] sm:$0xf]
  %v4061 = vld [vmem:[%s4051 + $0x24] sm:$0xf]
  %v4062 = vld [vmem:[%s4051 + $0x28] sm:$0xf]
  %v4063 = vld [vmem:[%s4051 + $0x2c] sm:$0xf]
  %v4064 = vld [vmem:[%s4051 + $0x30] sm:$0xf]
  %v4065 = vld [vmem:[%s4051 + $0x34] sm:$0xf]
  %v4066 = vld [vmem:[%s4051 + $0x38] sm:$0xf]
  %v4067 = vld [vmem:[%s4051 + $0x3c] sm:$0xf]
  %v4084 = vunpack.c.l.b16 %v4035
  %v4085 = vunpack.c.l.b16 %v4036
  %v4086 = vunpack.c.l.b16 %v4037
  %v4087 = vunpack.c.l.b16 %v4038
  %v4088 = vunpack.c.l.b16 %v4039
  %v4089 = vunpack.c.l.b16 %v4040
  %v4090 = vunpack.c.l.b16 %v4041
  %v4091 = vunpack.c.l.b16 %v4042
  %v4092 = vunpack.c.l.b16 %v4043
  %v4093 = vunpack.c.l.b16 %v4044
  %v4094 = vunpack.c.l.b16 %v4045
  %v4095 = vunpack.c.l.b16 %v4046
  %v4096 = vunpack.c.l.b16 %v4047
  %v4097 = vunpack.c.l.b16 %v4048
  %v4098 = vunpack.c.l.b16 %v4049
  %v4099 = vunpack.c.l.b16 %v4050
  %v4100 = vpack.c.b16 %v4085, %v4084
  %v4101 = vpack.c.b16 %v4087, %v4086
  %v4102 = vpack.c.b16 %v4089, %v4088
  %v4103 = vpack.c.b16 %v4091, %v4090
  %v4104 = vpack.c.b16 %v4093, %v4092
  %v4105 = vpack.c.b16 %v4095, %v4094
  %v4106 = vpack.c.b16 %v4097, %v4096
  %v4107 = vpack.c.b16 %v4099, %v4098
  %v4132 = vunpack.c.l.b16 %v4052
  %v4133 = vunpack.c.l.b16 %v4053
  %v4134 = vunpack.c.l.b16 %v4054
  %v4135 = vunpack.c.l.b16 %v4055
  %v4136 = vunpack.c.l.b16 %v4056
  %v4137 = vunpack.c.l.b16 %v4057
  %v4138 = vunpack.c.l.b16 %v4058
  %v4139 = vunpack.c.l.b16 %v4059
  %v4140 = vunpack.c.l.b16 %v4060
  %v4141 = vunpack.c.l.b16 %v4061
  %v4142 = vunpack.c.l.b16 %v4062
  %v4143 = vunpack.c.l.b16 %v4063
  %v4144 = vunpack.c.l.b16 %v4064
  %v4145 = vunpack.c.l.b16 %v4065
  %v4146 = vunpack.c.l.b16 %v4066
  %v4147 = vunpack.c.l.b16 %v4067
  %v4148 = vpack.c.b16 %v4133, %v4132
  %v4149 = vpack.c.b16 %v4135, %v4134
  %v4150 = vpack.c.b16 %v4137, %v4136
  %v4151 = vpack.c.b16 %v4139, %v4138
  %v4152 = vpack.c.b16 %v4141, %v4140
  %v4153 = vpack.c.b16 %v4143, %v4142
  %v4154 = vpack.c.b16 %v4145, %v4144
  %v4155 = vpack.c.b16 %v4147, %v4146
  %4164 = vmatprep.subr.bf16.mxu0 0
  %4165 = vmatpush1.bf16.msra.mxu0 %v4148
  %4166 = vmatprep.subr.bf16.mxu0 0
  %4167 = vmatpush1.bf16.msra.mxu0 %v4149
  %4168 = vmatprep.subr.bf16.mxu0 0
  %4169 = vmatpush1.bf16.msra.mxu0 %v4150
  %4170 = vmatprep.subr.bf16.mxu0 0
  %4171 = vmatpush1.bf16.msra.mxu0 %v4151
  %4172 = vmatprep.subr.bf16.mxu0 0
  %4173 = vmatpush1.bf16.msra.mxu0 %v4152
  %4174 = vmatprep.subr.bf16.mxu0 0
  %4175 = vmatpush1.bf16.msra.mxu0 %v4153
  %4176 = vmatprep.subr.bf16.mxu0 0
  %4177 = vmatpush1.bf16.msra.mxu0 %v4154
  %4178 = vmatprep.subr.bf16.mxu0 0
  %4179 = vmatpush1.bf16.msra.mxu0 %v4155
  %4180 = vmatprep.subr.bf16.mxu0 0
  %4181 = vmatpush1.bf16.msra.mxu0 0
  %4182 = vmatprep.subr.bf16.mxu0 0
  %4183 = vmatpush1.bf16.msra.mxu0 0
  %4184 = vmatprep.subr.bf16.mxu0 0
  %4185 = vmatpush1.bf16.msra.mxu0 0
  %4186 = vmatprep.subr.bf16.mxu0 0
  %4187 = vmatpush1.bf16.msra.mxu0 0
  %4188 = vmatprep.subr.bf16.mxu0 0
  %4189 = vmatpush1.bf16.msra.mxu0 0
  %4190 = vmatprep.subr.bf16.mxu0 0
  %4191 = vmatpush1.bf16.msra.mxu0 0
  %4192 = vmatprep.subr.bf16.mxu0 0
  %4193 = vmatpush1.bf16.msra.mxu0 0
  %4194 = vmatprep.subr.bf16.mxu0 0
  %4195 = vmatpush1.bf16.msra.mxu0 0
  %4196 = vmatprep.mubr.bf16.mxu0 0
  %4197 = vmatmul.mubr.bf16.gmra.mrb[0].mxu0 %v4100
  %v4198 = vpop.f32.mrb[0].mxu0
  %v4199 = vadd.f32 0.0, %v4198
  %v4200 = vpop.f32.mrb[0].mxu0
  %v4201 = vpop.f32.mrb[0].mxu0
  %v4202 = vadd.f32 0.0, %v4201
  %v4203 = vpop.f32.mrb[0].mxu0
  %4204 = vmatprep.mubr.bf16.mxu0 0
  %4205 = vmatmul.mubr.bf16.gmra.mrb[0].mxu0 %v4101
  %v4206 = vpop.f32.mrb[0].mxu0
  %v4207 = vadd.f32 0.0, %v4206
  %v4208 = vpop.f32.mrb[0].mxu0
  %v4209 = vpop.f32.mrb[0].mxu0
  %v4210 = vadd.f32 0.0, %v4209
  %v4211 = vpop.f32.mrb[0].mxu0
  %4212 = vmatprep.mubr.bf16.mxu0 0
  %4213 = vmatmul.mubr.bf16.gmra.mrb[0].mxu0 %v4102
  %v4214 = vpop.f32.mrb[0].mxu0
  %v4215 = vadd.f32 0.0, %v4214
  %v4216 = vpop.f32.mrb[0].mxu0
  %v4217 = vpop.f32.mrb[0].mxu0
  %v4218 = vadd.f32 0.0, %v4217
  %v4219 = vpop.f32.mrb[0].mxu0
  %4220 = vmatprep.mubr.bf16.mxu0 0
  %4221 = vmatmul.mubr.bf16.gmra.mrb[0].mxu0 %v4103
  %v4222 = vpop.f32.mrb[0].mxu0
  %v4223 = vadd.f32 0.0, %v4222
  %v4224 = vpop.f32.mrb[0].mxu0
  %v4225 = vpop.f32.mrb[0].mxu0
  %v4226 = vadd.f32 0.0, %v4225
  %v4227 = vpop.f32.mrb[0].mxu0
  %4228 = vmatprep.mubr.bf16.mxu0 0
  %4229 = vmatmul.mubr.bf16.gmra.mrb[0].mxu0 %v4104
  %v4230 = vpop.f32.mrb[0].mxu0
  %v4231 = vadd.f32 0.0, %v4230
  %v4232 = vpop.f32.mrb[0].mxu0
  %v4233 = vpop.f32.mrb[0].mxu0
  %v4234 = vadd.f32 0.0, %v4233
  %v4235 = vpop.f32.mrb[0].mxu0
  %4236 = vmatprep.mubr.bf16.mxu0 0
  %4237 = vmatmul.mubr.bf16.gmra.mrb[0].mxu0 %v4105
  %v4238 = vpop.f32.mrb[0].mxu0
  %v4239 = vadd.f32 0.0, %v4238
  %v4240 = vpop.f32.mrb[0].mxu0
  %v4241 = vpop.f32.mrb[0].mxu0
  %v4242 = vadd.f32 0.0, %v4241
  %v4243 = vpop.f32.mrb[0].mxu0
  %4244 = vmatprep.mubr.bf16.mxu0 0
  %4245 = vmatmul.mubr.bf16.gmra.mrb[0].mxu0 %v4106
  %v4246 = vpop.f32.mrb[0].mxu0
  %v4247 = vadd.f32 0.0, %v4246
  %v4248 = vpop.f32.mrb[0].mxu0
  %v4249 = vpop.f32.mrb[0].mxu0
  %v4250 = vadd.f32 0.0, %v4249
  %v4251 = vpop.f32.mrb[0].mxu0
  %4252 = vmatprep.mubr.bf16.mxu0 0
  %4253 = vmatmul.mubr.bf16.gmra.mrb[0].mxu0 %v4107
  %v4254 = vpop.f32.mrb[0].mxu0
  %v4255 = vadd.f32 0.0, %v4254
  %v4256 = vpop.f32.mrb[0].mxu0
  %v4257 = vpop.f32.mrb[0].mxu0
  %v4258 = vadd.f32 0.0, %v4257
  %v4259 = vpop.f32.mrb[0].mxu0
  %4260 = vdwg.mxu0
  %v4261 = vadd.f32 %v3973, %v4199
  %v4262 = vadd.f32 %v3976, %v4202
  %v4263 = vadd.f32 %v3981, %v4207
  %v4264 = vadd.f32 %v3984, %v4210
  %v4265 = vadd.f32 %v3989, %v4215
  %v4266 = vadd.f32 %v3992, %v4218
  %v4267 = vadd.f32 %v3997, %v4223
  %v4268 = vadd.f32 %v4000, %v4226
  %v4269 = vadd.f32 %v4005, %v4231
  %v4270 = vadd.f32 %v4008, %v4234
  %v4271 = vadd.f32 %v4013, %v4239
  %v4272 = vadd.f32 %v4016, %v4242
  %v4273 = vadd.f32 %v4021, %v4247
  %v4274 = vadd.f32 %v4024, %v4250
  %v4275 = vadd.f32 %v4029, %v4255
  %v4276 = vadd.f32 %v4032, %v4258
  %v4277 = vld [vmem:[%s712] sm:$0xf]
  %v4278 = vld [vmem:[%s712 + $0x4] sm:$0xf]
  %v4279 = vld [vmem:[%s712 + $0x8] sm:$0xf]
  %v4280 = vld [vmem:[%s712 + $0xc] sm:$0xf]
  %v4281 = vld [vmem:[%s712 + $0x10] sm:$0xf]
  %v4282 = vld [vmem:[%s712 + $0x14] sm:$0xf]
  %v4283 = vld [vmem:[%s712 + $0x18] sm:$0xf]
  %v4284 = vld [vmem:[%s712 + $0x1c] sm:$0xf]
  %v4285 = vld [vmem:[%s712 + $0x20] sm:$0xf]
  %v4286 = vld [vmem:[%s712 + $0x24] sm:$0xf]
  %v4287 = vld [vmem:[%s712 + $0x28] sm:$0xf]
  %v4288 = vld [vmem:[%s712 + $0x2c] sm:$0xf]
  %v4289 = vld [vmem:[%s712 + $0x30] sm:$0xf]
  %v4290 = vld [vmem:[%s712 + $0x34] sm:$0xf]
  %v4291 = vld [vmem:[%s712 + $0x38] sm:$0xf]
  %v4292 = vld [vmem:[%s712 + $0x3c] sm:$0xf]
  %s4293 = scalar_lea.vmem %s1, 960
  %v4294 = vld [vmem:[%s4293] sm:$0xf]
  %v4295 = vld [vmem:[%s4293 + $0x4] sm:$0xf]
  %v4296 = vld [vmem:[%s4293 + $0x8] sm:$0xf]
  %v4297 = vld [vmem:[%s4293 + $0xc] sm:$0xf]
  %v4298 = vld [vmem:[%s4293 + $0x10] sm:$0xf]
  %v4299 = vld [vmem:[%s4293 + $0x14] sm:$0xf]
  %v4300 = vld [vmem:[%s4293 + $0x18] sm:$0xf]
  %v4301 = vld [vmem:[%s4293 + $0x1c] sm:$0xf]
  %v4302 = vld [vmem:[%s4293 + $0x20] sm:$0xf]
  %v4303 = vld [vmem:[%s4293 + $0x24] sm:$0xf]
  %v4304 = vld [vmem:[%s4293 + $0x28] sm:$0xf]
  %v4305 = vld [vmem:[%s4293 + $0x2c] sm:$0xf]
  %v4306 = vld [vmem:[%s4293 + $0x30] sm:$0xf]
  %v4307 = vld [vmem:[%s4293 + $0x34] sm:$0xf]
  %v4308 = vld [vmem:[%s4293 + $0x38] sm:$0xf]
  %v4309 = vld [vmem:[%s4293 + $0x3c] sm:$0xf]
  %v4326 = vunpack.c.l.b16 %v4277
  %v4327 = vunpack.c.l.b16 %v4278
  %v4328 = vunpack.c.l.b16 %v4279
  %v4329 = vunpack.c.l.b16 %v4280
  %v4330 = vunpack.c.l.b16 %v4281
  %v4331 = vunpack.c.l.b16 %v4282
  %v4332 = vunpack.c.l.b16 %v4283
  %v4333 = vunpack.c.l.b16 %v4284
  %v4334 = vunpack.c.l.b16 %v4285
  %v4335 = vunpack.c.l.b16 %v4286
  %v4336 = vunpack.c.l.b16 %v4287
  %v4337 = vunpack.c.l.b16 %v4288
  %v4338 = vunpack.c.l.b16 %v4289
  %v4339 = vunpack.c.l.b16 %v4290
  %v4340 = vunpack.c.l.b16 %v4291
  %v4341 = vunpack.c.l.b16 %v4292
  %v4342 = vpack.c.b16 %v4327, %v4326
  %v4343 = vpack.c.b16 %v4329, %v4328
  %v4344 = vpack.c.b16 %v4331, %v4330
  %v4345 = vpack.c.b16 %v4333, %v4332
  %v4346 = vpack.c.b16 %v4335, %v4334
  %v4347 = vpack.c.b16 %v4337, %v4336
  %v4348 = vpack.c.b16 %v4339, %v4338
  %v4349 = vpack.c.b16 %v4341, %v4340
  %v4374 = vunpack.c.l.b16 %v4294
  %v4375 = vunpack.c.l.b16 %v4295
  %v4376 = vunpack.c.l.b16 %v4296
  %v4377 = vunpack.c.l.b16 %v4297
  %v4378 = vunpack.c.l.b16 %v4298
  %v4379 = vunpack.c.l.b16 %v4299
  %v4380 = vunpack.c.l.b16 %v4300
  %v4381 = vunpack.c.l.b16 %v4301
  %v4382 = vunpack.c.l.b16 %v4302
  %v4383 = vunpack.c.l.b16 %v4303
  %v4384 = vunpack.c.l.b16 %v4304
  %v4385 = vunpack.c.l.b16 %v4305
  %v4386 = vunpack.c.l.b16 %v4306
  %v4387 = vunpack.c.l.b16 %v4307
  %v4388 = vunpack.c.l.b16 %v4308
  %v4389 = vunpack.c.l.b16 %v4309
  %v4390 = vpack.c.b16 %v4375, %v4374
  %v4391 = vpack.c.b16 %v4377, %v4376
  %v4392 = vpack.c.b16 %v4379, %v4378
  %v4393 = vpack.c.b16 %v4381, %v4380
  %v4394 = vpack.c.b16 %v4383, %v4382
  %v4395 = vpack.c.b16 %v4385, %v4384
  %v4396 = vpack.c.b16 %v4387, %v4386
  %v4397 = vpack.c.b16 %v4389, %v4388
  %4406 = vmatprep.subr.bf16.mxu0 0
  %4407 = vmatpush1.bf16.msra.mxu0 %v4390
  %4408 = vmatprep.subr.bf16.mxu0 0
  %4409 = vmatpush1.bf16.msra.mxu0 %v4391
  %4410 = vmatprep.subr.bf16.mxu0 0
  %4411 = vmatpush1.bf16.msra.mxu0 %v4392
  %4412 = vmatprep.subr.bf16.mxu0 0
  %4413 = vmatpush1.bf16.msra.mxu0 %v4393
  %4414 = vmatprep.subr.bf16.mxu0 0
  %4415 = vmatpush1.bf16.msra.mxu0 %v4394
  %4416 = vmatprep.subr.bf16.mxu0 0
  %4417 = vmatpush1.bf16.msra.mxu0 %v4395
  %4418 = vmatprep.subr.bf16.mxu0 0
  %4419 = vmatpush1.bf16.msra.mxu0 %v4396
  %4420 = vmatprep.subr.bf16.mxu0 0
  %4421 = vmatpush1.bf16.msra.mxu0 %v4397
  %4422 = vmatprep.subr.bf16.mxu0 0
  %4423 = vmatpush1.bf16.msra.mxu0 0
  %4424 = vmatprep.subr.bf16.mxu0 0
  %4425 = vmatpush1.bf16.msra.mxu0 0
  %4426 = vmatprep.subr.bf16.mxu0 0
  %4427 = vmatpush1.bf16.msra.mxu0 0
  %4428 = vmatprep.subr.bf16.mxu0 0
  %4429 = vmatpush1.bf16.msra.mxu0 0
  %4430 = vmatprep.subr.bf16.mxu0 0
  %4431 = vmatpush1.bf16.msra.mxu0 0
  %4432 = vmatprep.subr.bf16.mxu0 0
  %4433 = vmatpush1.bf16.msra.mxu0 0
  %4434 = vmatprep.subr.bf16.mxu0 0
  %4435 = vmatpush1.bf16.msra.mxu0 0
  %4436 = vmatprep.subr.bf16.mxu0 0
  %4437 = vmatpush1.bf16.msra.mxu0 0
  %4438 = vmatprep.mubr.bf16.mxu0 0
  %4439 = vmatmul.mubr.bf16.gmra.mrb[0].mxu0 %v4342
  %v4440 = vpop.f32.mrb[0].mxu0
  %v4441 = vadd.f32 0.0, %v4440
  %v4442 = vpop.f32.mrb[0].mxu0
  %v4443 = vpop.f32.mrb[0].mxu0
  %v4444 = vadd.f32 0.0, %v4443
  %v4445 = vpop.f32.mrb[0].mxu0
  %4446 = vmatprep.mubr.bf16.mxu0 0
  %4447 = vmatmul.mubr.bf16.gmra.mrb[0].mxu0 %v4343
  %v4448 = vpop.f32.mrb[0].mxu0
  %v4449 = vadd.f32 0.0, %v4448
  %v4450 = vpop.f32.mrb[0].mxu0
  %v4451 = vpop.f32.mrb[0].mxu0
  %v4452 = vadd.f32 0.0, %v4451
  %v4453 = vpop.f32.mrb[0].mxu0
  %4454 = vmatprep.mubr.bf16.mxu0 0
  %4455 = vmatmul.mubr.bf16.gmra.mrb[0].mxu0 %v4344
  %v4456 = vpop.f32.mrb[0].mxu0
  %v4457 = vadd.f32 0.0, %v4456
  %v4458 = vpop.f32.mrb[0].mxu0
  %v4459 = vpop.f32.mrb[0].mxu0
  %v4460 = vadd.f32 0.0, %v4459
  %v4461 = vpop.f32.mrb[0].mxu0
  %4462 = vmatprep.mubr.bf16.mxu0 0
  %4463 = vmatmul.mubr.bf16.gmra.mrb[0].mxu0 %v4345
  %v4464 = vpop.f32.mrb[0].mxu0
  %v4465 = vadd.f32 0.0, %v4464
  %v4466 = vpop.f32.mrb[0].mxu0
  %v4467 = vpop.f32.mrb[0].mxu0
  %v4468 = vadd.f32 0.0, %v4467
  %v4469 = vpop.f32.mrb[0].mxu0
  %4470 = vmatprep.mubr.bf16.mxu0 0
  %4471 = vmatmul.mubr.bf16.gmra.mrb[0].mxu0 %v4346
  %v4472 = vpop.f32.mrb[0].mxu0
  %v4473 = vadd.f32 0.0, %v4472
  %v4474 = vpop.f32.mrb[0].mxu0
  %v4475 = vpop.f32.mrb[0].mxu0
  %v4476 = vadd.f32 0.0, %v4475
  %v4477 = vpop.f32.mrb[0].mxu0
  %4478 = vmatprep.mubr.bf16.mxu0 0
  %4479 = vmatmul.mubr.bf16.gmra.mrb[0].mxu0 %v4347
  %v4480 = vpop.f32.mrb[0].mxu0
  %v4481 = vadd.f32 0.0, %v4480
  %v4482 = vpop.f32.mrb[0].mxu0
  %v4483 = vpop.f32.mrb[0].mxu0
  %v4484 = vadd.f32 0.0, %v4483
  %v4485 = vpop.f32.mrb[0].mxu0
  %4486 = vmatprep.mubr.bf16.mxu0 0
  %4487 = vmatmul.mubr.bf16.gmra.mrb[0].mxu0 %v4348
  %v4488 = vpop.f32.mrb[0].mxu0
  %v4489 = vadd.f32 0.0, %v4488
  %v4490 = vpop.f32.mrb[0].mxu0
  %v4491 = vpop.f32.mrb[0].mxu0
  %v4492 = vadd.f32 0.0, %v4491
  %v4493 = vpop.f32.mrb[0].mxu0
  %4494 = vmatprep.mubr.bf16.mxu0 0
  %4495 = vmatmul.mubr.bf16.gmra.mrb[0].mxu0 %v4349
  %v4496 = vpop.f32.mrb[0].mxu0
  %v4497 = vadd.f32 0.0, %v4496
  %v4498 = vpop.f32.mrb[0].mxu0
  %v4499 = vpop.f32.mrb[0].mxu0
  %v4500 = vadd.f32 0.0, %v4499
  %v4501 = vpop.f32.mrb[0].mxu0
  %4502 = vdwg.mxu0
  %v4503 = vadd.f32 %v4261, %v4441
  %v4504 = vadd.f32 %v4262, %v4444
  %v4505 = vadd.f32 %v4263, %v4449
  %v4506 = vadd.f32 %v4264, %v4452
  %v4507 = vadd.f32 %v4265, %v4457
  %v4508 = vadd.f32 %v4266, %v4460
  %v4509 = vadd.f32 %v4267, %v4465
  %v4510 = vadd.f32 %v4268, %v4468
  %v4511 = vadd.f32 %v4269, %v4473
  %v4512 = vadd.f32 %v4270, %v4476
  %v4513 = vadd.f32 %v4271, %v4481
  %v4514 = vadd.f32 %v4272, %v4484
  %v4515 = vadd.f32 %v4273, %v4489
  %v4516 = vadd.f32 %v4274, %v4492
  %v4517 = vadd.f32 %v4275, %v4497
  %v4518 = vadd.f32 %v4276, %v4500
  %v4519 = vpack.c.bf16 %v4504, %v4503
  %v4520 = vpack.c.bf16 %v4506, %v4505
  %v4521 = vpack.c.bf16 %v4508, %v4507
  %v4522 = vpack.c.bf16 %v4510, %v4509
  %v4523 = vpack.c.bf16 %v4512, %v4511
  %v4524 = vpack.c.bf16 %v4514, %v4513
  %v4525 = vpack.c.bf16 %v4516, %v4515
  %v4526 = vpack.c.bf16 %v4518, %v4517
  %v4535 = vunpack.c.l.b16 %v4519
  %v4536 = vunpack.c.h.b16 %v4519
  %v4537 = vunpack.c.l.b16 %v4520
  %v4538 = vunpack.c.h.b16 %v4520
  %v4539 = vunpack.c.l.b16 %v4521
  %v4540 = vunpack.c.h.b16 %v4521
  %v4541 = vunpack.c.l.b16 %v4522
  %v4542 = vunpack.c.h.b16 %v4522
  %v4543 = vunpack.c.l.b16 %v4523
  %v4544 = vunpack.c.h.b16 %v4523
  %v4545 = vunpack.c.l.b16 %v4524
  %v4546 = vunpack.c.h.b16 %v4524
  %v4547 = vunpack.c.l.b16 %v4525
  %v4548 = vunpack.c.h.b16 %v4525
  %v4549 = vunpack.c.l.b16 %v4526
  %v4550 = vunpack.c.h.b16 %v4526
  %v4551 = vpack.c.b16 %v4535, %v4535
  %v4552 = vpack.c.b16 %v4536, %v4536
  %v4553 = vpack.c.b16 %v4537, %v4537
  %v4554 = vpack.c.b16 %v4538, %v4538
  %v4555 = vpack.c.b16 %v4539, %v4539
  %v4556 = vpack.c.b16 %v4540, %v4540
  %v4557 = vpack.c.b16 %v4541, %v4541
  %v4558 = vpack.c.b16 %v4542, %v4542
  %v4559 = vpack.c.b16 %v4543, %v4543
  %v4560 = vpack.c.b16 %v4544, %v4544
  %v4561 = vpack.c.b16 %v4545, %v4545
  %v4562 = vpack.c.b16 %v4546, %v4546
  %v4563 = vpack.c.b16 %v4547, %v4547
  %v4564 = vpack.c.b16 %v4548, %v4548
  %v4565 = vpack.c.b16 %v4549, %v4549
  %v4566 = vpack.c.b16 %v4550, %v4550
  %s4583 = scalar_lea.vmem %s3, 192
  %4584 = vst.msk [vmem:[%s4583] sm:$0xf] %vm1019, %v4551
  %4585 = vst.msk [vmem:[%s4583 + $0x4] sm:$0xf] %vm1019, %v4552
  %4586 = vst.msk [vmem:[%s4583 + $0x8] sm:$0xf] %vm1019, %v4553
  %4587 = vst.msk [vmem:[%s4583 + $0xc] sm:$0xf] %vm1019, %v4554
  %4588 = vst.msk [vmem:[%s4583 + $0x10] sm:$0xf] %vm1019, %v4555
  %4589 = vst.msk [vmem:[%s4583 + $0x14] sm:$0xf] %vm1019, %v4556
  %4590 = vst.msk [vmem:[%s4583 + $0x18] sm:$0xf] %vm1019, %v4557
  %4591 = vst.msk [vmem:[%s4583 + $0x1c] sm:$0xf] %vm1019, %v4558
  %4592 = vst.msk [vmem:[%s4583 + $0x20] sm:$0xf] %vm1019, %v4559
  %4593 = vst.msk [vmem:[%s4583 + $0x24] sm:$0xf] %vm1019, %v4560
  %4594 = vst.msk [vmem:[%s4583 + $0x28] sm:$0xf] %vm1019, %v4561
  %4595 = vst.msk [vmem:[%s4583 + $0x2c] sm:$0xf] %vm1019, %v4562
  %4596 = vst.msk [vmem:[%s4583 + $0x30] sm:$0xf] %vm1019, %v4563
  %4597 = vst.msk [vmem:[%s4583 + $0x34] sm:$0xf] %vm1019, %v4564
  %4598 = vst.msk [vmem:[%s4583 + $0x38] sm:$0xf] %vm1019, %v4565
  %4599 = vst.msk [vmem:[%s4583 + $0x3c] sm:$0xf] %vm1019, %v4566
  %s4600 = scalar_lea.vmem %s2, 96
  %v4601 = vld [vmem:[%s4600] sm:$0xf]
  %v4602 = vld [vmem:[%s4600 + $0x4] sm:$0xf]
  %v4603 = vld [vmem:[%s4600 + $0x8] sm:$0xf]
  %v4604 = vld [vmem:[%s4600 + $0xc] sm:$0xf]
  %v4605 = vld [vmem:[%s4600 + $0x10] sm:$0xf]
  %v4606 = vld [vmem:[%s4600 + $0x14] sm:$0xf]
  %v4607 = vld [vmem:[%s4600 + $0x18] sm:$0xf]
  %v4608 = vld [vmem:[%s4600 + $0x1c] sm:$0xf]
  %v4617 = vunpack.c.l.b16 %v4601
  %v4618 = vunpack.c.l.b16 %v4602
  %v4619 = vunpack.c.l.b16 %v4603
  %v4620 = vunpack.c.l.b16 %v4604
  %v4621 = vunpack.c.l.b16 %v4605
  %v4622 = vunpack.c.l.b16 %v4606
  %v4623 = vunpack.c.l.b16 %v4607
  %v4624 = vunpack.c.l.b16 %v4608
  %v4625 = vpack.c.b16 %v4618, %v4617
  %v4626 = vpack.c.b16 %v4620, %v4619
  %v4627 = vpack.c.b16 %v4622, %v4621
  %v4628 = vpack.c.b16 %v4624, %v4623
  %v4634 = vsel %vm1068, %v4519, 0
  %v4637 = vsel %vm1068, %v4520, 0
  %v4640 = vsel %vm1068, %v4521, 0
  %v4643 = vsel %vm1068, %v4522, 0
  %v4646 = vsel %vm1068, %v4523, 0
  %v4649 = vsel %vm1068, %v4524, 0
  %v4652 = vsel %vm1068, %v4525, 0
  %v4655 = vsel %vm1068, %v4526, 0
  %4657 = vmatprep.subr.bf16.mxu0 0
  %4658 = vmatpush1.bf16.msra.mxu0 %v4625
  %4659 = vmatprep.subr.bf16.mxu0 0
  %4660 = vmatpush1.bf16.msra.mxu0 %v4626
  %4661 = vmatprep.subr.bf16.mxu0 0
  %4662 = vmatpush1.bf16.msra.mxu0 %v4627
  %4663 = vmatprep.subr.bf16.mxu0 0
  %4664 = vmatpush1.bf16.msra.mxu0 %v4628
  %4665 = vmatprep.subr.bf16.mxu0 0
  %4666 = vmatpush1.bf16.msra.mxu0 0
  %4667 = vmatprep.subr.bf16.mxu0 0
  %4668 = vmatpush1.bf16.msra.mxu0 0
  %4669 = vmatprep.subr.bf16.mxu0 0
  %4670 = vmatpush1.bf16.msra.mxu0 0
  %4671 = vmatprep.subr.bf16.mxu0 0
  %4672 = vmatpush1.bf16.msra.mxu0 0
  %4673 = vmatprep.subr.bf16.mxu0 0
  %4674 = vmatpush1.bf16.msra.mxu0 0
  %4675 = vmatprep.subr.bf16.mxu0 0
  %4676 = vmatpush1.bf16.msra.mxu0 0
  %4677 = vmatprep.subr.bf16.mxu0 0
  %4678 = vmatpush1.bf16.msra.mxu0 0
  %4679 = vmatprep.subr.bf16.mxu0 0
  %4680 = vmatpush1.bf16.msra.mxu0 0
  %4681 = vmatprep.subr.bf16.mxu0 0
  %4682 = vmatpush1.bf16.msra.mxu0 0
  %4683 = vmatprep.subr.bf16.mxu0 0
  %4684 = vmatpush1.bf16.msra.mxu0 0
  %4685 = vmatprep.subr.bf16.mxu0 0
  %4686 = vmatpush1.bf16.msra.mxu0 0
  %4687 = vmatprep.subr.bf16.mxu0 0
  %4688 = vmatpush1.bf16.msra.mxu0 0
  %4689 = vmatprep.mubr.bf16.mxu0 0
  %4690 = vmatmul.mubr.bf16.gmra.mrb[0].mxu0 %v4634
  %v4691 = vpop.f32.mrb[0].mxu0
  %v4692 = vadd.f32 0.0, %v4691
  %v4693 = vpop.f32.mrb[0].mxu0
  %v4694 = vpop.f32.mrb[0].mxu0
  %v4695 = vadd.f32 0.0, %v4694
  %v4696 = vpop.f32.mrb[0].mxu0
  %4697 = vmatprep.mubr.bf16.mxu0 0
  %4698 = vmatmul.mubr.bf16.gmra.mrb[0].mxu0 %v4637
  %v4699 = vpop.f32.mrb[0].mxu0
  %v4700 = vadd.f32 0.0, %v4699
  %v4701 = vpop.f32.mrb[0].mxu0
  %v4702 = vpop.f32.mrb[0].mxu0
  %v4703 = vadd.f32 0.0, %v4702
  %v4704 = vpop.f32.mrb[0].mxu0
  %4705 = vmatprep.mubr.bf16.mxu0 0
  %4706 = vmatmul.mubr.bf16.gmra.mrb[0].mxu0 %v4640
  %v4707 = vpop.f32.mrb[0].mxu0
  %v4708 = vadd.f32 0.0, %v4707
  %v4709 = vpop.f32.mrb[0].mxu0
  %v4710 = vpop.f32.mrb[0].mxu0
  %v4711 = vadd.f32 0.0, %v4710
  %v4712 = vpop.f32.mrb[0].mxu0
  %4713 = vmatprep.mubr.bf16.mxu0 0
  %4714 = vmatmul.mubr.bf16.gmra.mrb[0].mxu0 %v4643
  %v4715 = vpop.f32.mrb[0].mxu0
  %v4716 = vadd.f32 0.0, %v4715
  %v4717 = vpop.f32.mrb[0].mxu0
  %v4718 = vpop.f32.mrb[0].mxu0
  %v4719 = vadd.f32 0.0, %v4718
  %v4720 = vpop.f32.mrb[0].mxu0
  %4721 = vmatprep.mubr.bf16.mxu0 0
  %4722 = vmatmul.mubr.bf16.gmra.mrb[0].mxu0 %v4646
  %v4723 = vpop.f32.mrb[0].mxu0
  %v4724 = vadd.f32 0.0, %v4723
  %v4725 = vpop.f32.mrb[0].mxu0
  %v4726 = vpop.f32.mrb[0].mxu0
  %v4727 = vadd.f32 0.0, %v4726
  %v4728 = vpop.f32.mrb[0].mxu0
  %4729 = vmatprep.mubr.bf16.mxu0 0
  %4730 = vmatmul.mubr.bf16.gmra.mrb[0].mxu0 %v4649
  %v4731 = vpop.f32.mrb[0].mxu0
  %v4732 = vadd.f32 0.0, %v4731
  %v4733 = vpop.f32.mrb[0].mxu0
  %v4734 = vpop.f32.mrb[0].mxu0
  %v4735 = vadd.f32 0.0, %v4734
  %v4736 = vpop.f32.mrb[0].mxu0
  %4737 = vmatprep.mubr.bf16.mxu0 0
  %4738 = vmatmul.mubr.bf16.gmra.mrb[0].mxu0 %v4652
  %v4739 = vpop.f32.mrb[0].mxu0
  %v4740 = vadd.f32 0.0, %v4739
  %v4741 = vpop.f32.mrb[0].mxu0
  %v4742 = vpop.f32.mrb[0].mxu0
  %v4743 = vadd.f32 0.0, %v4742
  %v4744 = vpop.f32.mrb[0].mxu0
  %4745 = vmatprep.mubr.bf16.mxu0 0
  %4746 = vmatmul.mubr.bf16.gmra.mrb[0].mxu0 %v4655
  %v4747 = vpop.f32.mrb[0].mxu0
  %v4748 = vadd.f32 0.0, %v4747
  %v4749 = vpop.f32.mrb[0].mxu0
  %v4750 = vpop.f32.mrb[0].mxu0
  %v4751 = vadd.f32 0.0, %v4750
  %v4752 = vpop.f32.mrb[0].mxu0
  %4753 = vdwg.mxu0
  %s4754 = scalar_lea.vmem %s4, 384
  %4755 = vst.msk [vmem:[%s4754] sm:$0xff] %vm1190, %v4692
  %4756 = vst.msk [vmem:[%s4754 + $0x8] sm:$0xff] %vm1190, %v4695
  %4757 = vst.msk [vmem:[%s4754 + $0x10] sm:$0xff] %vm1190, %v4700
  %4758 = vst.msk [vmem:[%s4754 + $0x18] sm:$0xff] %vm1190, %v4703
  %4759 = vst.msk [vmem:[%s4754 + $0x20] sm:$0xff] %vm1190, %v4708
  %4760 = vst.msk [vmem:[%s4754 + $0x28] sm:$0xff] %vm1190, %v4711
  %4761 = vst.msk [vmem:[%s4754 + $0x30] sm:$0xff] %vm1190, %v4716
  %4762 = vst.msk [vmem:[%s4754 + $0x38] sm:$0xff] %vm1190, %v4719
  %4763 = vst.msk [vmem:[%s4754 + $0x40] sm:$0xff] %vm1190, %v4724
  %4764 = vst.msk [vmem:[%s4754 + $0x48] sm:$0xff] %vm1190, %v4727
  %4765 = vst.msk [vmem:[%s4754 + $0x50] sm:$0xff] %vm1190, %v4732
  %4766 = vst.msk [vmem:[%s4754 + $0x58] sm:$0xff] %vm1190, %v4735
  %4767 = vst.msk [vmem:[%s4754 + $0x60] sm:$0xff] %vm1190, %v4740
  %4768 = vst.msk [vmem:[%s4754 + $0x68] sm:$0xff] %vm1190, %v4743
  %4769 = vst.msk [vmem:[%s4754 + $0x70] sm:$0xff] %vm1190, %v4748
  %4770 = vst.msk [vmem:[%s4754 + $0x78] sm:$0xff] %vm1190, %v4751
  // Predicated region
  $region14: #{gat_model_forward.7} parent=0 // pred_check
    _
  $region15: #{gat_model_forward.7} parent=0 // pred_check_branch
    %4772 = sbr.rel (0) target = $region17
  $region16: #{gat_model_forward.7} parent=0 // pred_region
    _
  $region17: #{gat_model_forward.7} parent=0 // pred_fallthru
    _
  // Predicated region
  $region18: #{gat_model_forward.7} parent=0 // pred_check
    _
  $region19: #{gat_model_forward.7} parent=0 // pred_check_branch
    %4774 = sbr.rel (0) target = $region21
  $region20: #{gat_model_forward.7} parent=0 // pred_region
    _
  $region21: #{gat_model_forward.7} parent=0 // pred_fallthru
    _
  // Predicated region
  $region22: #{gat_model_forward.7} parent=0 // pred_check
    _
  $region23: #{gat_model_forward.7} parent=0 // pred_check_branch
    %4776 = sbr.rel (0) target = $region25
  $region24: #{gat_model_forward.7} parent=0 // pred_region
    _
  $region25: #{gat_model_forward.7} parent=0 // pred_fallthru
    _
  // Predicated region
  $region26: #{gat_model_forward.7} parent=0 // pred_check
    _
  $region27: #{gat_model_forward.7} parent=0 // pred_check_branch
    %4778 = sbr.rel (0) target = $region29
  $region28: #{gat_model_forward.7} parent=0 // pred_region
    _
  $region29: #{gat_model_forward.7} parent=0 // pred_fallthru
    _

// kernel: gat_model_forward.9
$region0: #{gat_model_forward.9}
  #allocation0 [shape = 'u32[]', space=smem, size = 0x4, offset = 0x4, fixed_abs, tag = 'smem constant byte address 0x4 - core index']
  #allocation1 [shape = 'u32[144,128]{1,0:T(1,128)}', space=vmem, size = 0x12000, scoped, tag = 'internal scratch']
  %s0 = inlined_call_operand.vmem [shape: bf16[4,128,64], index: 0, kind: input, shape index: {}]
  %s1 = inlined_call_operand.vmem [shape: bf16[4,64,128], index: 1, kind: input, shape index: {}]
  %s2 = inlined_call_operand.vmem [shape: f32[1,128], index: 2, kind: input, shape index: {}]
  %s3 = inlined_call_operand.vmem [shape: f32[128,128], index: 3, kind: output, shape index: {}]
  %s4 = sld [smem:[#allocation0]]
  $region22: #{gat_model_forward.9} parent=0
    _
  %s6 = ssub.s32 1, %s4
  %s7 = scalar_select 0, %s6, %s4
  // Predicated region
  $region2: #{gat_model_forward.9} parent=0 // pred_check
    _
  $region3: #{gat_model_forward.9} parent=0 // pred_check_branch
    %9 = sbr.rel (0) target = $region5
  $region4: #{gat_model_forward.9} parent=0 // pred_region
    _
  $region5: #{gat_model_forward.9} parent=0 // pred_fallthru
    _
  // Predicated region
  $region6: #{gat_model_forward.9} parent=0 // pred_check
    _
  $region7: #{gat_model_forward.9} parent=0 // pred_check_branch
    %11 = sbr.rel (0) target = $region9
  $region8: #{gat_model_forward.9} parent=0 // pred_region
    _
  $region9: #{gat_model_forward.9} parent=0 // pred_fallthru
    _
  // Predicated region
  $region10: #{gat_model_forward.9} parent=0 // pred_check
    _
  $region11: #{gat_model_forward.9} parent=0 // pred_check_branch
    %13 = sbr.rel (0) target = $region13
  $region12: #{gat_model_forward.9} parent=0 // pred_region
    _
  $region13: #{gat_model_forward.9} parent=0 // pred_fallthru
    _
  %v15 = vld [vmem:[%s0] sm:$0xf]
  %v16 = vld [vmem:[%s0 + $0x4] sm:$0xf]
  %v17 = vld [vmem:[%s0 + $0x8] sm:$0xf]
  %v18 = vld [vmem:[%s0 + $0xc] sm:$0xf]
  %v19 = vld [vmem:[%s0 + $0x10] sm:$0xf]
  %v20 = vld [vmem:[%s0 + $0x14] sm:$0xf]
  %v21 = vld [vmem:[%s0 + $0x18] sm:$0xf]
  %v22 = vld [vmem:[%s0 + $0x1c] sm:$0xf]
  %v23 = vld [vmem:[%s0 + $0x20] sm:$0xf]
  %v24 = vld [vmem:[%s0 + $0x24] sm:$0xf]
  %v25 = vld [vmem:[%s0 + $0x28] sm:$0xf]
  %v26 = vld [vmem:[%s0 + $0x2c] sm:$0xf]
  %v27 = vld [vmem:[%s0 + $0x30] sm:$0xf]
  %v28 = vld [vmem:[%s0 + $0x34] sm:$0xf]
  %v29 = vld [vmem:[%s0 + $0x38] sm:$0xf]
  %v30 = vld [vmem:[%s0 + $0x3c] sm:$0xf]
  %v31 = vld [vmem:[%s1] sm:$0xf]
  %v32 = vld [vmem:[%s1 + $0x4] sm:$0xf]
  %v33 = vld [vmem:[%s1 + $0x8] sm:$0xf]
  %v34 = vld [vmem:[%s1 + $0xc] sm:$0xf]
  %v35 = vld [vmem:[%s1 + $0x10] sm:$0xf]
  %v36 = vld [vmem:[%s1 + $0x14] sm:$0xf]
  %v37 = vld [vmem:[%s1 + $0x18] sm:$0xf]
  %v38 = vld [vmem:[%s1 + $0x1c] sm:$0xf]
  %s39 = scalar_lea.vmem %s0, 64
  %v40 = vld [vmem:[%s39] sm:$0xf]
  %v41 = vld [vmem:[%s39 + $0x4] sm:$0xf]
  %v42 = vld [vmem:[%s39 + $0x8] sm:$0xf]
  %v43 = vld [vmem:[%s39 + $0xc] sm:$0xf]
  %v44 = vld [vmem:[%s39 + $0x10] sm:$0xf]
  %v45 = vld [vmem:[%s39 + $0x14] sm:$0xf]
  %v46 = vld [vmem:[%s39 + $0x18] sm:$0xf]
  %v47 = vld [vmem:[%s39 + $0x1c] sm:$0xf]
  %v48 = vld [vmem:[%s39 + $0x20] sm:$0xf]
  %v49 = vld [vmem:[%s39 + $0x24] sm:$0xf]
  %v50 = vld [vmem:[%s39 + $0x28] sm:$0xf]
  %v51 = vld [vmem:[%s39 + $0x2c] sm:$0xf]
  %v52 = vld [vmem:[%s39 + $0x30] sm:$0xf]
  %v53 = vld [vmem:[%s39 + $0x34] sm:$0xf]
  %v54 = vld [vmem:[%s39 + $0x38] sm:$0xf]
  %v55 = vld [vmem:[%s39 + $0x3c] sm:$0xf]
  %s56 = scalar_lea.vmem %s1, 32
  %v57 = vld [vmem:[%s56] sm:$0xf]
  %v58 = vld [vmem:[%s56 + $0x4] sm:$0xf]
  %v59 = vld [vmem:[%s56 + $0x8] sm:$0xf]
  %v60 = vld [vmem:[%s56 + $0xc] sm:$0xf]
  %v61 = vld [vmem:[%s56 + $0x10] sm:$0xf]
  %v62 = vld [vmem:[%s56 + $0x14] sm:$0xf]
  %v63 = vld [vmem:[%s56 + $0x18] sm:$0xf]
  %v64 = vld [vmem:[%s56 + $0x1c] sm:$0xf]
  %v81 = vunpack.c.l.b16 %v40
  %v82 = vunpack.c.l.b16 %v41
  %v83 = vunpack.c.l.b16 %v42
  %v84 = vunpack.c.l.b16 %v43
  %v85 = vunpack.c.l.b16 %v44
  %v86 = vunpack.c.l.b16 %v45
  %v87 = vunpack.c.l.b16 %v46
  %v88 = vunpack.c.l.b16 %v47
  %v89 = vunpack.c.l.b16 %v48
  %v90 = vunpack.c.l.b16 %v49
  %v91 = vunpack.c.l.b16 %v50
  %v92 = vunpack.c.l.b16 %v51
  %v93 = vunpack.c.l.b16 %v52
  %v94 = vunpack.c.l.b16 %v53
  %v95 = vunpack.c.l.b16 %v54
  %v96 = vunpack.c.l.b16 %v55
  %v97 = vpack.c.b16 %v82, %v81
  %v98 = vpack.c.b16 %v84, %v83
  %v99 = vpack.c.b16 %v86, %v85
  %v100 = vpack.c.b16 %v88, %v87
  %v101 = vpack.c.b16 %v90, %v89
  %v102 = vpack.c.b16 %v92, %v91
  %v103 = vpack.c.b16 %v94, %v93
  %v104 = vpack.c.b16 %v96, %v95
  %v113 = vunpack.c.l.b16 %v57
  %v114 = vunpack.c.l.b16 %v58
  %v115 = vunpack.c.l.b16 %v59
  %v116 = vunpack.c.l.b16 %v60
  %v117 = vunpack.c.l.b16 %v61
  %v118 = vunpack.c.l.b16 %v62
  %v119 = vunpack.c.l.b16 %v63
  %v120 = vunpack.c.l.b16 %v64
  %v121 = vpack.c.b16 %v114, %v113
  %v122 = vpack.c.b16 %v116, %v115
  %v123 = vpack.c.b16 %v118, %v117
  %v124 = vpack.c.b16 %v120, %v119
  %vm129 = vcmask 523264
  %v131 = vsel %vm129, %v97, 0
  %v134 = vsel %vm129, %v98, 0
  %v137 = vsel %vm129, %v99, 0
  %v140 = vsel %vm129, %v100, 0
  %v143 = vsel %vm129, %v101, 0
  %v146 = vsel %vm129, %v102, 0
  %v149 = vsel %vm129, %v103, 0
  %v152 = vsel %vm129, %v104, 0
  %154 = vmatprep.subr.bf16.mxu0 0
  %155 = vmatpush1.bf16.msra.mxu0 %v121
  %156 = vmatprep.subr.bf16.mxu0 0
  %157 = vmatpush1.bf16.msra.mxu0 %v122
  %158 = vmatprep.subr.bf16.mxu0 0
  %159 = vmatpush1.bf16.msra.mxu0 %v123
  %160 = vmatprep.subr.bf16.mxu0 0
  %161 = vmatpush1.bf16.msra.mxu0 %v124
  %162 = vmatprep.subr.bf16.mxu0 0
  %163 = vmatpush1.bf16.msra.mxu0 0
  %164 = vmatprep.subr.bf16.mxu0 0
  %165 = vmatpush1.bf16.msra.mxu0 0
  %166 = vmatprep.subr.bf16.mxu0 0
  %167 = vmatpush1.bf16.msra.mxu0 0
  %168 = vmatprep.subr.bf16.mxu0 0
  %169 = vmatpush1.bf16.msra.mxu0 0
  %170 = vmatprep.subr.bf16.mxu0 0
  %171 = vmatpush1.bf16.msra.mxu0 0
  %172 = vmatprep.subr.bf16.mxu0 0
  %173 = vmatpush1.bf16.msra.mxu0 0
  %174 = vmatprep.subr.bf16.mxu0 0
  %175 = vmatpush1.bf16.msra.mxu0 0
  %176 = vmatprep.subr.bf16.mxu0 0
  %177 = vmatpush1.bf16.msra.mxu0 0
  %178 = vmatprep.subr.bf16.mxu0 0
  %179 = vmatpush1.bf16.msra.mxu0 0
  %180 = vmatprep.subr.bf16.mxu0 0
  %181 = vmatpush1.bf16.msra.mxu0 0
  %182 = vmatprep.subr.bf16.mxu0 0
  %183 = vmatpush1.bf16.msra.mxu0 0
  %184 = vmatprep.subr.bf16.mxu0 0
  %185 = vmatpush1.bf16.msra.mxu0 0
  %186 = vmatprep.mubr.bf16.mxu0 0
  %187 = vmatmul.mubr.bf16.gmra.mrb[0].mxu0 %v131
  %v188 = vpop.f32.mrb[0].mxu0
  %v189 = vadd.f32 0.0, %v188
  %v190 = vpop.f32.mrb[0].mxu0
  %v191 = vpop.f32.mrb[0].mxu0
  %v192 = vadd.f32 0.0, %v191
  %v193 = vpop.f32.mrb[0].mxu0
  %194 = vmatprep.mubr.bf16.mxu0 0
  %195 = vmatmul.mubr.bf16.gmra.mrb[0].mxu0 %v134
  %v196 = vpop.f32.mrb[0].mxu0
  %v197 = vadd.f32 0.0, %v196
  %v198 = vpop.f32.mrb[0].mxu0
  %v199 = vpop.f32.mrb[0].mxu0
  %v200 = vadd.f32 0.0, %v199
  %v201 = vpop.f32.mrb[0].mxu0
  %202 = vmatprep.mubr.bf16.mxu0 0
  %203 = vmatmul.mubr.bf16.gmra.mrb[0].mxu0 %v137
  %v204 = vpop.f32.mrb[0].mxu0
  %v205 = vadd.f32 0.0, %v204
  %v206 = vpop.f32.mrb[0].mxu0
  %v207 = vpop.f32.mrb[0].mxu0
  %v208 = vadd.f32 0.0, %v207
  %v209 = vpop.f32.mrb[0].mxu0
  %210 = vmatprep.mubr.bf16.mxu0 0
  %211 = vmatmul.mubr.bf16.gmra.mrb[0].mxu0 %v140
  %v212 = vpop.f32.mrb[0].mxu0
  %v213 = vadd.f32 0.0, %v212
  %v214 = vpop.f32.mrb[0].mxu0
  %v215 = vpop.f32.mrb[0].mxu0
  %v216 = vadd.f32 0.0, %v215
  %v217 = vpop.f32.mrb[0].mxu0
  %218 = vmatprep.mubr.bf16.mxu0 0
  %219 = vmatmul.mubr.bf16.gmra.mrb[0].mxu0 %v143
  %v220 = vpop.f32.mrb[0].mxu0
  %v221 = vadd.f32 0.0, %v220
  %v222 = vpop.f32.mrb[0].mxu0
  %v223 = vpop.f32.mrb[0].mxu0
  %v224 = vadd.f32 0.0, %v223
  %v225 = vpop.f32.mrb[0].mxu0
  %226 = vmatprep.mubr.bf16.mxu0 0
  %227 = vmatmul.mubr.bf16.gmra.mrb[0].mxu0 %v146
  %v228 = vpop.f32.mrb[0].mxu0
  %v229 = vadd.f32 0.0, %v228
  %v230 = vpop.f32.mrb[0].mxu0
  %v231 = vpop.f32.mrb[0].mxu0
  %v232 = vadd.f32 0.0, %v231
  %v233 = vpop.f32.mrb[0].mxu0
  %234 = vmatprep.mubr.bf16.mxu0 0
  %235 = vmatmul.mubr.bf16.gmra.mrb[0].mxu0 %v149
  %v236 = vpop.f32.mrb[0].mxu0
  %v237 = vadd.f32 0.0, %v236
  %v238 = vpop.f32.mrb[0].mxu0
  %v239 = vpop.f32.mrb[0].mxu0
  %v240 = vadd.f32 0.0, %v239
  %v241 = vpop.f32.mrb[0].mxu0
  %242 = vmatprep.mubr.bf16.mxu0 0
  %243 = vmatmul.mubr.bf16.gmra.mrb[0].mxu0 %v152
  %v244 = vpop.f32.mrb[0].mxu0
  %v245 = vadd.f32 0.0, %v244
  %v246 = vpop.f32.mrb[0].mxu0
  %v247 = vpop.f32.mrb[0].mxu0
  %v248 = vadd.f32 0.0, %v247
  %v249 = vpop.f32.mrb[0].mxu0
  %250 = vdwg.mxu0
  %v267 = vunpack.c.l.b16 %v15
  %v268 = vunpack.c.l.b16 %v16
  %v269 = vunpack.c.l.b16 %v17
  %v270 = vunpack.c.l.b16 %v18
  %v271 = vunpack.c.l.b16 %v19
  %v272 = vunpack.c.l.b16 %v20
  %v273 = vunpack.c.l.b16 %v21
  %v274 = vunpack.c.l.b16 %v22
  %v275 = vunpack.c.l.b16 %v23
  %v276 = vunpack.c.l.b16 %v24
  %v277 = vunpack.c.l.b16 %v25
  %v278 = vunpack.c.l.b16 %v26
  %v279 = vunpack.c.l.b16 %v27
  %v280 = vunpack.c.l.b16 %v28
  %v281 = vunpack.c.l.b16 %v29
  %v282 = vunpack.c.l.b16 %v30
  %v283 = vpack.c.b16 %v268, %v267
  %v284 = vpack.c.b16 %v270, %v269
  %v285 = vpack.c.b16 %v272, %v271
  %v286 = vpack.c.b16 %v274, %v273
  %v287 = vpack.c.b16 %v276, %v275
  %v288 = vpack.c.b16 %v278, %v277
  %v289 = vpack.c.b16 %v280, %v279
  %v290 = vpack.c.b16 %v282, %v281
  %v299 = vunpack.c.l.b16 %v31
  %v300 = vunpack.c.l.b16 %v32
  %v301 = vunpack.c.l.b16 %v33
  %v302 = vunpack.c.l.b16 %v34
  %v303 = vunpack.c.l.b16 %v35
  %v304 = vunpack.c.l.b16 %v36
  %v305 = vunpack.c.l.b16 %v37
  %v306 = vunpack.c.l.b16 %v38
  %v307 = vpack.c.b16 %v300, %v299
  %v308 = vpack.c.b16 %v302, %v301
  %v309 = vpack.c.b16 %v304, %v303
  %v310 = vpack.c.b16 %v306, %v305
  %v316 = vsel %vm129, %v283, 0
  %v319 = vsel %vm129, %v284, 0
  %v322 = vsel %vm129, %v285, 0
  %v325 = vsel %vm129, %v286, 0
  %v328 = vsel %vm129, %v287, 0
  %v331 = vsel %vm129, %v288, 0
  %v334 = vsel %vm129, %v289, 0
  %v337 = vsel %vm129, %v290, 0
  %339 = vmatprep.subr.bf16.mxu0 0
  %340 = vmatpush1.bf16.msra.mxu0 %v307
  %341 = vmatprep.subr.bf16.mxu0 0
  %342 = vmatpush1.bf16.msra.mxu0 %v308
  %343 = vmatprep.subr.bf16.mxu0 0
  %344 = vmatpush1.bf16.msra.mxu0 %v309
  %345 = vmatprep.subr.bf16.mxu0 0
  %346 = vmatpush1.bf16.msra.mxu0 %v310
  %347 = vmatprep.subr.bf16.mxu0 0
  %348 = vmatpush1.bf16.msra.mxu0 0
  %349 = vmatprep.subr.bf16.mxu0 0
  %350 = vmatpush1.bf16.msra.mxu0 0
  %351 = vmatprep.subr.bf16.mxu0 0
  %352 = vmatpush1.bf16.msra.mxu0 0
  %353 = vmatprep.subr.bf16.mxu0 0
  %354 = vmatpush1.bf16.msra.mxu0 0
  %355 = vmatprep.subr.bf16.mxu0 0
  %356 = vmatpush1.bf16.msra.mxu0 0
  %357 = vmatprep.subr.bf16.mxu0 0
  %358 = vmatpush1.bf16.msra.mxu0 0
  %359 = vmatprep.subr.bf16.mxu0 0
  %360 = vmatpush1.bf16.msra.mxu0 0
  %361 = vmatprep.subr.bf16.mxu0 0
  %362 = vmatpush1.bf16.msra.mxu0 0
  %363 = vmatprep.subr.bf16.mxu0 0
  %364 = vmatpush1.bf16.msra.mxu0 0
  %365 = vmatprep.subr.bf16.mxu0 0
  %366 = vmatpush1.bf16.msra.mxu0 0
  %367 = vmatprep.subr.bf16.mxu0 0
  %368 = vmatpush1.bf16.msra.mxu0 0
  %369 = vmatprep.subr.bf16.mxu0 0
  %370 = vmatpush1.bf16.msra.mxu0 0
  %371 = vmatprep.mubr.bf16.mxu0 0
  %372 = vmatmul.mubr.bf16.gmra.mrb[0].mxu0 %v316
  %v373 = vpop.f32.mrb[0].mxu0
  %v374 = vadd.f32 %v189, %v373
  %v375 = vpop.f32.mrb[0].mxu0
  %v376 = vpop.f32.mrb[0].mxu0
  %v377 = vadd.f32 %v192, %v376
  %v378 = vpop.f32.mrb[0].mxu0
  %379 = vmatprep.mubr.bf16.mxu0 0
  %380 = vmatmul.mubr.bf16.gmra.mrb[0].mxu0 %v319
  %v381 = vpop.f32.mrb[0].mxu0
  %v382 = vadd.f32 %v197, %v381
  %v383 = vpop.f32.mrb[0].mxu0
  %v384 = vpop.f32.mrb[0].mxu0
  %v385 = vadd.f32 %v200, %v384
  %v386 = vpop.f32.mrb[0].mxu0
  %387 = vmatprep.mubr.bf16.mxu0 0
  %388 = vmatmul.mubr.bf16.gmra.mrb[0].mxu0 %v322
  %v389 = vpop.f32.mrb[0].mxu0
  %v390 = vadd.f32 %v205, %v389
  %v391 = vpop.f32.mrb[0].mxu0
  %v392 = vpop.f32.mrb[0].mxu0
  %v393 = vadd.f32 %v208, %v392
  %v394 = vpop.f32.mrb[0].mxu0
  %395 = vmatprep.mubr.bf16.mxu0 0
  %396 = vmatmul.mubr.bf16.gmra.mrb[0].mxu0 %v325
  %v397 = vpop.f32.mrb[0].mxu0
  %v398 = vadd.f32 %v213, %v397
  %v399 = vpop.f32.mrb[0].mxu0
  %v400 = vpop.f32.mrb[0].mxu0
  %v401 = vadd.f32 %v216, %v400
  %v402 = vpop.f32.mrb[0].mxu0
  %403 = vmatprep.mubr.bf16.mxu0 0
  %404 = vmatmul.mubr.bf16.gmra.mrb[0].mxu0 %v328
  %v405 = vpop.f32.mrb[0].mxu0
  %v406 = vadd.f32 %v221, %v405
  %v407 = vpop.f32.mrb[0].mxu0
  %v408 = vpop.f32.mrb[0].mxu0
  %v409 = vadd.f32 %v224, %v408
  %v410 = vpop.f32.mrb[0].mxu0
  %411 = vmatprep.mubr.bf16.mxu0 0
  %412 = vmatmul.mubr.bf16.gmra.mrb[0].mxu0 %v331
  %v413 = vpop.f32.mrb[0].mxu0
  %v414 = vadd.f32 %v229, %v413
  %v415 = vpop.f32.mrb[0].mxu0
  %v416 = vpop.f32.mrb[0].mxu0
  %v417 = vadd.f32 %v232, %v416
  %v418 = vpop.f32.mrb[0].mxu0
  %419 = vmatprep.mubr.bf16.mxu0 0
  %420 = vmatmul.mubr.bf16.gmra.mrb[0].mxu0 %v334
  %v421 = vpop.f32.mrb[0].mxu0
  %v422 = vadd.f32 %v237, %v421
  %v423 = vpop.f32.mrb[0].mxu0
  %v424 = vpop.f32.mrb[0].mxu0
  %v425 = vadd.f32 %v240, %v424
  %v426 = vpop.f32.mrb[0].mxu0
  %427 = vmatprep.mubr.bf16.mxu0 0
  %428 = vmatmul.mubr.bf16.gmra.mrb[0].mxu0 %v337
  %v429 = vpop.f32.mrb[0].mxu0
  %v430 = vadd.f32 %v245, %v429
  %v431 = vpop.f32.mrb[0].mxu0
  %v432 = vpop.f32.mrb[0].mxu0
  %v433 = vadd.f32 %v248, %v432
  %v434 = vpop.f32.mrb[0].mxu0
  %435 = vdwg.mxu0
  %s436 = scalar_lea.vmem %s0, 128
  %v437 = vld [vmem:[%s436] sm:$0xf]
  %v438 = vld [vmem:[%s436 + $0x4] sm:$0xf]
  %v439 = vld [vmem:[%s436 + $0x8] sm:$0xf]
  %v440 = vld [vmem:[%s436 + $0xc] sm:$0xf]
  %v441 = vld [vmem:[%s436 + $0x10] sm:$0xf]
  %v442 = vld [vmem:[%s436 + $0x14] sm:$0xf]
  %v443 = vld [vmem:[%s436 + $0x18] sm:$0xf]
  %v444 = vld [vmem:[%s436 + $0x1c] sm:$0xf]
  %v445 = vld [vmem:[%s436 + $0x20] sm:$0xf]
  %v446 = vld [vmem:[%s436 + $0x24] sm:$0xf]
  %v447 = vld [vmem:[%s436 + $0x28] sm:$0xf]
  %v448 = vld [vmem:[%s436 + $0x2c] sm:$0xf]
  %v449 = vld [vmem:[%s436 + $0x30] sm:$0xf]
  %v450 = vld [vmem:[%s436 + $0x34] sm:$0xf]
  %v451 = vld [vmem:[%s436 + $0x38] sm:$0xf]
  %v452 = vld [vmem:[%s436 + $0x3c] sm:$0xf]
  %s453 = scalar_lea.vmem %s1, 64
  %v454 = vld [vmem:[%s453] sm:$0xf]
  %v455 = vld [vmem:[%s453 + $0x4] sm:$0xf]
  %v456 = vld [vmem:[%s453 + $0x8] sm:$0xf]
  %v457 = vld [vmem:[%s453 + $0xc] sm:$0xf]
  %v458 = vld [vmem:[%s453 + $0x10] sm:$0xf]
  %v459 = vld [vmem:[%s453 + $0x14] sm:$0xf]
  %v460 = vld [vmem:[%s453 + $0x18] sm:$0xf]
  %v461 = vld [vmem:[%s453 + $0x1c] sm:$0xf]
  %v478 = vunpack.c.l.b16 %v437
  %v479 = vunpack.c.l.b16 %v438
  %v480 = vunpack.c.l.b16 %v439
  %v481 = vunpack.c.l.b16 %v440
  %v482 = vunpack.c.l.b16 %v441
  %v483 = vunpack.c.l.b16 %v442
  %v484 = vunpack.c.l.b16 %v443
  %v485 = vunpack.c.l.b16 %v444
  %v486 = vunpack.c.l.b16 %v445
  %v487 = vunpack.c.l.b16 %v446
  %v488 = vunpack.c.l.b16 %v447
  %v489 = vunpack.c.l.b16 %v448
  %v490 = vunpack.c.l.b16 %v449
  %v491 = vunpack.c.l.b16 %v450
  %v492 = vunpack.c.l.b16 %v451
  %v493 = vunpack.c.l.b16 %v452
  %v494 = vpack.c.b16 %v479, %v478
  %v495 = vpack.c.b16 %v481, %v480
  %v496 = vpack.c.b16 %v483, %v482
  %v497 = vpack.c.b16 %v485, %v484
  %v498 = vpack.c.b16 %v487, %v486
  %v499 = vpack.c.b16 %v489, %v488
  %v500 = vpack.c.b16 %v491, %v490
  %v501 = vpack.c.b16 %v493, %v492
  %v510 = vunpack.c.l.b16 %v454
  %v511 = vunpack.c.l.b16 %v455
  %v512 = vunpack.c.l.b16 %v456
  %v513 = vunpack.c.l.b16 %v457
  %v514 = vunpack.c.l.b16 %v458
  %v515 = vunpack.c.l.b16 %v459
  %v516 = vunpack.c.l.b16 %v460
  %v517 = vunpack.c.l.b16 %v461
  %v518 = vpack.c.b16 %v511, %v510
  %v519 = vpack.c.b16 %v513, %v512
  %v520 = vpack.c.b16 %v515, %v514
  %v521 = vpack.c.b16 %v517, %v516
  %v527 = vsel %vm129, %v494, 0
  %v530 = vsel %vm129, %v495, 0
  %v533 = vsel %vm129, %v496, 0
  %v536 = vsel %vm129, %v497, 0
  %v539 = vsel %vm129, %v498, 0
  %v542 = vsel %vm129, %v499, 0
  %v545 = vsel %vm129, %v500, 0
  %v548 = vsel %vm129, %v501, 0
  %550 = vmatprep.subr.bf16.mxu0 0
  %551 = vmatpush1.bf16.msra.mxu0 %v518
  %552 = vmatprep.subr.bf16.mxu0 0
  %553 = vmatpush1.bf16.msra.mxu0 %v519
  %554 = vmatprep.subr.bf16.mxu0 0
  %555 = vmatpush1.bf16.msra.mxu0 %v520
  %556 = vmatprep.subr.bf16.mxu0 0
  %557 = vmatpush1.bf16.msra.mxu0 %v521
  %558 = vmatprep.subr.bf16.mxu0 0
  %559 = vmatpush1.bf16.msra.mxu0 0
  %560 = vmatprep.subr.bf16.mxu0 0
  %561 = vmatpush1.bf16.msra.mxu0 0
  %562 = vmatprep.subr.bf16.mxu0 0
  %563 = vmatpush1.bf16.msra.mxu0 0
  %564 = vmatprep.subr.bf16.mxu0 0
  %565 = vmatpush1.bf16.msra.mxu0 0
  %566 = vmatprep.subr.bf16.mxu0 0
  %567 = vmatpush1.bf16.msra.mxu0 0
  %568 = vmatprep.subr.bf16.mxu0 0
  %569 = vmatpush1.bf16.msra.mxu0 0
  %570 = vmatprep.subr.bf16.mxu0 0
  %571 = vmatpush1.bf16.msra.mxu0 0
  %572 = vmatprep.subr.bf16.mxu0 0
  %573 = vmatpush1.bf16.msra.mxu0 0
  %574 = vmatprep.subr.bf16.mxu0 0
  %575 = vmatpush1.bf16.msra.mxu0 0
  %576 = vmatprep.subr.bf16.mxu0 0
  %577 = vmatpush1.bf16.msra.mxu0 0
  %578 = vmatprep.subr.bf16.mxu0 0
  %579 = vmatpush1.bf16.msra.mxu0 0
  %580 = vmatprep.subr.bf16.mxu0 0
  %581 = vmatpush1.bf16.msra.mxu0 0
  %582 = vmatprep.mubr.bf16.mxu0 0
  %583 = vmatmul.mubr.bf16.gmra.mrb[0].mxu0 %v527
  %v584 = vpop.f32.mrb[0].mxu0
  %v585 = vadd.f32 0.0, %v584
  %v586 = vpop.f32.mrb[0].mxu0
  %v587 = vpop.f32.mrb[0].mxu0
  %v588 = vadd.f32 0.0, %v587
  %v589 = vpop.f32.mrb[0].mxu0
  %590 = vmatprep.mubr.bf16.mxu0 0
  %591 = vmatmul.mubr.bf16.gmra.mrb[0].mxu0 %v530
  %v592 = vpop.f32.mrb[0].mxu0
  %v593 = vadd.f32 0.0, %v592
  %v594 = vpop.f32.mrb[0].mxu0
  %v595 = vpop.f32.mrb[0].mxu0
  %v596 = vadd.f32 0.0, %v595
  %v597 = vpop.f32.mrb[0].mxu0
  %598 = vmatprep.mubr.bf16.mxu0 0
  %599 = vmatmul.mubr.bf16.gmra.mrb[0].mxu0 %v533
  %v600 = vpop.f32.mrb[0].mxu0
  %v601 = vadd.f32 0.0, %v600
  %v602 = vpop.f32.mrb[0].mxu0
  %v603 = vpop.f32.mrb[0].mxu0
  %v604 = vadd.f32 0.0, %v603
  %v605 = vpop.f32.mrb[0].mxu0
  %606 = vmatprep.mubr.bf16.mxu0 0
  %607 = vmatmul.mubr.bf16.gmra.mrb[0].mxu0 %v536
  %v608 = vpop.f32.mrb[0].mxu0
  %v609 = vadd.f32 0.0, %v608
  %v610 = vpop.f32.mrb[0].mxu0
  %v611 = vpop.f32.mrb[0].mxu0
  %v612 = vadd.f32 0.0, %v611
  %v613 = vpop.f32.mrb[0].mxu0
  %614 = vmatprep.mubr.bf16.mxu0 0
  %615 = vmatmul.mubr.bf16.gmra.mrb[0].mxu0 %v539
  %v616 = vpop.f32.mrb[0].mxu0
  %v617 = vadd.f32 0.0, %v616
  %v618 = vpop.f32.mrb[0].mxu0
  %v619 = vpop.f32.mrb[0].mxu0
  %v620 = vadd.f32 0.0, %v619
  %v621 = vpop.f32.mrb[0].mxu0
  %622 = vmatprep.mubr.bf16.mxu0 0
  %623 = vmatmul.mubr.bf16.gmra.mrb[0].mxu0 %v542
  %v624 = vpop.f32.mrb[0].mxu0
  %v625 = vadd.f32 0.0, %v624
  %v626 = vpop.f32.mrb[0].mxu0
  %v627 = vpop.f32.mrb[0].mxu0
  %v628 = vadd.f32 0.0, %v627
  %v629 = vpop.f32.mrb[0].mxu0
  %630 = vmatprep.mubr.bf16.mxu0 0
  %631 = vmatmul.mubr.bf16.gmra.mrb[0].mxu0 %v545
  %v632 = vpop.f32.mrb[0].mxu0
  %v633 = vadd.f32 0.0, %v632
  %v634 = vpop.f32.mrb[0].mxu0
  %v635 = vpop.f32.mrb[0].mxu0
  %v636 = vadd.f32 0.0, %v635
  %v637 = vpop.f32.mrb[0].mxu0
  %638 = vmatprep.mubr.bf16.mxu0 0
  %639 = vmatmul.mubr.bf16.gmra.mrb[0].mxu0 %v548
  %v640 = vpop.f32.mrb[0].mxu0
  %v641 = vadd.f32 0.0, %v640
  %v642 = vpop.f32.mrb[0].mxu0
  %v643 = vpop.f32.mrb[0].mxu0
  %v644 = vadd.f32 0.0, %v643
  %v645 = vpop.f32.mrb[0].mxu0
  %646 = vdwg.mxu0
  %v647 = vadd.f32 %v374, %v585
  %v648 = vadd.f32 %v377, %v588
  %v649 = vadd.f32 %v382, %v593
  %v650 = vadd.f32 %v385, %v596
  %v651 = vadd.f32 %v390, %v601
  %v652 = vadd.f32 %v393, %v604
  %v653 = vadd.f32 %v398, %v609
  %v654 = vadd.f32 %v401, %v612
  %v655 = vadd.f32 %v406, %v617
  %v656 = vadd.f32 %v409, %v620
  %v657 = vadd.f32 %v414, %v625
  %v658 = vadd.f32 %v417, %v628
  %v659 = vadd.f32 %v422, %v633
  %v660 = vadd.f32 %v425, %v636
  %v661 = vadd.f32 %v430, %v641
  %v662 = vadd.f32 %v433, %v644
  %s663 = scalar_lea.vmem %s0, 192
  %v664 = vld [vmem:[%s663] sm:$0xf]
  %v665 = vld [vmem:[%s663 + $0x4] sm:$0xf]
  %v666 = vld [vmem:[%s663 + $0x8] sm:$0xf]
  %v667 = vld [vmem:[%s663 + $0xc] sm:$0xf]
  %v668 = vld [vmem:[%s663 + $0x10] sm:$0xf]
  %v669 = vld [vmem:[%s663 + $0x14] sm:$0xf]
  %v670 = vld [vmem:[%s663 + $0x18] sm:$0xf]
  %v671 = vld [vmem:[%s663 + $0x1c] sm:$0xf]
  %v672 = vld [vmem:[%s663 + $0x20] sm:$0xf]
  %v673 = vld [vmem:[%s663 + $0x24] sm:$0xf]
  %v674 = vld [vmem:[%s663 + $0x28] sm:$0xf]
  %v675 = vld [vmem:[%s663 + $0x2c] sm:$0xf]
  %v676 = vld [vmem:[%s663 + $0x30] sm:$0xf]
  %v677 = vld [vmem:[%s663 + $0x34] sm:$0xf]
  %v678 = vld [vmem:[%s663 + $0x38] sm:$0xf]
  %v679 = vld [vmem:[%s663 + $0x3c] sm:$0xf]
  %s680 = scalar_lea.vmem %s1, 96
  %v681 = vld [vmem:[%s680] sm:$0xf]
  %v682 = vld [vmem:[%s680 + $0x4] sm:$0xf]
  %v683 = vld [vmem:[%s680 + $0x8] sm:$0xf]
  %v684 = vld [vmem:[%s680 + $0xc] sm:$0xf]
  %v685 = vld [vmem:[%s680 + $0x10] sm:$0xf]
  %v686 = vld [vmem:[%s680 + $0x14] sm:$0xf]
  %v687 = vld [vmem:[%s680 + $0x18] sm:$0xf]
  %v688 = vld [vmem:[%s680 + $0x1c] sm:$0xf]
  %v705 = vunpack.c.l.b16 %v664
  %v706 = vunpack.c.l.b16 %v665
  %v707 = vunpack.c.l.b16 %v666
  %v708 = vunpack.c.l.b16 %v667
  %v709 = vunpack.c.l.b16 %v668
  %v710 = vunpack.c.l.b16 %v669
  %v711 = vunpack.c.l.b16 %v670
  %v712 = vunpack.c.l.b16 %v671
  %v713 = vunpack.c.l.b16 %v672
  %v714 = vunpack.c.l.b16 %v673
  %v715 = vunpack.c.l.b16 %v674
  %v716 = vunpack.c.l.b16 %v675
  %v717 = vunpack.c.l.b16 %v676
  %v718 = vunpack.c.l.b16 %v677
  %v719 = vunpack.c.l.b16 %v678
  %v720 = vunpack.c.l.b16 %v679
  %v721 = vpack.c.b16 %v706, %v705
  %v722 = vpack.c.b16 %v708, %v707
  %v723 = vpack.c.b16 %v710, %v709
  %v724 = vpack.c.b16 %v712, %v711
  %v725 = vpack.c.b16 %v714, %v713
  %v726 = vpack.c.b16 %v716, %v715
  %v727 = vpack.c.b16 %v718, %v717
  %v728 = vpack.c.b16 %v720, %v719
  %v737 = vunpack.c.l.b16 %v681
  %v738 = vunpack.c.l.b16 %v682
  %v739 = vunpack.c.l.b16 %v683
  %v740 = vunpack.c.l.b16 %v684
  %v741 = vunpack.c.l.b16 %v685
  %v742 = vunpack.c.l.b16 %v686
  %v743 = vunpack.c.l.b16 %v687
  %v744 = vunpack.c.l.b16 %v688
  %v745 = vpack.c.b16 %v738, %v737
  %v746 = vpack.c.b16 %v740, %v739
  %v747 = vpack.c.b16 %v742, %v741
  %v748 = vpack.c.b16 %v744, %v743
  %v754 = vsel %vm129, %v721, 0
  %v757 = vsel %vm129, %v722, 0
  %v760 = vsel %vm129, %v723, 0
  %v763 = vsel %vm129, %v724, 0
  %v766 = vsel %vm129, %v725, 0
  %v769 = vsel %vm129, %v726, 0
  %v772 = vsel %vm129, %v727, 0
  %v775 = vsel %vm129, %v728, 0
  %777 = vmatprep.subr.bf16.mxu0 0
  %778 = vmatpush1.bf16.msra.mxu0 %v745
  %779 = vmatprep.subr.bf16.mxu0 0
  %780 = vmatpush1.bf16.msra.mxu0 %v746
  %781 = vmatprep.subr.bf16.mxu0 0
  %782 = vmatpush1.bf16.msra.mxu0 %v747
  %783 = vmatprep.subr.bf16.mxu0 0
  %784 = vmatpush1.bf16.msra.mxu0 %v748
  %785 = vmatprep.subr.bf16.mxu0 0
  %786 = vmatpush1.bf16.msra.mxu0 0
  %787 = vmatprep.subr.bf16.mxu0 0
  %788 = vmatpush1.bf16.msra.mxu0 0
  %789 = vmatprep.subr.bf16.mxu0 0
  %790 = vmatpush1.bf16.msra.mxu0 0
  %791 = vmatprep.subr.bf16.mxu0 0
  %792 = vmatpush1.bf16.msra.mxu0 0
  %793 = vmatprep.subr.bf16.mxu0 0
  %794 = vmatpush1.bf16.msra.mxu0 0
  %795 = vmatprep.subr.bf16.mxu0 0
  %796 = vmatpush1.bf16.msra.mxu0 0
  %797 = vmatprep.subr.bf16.mxu0 0
  %798 = vmatpush1.bf16.msra.mxu0 0
  %799 = vmatprep.subr.bf16.mxu0 0
  %800 = vmatpush1.bf16.msra.mxu0 0
  %801 = vmatprep.subr.bf16.mxu0 0
  %802 = vmatpush1.bf16.msra.mxu0 0
  %803 = vmatprep.subr.bf16.mxu0 0
  %804 = vmatpush1.bf16.msra.mxu0 0
  %805 = vmatprep.subr.bf16.mxu0 0
  %806 = vmatpush1.bf16.msra.mxu0 0
  %807 = vmatprep.subr.bf16.mxu0 0
  %808 = vmatpush1.bf16.msra.mxu0 0
  %809 = vmatprep.mubr.bf16.mxu0 0
  %810 = vmatmul.mubr.bf16.gmra.mrb[0].mxu0 %v754
  %v811 = vpop.f32.mrb[0].mxu0
  %v812 = vadd.f32 0.0, %v811
  %v813 = vpop.f32.mrb[0].mxu0
  %v814 = vpop.f32.mrb[0].mxu0
  %v815 = vadd.f32 0.0, %v814
  %v816 = vpop.f32.mrb[0].mxu0
  %817 = vmatprep.mubr.bf16.mxu0 0
  %818 = vmatmul.mubr.bf16.gmra.mrb[0].mxu0 %v757
  %v819 = vpop.f32.mrb[0].mxu0
  %v820 = vadd.f32 0.0, %v819
  %v821 = vpop.f32.mrb[0].mxu0
  %v822 = vpop.f32.mrb[0].mxu0
  %v823 = vadd.f32 0.0, %v822
  %v824 = vpop.f32.mrb[0].mxu0
  %825 = vmatprep.mubr.bf16.mxu0 0
  %826 = vmatmul.mubr.bf16.gmra.mrb[0].mxu0 %v760
  %v827 = vpop.f32.mrb[0].mxu0
  %v828 = vadd.f32 0.0, %v827
  %v829 = vpop.f32.mrb[0].mxu0
  %v830 = vpop.f32.mrb[0].mxu0
  %v831 = vadd.f32 0.0, %v830
  %v832 = vpop.f32.mrb[0].mxu0
  %833 = vmatprep.mubr.bf16.mxu0 0
  %834 = vmatmul.mubr.bf16.gmra.mrb[0].mxu0 %v763
  %v835 = vpop.f32.mrb[0].mxu0
  %v836 = vadd.f32 0.0, %v835
  %v837 = vpop.f32.mrb[0].mxu0
  %v838 = vpop.f32.mrb[0].mxu0
  %v839 = vadd.f32 0.0, %v838
  %v840 = vpop.f32.mrb[0].mxu0
  %841 = vmatprep.mubr.bf16.mxu0 0
  %842 = vmatmul.mubr.bf16.gmra.mrb[0].mxu0 %v766
  %v843 = vpop.f32.mrb[0].mxu0
  %v844 = vadd.f32 0.0, %v843
  %v845 = vpop.f32.mrb[0].mxu0
  %v846 = vpop.f32.mrb[0].mxu0
  %v847 = vadd.f32 0.0, %v846
  %v848 = vpop.f32.mrb[0].mxu0
  %849 = vmatprep.mubr.bf16.mxu0 0
  %850 = vmatmul.mubr.bf16.gmra.mrb[0].mxu0 %v769
  %v851 = vpop.f32.mrb[0].mxu0
  %v852 = vadd.f32 0.0, %v851
  %v853 = vpop.f32.mrb[0].mxu0
  %v854 = vpop.f32.mrb[0].mxu0
  %v855 = vadd.f32 0.0, %v854
  %v856 = vpop.f32.mrb[0].mxu0
  %857 = vmatprep.mubr.bf16.mxu0 0
  %858 = vmatmul.mubr.bf16.gmra.mrb[0].mxu0 %v772
  %v859 = vpop.f32.mrb[0].mxu0
  %v860 = vadd.f32 0.0, %v859
  %v861 = vpop.f32.mrb[0].mxu0
  %v862 = vpop.f32.mrb[0].mxu0
  %v863 = vadd.f32 0.0, %v862
  %v864 = vpop.f32.mrb[0].mxu0
  %865 = vmatprep.mubr.bf16.mxu0 0
  %866 = vmatmul.mubr.bf16.gmra.mrb[0].mxu0 %v775
  %v867 = vpop.f32.mrb[0].mxu0
  %v868 = vadd.f32 0.0, %v867
  %v869 = vpop.f32.mrb[0].mxu0
  %v870 = vpop.f32.mrb[0].mxu0
  %v871 = vadd.f32 0.0, %v870
  %v872 = vpop.f32.mrb[0].mxu0
  %873 = vdwg.mxu0
  %v874 = vadd.f32 %v647, %v812
  %v875 = vadd.f32 %v648, %v815
  %v876 = vadd.f32 %v649, %v820
  %v877 = vadd.f32 %v650, %v823
  %v878 = vadd.f32 %v651, %v828
  %v879 = vadd.f32 %v652, %v831
  %v880 = vadd.f32 %v653, %v836
  %v881 = vadd.f32 %v654, %v839
  %v882 = vadd.f32 %v655, %v844
  %v883 = vadd.f32 %v656, %v847
  %v884 = vadd.f32 %v657, %v852
  %v885 = vadd.f32 %v658, %v855
  %v886 = vadd.f32 %v659, %v860
  %v887 = vadd.f32 %v660, %v863
  %v888 = vadd.f32 %v661, %v868
  %v889 = vadd.f32 %v662, %v871
  %v890 = vld [vmem:[%s2] sm:$0x1]
  %v892 = vlaneseq
  %v893 = vshrl.u32 %v892, 7
  %v894 = vsub.s32 0, %v893
  %v895 = vrot.slane %v890, %v894
  %v897 = vadd.f32 %v874, %v895
  %v898 = vadd.f32 %v875, %v895
  %v899 = vadd.f32 %v876, %v895
  %v900 = vadd.f32 %v877, %v895
  %v901 = vadd.f32 %v878, %v895
  %v902 = vadd.f32 %v879, %v895
  %v903 = vadd.f32 %v880, %v895
  %v904 = vadd.f32 %v881, %v895
  %v905 = vadd.f32 %v882, %v895
  %v906 = vadd.f32 %v883, %v895
  %v907 = vadd.f32 %v884, %v895
  %v908 = vadd.f32 %v885, %v895
  %v909 = vadd.f32 %v886, %v895
  %v910 = vadd.f32 %v887, %v895
  %v911 = vadd.f32 %v888, %v895
  %v912 = vadd.f32 %v889, %v895
  %913 = vst [vmem:[%s3] sm:$0xff] %v897
  %914 = vst [vmem:[%s3 + $0x8] sm:$0xff] %v898
  %915 = vst [vmem:[%s3 + $0x10] sm:$0xff] %v899
  %916 = vst [vmem:[%s3 + $0x18] sm:$0xff] %v900
  %917 = vst [vmem:[%s3 + $0x20] sm:$0xff] %v901
  %918 = vst [vmem:[%s3 + $0x28] sm:$0xff] %v902
  %919 = vst [vmem:[%s3 + $0x30] sm:$0xff] %v903
  %920 = vst [vmem:[%s3 + $0x38] sm:$0xff] %v904
  %921 = vst [vmem:[%s3 + $0x40] sm:$0xff] %v905
  %922 = vst [vmem:[%s3 + $0x48] sm:$0xff] %v906
  %923 = vst [vmem:[%s3 + $0x50] sm:$0xff] %v907
  %924 = vst [vmem:[%s3 + $0x58] sm:$0xff] %v908
  %925 = vst [vmem:[%s3 + $0x60] sm:$0xff] %v909
  %926 = vst [vmem:[%s3 + $0x68] sm:$0xff] %v910
  %927 = vst [vmem:[%s3 + $0x70] sm:$0xff] %v911
  %928 = vst [vmem:[%s3 + $0x78] sm:$0xff] %v912
  // Predicated region
  $region14: #{gat_model_forward.9} parent=0 // pred_check
    _
  $region15: #{gat_model_forward.9} parent=0 // pred_check_branch
    %930 = sbr.rel (0) target = $region17
  $region16: #{gat_model_forward.9} parent=0 // pred_region
    _
  $region17: #{gat_model_forward.9} parent=0 // pred_fallthru
    _
  // Predicated region
  $region18: #{gat_model_forward.9} parent=0 // pred_check
    _
  $region19: #{gat_model_forward.9} parent=0 // pred_check_branch
    %932 = sbr.rel (0) target = $region21
  $region20: #{gat_model_forward.9} parent=0 // pred_region
    _
  $region21: #{gat_model_forward.9} parent=0 // pred_fallthru
    _

</llo_original>
